<compile_context>
chip_gen: v5e
topology: v5e:2x2
jax: 0.10.0
libtpu: 0.0.40
codegen_flags: <defaults>
</compile_context>

<pallas_src>
import functools

import jax
import jax.numpy as jnp
from jax.experimental import pallas as pl
from jax.experimental.pallas import tpu as pltpu


def _round_up(v, m):
    return ((v + m - 1) // m) * m


# ---------------------------------------------------------------------------
# In-kernel building blocks (all sizes are static Python ints)
# ---------------------------------------------------------------------------
def _conv3x3_relu_folded(src_ref, lhs_ref, w_ref, b_ref, dst_ref, *, hgt, wdt,
                         cin):
    """3x3 / stride-1 / pad-1 conv + bias + ReLU over a zero-padded flat image.

    src_ref : ((hgt+3)*(wdt+2), cin) bf16 zero-padded flat rows
    lhs_ref : (hgt*(wdt+2), Kp)      bf16 scratch, Kp = 9*cin rounded to 128
    w_ref   : (Kp, cout)             bf16 weights, taps folded into K
    b_ref   : (1, cout)              f32
    dst_ref : (hgt*(wdt+2), cout)    f32 conv output; columns wdt, wdt+1 of
                                     each image row hold garbage and are never
                                     read by the pooling step.
    """
    wp = wdt + 2
    lout = hgt * wp
    if lhs_ref.shape[1] != 9 * cin:          # zero the K-padding columns
        lhs_ref[...] = jnp.zeros_like(lhs_ref)
    for t in range(9):                       # fused im2col: 9 shifted windows
        shift = (t // 3) * wp + (t % 3)
        lhs_ref[:, t * cin:(t + 1) * cin] = src_ref[shift:shift + lout, :]
    acc = jnp.dot(lhs_ref[...], w_ref[...], preferred_element_type=jnp.float32)
    dst_ref[...] = jnp.maximum(acc + b_ref[...], 0.0)


def _maxpool2x2_into_padded(src_ref, dst_ref, *, hgt, wdt):
    """2x2 / stride-2 max pool of a flat conv output, written straight into
    the next stage's zero-padded flat input scratch (bf16)."""
    wp = wdt + 2
    ho_n, wo_n = hgt // 2, wdt // 2
    wp_next = wdt // 2 + 2
    dst_ref[...] = jnp.zeros_like(dst_ref)   # zero padding for the next conv
    for ho in range(ho_n):
        base = 2 * ho * wp
        c00 = src_ref[pl.ds(base, wo_n, stride=2), :]           # h even, w even
        c01 = src_ref[pl.ds(base + 1, wo_n, stride=2), :]       # h even, w odd
        c10 = src_ref[pl.ds(base + wp, wo_n, stride=2), :]      # h odd,  w even
        c11 = src_ref[pl.ds(base + wp + 1, wo_n, stride=2), :]  # h odd,  w odd
        pooled = jnp.maximum(jnp.maximum(c00, c01), jnp.maximum(c10, c11))
        row0 = (1 + ho) * wp_next + 1
        dst_ref[row0:row0 + wo_n, :] = pooled.astype(dst_ref.dtype)


def _maxpool2x2_into_row(src_ref, dst_ref, *, hgt, wdt, cout):
    """Final 2x2 / stride-2 max pool, laid out as one lane-concatenated
    (1, (hgt//2)*(wdt//2)*cout) bf16 row in (h, w, c) order; the PyTorch NCHW
    flatten permutation is folded into fc1's weight rows at prepare time."""
    wp = wdt + 2
    ho_n, wo_n = hgt // 2, wdt // 2
    for ho in range(ho_n):
        for wo in range(wo_n):
            base = 2 * ho * wp + 2 * wo
            top = src_ref[base:base + 2, :]
            bot = src_ref[base + wp:base + wp + 2, :]
            m = jnp.max(jnp.maximum(top, bot), axis=0, keepdims=True)  # (1, c)
            p = ho * wo_n + wo
            dst_ref[:, p * cout:(p + 1) * cout] = m.astype(dst_ref.dtype)


# ---------------------------------------------------------------------------
# Fully fused forward kernel (one batch element per grid step)
# ---------------------------------------------------------------------------
def _fused_forward_kernel(x_ref,
                          wc1_ref, bc1_ref, wc2_ref, bc2_ref, wc3_ref, bc3_ref,
                          wf1_ref, bf1_ref, wf2_ref, bf2_ref, wf3_ref, bf3_ref,
                          o_ref,
                          lhs1, ybuf1, pad2, lhs2, ybuf2, pad3, lhs3, ybuf3,
                          flat_in, *, dims):
    (h1, w1, c1), (h2, w2, c2), (h3, w3, c3) = dims

    # ---- stage 1: conv1 + ReLU + 2x2 max pool --------------------------------
    _conv3x3_relu_folded(x_ref, lhs1, wc1_ref, bc1_ref, ybuf1,
                         hgt=h1, wdt=w1, cin=c1)
    _maxpool2x2_into_padded(ybuf1, pad2, hgt=h1, wdt=w1)

    # ---- stage 2: conv2 + ReLU + 2x2 max pool --------------------------------
    _conv3x3_relu_folded(pad2, lhs2, wc2_ref, bc2_ref, ybuf2,
                         hgt=h2, wdt=w2, cin=c2)
    _maxpool2x2_into_padded(ybuf2, pad3, hgt=h2, wdt=w2)

    # ---- stage 3: conv3 + ReLU + 2x2 max pool -> flat MLP input row ----------
    _conv3x3_relu_folded(pad3, lhs3, wc3_ref, bc3_ref, ybuf3,
                         hgt=h3, wdt=w3, cin=c3)
    _maxpool2x2_into_row(ybuf3, flat_in, hgt=h3, wdt=w3,
                         cout=ybuf3.shape[-1])

    # ---- MLP: fc1 -> ReLU -> fc2 -> ReLU -> fc3 ------------------------------
    h = jnp.dot(flat_in[...], wf1_ref[...], preferred_element_type=jnp.float32)
    h = jnp.maximum(h + bf1_ref[...], 0.0)
    # TODO(synk): dropout1 implemented as identity (inference/eval-mode).
    h = jnp.dot(h.astype(wf2_ref.dtype), wf2_ref[...],
                preferred_element_type=jnp.float32)
    h = jnp.maximum(h + bf2_ref[...], 0.0)
    # TODO(synk): dropout2 implemented as identity (inference/eval-mode).
    h = jnp.dot(h.astype(wf3_ref.dtype), wf3_ref[...],
                preferred_element_type=jnp.float32)
    o_ref[...] = h + bf3_ref[...]            # (1, 128) lane-dense f32 logits


# ---------------------------------------------------------------------------
# Parameters (deterministic synthetic init; Kaiming-like scales)
# ---------------------------------------------------------------------------
def init_params(key, input_size, output_size):
    """Raw parameters in PyTorch layout (OIHW convs, (out,in) linears)."""
    ks = jax.random.split(key, 12)

    def kaiming(k, shape, fan_in):
        bound = jnp.sqrt(6.0 / fan_in)
        return jax.random.uniform(k, shape, jnp.float32, -bound, bound)

    p = {}
    p["conv1_w"] = kaiming(ks[0], (64, 3, 3, 3), 3 * 9)
    p["conv1_b"] = kaiming(ks[1], (64,), 3 * 9)
    p["conv2_w"] = kaiming(ks[2], (128, 64, 3, 3), 64 * 9)
    p["conv2_b"] = kaiming(ks[3], (128,), 64 * 9)
    p["conv3_w"] = kaiming(ks[4], (256, 128, 3, 3), 128 * 9)
    p["conv3_b"] = kaiming(ks[5], (256,), 128 * 9)
    fc1_in = 256 * input_size
    p["fc1_w"] = kaiming(ks[6], (512, fc1_in), fc1_in)
    p["fc1_b"] = kaiming(ks[7], (512,), fc1_in)
    p["fc2_w"] = kaiming(ks[8], (256, 512), 512)
    p["fc2_b"] = kaiming(ks[9], (256,), 512)
    p["fc3_w"] = kaiming(ks[10], (output_size, 256), 256)
    p["fc3_b"] = kaiming(ks[11], (output_size,), 256)
    return p


def prepare_params(p, input_size):
    """One-time layout prep (done at init, never per forward):
      * convs  -> (Kp, Cout) bf16 with the 9 taps folded into K
                  (Cin padded to mult of 8, K padded to mult of 128)
      * fc1    -> (in, out) bf16 with rows permuted from the NCHW flatten
                  order to the kernel's natural (h, w, c) order
      * fc2    -> (in, out) bf16
      * fc3    -> (in, 128) bf16 (output zero-padded to a lane-dense width)
      * biases -> (1, out) f32 (fc3 bias padded to 128)
    """
    def prep_conv(w_oihw, b):
        cout, cin = w_oihw.shape[0], w_oihw.shape[1]
        cin_p = _round_up(cin, 8)
        w = jnp.transpose(w_oihw, (2, 3, 1, 0))                 # (3,3,ci,co)
        w = jnp.pad(w, ((0, 0), (0, 0), (0, cin_p - cin), (0, 0)))
        w = w.reshape(9 * cin_p, cout)
        k_pad = _round_up(9 * cin_p, 128)
        w = jnp.pad(w, ((0, k_pad - 9 * cin_p), (0, 0)))
        return w.astype(jnp.bfloat16), b.reshape(1, -1).astype(jnp.float32)

    def prep_fc(w_oi, b, out_pad=None):
        w = jnp.transpose(w_oi, (1, 0))
        bb = b.reshape(1, -1)
        if out_pad is not None and out_pad > w.shape[1]:
            w = jnp.pad(w, ((0, 0), (0, out_pad - w.shape[1])))
            bb = jnp.pad(bb, ((0, 0), (0, out_pad - bb.shape[1])))
        return w.astype(jnp.bfloat16), bb.astype(jnp.float32)

    q = {}
    q["conv1_w"], q["conv1_b"] = prep_conv(p["conv1_w"], p["conv1_b"])
    q["conv2_w"], q["conv2_b"] = prep_conv(p["conv2_w"], p["conv2_b"])
    q["conv3_w"], q["conv3_b"] = prep_conv(p["conv3_w"], p["conv3_b"])

    # fc1: fold the PyTorch NCHW-flatten permutation into the weight rows:
    # original in-index = c*npos + pos ; kernel consumes pos*c3 + c.
    c3 = p["conv3_w"].shape[0]
    npos = input_size
    w1 = jnp.transpose(p["fc1_w"], (1, 0))                       # (c3*npos, 512)
    w1 = w1.reshape(c3, npos, -1).transpose(1, 0, 2).reshape(npos * c3, -1)
    q["fc1_w"] = w1.astype(jnp.bfloat16)
    q["fc1_b"] = p["fc1_b"].reshape(1, -1).astype(jnp.float32)

    q["fc2_w"], q["fc2_b"] = prep_fc(p["fc2_w"], p["fc2_b"])
    out_pad = _round_up(p["fc3_w"].shape[0], 128)
    q["fc3_w"], q["fc3_b"] = prep_fc(p["fc3_w"], p["fc3_b"], out_pad=out_pad)
    return q


# ---------------------------------------------------------------------------
# Forward pass (mirrors NeuralNetwork.forward, eval mode) — one pallas_call
# ---------------------------------------------------------------------------
@functools.partial(jax.jit, static_argnames=("output_size",))
def forward(params, x_nchw, *, output_size):
    N, cin, H, W = x_nchw.shape
    assert H % 8 == 0 and W % 8 == 0, "needs H, W divisible by 8 (3 pools)"

    wc1, wc2, wc3 = params["conv1_w"], params["conv2_w"], params["conv3_w"]
    bc1, bc2, bc3 = params["conv1_b"], params["conv2_b"], params["conv3_b"]
    wf1, wf2, wf3 = params["fc1_w"], params["fc2_w"], params["fc3_w"]
    bf1, bf2, bf3 = params["fc1_b"], params["fc2_b"], params["fc3_b"]

    c1p = _round_up(cin, 8)
    co1, co2, co3 = bc1.shape[1], bc2.shape[1], bc3.shape[1]
    h1, w1 = H, W
    h2, w2 = H // 2, W // 2
    h3, w3 = H // 4, W // 4
    wp1, wp2, wp3 = w1 + 2, w2 + 2, w3 + 2
    lin1, lout1 = (h1 + 3) * wp1, h1 * wp1
    lin2, lout2 = (h2 + 3) * wp2, h2 * wp2
    lin3, lout3 = (h3 + 3) * wp3, h3 * wp3
    k1, k2, k3 = wc1.shape[0], wc2.shape[0], wc3.shape[0]   # folded, padded K
    kfc = wf1.shape[0]
    n1, n2, n3p = wf1.shape[1], wf2.shape[1], wf3.shape[1]

    # Tiny one-shot input prep (6 KB): NCHW -> NHWC, zero-pad spatially
    # ((1,2),(1,1)) and channels to c1p, flatten to padded rows.
    x = jnp.transpose(x_nchw, (0, 2, 3, 1)).astype(jnp.bfloat16)
    x = jnp.pad(x, ((0, 0), (1, 2), (1, 1), (0, c1p - cin)))
    xflat = x.reshape(N, lin1, c1p)

    dims = ((h1, w1, c1p), (h2, w2, co1), (h3, w3, co2))

    out = pl.pallas_call(
        functools.partial(_fused_forward_kernel, dims=dims),
        out_shape=jax.ShapeDtypeStruct((N, 1, n3p), jnp.float32),
        grid=(N,),
        in_specs=[
            pl.BlockSpec((None, lin1, c1p), lambda n: (n, 0, 0)),
            pl.BlockSpec((k1, co1), lambda n: (0, 0)),
            pl.BlockSpec((1, co1), lambda n: (0, 0)),
            pl.BlockSpec((k2, co2), lambda n: (0, 0)),
            pl.BlockSpec((1, co2), lambda n: (0, 0)),
            pl.BlockSpec((k3, co3), lambda n: (0, 0)),
            pl.BlockSpec((1, co3), lambda n: (0, 0)),
            pl.BlockSpec((kfc, n1), lambda n: (0, 0)),
            pl.BlockSpec((1, n1), lambda n: (0, 0)),
            pl.BlockSpec((n1, n2), lambda n: (0, 0)),
            pl.BlockSpec((1, n2), lambda n: (0, 0)),
            pl.BlockSpec((n2, n3p), lambda n: (0, 0)),
            pl.BlockSpec((1, n3p), lambda n: (0, 0)),
        ],
        out_specs=pl.BlockSpec((None, 1, n3p), lambda n: (n, 0, 0)),
        scratch_shapes=[
            pltpu.VMEM((lout1, k1), jnp.bfloat16),   # conv1 folded-K im2col
            pltpu.VMEM((lout1, co1), jnp.float32),   # conv1 output (pre-pool)
            pltpu.VMEM((lin2, co1), jnp.bfloat16),   # stage-2 padded input
            pltpu.VMEM((lout2, k2), jnp.bfloat16),   # conv2 folded-K im2col
            pltpu.VMEM((lout2, co2), jnp.float32),   # conv2 output
            pltpu.VMEM((lin3, co2), jnp.bfloat16),   # stage-3 padded input
            pltpu.VMEM((lout3, k3), jnp.bfloat16),   # conv3 folded-K im2col
            pltpu.VMEM((lout3, co3), jnp.float32),   # conv3 output
            pltpu.VMEM((1, kfc), jnp.bfloat16),      # flattened MLP input row
        ],
        compiler_params=pltpu.CompilerParams(dimension_semantics=("parallel",)),
    )(xflat, wc1, bc1, wc2, bc2, wc3, bc3, wf1, bf1, wf2, bf2, wf3, bf3)

    return out.reshape(N, n3p)[:, :output_size]


if __name__ == "__main__":
    # x: [N=2, C=3, H=16, W=16] -> after 3 pools: 2x2 spatial -> input_size = 4
    N, C, H, W = 2, 3, 16, 16
    input_size = (H // 8) * (W // 8)  # 4
    output_size = 10

    key = jax.random.PRNGKey(0)
    kx, kp = jax.random.split(key)
    x = jax.random.normal(kx, (N, C, H, W), jnp.float32)
    params = prepare_params(init_params(kp, input_size, output_size),
                            input_size)

    out = forward(params, x, output_size=output_size)
    out = jax.block_until_ready(out)
    assert out.shape == (N, output_size), out.shape
    assert bool(jnp.all(jnp.isfinite(out)))
    print("KERNEL_OK")
</pallas_src>

<mosaic_0001>
module attributes {stable_mosaic.version = 11 : i64} {
  func.func @_fused_forward_kernel(%arg0: i32, %arg1: memref<1x342x8xbf16, #tpu.memory_space<vmem>>, %arg2: memref<128x64xbf16, #tpu.memory_space<vmem>>, %arg3: memref<1x64xf32, #tpu.memory_space<vmem>>, %arg4: memref<640x128xbf16, #tpu.memory_space<vmem>>, %arg5: memref<1x128xf32, #tpu.memory_space<vmem>>, %arg6: memref<1152x256xbf16, #tpu.memory_space<vmem>>, %arg7: memref<1x256xf32, #tpu.memory_space<vmem>>, %arg8: memref<1024x512xbf16, #tpu.memory_space<vmem>>, %arg9: memref<1x512xf32, #tpu.memory_space<vmem>>, %arg10: memref<512x256xbf16, #tpu.memory_space<vmem>>, %arg11: memref<1x256xf32, #tpu.memory_space<vmem>>, %arg12: memref<256x128xbf16, #tpu.memory_space<vmem>>, %arg13: memref<1x128xf32, #tpu.memory_space<vmem>>, %arg14: memref<1x1x128xf32, #tpu.memory_space<vmem>>, %arg15: memref<288x128xbf16, #tpu.memory_space<vmem>>, %arg16: memref<288x64xf32, #tpu.memory_space<vmem>>, %arg17: memref<110x64xbf16, #tpu.memory_space<vmem>>, %arg18: memref<80x640xbf16, #tpu.memory_space<vmem>>, %arg19: memref<80x128xf32, #tpu.memory_space<vmem>>, %arg20: memref<42x128xbf16, #tpu.memory_space<vmem>>, %arg21: memref<24x1152xbf16, #tpu.memory_space<vmem>>, %arg22: memref<24x256xf32, #tpu.memory_space<vmem>>, %arg23: memref<1x1024xbf16, #tpu.memory_space<vmem>>) attributes {dimension_semantics = [#tpu.dimension_semantics<parallel>], iteration_bounds = array<i64: 2>, scalar_prefetch = 0 : i64, scratch_operands = 9 : i64, tpu.core_type = #tpu.core_type<tc>, window_params = [{transform_indices = @transform_0, window_bounds = array<i64: 1, 342, 8>}, {pipeline_mode = #tpu.pipeline_mode<synchronous>, transform_indices = @transform_1, window_bounds = array<i64: 128, 64>}, {pipeline_mode = #tpu.pipeline_mode<synchronous>, transform_indices = @transform_2, window_bounds = array<i64: 1, 64>}, {pipeline_mode = #tpu.pipeline_mode<synchronous>, transform_indices = @transform_3, window_bounds = array<i64: 640, 128>}, {pipeline_mode = #tpu.pipeline_mode<synchronous>, transform_indices = @transform_4, window_bounds = array<i64: 1, 128>}, {pipeline_mode = #tpu.pipeline_mode<synchronous>, transform_indices = @transform_5, window_bounds = array<i64: 1152, 256>}, {pipeline_mode = #tpu.pipeline_mode<synchronous>, transform_indices = @transform_6, window_bounds = array<i64: 1, 256>}, {pipeline_mode = #tpu.pipeline_mode<synchronous>, transform_indices = @transform_7, window_bounds = array<i64: 1024, 512>}, {pipeline_mode = #tpu.pipeline_mode<synchronous>, transform_indices = @transform_8, window_bounds = array<i64: 1, 512>}, {pipeline_mode = #tpu.pipeline_mode<synchronous>, transform_indices = @transform_9, window_bounds = array<i64: 512, 256>}, {pipeline_mode = #tpu.pipeline_mode<synchronous>, transform_indices = @transform_10, window_bounds = array<i64: 1, 256>}, {pipeline_mode = #tpu.pipeline_mode<synchronous>, transform_indices = @transform_11, window_bounds = array<i64: 256, 128>}, {pipeline_mode = #tpu.pipeline_mode<synchronous>, transform_indices = @transform_12, window_bounds = array<i64: 1, 128>}, {transform_indices = @transform_13, window_bounds = array<i64: 1, 1, 128>}]} {
    %cst = arith.constant 0.000000e+00 : bf16
    %0 = vector.broadcast %cst : bf16 to vector<288x128xbf16>
    %c0 = arith.constant 0 : index
    %c0_0 = arith.constant 0 : index
    %1 = vector.load %arg15[%c0, %c0_0] : memref<288x128xbf16, #tpu.memory_space<vmem>>, vector<288x128xbf16>
    tpu.vector_store %arg15[%c0, %c0_0], %0 {strides = array<i32>} : memref<288x128xbf16, #tpu.memory_space<vmem>>, vector<288x128xbf16>,
    %c0_1 = arith.constant 0 : index
    %c0_2 = arith.constant 0 : index
    %c0_3 = arith.constant 0 : index
    %2 = vector.load %arg1[%c0_1, %c0_2, %c0_3] : memref<1x342x8xbf16, #tpu.memory_space<vmem>>, vector<1x288x8xbf16>
    %3 = vector.shape_cast %2 : vector<1x288x8xbf16> to vector<288x8xbf16>
    %c0_4 = arith.constant 0 : index
    %c0_5 = arith.constant 0 : index
    %4 = vector.load %arg15[%c0_4, %c0_5] : memref<288x128xbf16, #tpu.memory_space<vmem>>, vector<288x8xbf16>
    tpu.vector_store %arg15[%c0_4, %c0_5], %3 {strides = array<i32>} : memref<288x128xbf16, #tpu.memory_space<vmem>>, vector<288x8xbf16>,
    %c0_6 = arith.constant 0 : index
    %c1 = arith.constant 1 : index
    %c0_7 = arith.constant 0 : index
    %5 = vector.load %arg1[%c0_6, %c1, %c0_7] : memref<1x342x8xbf16, #tpu.memory_space<vmem>>, vector<1x288x8xbf16>
    %6 = vector.shape_cast %5 : vector<1x288x8xbf16> to vector<288x8xbf16>
    %c0_8 = arith.constant 0 : index
    %c8 = arith.constant 8 : index
    %7 = vector.load %arg15[%c0_8, %c8] : memref<288x128xbf16, #tpu.memory_space<vmem>>, vector<288x8xbf16>
    tpu.vector_store %arg15[%c0_8, %c8], %6 {strides = array<i32>} : memref<288x128xbf16, #tpu.memory_space<vmem>>, vector<288x8xbf16>,
    %c0_9 = arith.constant 0 : index
    %c2 = arith.constant 2 : index
    %c0_10 = arith.constant 0 : index
    %8 = vector.load %arg1[%c0_9, %c2, %c0_10] : memref<1x342x8xbf16, #tpu.memory_space<vmem>>, vector<1x288x8xbf16>
    %9 = vector.shape_cast %8 : vector<1x288x8xbf16> to vector<288x8xbf16>
    %c0_11 = arith.constant 0 : index
    %c16 = arith.constant 16 : index
    %10 = vector.load %arg15[%c0_11, %c16] : memref<288x128xbf16, #tpu.memory_space<vmem>>, vector<288x8xbf16>
    tpu.vector_store %arg15[%c0_11, %c16], %9 {strides = array<i32>} : memref<288x128xbf16, #tpu.memory_space<vmem>>, vector<288x8xbf16>,
    %c0_12 = arith.constant 0 : index
    %c18 = arith.constant 18 : index
    %c0_13 = arith.constant 0 : index
    %11 = vector.load %arg1[%c0_12, %c18, %c0_13] : memref<1x342x8xbf16, #tpu.memory_space<vmem>>, vector<1x288x8xbf16>
    %12 = vector.shape_cast %11 : vector<1x288x8xbf16> to vector<288x8xbf16>
    %c0_14 = arith.constant 0 : index
    %c24 = arith.constant 24 : index
    %13 = vector.load %arg15[%c0_14, %c24] : memref<288x128xbf16, #tpu.memory_space<vmem>>, vector<288x8xbf16>
    tpu.vector_store %arg15[%c0_14, %c24], %12 {strides = array<i32>} : memref<288x128xbf16, #tpu.memory_space<vmem>>, vector<288x8xbf16>,
    %c0_15 = arith.constant 0 : index
    %c19 = arith.constant 19 : index
    %c0_16 = arith.constant 0 : index
    %14 = vector.load %arg1[%c0_15, %c19, %c0_16] : memref<1x342x8xbf16, #tpu.memory_space<vmem>>, vector<1x288x8xbf16>
    %15 = vector.shape_cast %14 : vector<1x288x8xbf16> to vector<288x8xbf16>
    %c0_17 = arith.constant 0 : index
    %c32 = arith.constant 32 : index
    %16 = vector.load %arg15[%c0_17, %c32] : memref<288x128xbf16, #tpu.memory_space<vmem>>, vector<288x8xbf16>
    tpu.vector_store %arg15[%c0_17, %c32], %15 {strides = array<i32>} : memref<288x128xbf16, #tpu.memory_space<vmem>>, vector<288x8xbf16>,
    %c0_18 = arith.constant 0 : index
    %c20 = arith.constant 20 : index
    %c0_19 = arith.constant 0 : index
    %17 = vector.load %arg1[%c0_18, %c20, %c0_19] : memref<1x342x8xbf16, #tpu.memory_space<vmem>>, vector<1x288x8xbf16>
    %18 = vector.shape_cast %17 : vector<1x288x8xbf16> to vector<288x8xbf16>
    %c0_20 = arith.constant 0 : index
    %c40 = arith.constant 40 : index
    %19 = vector.load %arg15[%c0_20, %c40] : memref<288x128xbf16, #tpu.memory_space<vmem>>, vector<288x8xbf16>
    tpu.vector_store %arg15[%c0_20, %c40], %18 {strides = array<i32>} : memref<288x128xbf16, #tpu.memory_space<vmem>>, vector<288x8xbf16>,
    %c0_21 = arith.constant 0 : index
    %c36 = arith.constant 36 : index
    %c0_22 = arith.constant 0 : index
    %20 = vector.load %arg1[%c0_21, %c36, %c0_22] : memref<1x342x8xbf16, #tpu.memory_space<vmem>>, vector<1x288x8xbf16>
    %21 = vector.shape_cast %20 : vector<1x288x8xbf16> to vector<288x8xbf16>
    %c0_23 = arith.constant 0 : index
    %c48 = arith.constant 48 : index
    %22 = vector.load %arg15[%c0_23, %c48] : memref<288x128xbf16, #tpu.memory_space<vmem>>, vector<288x8xbf16>
    tpu.vector_store %arg15[%c0_23, %c48], %21 {strides = array<i32>} : memref<288x128xbf16, #tpu.memory_space<vmem>>, vector<288x8xbf16>,
    %c0_24 = arith.constant 0 : index
    %c37 = arith.constant 37 : index
    %c0_25 = arith.constant 0 : index
    %23 = vector.load %arg1[%c0_24, %c37, %c0_25] : memref<1x342x8xbf16, #tpu.memory_space<vmem>>, vector<1x288x8xbf16>
    %24 = vector.shape_cast %23 : vector<1x288x8xbf16> to vector<288x8xbf16>
    %c0_26 = arith.constant 0 : index
    %c56 = arith.constant 56 : index
    %25 = vector.load %arg15[%c0_26, %c56] : memref<288x128xbf16, #tpu.memory_space<vmem>>, vector<288x8xbf16>
    tpu.vector_store %arg15[%c0_26, %c56], %24 {strides = array<i32>} : memref<288x128xbf16, #tpu.memory_space<vmem>>, vector<288x8xbf16>,
    %c0_27 = arith.constant 0 : index
    %c38 = arith.constant 38 : index
    %c0_28 = arith.constant 0 : index
    %26 = vector.load %arg1[%c0_27, %c38, %c0_28] : memref<1x342x8xbf16, #tpu.memory_space<vmem>>, vector<1x288x8xbf16>
    %27 = vector.shape_cast %26 : vector<1x288x8xbf16> to vector<288x8xbf16>
    %c0_29 = arith.constant 0 : index
    %c64 = arith.constant 64 : index
    %28 = vector.load %arg15[%c0_29, %c64] : memref<288x128xbf16, #tpu.memory_space<vmem>>, vector<288x8xbf16>
    tpu.vector_store %arg15[%c0_29, %c64], %27 {strides = array<i32>} : memref<288x128xbf16, #tpu.memory_space<vmem>>, vector<288x8xbf16>,
    %c0_30 = arith.constant 0 : index
    %c0_31 = arith.constant 0 : index
    %29 = vector.load %arg15[%c0_30, %c0_31] : memref<288x128xbf16, #tpu.memory_space<vmem>>, vector<288x128xbf16>
    %c0_32 = arith.constant 0 : index
    %c0_33 = arith.constant 0 : index
    %30 = vector.load %arg2[%c0_32, %c0_33] : memref<128x64xbf16, #tpu.memory_space<vmem>>, vector<128x64xbf16>
    %cst_34 = arith.constant dense<0.000000e+00> : vector<288x64xf32>
    %31 = tpu.matmul %29, %30, %cst_34 {dimension_numbers = #tpu.dot_dimension_numbers<[1], [0], [0], [1], [0, 0, 1, 1], [], []>} : vector<288x128xbf16>, vector<128x64xbf16>, vector<288x64xf32> -> vector<288x64xf32>
    %c0_35 = arith.constant 0 : index
    %c0_36 = arith.constant 0 : index
    %32 = vector.load %arg3[%c0_35, %c0_36] : memref<1x64xf32, #tpu.memory_space<vmem>>, vector<1x64xf32>
    %33 = vector.broadcast %32 : vector<1x64xf32> to vector<288x64xf32>
    %34 = arith.addf %31, %33 : vector<288x64xf32>
    %cst_37 = arith.constant 0.000000e+00 : f32
    %35 = vector.broadcast %cst_37 : f32 to vector<288x64xf32>
    %36 = arith.maximumf %34, %35 : vector<288x64xf32>
    %c0_38 = arith.constant 0 : index
    %c0_39 = arith.constant 0 : index
    %37 = vector.load %arg16[%c0_38, %c0_39] : memref<288x64xf32, #tpu.memory_space<vmem>>, vector<288x64xf32>
    tpu.vector_store %arg16[%c0_38, %c0_39], %36 {strides = array<i32>} : memref<288x64xf32, #tpu.memory_space<vmem>>, vector<288x64xf32>,
    %cst_40 = arith.constant 0.000000e+00 : bf16
    %38 = vector.broadcast %cst_40 : bf16 to vector<110x64xbf16>
    %c0_41 = arith.constant 0 : index
    %c0_42 = arith.constant 0 : index
    %39 = vector.load %arg17[%c0_41, %c0_42] : memref<110x64xbf16, #tpu.memory_space<vmem>>, vector<110x64xbf16>
    tpu.vector_store %arg17[%c0_41, %c0_42], %38 {strides = array<i32>} : memref<110x64xbf16, #tpu.memory_space<vmem>>, vector<110x64xbf16>,
    %c0_43 = arith.constant 0 : index
    %c0_44 = arith.constant 0 : index
    %40 = tpu.strided_load %arg16[%c0_43, %c0_44] {strides = array<i32: 2, 1>} : memref<288x64xf32, #tpu.memory_space<vmem>>, vector<8x64xf32>
    %c1_45 = arith.constant 1 : index
    %c0_46 = arith.constant 0 : index
    %41 = tpu.strided_load %arg16[%c1_45, %c0_46] {strides = array<i32: 2, 1>} : memref<288x64xf32, #tpu.memory_space<vmem>>, vector<8x64xf32>
    %c18_47 = arith.constant 18 : index
    %c0_48 = arith.constant 0 : index
    %42 = tpu.strided_load %arg16[%c18_47, %c0_48] {strides = array<i32: 2, 1>} : memref<288x64xf32, #tpu.memory_space<vmem>>, vector<8x64xf32>
    %c19_49 = arith.constant 19 : index
    %c0_50 = arith.constant 0 : index
    %43 = tpu.strided_load %arg16[%c19_49, %c0_50] {strides = array<i32: 2, 1>} : memref<288x64xf32, #tpu.memory_space<vmem>>, vector<8x64xf32>
    %44 = arith.maximumf %40, %41 : vector<8x64xf32>
    %45 = arith.maximumf %42, %43 : vector<8x64xf32>
    %46 = arith.maximumf %44, %45 : vector<8x64xf32>
    %47 = arith.truncf %46 : vector<8x64xf32> to vector<8x64xbf16>
    %c11 = arith.constant 11 : index
    %c0_51 = arith.constant 0 : index
    %48 = vector.load %arg17[%c11, %c0_51] : memref<110x64xbf16, #tpu.memory_space<vmem>>, vector<8x64xbf16>
    tpu.vector_store %arg17[%c11, %c0_51], %47 {strides = array<i32>} : memref<110x64xbf16, #tpu.memory_space<vmem>>, vector<8x64xbf16>,
    %c36_52 = arith.constant 36 : index
    %c0_53 = arith.constant 0 : index
    %49 = tpu.strided_load %arg16[%c36_52, %c0_53] {strides = array<i32: 2, 1>} : memref<288x64xf32, #tpu.memory_space<vmem>>, vector<8x64xf32>
    %c37_54 = arith.constant 37 : index
    %c0_55 = arith.constant 0 : index
    %50 = tpu.strided_load %arg16[%c37_54, %c0_55] {strides = array<i32: 2, 1>} : memref<288x64xf32, #tpu.memory_space<vmem>>, vector<8x64xf32>
    %c54 = arith.constant 54 : index
    %c0_56 = arith.constant 0 : index
    %51 = tpu.strided_load %arg16[%c54, %c0_56] {strides = array<i32: 2, 1>} : memref<288x64xf32, #tpu.memory_space<vmem>>, vector<8x64xf32>
    %c55 = arith.constant 55 : index
    %c0_57 = arith.constant 0 : index
    %52 = tpu.strided_load %arg16[%c55, %c0_57] {strides = array<i32: 2, 1>} : memref<288x64xf32, #tpu.memory_space<vmem>>, vector<8x64xf32>
    %53 = arith.maximumf %49, %50 : vector<8x64xf32>
    %54 = arith.maximumf %51, %52 : vector<8x64xf32>
    %55 = arith.maximumf %53, %54 : vector<8x64xf32>
    %56 = arith.truncf %55 : vector<8x64xf32> to vector<8x64xbf16>
    %c21 = arith.constant 21 : index
    %c0_58 = arith.constant 0 : index
    %57 = vector.load %arg17[%c21, %c0_58] : memref<110x64xbf16, #tpu.memory_space<vmem>>, vector<8x64xbf16>
    tpu.vector_store %arg17[%c21, %c0_58], %56 {strides = array<i32>} : memref<110x64xbf16, #tpu.memory_space<vmem>>, vector<8x64xbf16>,
    %c72 = arith.constant 72 : index
    %c0_59 = arith.constant 0 : index
    %58 = tpu.strided_load %arg16[%c72, %c0_59] {strides = array<i32: 2, 1>} : memref<288x64xf32, #tpu.memory_space<vmem>>, vector<8x64xf32>
    %c73 = arith.constant 73 : index
    %c0_60 = arith.constant 0 : index
    %59 = tpu.strided_load %arg16[%c73, %c0_60] {strides = array<i32: 2, 1>} : memref<288x64xf32, #tpu.memory_space<vmem>>, vector<8x64xf32>
    %c90 = arith.constant 90 : index
    %c0_61 = arith.constant 0 : index
    %60 = tpu.strided_load %arg16[%c90, %c0_61] {strides = array<i32: 2, 1>} : memref<288x64xf32, #tpu.memory_space<vmem>>, vector<8x64xf32>
    %c91 = arith.constant 91 : index
    %c0_62 = arith.constant 0 : index
    %61 = tpu.strided_load %arg16[%c91, %c0_62] {strides = array<i32: 2, 1>} : memref<288x64xf32, #tpu.memory_space<vmem>>, vector<8x64xf32>
    %62 = arith.maximumf %58, %59 : vector<8x64xf32>
    %63 = arith.maximumf %60, %61 : vector<8x64xf32>
    %64 = arith.maximumf %62, %63 : vector<8x64xf32>
    %65 = arith.truncf %64 : vector<8x64xf32> to vector<8x64xbf16>
    %c31 = arith.constant 31 : index
    %c0_63 = arith.constant 0 : index
    %66 = vector.load %arg17[%c31, %c0_63] : memref<110x64xbf16, #tpu.memory_space<vmem>>, vector<8x64xbf16>
    tpu.vector_store %arg17[%c31, %c0_63], %65 {strides = array<i32>} : memref<110x64xbf16, #tpu.memory_space<vmem>>, vector<8x64xbf16>,
    %c108 = arith.constant 108 : index
    %c0_64 = arith.constant 0 : index
    %67 = tpu.strided_load %arg16[%c108, %c0_64] {strides = array<i32: 2, 1>} : memref<288x64xf32, #tpu.memory_space<vmem>>, vector<8x64xf32>
    %c109 = arith.constant 109 : index
    %c0_65 = arith.constant 0 : index
    %68 = tpu.strided_load %arg16[%c109, %c0_65] {strides = array<i32: 2, 1>} : memref<288x64xf32, #tpu.memory_space<vmem>>, vector<8x64xf32>
    %c126 = arith.constant 126 : index
    %c0_66 = arith.constant 0 : index
    %69 = tpu.strided_load %arg16[%c126, %c0_66] {strides = array<i32: 2, 1>} : memref<288x64xf32, #tpu.memory_space<vmem>>, vector<8x64xf32>
    %c127 = arith.constant 127 : index
    %c0_67 = arith.constant 0 : index
    %70 = tpu.strided_load %arg16[%c127, %c0_67] {strides = array<i32: 2, 1>} : memref<288x64xf32, #tpu.memory_space<vmem>>, vector<8x64xf32>
    %71 = arith.maximumf %67, %68 : vector<8x64xf32>
    %72 = arith.maximumf %69, %70 : vector<8x64xf32>
    %73 = arith.maximumf %71, %72 : vector<8x64xf32>
    %74 = arith.truncf %73 : vector<8x64xf32> to vector<8x64xbf16>
    %c41 = arith.constant 41 : index
    %c0_68 = arith.constant 0 : index
    %75 = vector.load %arg17[%c41, %c0_68] : memref<110x64xbf16, #tpu.memory_space<vmem>>, vector<8x64xbf16>
    tpu.vector_store %arg17[%c41, %c0_68], %74 {strides = array<i32>} : memref<110x64xbf16, #tpu.memory_space<vmem>>, vector<8x64xbf16>,
    %c144 = arith.constant 144 : index
    %c0_69 = arith.constant 0 : index
    %76 = tpu.strided_load %arg16[%c144, %c0_69] {strides = array<i32: 2, 1>} : memref<288x64xf32, #tpu.memory_space<vmem>>, vector<8x64xf32>
    %c145 = arith.constant 145 : index
    %c0_70 = arith.constant 0 : index
    %77 = tpu.strided_load %arg16[%c145, %c0_70] {strides = array<i32: 2, 1>} : memref<288x64xf32, #tpu.memory_space<vmem>>, vector<8x64xf32>
    %c162 = arith.constant 162 : index
    %c0_71 = arith.constant 0 : index
    %78 = tpu.strided_load %arg16[%c162, %c0_71] {strides = array<i32: 2, 1>} : memref<288x64xf32, #tpu.memory_space<vmem>>, vector<8x64xf32>
    %c163 = arith.constant 163 : index
    %c0_72 = arith.constant 0 : index
    %79 = tpu.strided_load %arg16[%c163, %c0_72] {strides = array<i32: 2, 1>} : memref<288x64xf32, #tpu.memory_space<vmem>>, vector<8x64xf32>
    %80 = arith.maximumf %76, %77 : vector<8x64xf32>
    %81 = arith.maximumf %78, %79 : vector<8x64xf32>
    %82 = arith.maximumf %80, %81 : vector<8x64xf32>
    %83 = arith.truncf %82 : vector<8x64xf32> to vector<8x64xbf16>
    %c51 = arith.constant 51 : index
    %c0_73 = arith.constant 0 : index
    %84 = vector.load %arg17[%c51, %c0_73] : memref<110x64xbf16, #tpu.memory_space<vmem>>, vector<8x64xbf16>
    tpu.vector_store %arg17[%c51, %c0_73], %83 {strides = array<i32>} : memref<110x64xbf16, #tpu.memory_space<vmem>>, vector<8x64xbf16>,
    %c180 = arith.constant 180 : index
    %c0_74 = arith.constant 0 : index
    %85 = tpu.strided_load %arg16[%c180, %c0_74] {strides = array<i32: 2, 1>} : memref<288x64xf32, #tpu.memory_space<vmem>>, vector<8x64xf32>
    %c181 = arith.constant 181 : index
    %c0_75 = arith.constant 0 : index
    %86 = tpu.strided_load %arg16[%c181, %c0_75] {strides = array<i32: 2, 1>} : memref<288x64xf32, #tpu.memory_space<vmem>>, vector<8x64xf32>
    %c198 = arith.constant 198 : index
    %c0_76 = arith.constant 0 : index
    %87 = tpu.strided_load %arg16[%c198, %c0_76] {strides = array<i32: 2, 1>} : memref<288x64xf32, #tpu.memory_space<vmem>>, vector<8x64xf32>
    %c199 = arith.constant 199 : index
    %c0_77 = arith.constant 0 : index
    %88 = tpu.strided_load %arg16[%c199, %c0_77] {strides = array<i32: 2, 1>} : memref<288x64xf32, #tpu.memory_space<vmem>>, vector<8x64xf32>
    %89 = arith.maximumf %85, %86 : vector<8x64xf32>
    %90 = arith.maximumf %87, %88 : vector<8x64xf32>
    %91 = arith.maximumf %89, %90 : vector<8x64xf32>
    %92 = arith.truncf %91 : vector<8x64xf32> to vector<8x64xbf16>
    %c61 = arith.constant 61 : index
    %c0_78 = arith.constant 0 : index
    %93 = vector.load %arg17[%c61, %c0_78] : memref<110x64xbf16, #tpu.memory_space<vmem>>, vector<8x64xbf16>
    tpu.vector_store %arg17[%c61, %c0_78], %92 {strides = array<i32>} : memref<110x64xbf16, #tpu.memory_space<vmem>>, vector<8x64xbf16>,
    %c216 = arith.constant 216 : index
    %c0_79 = arith.constant 0 : index
    %94 = tpu.strided_load %arg16[%c216, %c0_79] {strides = array<i32: 2, 1>} : memref<288x64xf32, #tpu.memory_space<vmem>>, vector<8x64xf32>
    %c217 = arith.constant 217 : index
    %c0_80 = arith.constant 0 : index
    %95 = tpu.strided_load %arg16[%c217, %c0_80] {strides = array<i32: 2, 1>} : memref<288x64xf32, #tpu.memory_space<vmem>>, vector<8x64xf32>
    %c234 = arith.constant 234 : index
    %c0_81 = arith.constant 0 : index
    %96 = tpu.strided_load %arg16[%c234, %c0_81] {strides = array<i32: 2, 1>} : memref<288x64xf32, #tpu.memory_space<vmem>>, vector<8x64xf32>
    %c235 = arith.constant 235 : index
    %c0_82 = arith.constant 0 : index
    %97 = tpu.strided_load %arg16[%c235, %c0_82] {strides = array<i32: 2, 1>} : memref<288x64xf32, #tpu.memory_space<vmem>>, vector<8x64xf32>
    %98 = arith.maximumf %94, %95 : vector<8x64xf32>
    %99 = arith.maximumf %96, %97 : vector<8x64xf32>
    %100 = arith.maximumf %98, %99 : vector<8x64xf32>
    %101 = arith.truncf %100 : vector<8x64xf32> to vector<8x64xbf16>
    %c71 = arith.constant 71 : index
    %c0_83 = arith.constant 0 : index
    %102 = vector.load %arg17[%c71, %c0_83] : memref<110x64xbf16, #tpu.memory_space<vmem>>, vector<8x64xbf16>
    tpu.vector_store %arg17[%c71, %c0_83], %101 {strides = array<i32>} : memref<110x64xbf16, #tpu.memory_space<vmem>>, vector<8x64xbf16>,
    %c252 = arith.constant 252 : index
    %c0_84 = arith.constant 0 : index
    %103 = tpu.strided_load %arg16[%c252, %c0_84] {strides = array<i32: 2, 1>} : memref<288x64xf32, #tpu.memory_space<vmem>>, vector<8x64xf32>
    %c253 = arith.constant 253 : index
    %c0_85 = arith.constant 0 : index
    %104 = tpu.strided_load %arg16[%c253, %c0_85] {strides = array<i32: 2, 1>} : memref<288x64xf32, #tpu.memory_space<vmem>>, vector<8x64xf32>
    %c270 = arith.constant 270 : index
    %c0_86 = arith.constant 0 : index
    %105 = tpu.strided_load %arg16[%c270, %c0_86] {strides = array<i32: 2, 1>} : memref<288x64xf32, #tpu.memory_space<vmem>>, vector<8x64xf32>
    %c271 = arith.constant 271 : index
    %c0_87 = arith.constant 0 : index
    %106 = tpu.strided_load %arg16[%c271, %c0_87] {strides = array<i32: 2, 1>} : memref<288x64xf32, #tpu.memory_space<vmem>>, vector<8x64xf32>
    %107 = arith.maximumf %103, %104 : vector<8x64xf32>
    %108 = arith.maximumf %105, %106 : vector<8x64xf32>
    %109 = arith.maximumf %107, %108 : vector<8x64xf32>
    %110 = arith.truncf %109 : vector<8x64xf32> to vector<8x64xbf16>
    %c81 = arith.constant 81 : index
    %c0_88 = arith.constant 0 : index
    %111 = vector.load %arg17[%c81, %c0_88] : memref<110x64xbf16, #tpu.memory_space<vmem>>, vector<8x64xbf16>
    tpu.vector_store %arg17[%c81, %c0_88], %110 {strides = array<i32>} : memref<110x64xbf16, #tpu.memory_space<vmem>>, vector<8x64xbf16>,
    %cst_89 = arith.constant 0.000000e+00 : bf16
    %112 = vector.broadcast %cst_89 : bf16 to vector<80x640xbf16>
    %c0_90 = arith.constant 0 : index
    %c0_91 = arith.constant 0 : index
    %113 = vector.load %arg18[%c0_90, %c0_91] : memref<80x640xbf16, #tpu.memory_space<vmem>>, vector<80x640xbf16>
    tpu.vector_store %arg18[%c0_90, %c0_91], %112 {strides = array<i32>} : memref<80x640xbf16, #tpu.memory_space<vmem>>, vector<80x640xbf16>,
    %c0_92 = arith.constant 0 : index
    %c0_93 = arith.constant 0 : index
    %114 = vector.load %arg17[%c0_92, %c0_93] : memref<110x64xbf16, #tpu.memory_space<vmem>>, vector<80x64xbf16>
    %c0_94 = arith.constant 0 : index
    %c0_95 = arith.constant 0 : index
    %115 = vector.load %arg18[%c0_94, %c0_95] : memref<80x640xbf16, #tpu.memory_space<vmem>>, vector<80x64xbf16>
    tpu.vector_store %arg18[%c0_94, %c0_95], %114 {strides = array<i32>} : memref<80x640xbf16, #tpu.memory_space<vmem>>, vector<80x64xbf16>,
    %c1_96 = arith.constant 1 : index
    %c0_97 = arith.constant 0 : index
    %116 = vector.load %arg17[%c1_96, %c0_97] : memref<110x64xbf16, #tpu.memory_space<vmem>>, vector<80x64xbf16>
    %c0_98 = arith.constant 0 : index
    %c64_99 = arith.constant 64 : index
    %117 = vector.load %arg18[%c0_98, %c64_99] : memref<80x640xbf16, #tpu.memory_space<vmem>>, vector<80x64xbf16>
    tpu.vector_store %arg18[%c0_98, %c64_99], %116 {strides = array<i32>} : memref<80x640xbf16, #tpu.memory_space<vmem>>, vector<80x64xbf16>,
    %c2_100 = arith.constant 2 : index
    %c0_101 = arith.constant 0 : index
    %118 = vector.load %arg17[%c2_100, %c0_101] : memref<110x64xbf16, #tpu.memory_space<vmem>>, vector<80x64xbf16>
    %c0_102 = arith.constant 0 : index
    %c128 = arith.constant 128 : index
    %119 = vector.load %arg18[%c0_102, %c128] : memref<80x640xbf16, #tpu.memory_space<vmem>>, vector<80x64xbf16>
    tpu.vector_store %arg18[%c0_102, %c128], %118 {strides = array<i32>} : memref<80x640xbf16, #tpu.memory_space<vmem>>, vector<80x64xbf16>,
    %c10 = arith.constant 10 : index
    %c0_103 = arith.constant 0 : index
    %120 = vector.load %arg17[%c10, %c0_103] : memref<110x64xbf16, #tpu.memory_space<vmem>>, vector<80x64xbf16>
    %c0_104 = arith.constant 0 : index
    %c192 = arith.constant 192 : index
    %121 = vector.load %arg18[%c0_104, %c192] : memref<80x640xbf16, #tpu.memory_space<vmem>>, vector<80x64xbf16>
    tpu.vector_store %arg18[%c0_104, %c192], %120 {strides = array<i32>} : memref<80x640xbf16, #tpu.memory_space<vmem>>, vector<80x64xbf16>,
    %c11_105 = arith.constant 11 : index
    %c0_106 = arith.constant 0 : index
    %122 = vector.load %arg17[%c11_105, %c0_106] : memref<110x64xbf16, #tpu.memory_space<vmem>>, vector<80x64xbf16>
    %c0_107 = arith.constant 0 : index
    %c256 = arith.constant 256 : index
    %123 = vector.load %arg18[%c0_107, %c256] : memref<80x640xbf16, #tpu.memory_space<vmem>>, vector<80x64xbf16>
    tpu.vector_store %arg18[%c0_107, %c256], %122 {strides = array<i32>} : memref<80x640xbf16, #tpu.memory_space<vmem>>, vector<80x64xbf16>,
    %c12 = arith.constant 12 : index
    %c0_108 = arith.constant 0 : index
    %124 = vector.load %arg17[%c12, %c0_108] : memref<110x64xbf16, #tpu.memory_space<vmem>>, vector<80x64xbf16>
    %c0_109 = arith.constant 0 : index
    %c320 = arith.constant 320 : index
    %125 = vector.load %arg18[%c0_109, %c320] : memref<80x640xbf16, #tpu.memory_space<vmem>>, vector<80x64xbf16>
    tpu.vector_store %arg18[%c0_109, %c320], %124 {strides = array<i32>} : memref<80x640xbf16, #tpu.memory_space<vmem>>, vector<80x64xbf16>,
    %c20_110 = arith.constant 20 : index
    %c0_111 = arith.constant 0 : index
    %126 = vector.load %arg17[%c20_110, %c0_111] : memref<110x64xbf16, #tpu.memory_space<vmem>>, vector<80x64xbf16>
    %c0_112 = arith.constant 0 : index
    %c384 = arith.constant 384 : index
    %127 = vector.load %arg18[%c0_112, %c384] : memref<80x640xbf16, #tpu.memory_space<vmem>>, vector<80x64xbf16>
    tpu.vector_store %arg18[%c0_112, %c384], %126 {strides = array<i32>} : memref<80x640xbf16, #tpu.memory_space<vmem>>, vector<80x64xbf16>,
    %c21_113 = arith.constant 21 : index
    %c0_114 = arith.constant 0 : index
    %128 = vector.load %arg17[%c21_113, %c0_114] : memref<110x64xbf16, #tpu.memory_space<vmem>>, vector<80x64xbf16>
    %c0_115 = arith.constant 0 : index
    %c448 = arith.constant 448 : index
    %129 = vector.load %arg18[%c0_115, %c448] : memref<80x640xbf16, #tpu.memory_space<vmem>>, vector<80x64xbf16>
    tpu.vector_store %arg18[%c0_115, %c448], %128 {strides = array<i32>} : memref<80x640xbf16, #tpu.memory_space<vmem>>, vector<80x64xbf16>,
    %c22 = arith.constant 22 : index
    %c0_116 = arith.constant 0 : index
    %130 = vector.load %arg17[%c22, %c0_116] : memref<110x64xbf16, #tpu.memory_space<vmem>>, vector<80x64xbf16>
    %c0_117 = arith.constant 0 : index
    %c512 = arith.constant 512 : index
    %131 = vector.load %arg18[%c0_117, %c512] : memref<80x640xbf16, #tpu.memory_space<vmem>>, vector<80x64xbf16>
    tpu.vector_store %arg18[%c0_117, %c512], %130 {strides = array<i32>} : memref<80x640xbf16, #tpu.memory_space<vmem>>, vector<80x64xbf16>,
    %c0_118 = arith.constant 0 : index
    %c0_119 = arith.constant 0 : index
    %132 = vector.load %arg18[%c0_118, %c0_119] : memref<80x640xbf16, #tpu.memory_space<vmem>>, vector<80x640xbf16>
    %c0_120 = arith.constant 0 : index
    %c0_121 = arith.constant 0 : index
    %133 = vector.load %arg4[%c0_120, %c0_121] : memref<640x128xbf16, #tpu.memory_space<vmem>>, vector<640x128xbf16>
    %cst_122 = arith.constant dense<0.000000e+00> : vector<80x128xf32>
    %134 = tpu.matmul %132, %133, %cst_122 {dimension_numbers = #tpu.dot_dimension_numbers<[1], [0], [0], [1], [0, 0, 1, 1], [], []>} : vector<80x640xbf16>, vector<640x128xbf16>, vector<80x128xf32> -> vector<80x128xf32>
    %c0_123 = arith.constant 0 : index
    %c0_124 = arith.constant 0 : index
    %135 = vector.load %arg5[%c0_123, %c0_124] : memref<1x128xf32, #tpu.memory_space<vmem>>, vector<1x128xf32>
    %136 = vector.broadcast %135 : vector<1x128xf32> to vector<80x128xf32>
    %137 = arith.addf %134, %136 : vector<80x128xf32>
    %cst_125 = arith.constant 0.000000e+00 : f32
    %138 = vector.broadcast %cst_125 : f32 to vector<80x128xf32>
    %139 = arith.maximumf %137, %138 : vector<80x128xf32>
    %c0_126 = arith.constant 0 : index
    %c0_127 = arith.constant 0 : index
    %140 = vector.load %arg19[%c0_126, %c0_127] : memref<80x128xf32, #tpu.memory_space<vmem>>, vector<80x128xf32>
    tpu.vector_store %arg19[%c0_126, %c0_127], %139 {strides = array<i32>} : memref<80x128xf32, #tpu.memory_space<vmem>>, vector<80x128xf32>,
    %cst_128 = arith.constant 0.000000e+00 : bf16
    %141 = vector.broadcast %cst_128 : bf16 to vector<42x128xbf16>
    %c0_129 = arith.constant 0 : index
    %c0_130 = arith.constant 0 : index
    %142 = vector.load %arg20[%c0_129, %c0_130] : memref<42x128xbf16, #tpu.memory_space<vmem>>, vector<42x128xbf16>
    tpu.vector_store %arg20[%c0_129, %c0_130], %141 {strides = array<i32>} : memref<42x128xbf16, #tpu.memory_space<vmem>>, vector<42x128xbf16>,
    %c0_131 = arith.constant 0 : index
    %c0_132 = arith.constant 0 : index
    %143 = tpu.strided_load %arg19[%c0_131, %c0_132] {strides = array<i32: 2, 1>} : memref<80x128xf32, #tpu.memory_space<vmem>>, vector<4x128xf32>
    %c1_133 = arith.constant 1 : index
    %c0_134 = arith.constant 0 : index
    %144 = tpu.strided_load %arg19[%c1_133, %c0_134] {strides = array<i32: 2, 1>} : memref<80x128xf32, #tpu.memory_space<vmem>>, vector<4x128xf32>
    %c10_135 = arith.constant 10 : index
    %c0_136 = arith.constant 0 : index
    %145 = tpu.strided_load %arg19[%c10_135, %c0_136] {strides = array<i32: 2, 1>} : memref<80x128xf32, #tpu.memory_space<vmem>>, vector<4x128xf32>
    %c11_137 = arith.constant 11 : index
    %c0_138 = arith.constant 0 : index
    %146 = tpu.strided_load %arg19[%c11_137, %c0_138] {strides = array<i32: 2, 1>} : memref<80x128xf32, #tpu.memory_space<vmem>>, vector<4x128xf32>
    %147 = arith.maximumf %143, %144 : vector<4x128xf32>
    %148 = arith.maximumf %145, %146 : vector<4x128xf32>
    %149 = arith.maximumf %147, %148 : vector<4x128xf32>
    %150 = arith.truncf %149 : vector<4x128xf32> to vector<4x128xbf16>
    %c7 = arith.constant 7 : index
    %c0_139 = arith.constant 0 : index
    %151 = vector.load %arg20[%c7, %c0_139] : memref<42x128xbf16, #tpu.memory_space<vmem>>, vector<4x128xbf16>
    tpu.vector_store %arg20[%c7, %c0_139], %150 {strides = array<i32>} : memref<42x128xbf16, #tpu.memory_space<vmem>>, vector<4x128xbf16>,
    %c20_140 = arith.constant 20 : index
    %c0_141 = arith.constant 0 : index
    %152 = tpu.strided_load %arg19[%c20_140, %c0_141] {strides = array<i32: 2, 1>} : memref<80x128xf32, #tpu.memory_space<vmem>>, vector<4x128xf32>
    %c21_142 = arith.constant 21 : index
    %c0_143 = arith.constant 0 : index
    %153 = tpu.strided_load %arg19[%c21_142, %c0_143] {strides = array<i32: 2, 1>} : memref<80x128xf32, #tpu.memory_space<vmem>>, vector<4x128xf32>
    %c30 = arith.constant 30 : index
    %c0_144 = arith.constant 0 : index
    %154 = tpu.strided_load %arg19[%c30, %c0_144] {strides = array<i32: 2, 1>} : memref<80x128xf32, #tpu.memory_space<vmem>>, vector<4x128xf32>
    %c31_145 = arith.constant 31 : index
    %c0_146 = arith.constant 0 : index
    %155 = tpu.strided_load %arg19[%c31_145, %c0_146] {strides = array<i32: 2, 1>} : memref<80x128xf32, #tpu.memory_space<vmem>>, vector<4x128xf32>
    %156 = arith.maximumf %152, %153 : vector<4x128xf32>
    %157 = arith.maximumf %154, %155 : vector<4x128xf32>
    %158 = arith.maximumf %156, %157 : vector<4x128xf32>
    %159 = arith.truncf %158 : vector<4x128xf32> to vector<4x128xbf16>
    %c13 = arith.constant 13 : index
    %c0_147 = arith.constant 0 : index
    %160 = vector.load %arg20[%c13, %c0_147] : memref<42x128xbf16, #tpu.memory_space<vmem>>, vector<4x128xbf16>
    tpu.vector_store %arg20[%c13, %c0_147], %159 {strides = array<i32>} : memref<42x128xbf16, #tpu.memory_space<vmem>>, vector<4x128xbf16>,
    %c40_148 = arith.constant 40 : index
    %c0_149 = arith.constant 0 : index
    %161 = tpu.strided_load %arg19[%c40_148, %c0_149] {strides = array<i32: 2, 1>} : memref<80x128xf32, #tpu.memory_space<vmem>>, vector<4x128xf32>
    %c41_150 = arith.constant 41 : index
    %c0_151 = arith.constant 0 : index
    %162 = tpu.strided_load %arg19[%c41_150, %c0_151] {strides = array<i32: 2, 1>} : memref<80x128xf32, #tpu.memory_space<vmem>>, vector<4x128xf32>
    %c50 = arith.constant 50 : index
    %c0_152 = arith.constant 0 : index
    %163 = tpu.strided_load %arg19[%c50, %c0_152] {strides = array<i32: 2, 1>} : memref<80x128xf32, #tpu.memory_space<vmem>>, vector<4x128xf32>
    %c51_153 = arith.constant 51 : index
    %c0_154 = arith.constant 0 : index
    %164 = tpu.strided_load %arg19[%c51_153, %c0_154] {strides = array<i32: 2, 1>} : memref<80x128xf32, #tpu.memory_space<vmem>>, vector<4x128xf32>
    %165 = arith.maximumf %161, %162 : vector<4x128xf32>
    %166 = arith.maximumf %163, %164 : vector<4x128xf32>
    %167 = arith.maximumf %165, %166 : vector<4x128xf32>
    %168 = arith.truncf %167 : vector<4x128xf32> to vector<4x128xbf16>
    %c19_155 = arith.constant 19 : index
    %c0_156 = arith.constant 0 : index
    %169 = vector.load %arg20[%c19_155, %c0_156] : memref<42x128xbf16, #tpu.memory_space<vmem>>, vector<4x128xbf16>
    tpu.vector_store %arg20[%c19_155, %c0_156], %168 {strides = array<i32>} : memref<42x128xbf16, #tpu.memory_space<vmem>>, vector<4x128xbf16>,
    %c60 = arith.constant 60 : index
    %c0_157 = arith.constant 0 : index
    %170 = tpu.strided_load %arg19[%c60, %c0_157] {strides = array<i32: 2, 1>} : memref<80x128xf32, #tpu.memory_space<vmem>>, vector<4x128xf32>
    %c61_158 = arith.constant 61 : index
    %c0_159 = arith.constant 0 : index
    %171 = tpu.strided_load %arg19[%c61_158, %c0_159] {strides = array<i32: 2, 1>} : memref<80x128xf32, #tpu.memory_space<vmem>>, vector<4x128xf32>
    %c70 = arith.constant 70 : index
    %c0_160 = arith.constant 0 : index
    %172 = tpu.strided_load %arg19[%c70, %c0_160] {strides = array<i32: 2, 1>} : memref<80x128xf32, #tpu.memory_space<vmem>>, vector<4x128xf32>
    %c71_161 = arith.constant 71 : index
    %c0_162 = arith.constant 0 : index
    %173 = tpu.strided_load %arg19[%c71_161, %c0_162] {strides = array<i32: 2, 1>} : memref<80x128xf32, #tpu.memory_space<vmem>>, vector<4x128xf32>
    %174 = arith.maximumf %170, %171 : vector<4x128xf32>
    %175 = arith.maximumf %172, %173 : vector<4x128xf32>
    %176 = arith.maximumf %174, %175 : vector<4x128xf32>
    %177 = arith.truncf %176 : vector<4x128xf32> to vector<4x128xbf16>
    %c25 = arith.constant 25 : index
    %c0_163 = arith.constant 0 : index
    %178 = vector.load %arg20[%c25, %c0_163] : memref<42x128xbf16, #tpu.memory_space<vmem>>, vector<4x128xbf16>
    tpu.vector_store %arg20[%c25, %c0_163], %177 {strides = array<i32>} : memref<42x128xbf16, #tpu.memory_space<vmem>>, vector<4x128xbf16>,
    %c0_164 = arith.constant 0 : index
    %c0_165 = arith.constant 0 : index
    %179 = vector.load %arg20[%c0_164, %c0_165] : memref<42x128xbf16, #tpu.memory_space<vmem>>, vector<24x128xbf16>
    %c0_166 = arith.constant 0 : index
    %c0_167 = arith.constant 0 : index
    %180 = vector.load %arg21[%c0_166, %c0_167] : memref<24x1152xbf16, #tpu.memory_space<vmem>>, vector<24x128xbf16>
    tpu.vector_store %arg21[%c0_166, %c0_167], %179 {strides = array<i32>} : memref<24x1152xbf16, #tpu.memory_space<vmem>>, vector<24x128xbf16>,
    %c1_168 = arith.constant 1 : index
    %c0_169 = arith.constant 0 : index
    %181 = vector.load %arg20[%c1_168, %c0_169] : memref<42x128xbf16, #tpu.memory_space<vmem>>, vector<24x128xbf16>
    %c0_170 = arith.constant 0 : index
    %c128_171 = arith.constant 128 : index
    %182 = vector.load %arg21[%c0_170, %c128_171] : memref<24x1152xbf16, #tpu.memory_space<vmem>>, vector<24x128xbf16>
    tpu.vector_store %arg21[%c0_170, %c128_171], %181 {strides = array<i32>} : memref<24x1152xbf16, #tpu.memory_space<vmem>>, vector<24x128xbf16>,
    %c2_172 = arith.constant 2 : index
    %c0_173 = arith.constant 0 : index
    %183 = vector.load %arg20[%c2_172, %c0_173] : memref<42x128xbf16, #tpu.memory_space<vmem>>, vector<24x128xbf16>
    %c0_174 = arith.constant 0 : index
    %c256_175 = arith.constant 256 : index
    %184 = vector.load %arg21[%c0_174, %c256_175] : memref<24x1152xbf16, #tpu.memory_space<vmem>>, vector<24x128xbf16>
    tpu.vector_store %arg21[%c0_174, %c256_175], %183 {strides = array<i32>} : memref<24x1152xbf16, #tpu.memory_space<vmem>>, vector<24x128xbf16>,
    %c6 = arith.constant 6 : index
    %c0_176 = arith.constant 0 : index
    %185 = vector.load %arg20[%c6, %c0_176] : memref<42x128xbf16, #tpu.memory_space<vmem>>, vector<24x128xbf16>
    %c0_177 = arith.constant 0 : index
    %c384_178 = arith.constant 384 : index
    %186 = vector.load %arg21[%c0_177, %c384_178] : memref<24x1152xbf16, #tpu.memory_space<vmem>>, vector<24x128xbf16>
    tpu.vector_store %arg21[%c0_177, %c384_178], %185 {strides = array<i32>} : memref<24x1152xbf16, #tpu.memory_space<vmem>>, vector<24x128xbf16>,
    %c7_179 = arith.constant 7 : index
    %c0_180 = arith.constant 0 : index
    %187 = vector.load %arg20[%c7_179, %c0_180] : memref<42x128xbf16, #tpu.memory_space<vmem>>, vector<24x128xbf16>
    %c0_181 = arith.constant 0 : index
    %c512_182 = arith.constant 512 : index
    %188 = vector.load %arg21[%c0_181, %c512_182] : memref<24x1152xbf16, #tpu.memory_space<vmem>>, vector<24x128xbf16>
    tpu.vector_store %arg21[%c0_181, %c512_182], %187 {strides = array<i32>} : memref<24x1152xbf16, #tpu.memory_space<vmem>>, vector<24x128xbf16>,
    %c8_183 = arith.constant 8 : index
    %c0_184 = arith.constant 0 : index
    %189 = vector.load %arg20[%c8_183, %c0_184] : memref<42x128xbf16, #tpu.memory_space<vmem>>, vector<24x128xbf16>
    %c0_185 = arith.constant 0 : index
    %c640 = arith.constant 640 : index
    %190 = vector.load %arg21[%c0_185, %c640] : memref<24x1152xbf16, #tpu.memory_space<vmem>>, vector<24x128xbf16>
    tpu.vector_store %arg21[%c0_185, %c640], %189 {strides = array<i32>} : memref<24x1152xbf16, #tpu.memory_space<vmem>>, vector<24x128xbf16>,
    %c12_186 = arith.constant 12 : index
    %c0_187 = arith.constant 0 : index
    %191 = vector.load %arg20[%c12_186, %c0_187] : memref<42x128xbf16, #tpu.memory_space<vmem>>, vector<24x128xbf16>
    %c0_188 = arith.constant 0 : index
    %c768 = arith.constant 768 : index
    %192 = vector.load %arg21[%c0_188, %c768] : memref<24x1152xbf16, #tpu.memory_space<vmem>>, vector<24x128xbf16>
    tpu.vector_store %arg21[%c0_188, %c768], %191 {strides = array<i32>} : memref<24x1152xbf16, #tpu.memory_space<vmem>>, vector<24x128xbf16>,
    %c13_189 = arith.constant 13 : index
    %c0_190 = arith.constant 0 : index
    %193 = vector.load %arg20[%c13_189, %c0_190] : memref<42x128xbf16, #tpu.memory_space<vmem>>, vector<24x128xbf16>
    %c0_191 = arith.constant 0 : index
    %c896 = arith.constant 896 : index
    %194 = vector.load %arg21[%c0_191, %c896] : memref<24x1152xbf16, #tpu.memory_space<vmem>>, vector<24x128xbf16>
    tpu.vector_store %arg21[%c0_191, %c896], %193 {strides = array<i32>} : memref<24x1152xbf16, #tpu.memory_space<vmem>>, vector<24x128xbf16>,
    %c14 = arith.constant 14 : index
    %c0_192 = arith.constant 0 : index
    %195 = vector.load %arg20[%c14, %c0_192] : memref<42x128xbf16, #tpu.memory_space<vmem>>, vector<24x128xbf16>
    %c0_193 = arith.constant 0 : index
    %c1024 = arith.constant 1024 : index
    %196 = vector.load %arg21[%c0_193, %c1024] : memref<24x1152xbf16, #tpu.memory_space<vmem>>, vector<24x128xbf16>
    tpu.vector_store %arg21[%c0_193, %c1024], %195 {strides = array<i32>} : memref<24x1152xbf16, #tpu.memory_space<vmem>>, vector<24x128xbf16>,
    %c0_194 = arith.constant 0 : index
    %c0_195 = arith.constant 0 : index
    %197 = vector.load %arg21[%c0_194, %c0_195] : memref<24x1152xbf16, #tpu.memory_space<vmem>>, vector<24x1152xbf16>
    %c0_196 = arith.constant 0 : index
    %c0_197 = arith.constant 0 : index
    %198 = vector.load %arg6[%c0_196, %c0_197] : memref<1152x256xbf16, #tpu.memory_space<vmem>>, vector<1152x256xbf16>
    %cst_198 = arith.constant dense<0.000000e+00> : vector<24x256xf32>
    %199 = tpu.matmul %197, %198, %cst_198 {dimension_numbers = #tpu.dot_dimension_numbers<[1], [0], [0], [1], [0, 0, 1, 1], [], []>} : vector<24x1152xbf16>, vector<1152x256xbf16>, vector<24x256xf32> -> vector<24x256xf32>
    %c0_199 = arith.constant 0 : index
    %c0_200 = arith.constant 0 : index
    %200 = vector.load %arg7[%c0_199, %c0_200] : memref<1x256xf32, #tpu.memory_space<vmem>>, vector<1x256xf32>
    %201 = vector.broadcast %200 : vector<1x256xf32> to vector<24x256xf32>
    %202 = arith.addf %199, %201 : vector<24x256xf32>
    %cst_201 = arith.constant 0.000000e+00 : f32
    %203 = vector.broadcast %cst_201 : f32 to vector<24x256xf32>
    %204 = arith.maximumf %202, %203 : vector<24x256xf32>
    %c0_202 = arith.constant 0 : index
    %c0_203 = arith.constant 0 : index
    %205 = vector.load %arg22[%c0_202, %c0_203] : memref<24x256xf32, #tpu.memory_space<vmem>>, vector<24x256xf32>
    tpu.vector_store %arg22[%c0_202, %c0_203], %204 {strides = array<i32>} : memref<24x256xf32, #tpu.memory_space<vmem>>, vector<24x256xf32>,
    %c0_204 = arith.constant 0 : index
    %c0_205 = arith.constant 0 : index
    %206 = vector.load %arg22[%c0_204, %c0_205] : memref<24x256xf32, #tpu.memory_space<vmem>>, vector<2x256xf32>
    %c6_206 = arith.constant 6 : index
    %c0_207 = arith.constant 0 : index
    %207 = vector.load %arg22[%c6_206, %c0_207] : memref<24x256xf32, #tpu.memory_space<vmem>>, vector<2x256xf32>
    %208 = arith.maximumf %206, %207 : vector<2x256xf32>
    %cst_208 = arith.constant dense<0xFF800000> : vector<256xf32>
    %209 = vector.multi_reduction <maximumf>, %208, %cst_208 [0] : vector<2x256xf32> to vector<256xf32>
    %210 = vector.shape_cast %209 : vector<256xf32> to vector<1x256xf32>
    %211 = arith.truncf %210 : vector<1x256xf32> to vector<1x256xbf16>
    %c0_209 = arith.constant 0 : index
    %c0_210 = arith.constant 0 : index
    %212 = vector.load %arg23[%c0_209, %c0_210] : memref<1x1024xbf16, #tpu.memory_space<vmem>>, vector<1x256xbf16>
    tpu.vector_store %arg23[%c0_209, %c0_210], %211 {strides = array<i32>} : memref<1x1024xbf16, #tpu.memory_space<vmem>>, vector<1x256xbf16>,
    %c2_211 = arith.constant 2 : index
    %c0_212 = arith.constant 0 : index
    %213 = vector.load %arg22[%c2_211, %c0_212] : memref<24x256xf32, #tpu.memory_space<vmem>>, vector<2x256xf32>
    %c8_213 = arith.constant 8 : index
    %c0_214 = arith.constant 0 : index
    %214 = vector.load %arg22[%c8_213, %c0_214] : memref<24x256xf32, #tpu.memory_space<vmem>>, vector<2x256xf32>
    %215 = arith.maximumf %213, %214 : vector<2x256xf32>
    %cst_215 = arith.constant dense<0xFF800000> : vector<256xf32>
    %216 = vector.multi_reduction <maximumf>, %215, %cst_215 [0] : vector<2x256xf32> to vector<256xf32>
    %217 = vector.shape_cast %216 : vector<256xf32> to vector<1x256xf32>
    %218 = arith.truncf %217 : vector<1x256xf32> to vector<1x256xbf16>
    %c0_216 = arith.constant 0 : index
    %c256_217 = arith.constant 256 : index
    %219 = vector.load %arg23[%c0_216, %c256_217] : memref<1x1024xbf16, #tpu.memory_space<vmem>>, vector<1x256xbf16>
    tpu.vector_store %arg23[%c0_216, %c256_217], %218 {strides = array<i32>} : memref<1x1024xbf16, #tpu.memory_space<vmem>>, vector<1x256xbf16>,
    %c12_218 = arith.constant 12 : index
    %c0_219 = arith.constant 0 : index
    %220 = vector.load %arg22[%c12_218, %c0_219] : memref<24x256xf32, #tpu.memory_space<vmem>>, vector<2x256xf32>
    %c18_220 = arith.constant 18 : index
    %c0_221 = arith.constant 0 : index
    %221 = vector.load %arg22[%c18_220, %c0_221] : memref<24x256xf32, #tpu.memory_space<vmem>>, vector<2x256xf32>
    %222 = arith.maximumf %220, %221 : vector<2x256xf32>
    %cst_222 = arith.constant dense<0xFF800000> : vector<256xf32>
    %223 = vector.multi_reduction <maximumf>, %222, %cst_222 [0] : vector<2x256xf32> to vector<256xf32>
    %224 = vector.shape_cast %223 : vector<256xf32> to vector<1x256xf32>
    %225 = arith.truncf %224 : vector<1x256xf32> to vector<1x256xbf16>
    %c0_223 = arith.constant 0 : index
    %c512_224 = arith.constant 512 : index
    %226 = vector.load %arg23[%c0_223, %c512_224] : memref<1x1024xbf16, #tpu.memory_space<vmem>>, vector<1x256xbf16>
    tpu.vector_store %arg23[%c0_223, %c512_224], %225 {strides = array<i32>} : memref<1x1024xbf16, #tpu.memory_space<vmem>>, vector<1x256xbf16>,
    %c14_225 = arith.constant 14 : index
    %c0_226 = arith.constant 0 : index
    %227 = vector.load %arg22[%c14_225, %c0_226] : memref<24x256xf32, #tpu.memory_space<vmem>>, vector<2x256xf32>
    %c20_227 = arith.constant 20 : index
    %c0_228 = arith.constant 0 : index
    %228 = vector.load %arg22[%c20_227, %c0_228] : memref<24x256xf32, #tpu.memory_space<vmem>>, vector<2x256xf32>
    %229 = arith.maximumf %227, %228 : vector<2x256xf32>
    %cst_229 = arith.constant dense<0xFF800000> : vector<256xf32>
    %230 = vector.multi_reduction <maximumf>, %229, %cst_229 [0] : vector<2x256xf32> to vector<256xf32>
    %231 = vector.shape_cast %230 : vector<256xf32> to vector<1x256xf32>
    %232 = arith.truncf %231 : vector<1x256xf32> to vector<1x256xbf16>
    %c0_230 = arith.constant 0 : index
    %c768_231 = arith.constant 768 : index
    %233 = vector.load %arg23[%c0_230, %c768_231] : memref<1x1024xbf16, #tpu.memory_space<vmem>>, vector<1x256xbf16>
    tpu.vector_store %arg23[%c0_230, %c768_231], %232 {strides = array<i32>} : memref<1x1024xbf16, #tpu.memory_space<vmem>>, vector<1x256xbf16>,
    %c0_232 = arith.constant 0 : index
    %c0_233 = arith.constant 0 : index
    %234 = vector.load %arg23[%c0_232, %c0_233] : memref<1x1024xbf16, #tpu.memory_space<vmem>>, vector<1x1024xbf16>
    %c0_234 = arith.constant 0 : index
    %c0_235 = arith.constant 0 : index
    %235 = vector.load %arg8[%c0_234, %c0_235] : memref<1024x512xbf16, #tpu.memory_space<vmem>>, vector<1024x512xbf16>
    %cst_236 = arith.constant dense<0.000000e+00> : vector<1x512xf32>
    %236 = tpu.matmul %234, %235, %cst_236 {dimension_numbers = #tpu.dot_dimension_numbers<[1], [0], [0], [1], [0, 0, 1, 1], [], []>} : vector<1x1024xbf16>, vector<1024x512xbf16>, vector<1x512xf32> -> vector<1x512xf32>
    %c0_237 = arith.constant 0 : index
    %c0_238 = arith.constant 0 : index
    %237 = vector.load %arg9[%c0_237, %c0_238] : memref<1x512xf32, #tpu.memory_space<vmem>>, vector<1x512xf32>
    %238 = arith.addf %236, %237 : vector<1x512xf32>
    %cst_239 = arith.constant 0.000000e+00 : f32
    %239 = vector.broadcast %cst_239 : f32 to vector<1x512xf32>
    %240 = arith.maximumf %238, %239 : vector<1x512xf32>
    %241 = arith.truncf %240 : vector<1x512xf32> to vector<1x512xbf16>
    %c0_240 = arith.constant 0 : index
    %c0_241 = arith.constant 0 : index
    %242 = vector.load %arg10[%c0_240, %c0_241] : memref<512x256xbf16, #tpu.memory_space<vmem>>, vector<512x256xbf16>
    %cst_242 = arith.constant dense<0.000000e+00> : vector<1x256xf32>
    %243 = tpu.matmul %241, %242, %cst_242 {dimension_numbers = #tpu.dot_dimension_numbers<[1], [0], [0], [1], [0, 0, 1, 1], [], []>} : vector<1x512xbf16>, vector<512x256xbf16>, vector<1x256xf32> -> vector<1x256xf32>
    %c0_243 = arith.constant 0 : index
    %c0_244 = arith.constant 0 : index
    %244 = vector.load %arg11[%c0_243, %c0_244] : memref<1x256xf32, #tpu.memory_space<vmem>>, vector<1x256xf32>
    %245 = arith.addf %243, %244 : vector<1x256xf32>
    %cst_245 = arith.constant 0.000000e+00 : f32
    %246 = vector.broadcast %cst_245 : f32 to vector<1x256xf32>
    %247 = arith.maximumf %245, %246 : vector<1x256xf32>
    %248 = arith.truncf %247 : vector<1x256xf32> to vector<1x256xbf16>
    %c0_246 = arith.constant 0 : index
    %c0_247 = arith.constant 0 : index
    %249 = vector.load %arg12[%c0_246, %c0_247] : memref<256x128xbf16, #tpu.memory_space<vmem>>, vector<256x128xbf16>
    %cst_248 = arith.constant dense<0.000000e+00> : vector<1x128xf32>
    %250 = tpu.matmul %248, %249, %cst_248 {dimension_numbers = #tpu.dot_dimension_numbers<[1], [0], [0], [1], [0, 0, 1, 1], [], []>} : vector<1x256xbf16>, vector<256x128xbf16>, vector<1x128xf32> -> vector<1x128xf32>
    %c0_249 = arith.constant 0 : index
    %c0_250 = arith.constant 0 : index
    %251 = vector.load %arg13[%c0_249, %c0_250] : memref<1x128xf32, #tpu.memory_space<vmem>>, vector<1x128xf32>
    %252 = arith.addf %250, %251 : vector<1x128xf32>
    %c0_251 = arith.constant 0 : index
    %c0_252 = arith.constant 0 : index
    %c0_253 = arith.constant 0 : index
    %253 = vector.load %arg14[%c0_251, %c0_252, %c0_253] : memref<1x1x128xf32, #tpu.memory_space<vmem>>, vector<1x1x128xf32>
    %254 = vector.shape_cast %253 : vector<1x1x128xf32> to vector<1x128xf32>
    %255 = vector.shape_cast %252 : vector<1x128xf32> to vector<1x1x128xf32>
    tpu.vector_store %arg14[%c0_251, %c0_252, %c0_253], %255 {strides = array<i32>} : memref<1x1x128xf32, #tpu.memory_space<vmem>>, vector<1x1x128xf32>,
    return
  }
  func.func @transform_0(%arg0: i32) -> (i32, i32, i32) {
    %c0_i32 = arith.constant 0 : i32
    %c0_i32_0 = arith.constant 0 : i32
    %c0_i32_1 = arith.constant 0 : i32
    return %arg0, %c0_i32, %c0_i32_0 : i32, i32, i32
  }
  func.func @transform_1(%arg0: i32) -> (i32, i32) {
    %c0_i32 = arith.constant 0 : i32
    %c0_i32_0 = arith.constant 0 : i32
    %c0_i32_1 = arith.constant 0 : i32
    return %c0_i32, %c0_i32_0 : i32, i32
  }
  func.func @transform_2(%arg0: i32) -> (i32, i32) {
    %c0_i32 = arith.constant 0 : i32
    %c0_i32_0 = arith.constant 0 : i32
    %c0_i32_1 = arith.constant 0 : i32
    return %c0_i32, %c0_i32_0 : i32, i32
  }
  func.func @transform_3(%arg0: i32) -> (i32, i32) {
    %c0_i32 = arith.constant 0 : i32
    %c0_i32_0 = arith.constant 0 : i32
    %c0_i32_1 = arith.constant 0 : i32
    return %c0_i32, %c0_i32_0 : i32, i32
  }
  func.func @transform_4(%arg0: i32) -> (i32, i32) {
    %c0_i32 = arith.constant 0 : i32
    %c0_i32_0 = arith.constant 0 : i32
    %c0_i32_1 = arith.constant 0 : i32
    return %c0_i32, %c0_i32_0 : i32, i32
  }
  func.func @transform_5(%arg0: i32) -> (i32, i32) {
    %c0_i32 = arith.constant 0 : i32
    %c0_i32_0 = arith.constant 0 : i32
    %c0_i32_1 = arith.constant 0 : i32
    return %c0_i32, %c0_i32_0 : i32, i32
  }
  func.func @transform_6(%arg0: i32) -> (i32, i32) {
    %c0_i32 = arith.constant 0 : i32
    %c0_i32_0 = arith.constant 0 : i32
    %c0_i32_1 = arith.constant 0 : i32
    return %c0_i32, %c0_i32_0 : i32, i32
  }
  func.func @transform_7(%arg0: i32) -> (i32, i32) {
    %c0_i32 = arith.constant 0 : i32
    %c0_i32_0 = arith.constant 0 : i32
    %c0_i32_1 = arith.constant 0 : i32
    return %c0_i32, %c0_i32_0 : i32, i32
  }
  func.func @transform_8(%arg0: i32) -> (i32, i32) {
    %c0_i32 = arith.constant 0 : i32
    %c0_i32_0 = arith.constant 0 : i32
    %c0_i32_1 = arith.constant 0 : i32
    return %c0_i32, %c0_i32_0 : i32, i32
  }
  func.func @transform_9(%arg0: i32) -> (i32, i32) {
    %c0_i32 = arith.constant 0 : i32
    %c0_i32_0 = arith.constant 0 : i32
    %c0_i32_1 = arith.constant 0 : i32
    return %c0_i32, %c0_i32_0 : i32, i32
  }
  func.func @transform_10(%arg0: i32) -> (i32, i32) {
    %c0_i32 = arith.constant 0 : i32
    %c0_i32_0 = arith.constant 0 : i32
    %c0_i32_1 = arith.constant 0 : i32
    return %c0_i32, %c0_i32_0 : i32, i32
  }
  func.func @transform_11(%arg0: i32) -> (i32, i32) {
    %c0_i32 = arith.constant 0 : i32
    %c0_i32_0 = arith.constant 0 : i32
    %c0_i32_1 = arith.constant 0 : i32
    return %c0_i32, %c0_i32_0 : i32, i32
  }
  func.func @transform_12(%arg0: i32) -> (i32, i32) {
    %c0_i32 = arith.constant 0 : i32
    %c0_i32_0 = arith.constant 0 : i32
    %c0_i32_1 = arith.constant 0 : i32
    return %c0_i32, %c0_i32_0 : i32, i32
  }
  func.func @transform_13(%arg0: i32) -> (i32, i32, i32) {
    %c0_i32 = arith.constant 0 : i32
    %c0_i32_0 = arith.constant 0 : i32
    %c0_i32_1 = arith.constant 0 : i32
    return %arg0, %c0_i32, %c0_i32_0 : i32, i32, i32
  }
}

</mosaic_0001>

<llo_original>
// kernel: forward.1
$region0: #{forward.1}
  #allocation0 [shape = 'u32[]', space=smem, size = 0x4, offset = 0x4, fixed_abs, tag = 'smem constant byte address 0x4 - core index']
  #allocation1 [shape = 'u32[72,128]{1,0:T(1,128)}', space=vmem, size = 0x9000, scoped, tag = 'internal scratch']
  #allocation2 [shape = 'bf16[288,128]{1,0:T(8,128)(2,1)}', space=vmem, size = 0x12000, scoped, tag = 'scratch operand']
  #allocation3 [shape = 'f32[288,64]{1,0:T(8,128)}', space=vmem, size = 0x24000, scoped, tag = 'scratch operand']
  #allocation4 [shape = 'bf16[110,64]{1,0:T(8,128)(2,1)}', space=vmem, size = 0x7000, scoped, tag = 'scratch operand']
  #allocation5 [shape = 'bf16[80,640]{1,0:T(8,128)(2,1)}', space=vmem, size = 0x19000, scoped, tag = 'scratch operand']
  #allocation6 [shape = 'f32[80,128]{1,0:T(8,128)}', space=vmem, size = 0xa000, scoped, tag = 'scratch operand']
  #allocation7 [shape = 'bf16[42,128]{1,0:T(8,128)(2,1)}', space=vmem, size = 0x3000, scoped, tag = 'scratch operand']
  #allocation8 [shape = 'bf16[24,1152]{1,0:T(8,128)(2,1)}', space=vmem, size = 0xd800, scoped, tag = 'scratch operand']
  #allocation9 [shape = 'f32[24,256]{1,0:T(8,128)}', space=vmem, size = 0x6000, scoped, tag = 'scratch operand']
  #allocation10 [shape = 'bf16[1,1024]{1,0:T(2,128)(2,1)}', space=vmem, size = 0x1000, scoped, tag = 'scratch operand']
  %s0 = inlined_call_operand.vmem [shape: bf16[2,342,8], index: 0, kind: input, shape index: {}]
  %s1 = inlined_call_operand.vmem [shape: bf16[128,64], index: 1, kind: input, shape index: {}]
  %s2 = inlined_call_operand.vmem [shape: f32[1,64], index: 2, kind: input, shape index: {}]
  %s3 = inlined_call_operand.vmem [shape: bf16[640,128], index: 3, kind: input, shape index: {}]
  %s4 = inlined_call_operand.vmem [shape: f32[1,128], index: 4, kind: input, shape index: {}]
  %s5 = inlined_call_operand.hbm [shape: bf16[1152,256], index: 5, kind: input, shape index: {}]
  %s6 = inlined_call_operand.vmem [shape: f32[1,256], index: 6, kind: input, shape index: {}]
  %s7 = inlined_call_operand.hbm [shape: bf16[1024,512], index: 7, kind: input, shape index: {}]
  %s8 = inlined_call_operand.vmem [shape: f32[1,512], index: 8, kind: input, shape index: {}]
  %s9 = inlined_call_operand.vmem [shape: bf16[512,256], index: 9, kind: input, shape index: {}]
  %s10 = inlined_call_operand.vmem [shape: f32[1,256], index: 10, kind: input, shape index: {}]
  %s11 = inlined_call_operand.vmem [shape: bf16[256,128], index: 11, kind: input, shape index: {}]
  %s12 = inlined_call_operand.vmem [shape: f32[1,128], index: 12, kind: input, shape index: {}]
  %s13 = inlined_call_operand.hbm [shape: f32[2,1,128], index: 13, kind: output, shape index: {}]
  %s14 = sld [smem:[#allocation0]]
  $region93: #{forward.1} parent=0
    _
  %s16 = ssub.s32 1, %s14
  %s17 = scalar_select 0, %s16, %s14
  $region1: #{forward.1} parent=0
    #allocation11 [shape = 'u8[589824]{0}', space=vmem, size = 0x90000, scoped, tag = 'input window, operand 5, single buffered']
    #allocation12 [shape = 's32[2]{0}', space=sflag, size = 0x8, scoped, tag = 'scoped memory for forward.1']
    #allocation13 [shape = 's32[2]{0}', space=sflag, size = 0x8, scoped, tag = 'scoped memory for forward.1']
    #allocation14 [shape = 'u8[1048576]{0}', space=vmem, size = 0x100000, scoped, tag = 'input window, operand 7, single buffered']
    #allocation15 [shape = 's32[1]{0}', space=sflag, size = 0x4, scoped, tag = 'scoped memory for forward.1']
    #allocation16 [shape = 'u8[1024]{0}', space=vmem, size = 0x400, scoped, tag = 'output window, operand 0']
    %18 = vsyncpa [#allocation12], 0
    %19 = vsyncpa [#allocation15], 0
    %20 = vsyncpa [#allocation13], 0
    %s21 = scalar_lea.sflag [#allocation13], 1
    %22 = vsyncpa %s21, 0
    loop: start=0, step=1, limit=4
    $region2: #{forward.1} parent=1 // loop_pre_header
      _
    $region3: #{forward.1} parent=1 // loop_header
      %s24 = sphi 0, %s28
      %p25 = scmp.ge.s32.totalorder %s24, 4
      %s34 = sphi 0, %s36
      %s37 = sphi 0, %s34
      %s38 = sphi 0, %s37
      %s54 = sphi 0, %s38
      %s58 = sphi 0, %s58
      %s60 = sphi 0, %s58
      %s61 = sphi 0, %s60
      %s75 = sphi 0, %s61
      %s79 = sphi 0, %s79
      %s81 = sphi 0, %s79
      %s82 = sphi 0, %s81
      %s96 = sphi 0, %s82
      %s100 = sphi 0, %s100
      %s102 = sphi 0, %s100
      %s103 = sphi 0, %s102
      %s117 = sphi 0, %s103
      %s121 = sphi 0, %s121
      %s123 = sphi 0, %s121
      %s124 = sphi 0, %s123
      %s138 = sphi 0, %s124
      %s142 = sphi 0, %s142
      %s144 = sphi 0, %s142
      %s145 = sphi 0, %s144
      %s159 = sphi 0, %s145
      %s163 = sphi 0, %s163
      %s165 = sphi 0, %s163
      %s166 = sphi 0, %s165
      %s180 = sphi 0, %s166
      %s184 = sphi 0, %s184
      %s186 = sphi 0, %s184
      %s187 = sphi 0, %s186
      %s201 = sphi 0, %s187
      %s205 = sphi 0, %s205
      %s207 = sphi 0, %s205
      %s208 = sphi 0, %s207
      %s222 = sphi 0, %s208
      %s226 = sphi 0, %s226
      %s228 = sphi 0, %s226
      %s229 = sphi 0, %s228
      %s243 = sphi 0, %s229
      %s247 = sphi 0, %s247
      %s249 = sphi 0, %s247
      %s250 = sphi 0, %s249
      %s264 = sphi 0, %s250
      %s268 = sphi 0, %s268
      %s270 = sphi 0, %s268
      %s271 = sphi 0, %s270
      %s285 = sphi 0, %s271
      %s289 = sphi 0, %s289
      %s291 = sphi 0, %s289
      %s292 = sphi 0, %s291
      %s306 = sphi 0, %s292
      %s312 = sphi 0, %s314
      %s315 = sphi 0, %s312
      %s316 = sphi 0, %s315
      %s332 = sphi 0, %s316
    $region4: #{forward.1} parent=1 // loop_header_branch
      %27 = sbr.rel (%p25) target = $region8
    $region5: #{forward.1} parent=1 // loop_body
      %s29 = ssub.s32 %s24, 1
      %s30 = ssub.s32 %s24, 2
      %s31 = sadd.s32 %s24, 1
      %s32 = ssub.s32 %s24, %s31
      %p33 = scmp.eq.s32.totalorder %s32, 0
      %s35 = sadd.s32 %s34, 1
      %s36 = scalar_select %p33, %s34, %s35
      %p39 = pneg %p33
      %p40 = scmp.eq.s32.totalorder %s24, 1
      %p41 = por %p39, %p40
      %p42 = scmp.ne.s32.totalorder %s34, %s37
      %p43 = scmp.eq.s32.totalorder %s24, 0
      %p44 = por %p42, %p43
      %p45 = scmp.ne.s32.totalorder %s34, %s37
      %p46 = scmp.eq.s32.totalorder %s29, 1
      %p47 = por %p45, %p46
      %p48 = scmp.ne.s32.totalorder %s37, %s38
      %p49 = scmp.eq.s32.totalorder %s29, 0
      %p50 = por %p48, %p49
      %p51 = scmp.ne.s32.totalorder %s37, %s38
      %p52 = scmp.eq.s32.totalorder %s30, 1
      %p53 = por %p51, %p52
      %p55 = scmp.ne.s32.totalorder %s38, %s54
      %p56 = scmp.eq.s32.totalorder %s30, 0
      %p57 = por %p55, %p56
      %s59 = sadd.s32 %s58, 1
      %p62 = scmp.eq.s32.totalorder %s24, 1
      %p63 = scmp.ne.s32.totalorder %s58, %s60
      %p64 = scmp.eq.s32.totalorder %s24, 0
      %p65 = por %p63, %p64
      %p66 = scmp.ne.s32.totalorder %s58, %s60
      %p67 = scmp.eq.s32.totalorder %s29, 1
      %p68 = por %p66, %p67
      %p69 = scmp.ne.s32.totalorder %s60, %s61
      %p70 = scmp.eq.s32.totalorder %s29, 0
      %p71 = por %p69, %p70
      %p72 = scmp.ne.s32.totalorder %s60, %s61
      %p73 = scmp.eq.s32.totalorder %s30, 1
      %p74 = por %p72, %p73
      %p76 = scmp.ne.s32.totalorder %s61, %s75
      %p77 = scmp.eq.s32.totalorder %s30, 0
      %p78 = por %p76, %p77
      %s80 = sadd.s32 %s79, 1
      %p83 = scmp.eq.s32.totalorder %s24, 1
      %p84 = scmp.ne.s32.totalorder %s79, %s81
      %p85 = scmp.eq.s32.totalorder %s24, 0
      %p86 = por %p84, %p85
      %p87 = scmp.ne.s32.totalorder %s79, %s81
      %p88 = scmp.eq.s32.totalorder %s29, 1
      %p89 = por %p87, %p88
      %p90 = scmp.ne.s32.totalorder %s81, %s82
      %p91 = scmp.eq.s32.totalorder %s29, 0
      %p92 = por %p90, %p91
      %p93 = scmp.ne.s32.totalorder %s81, %s82
      %p94 = scmp.eq.s32.totalorder %s30, 1
      %p95 = por %p93, %p94
      %p97 = scmp.ne.s32.totalorder %s82, %s96
      %p98 = scmp.eq.s32.totalorder %s30, 0
      %p99 = por %p97, %p98
      %s101 = sadd.s32 %s100, 1
      %p104 = scmp.eq.s32.totalorder %s24, 1
      %p105 = scmp.ne.s32.totalorder %s100, %s102
      %p106 = scmp.eq.s32.totalorder %s24, 0
      %p107 = por %p105, %p106
      %p108 = scmp.ne.s32.totalorder %s100, %s102
      %p109 = scmp.eq.s32.totalorder %s29, 1
      %p110 = por %p108, %p109
      %p111 = scmp.ne.s32.totalorder %s102, %s103
      %p112 = scmp.eq.s32.totalorder %s29, 0
      %p113 = por %p111, %p112
      %p114 = scmp.ne.s32.totalorder %s102, %s103
      %p115 = scmp.eq.s32.totalorder %s30, 1
      %p116 = por %p114, %p115
      %p118 = scmp.ne.s32.totalorder %s103, %s117
      %p119 = scmp.eq.s32.totalorder %s30, 0
      %p120 = por %p118, %p119
      %s122 = sadd.s32 %s121, 1
      %p125 = scmp.eq.s32.totalorder %s24, 1
      %p126 = scmp.ne.s32.totalorder %s121, %s123
      %p127 = scmp.eq.s32.totalorder %s24, 0
      %p128 = por %p126, %p127
      %p129 = scmp.ne.s32.totalorder %s121, %s123
      %p130 = scmp.eq.s32.totalorder %s29, 1
      %p131 = por %p129, %p130
      %p132 = scmp.ne.s32.totalorder %s123, %s124
      %p133 = scmp.eq.s32.totalorder %s29, 0
      %p134 = por %p132, %p133
      %p135 = scmp.ne.s32.totalorder %s123, %s124
      %p136 = scmp.eq.s32.totalorder %s30, 1
      %p137 = por %p135, %p136
      %p139 = scmp.ne.s32.totalorder %s124, %s138
      %p140 = scmp.eq.s32.totalorder %s30, 0
      %p141 = por %p139, %p140
      %s143 = sadd.s32 %s142, 1
      %p146 = scmp.eq.s32.totalorder %s24, 1
      %p147 = scmp.ne.s32.totalorder %s142, %s144
      %p148 = scmp.eq.s32.totalorder %s24, 0
      %p149 = por %p147, %p148
      %p150 = scmp.ne.s32.totalorder %s142, %s144
      %p151 = scmp.eq.s32.totalorder %s29, 1
      %p152 = por %p150, %p151
      %p153 = scmp.ne.s32.totalorder %s144, %s145
      %p154 = scmp.eq.s32.totalorder %s29, 0
      %p155 = por %p153, %p154
      %p156 = scmp.ne.s32.totalorder %s144, %s145
      %p157 = scmp.eq.s32.totalorder %s30, 1
      %p158 = por %p156, %p157
      %p160 = scmp.ne.s32.totalorder %s145, %s159
      %p161 = scmp.eq.s32.totalorder %s30, 0
      %p162 = por %p160, %p161
      %s164 = sadd.s32 %s163, 1
      %p167 = scmp.eq.s32.totalorder %s24, 1
      %p168 = scmp.ne.s32.totalorder %s163, %s165
      %p169 = scmp.eq.s32.totalorder %s24, 0
      %p170 = por %p168, %p169
      %p171 = scmp.ne.s32.totalorder %s163, %s165
      %p172 = scmp.eq.s32.totalorder %s29, 1
      %p173 = por %p171, %p172
      %p174 = scmp.ne.s32.totalorder %s165, %s166
      %p175 = scmp.eq.s32.totalorder %s29, 0
      %p176 = por %p174, %p175
      %p177 = scmp.ne.s32.totalorder %s165, %s166
      %p178 = scmp.eq.s32.totalorder %s30, 1
      %p179 = por %p177, %p178
      %p181 = scmp.ne.s32.totalorder %s166, %s180
      %p182 = scmp.eq.s32.totalorder %s30, 0
      %p183 = por %p181, %p182
      %s185 = sadd.s32 %s184, 1
      %p188 = scmp.eq.s32.totalorder %s24, 1
      %p189 = scmp.ne.s32.totalorder %s184, %s186
      %p190 = scmp.eq.s32.totalorder %s24, 0
      %p191 = por %p189, %p190
      %p192 = scmp.ne.s32.totalorder %s184, %s186
      %p193 = scmp.eq.s32.totalorder %s29, 1
      %p194 = por %p192, %p193
      %p195 = scmp.ne.s32.totalorder %s186, %s187
      %p196 = scmp.eq.s32.totalorder %s29, 0
      %p197 = por %p195, %p196
      %p198 = scmp.ne.s32.totalorder %s186, %s187
      %p199 = scmp.eq.s32.totalorder %s30, 1
      %p200 = por %p198, %p199
      %p202 = scmp.ne.s32.totalorder %s187, %s201
      %p203 = scmp.eq.s32.totalorder %s30, 0
      %p204 = por %p202, %p203
      %s206 = sadd.s32 %s205, 1
      %p209 = scmp.eq.s32.totalorder %s24, 1
      %p210 = scmp.ne.s32.totalorder %s205, %s207
      %p211 = scmp.eq.s32.totalorder %s24, 0
      %p212 = por %p210, %p211
      %p213 = scmp.ne.s32.totalorder %s205, %s207
      %p214 = scmp.eq.s32.totalorder %s29, 1
      %p215 = por %p213, %p214
      %p216 = scmp.ne.s32.totalorder %s207, %s208
      %p217 = scmp.eq.s32.totalorder %s29, 0
      %p218 = por %p216, %p217
      %p219 = scmp.ne.s32.totalorder %s207, %s208
      %p220 = scmp.eq.s32.totalorder %s30, 1
      %p221 = por %p219, %p220
      %p223 = scmp.ne.s32.totalorder %s208, %s222
      %p224 = scmp.eq.s32.totalorder %s30, 0
      %p225 = por %p223, %p224
      %s227 = sadd.s32 %s226, 1
      %p230 = scmp.eq.s32.totalorder %s24, 1
      %p231 = scmp.ne.s32.totalorder %s226, %s228
      %p232 = scmp.eq.s32.totalorder %s24, 0
      %p233 = por %p231, %p232
      %p234 = scmp.ne.s32.totalorder %s226, %s228
      %p235 = scmp.eq.s32.totalorder %s29, 1
      %p236 = por %p234, %p235
      %p237 = scmp.ne.s32.totalorder %s228, %s229
      %p238 = scmp.eq.s32.totalorder %s29, 0
      %p239 = por %p237, %p238
      %p240 = scmp.ne.s32.totalorder %s228, %s229
      %p241 = scmp.eq.s32.totalorder %s30, 1
      %p242 = por %p240, %p241
      %p244 = scmp.ne.s32.totalorder %s229, %s243
      %p245 = scmp.eq.s32.totalorder %s30, 0
      %p246 = por %p244, %p245
      %s248 = sadd.s32 %s247, 1
      %p251 = scmp.eq.s32.totalorder %s24, 1
      %p252 = scmp.ne.s32.totalorder %s247, %s249
      %p253 = scmp.eq.s32.totalorder %s24, 0
      %p254 = por %p252, %p253
      %p255 = scmp.ne.s32.totalorder %s247, %s249
      %p256 = scmp.eq.s32.totalorder %s29, 1
      %p257 = por %p255, %p256
      %p258 = scmp.ne.s32.totalorder %s249, %s250
      %p259 = scmp.eq.s32.totalorder %s29, 0
      %p260 = por %p258, %p259
      %p261 = scmp.ne.s32.totalorder %s249, %s250
      %p262 = scmp.eq.s32.totalorder %s30, 1
      %p263 = por %p261, %p262
      %p265 = scmp.ne.s32.totalorder %s250, %s264
      %p266 = scmp.eq.s32.totalorder %s30, 0
      %p267 = por %p265, %p266
      %s269 = sadd.s32 %s268, 1
      %p272 = scmp.eq.s32.totalorder %s24, 1
      %p273 = scmp.ne.s32.totalorder %s268, %s270
      %p274 = scmp.eq.s32.totalorder %s24, 0
      %p275 = por %p273, %p274
      %p276 = scmp.ne.s32.totalorder %s268, %s270
      %p277 = scmp.eq.s32.totalorder %s29, 1
      %p278 = por %p276, %p277
      %p279 = scmp.ne.s32.totalorder %s270, %s271
      %p280 = scmp.eq.s32.totalorder %s29, 0
      %p281 = por %p279, %p280
      %p282 = scmp.ne.s32.totalorder %s270, %s271
      %p283 = scmp.eq.s32.totalorder %s30, 1
      %p284 = por %p282, %p283
      %p286 = scmp.ne.s32.totalorder %s271, %s285
      %p287 = scmp.eq.s32.totalorder %s30, 0
      %p288 = por %p286, %p287
      %s290 = sadd.s32 %s289, 1
      %p293 = scmp.eq.s32.totalorder %s24, 1
      %p294 = scmp.ne.s32.totalorder %s289, %s291
      %p295 = scmp.eq.s32.totalorder %s24, 0
      %p296 = por %p294, %p295
      %p297 = scmp.ne.s32.totalorder %s289, %s291
      %p298 = scmp.eq.s32.totalorder %s29, 1
      %p299 = por %p297, %p298
      %p300 = scmp.ne.s32.totalorder %s291, %s292
      %p301 = scmp.eq.s32.totalorder %s29, 0
      %p302 = por %p300, %p301
      %p303 = scmp.ne.s32.totalorder %s291, %s292
      %p304 = scmp.eq.s32.totalorder %s30, 1
      %p305 = por %p303, %p304
      %p307 = scmp.ne.s32.totalorder %s292, %s306
      %p308 = scmp.eq.s32.totalorder %s30, 0
      %p309 = por %p307, %p308
      %s310 = ssub.s32 %s24, %s31
      %p311 = scmp.eq.s32.totalorder %s310, 0
      %s313 = sadd.s32 %s312, 1
      %s314 = scalar_select %p311, %s312, %s313
      %p317 = pneg %p311
      %p318 = scmp.eq.s32.totalorder %s24, 1
      %p319 = por %p317, %p318
      %p320 = scmp.ne.s32.totalorder %s312, %s315
      %p321 = scmp.eq.s32.totalorder %s24, 0
      %p322 = por %p320, %p321
      %p323 = scmp.ne.s32.totalorder %s312, %s315
      %p324 = scmp.eq.s32.totalorder %s29, 1
      %p325 = por %p323, %p324
      %p326 = scmp.ne.s32.totalorder %s315, %s316
      %p327 = scmp.eq.s32.totalorder %s29, 0
      %p328 = por %p326, %p327
      %p329 = scmp.ne.s32.totalorder %s315, %s316
      %p330 = scmp.eq.s32.totalorder %s30, 1
      %p331 = por %p329, %p330
      %p333 = scmp.ne.s32.totalorder %s316, %s332
      %p334 = scmp.eq.s32.totalorder %s30, 0
      %p335 = por %p333, %p334
      %p336 = scmp.le.s32.totalorder 1, %s24
      %p337 = scmp.lt.s32.totalorder %s24, 3
      %p338 = pnand %p336, %p337
      %p339 = pneg %p338
      // Predicated region
      $region9: #{forward.1} parent=5 // pred_check
        _
      $region10: #{forward.1} parent=5 // pred_check_branch
        %341 = sbr.rel (%p338) target = $region12
      $region11: #{forward.1} parent=5 // pred_region
        %s342 = ssub.s32 %s24, 1
        // Predicated region
        $region13: #{forward.1} parent=11 // pred_check
          %p343 = pneg %p71
        $region14: #{forward.1} parent=11 // pred_check_branch
          %345 = sbr.rel (%p343) target = $region16
        $region15: #{forward.1} parent=11 // pred_region
          _
        $region16: #{forward.1} parent=11 // pred_fallthru
          _
        // Predicated region
        $region17: #{forward.1} parent=11 // pred_check
          %p346 = pneg %p92
        $region18: #{forward.1} parent=11 // pred_check_branch
          %348 = sbr.rel (%p346) target = $region20
        $region19: #{forward.1} parent=11 // pred_region
          _
        $region20: #{forward.1} parent=11 // pred_fallthru
          _
        // Predicated region
        $region21: #{forward.1} parent=11 // pred_check
          %p349 = pneg %p113
        $region22: #{forward.1} parent=11 // pred_check_branch
          %351 = sbr.rel (%p349) target = $region24
        $region23: #{forward.1} parent=11 // pred_region
          _
        $region24: #{forward.1} parent=11 // pred_fallthru
          _
        // Predicated region
        $region25: #{forward.1} parent=11 // pred_check
          %p352 = pneg %p134
        $region26: #{forward.1} parent=11 // pred_check_branch
          %354 = sbr.rel (%p352) target = $region28
        $region27: #{forward.1} parent=11 // pred_region
          _
        $region28: #{forward.1} parent=11 // pred_fallthru
          _
        // Predicated region
        $region29: #{forward.1} parent=11 // pred_check
          %p355 = pneg %p155
        $region30: #{forward.1} parent=11 // pred_check_branch
          %357 = sbr.rel (%p355) target = $region32
        $region31: #{forward.1} parent=11 // pred_region
          %359 = vsyncadd [#allocation12], 0
          %s360 = sshll.u32 %s5, 4
          %s361 = int_to_ptr.hbm [resolvable:$true] %s360
          %s362 = sshll.u32 [#allocation11], 4
          %s363 = int_to_ptr.vmem [resolvable:$true] %s362
          %368 = dma.hbm_to_vmem [thread:$0]  %s361, 18432, %s363, [#allocation12], 128, 128, 8
        $region32: #{forward.1} parent=11 // pred_fallthru
          _
        // Predicated region
        $region33: #{forward.1} parent=11 // pred_check
          %p369 = pneg %p176
        $region34: #{forward.1} parent=11 // pred_check_branch
          %371 = sbr.rel (%p369) target = $region36
        $region35: #{forward.1} parent=11 // pred_region
          _
        $region36: #{forward.1} parent=11 // pred_fallthru
          _
        // Predicated region
        $region37: #{forward.1} parent=11 // pred_check
          %p372 = pneg %p197
        $region38: #{forward.1} parent=11 // pred_check_branch
          %374 = sbr.rel (%p372) target = $region40
        $region39: #{forward.1} parent=11 // pred_region
          %376 = vsyncadd [#allocation15], 0
          %s377 = sshll.u32 %s7, 4
          %s378 = int_to_ptr.hbm [resolvable:$true] %s377
          %s379 = sshll.u32 [#allocation14], 4
          %s380 = int_to_ptr.vmem [resolvable:$true] %s379
          %385 = dma.hbm_to_vmem [thread:$0]  %s378, 32768, %s380, [#allocation15], 256, 256, 16
        $region40: #{forward.1} parent=11 // pred_fallthru
          _
        // Predicated region
        $region41: #{forward.1} parent=11 // pred_check
          %p386 = pneg %p218
        $region42: #{forward.1} parent=11 // pred_check_branch
          %388 = sbr.rel (%p386) target = $region44
        $region43: #{forward.1} parent=11 // pred_region
          _
        $region44: #{forward.1} parent=11 // pred_fallthru
          _
        // Predicated region
        $region45: #{forward.1} parent=11 // pred_check
          %p389 = pneg %p239
        $region46: #{forward.1} parent=11 // pred_check_branch
          %391 = sbr.rel (%p389) target = $region48
        $region47: #{forward.1} parent=11 // pred_region
          _
        $region48: #{forward.1} parent=11 // pred_fallthru
          _
        // Predicated region
        $region49: #{forward.1} parent=11 // pred_check
          %p392 = pneg %p260
        $region50: #{forward.1} parent=11 // pred_check_branch
          %394 = sbr.rel (%p392) target = $region52
        $region51: #{forward.1} parent=11 // pred_region
          _
        $region52: #{forward.1} parent=11 // pred_fallthru
          _
        // Predicated region
        $region53: #{forward.1} parent=11 // pred_check
          %p395 = pneg %p281
        $region54: #{forward.1} parent=11 // pred_check_branch
          %397 = sbr.rel (%p395) target = $region56
        $region55: #{forward.1} parent=11 // pred_region
          _
        $region56: #{forward.1} parent=11 // pred_fallthru
          _
        // Predicated region
        $region57: #{forward.1} parent=11 // pred_check
          %p398 = pneg %p302
        $region58: #{forward.1} parent=11 // pred_check_branch
          %400 = sbr.rel (%p398) target = $region60
        $region59: #{forward.1} parent=11 // pred_region
          _
        $region60: #{forward.1} parent=11 // pred_fallthru
          _
      $region12: #{forward.1} parent=5 // pred_fallthru
        _
      %p401 = scmp.lt.s32.totalorder %s24, 2
      // Predicated region
      $region61: #{forward.1} parent=5 // pred_check
        %p402 = pneg %p401
      $region62: #{forward.1} parent=5 // pred_check_branch
        %404 = sbr.rel (%p402) target = $region64
      $region63: #{forward.1} parent=5 // pred_region
        // Predicated region
        $region65: #{forward.1} parent=63 // pred_check
          %p405 = pneg %p44
        $region66: #{forward.1} parent=63 // pred_check_branch
          %407 = sbr.rel (%p405) target = $region68
        $region67: #{forward.1} parent=63 // pred_region
          %p408 = scmp.lt.s32.totalorder %s24, 1
          %s409 = scalar_select %p408, %s24, 1
          %s410 = smul.addr %s409, 43
          %s411 = smul.addr %s410, 4
          %s412 = scalar_lea.vmem %s0, %s411
        $region68: #{forward.1} parent=63 // pred_fallthru
          _
      $region64: #{forward.1} parent=5 // pred_fallthru
        _
      %p413 = scmp.le.s32.totalorder 1, %s24
      %p414 = scmp.lt.s32.totalorder %s24, 3
      %p415 = pnand %p413, %p414
      %p416 = pneg %p415
      // Predicated region
      $region69: #{forward.1} parent=5 // pred_check
        _
      $region70: #{forward.1} parent=5 // pred_check_branch
        %418 = sbr.rel (%p415) target = $region72
      $region71: #{forward.1} parent=5 // pred_region
        %s419 = ssub.s32 %s24, 1
        // Predicated region
        $region73: #{forward.1} parent=71 // pred_check
          %p420 = pneg %p155
        $region74: #{forward.1} parent=71 // pred_check_branch
          %422 = sbr.rel (%p420) target = $region76
        $region75: #{forward.1} parent=71 // pred_region
          %424 = dma.done [#allocation12], 18432
        $region76: #{forward.1} parent=71 // pred_fallthru
          _
        // Predicated region
        $region77: #{forward.1} parent=71 // pred_check
          %p425 = pneg %p197
        $region78: #{forward.1} parent=71 // pred_check_branch
          %427 = sbr.rel (%p425) target = $region80
        $region79: #{forward.1} parent=71 // pred_region
          %429 = dma.done [#allocation15], 32768
        $region80: #{forward.1} parent=71 // pred_fallthru
          _
        %p430 = scmp.lt.s32.totalorder %s29, 1
        %s431 = scalar_select %p430, %s29, 1
        %s432 = smul.addr %s431, 43
        %s433 = smul.addr %s432, 4
        %s434 = scalar_lea.vmem %s0, %s433
        %p435 = pneg %p50
        %p436 = pneg %p47
        %p437 = pneg %p71
        %p438 = pneg %p68
        %p439 = pneg %p92
        %p440 = pneg %p89
        %p441 = pneg %p113
        %p442 = pneg %p110
        %p443 = pneg %p134
        %p444 = pneg %p131
        %p445 = pneg %p155
        %p446 = pneg %p152
        %p447 = pneg %p176
        %p448 = pneg %p173
        %p449 = pneg %p197
        %p450 = pneg %p194
        %p451 = pneg %p218
        %p452 = pneg %p215
        %p453 = pneg %p239
        %p454 = pneg %p236
        %p455 = pneg %p260
        %p456 = pneg %p257
        %p457 = pneg %p281
        %p458 = pneg %p278
        %p459 = pneg %p302
        %p460 = pneg %p299
        %p461 = pneg %p328
        %p462 = pneg %p325
        %s463 = sand.u32 %s315, 1
        %s464 = scalar_lea.sflag [#allocation13], %s463
        %s465 = sand.u32 %s315, 1
        %s466 = scalar_lea.vmem [#allocation16], %s465
        %p467 = scmp.lt.s32.totalorder %s29, 1
        %s468 = scalar_select %p467, %s29, 1
        %s469 = smul.addr %s468, 43
        %s470 = smul.addr %s469, 4
        %s471 = scalar_lea.vmem %s0, %s470
        %473 = vst [vmem:[#allocation2] sm:$0xf] 0
        %474 = vst [vmem:[#allocation2 + $0x4] sm:$0xf] 0
        %475 = vst [vmem:[#allocation2 + $0x8] sm:$0xf] 0
        %476 = vst [vmem:[#allocation2 + $0xc] sm:$0xf] 0
        %477 = vst [vmem:[#allocation2 + $0x10] sm:$0xf] 0
        %478 = vst [vmem:[#allocation2 + $0x14] sm:$0xf] 0
        %479 = vst [vmem:[#allocation2 + $0x18] sm:$0xf] 0
        %480 = vst [vmem:[#allocation2 + $0x1c] sm:$0xf] 0
        %481 = vst [vmem:[#allocation2 + $0x20] sm:$0xf] 0
        %482 = vst [vmem:[#allocation2 + $0x24] sm:$0xf] 0
        %483 = vst [vmem:[#allocation2 + $0x28] sm:$0xf] 0
        %484 = vst [vmem:[#allocation2 + $0x2c] sm:$0xf] 0
        %485 = vst [vmem:[#allocation2 + $0x30] sm:$0xf] 0
        %486 = vst [vmem:[#allocation2 + $0x34] sm:$0xf] 0
        %487 = vst [vmem:[#allocation2 + $0x38] sm:$0xf] 0
        %488 = vst [vmem:[#allocation2 + $0x3c] sm:$0xf] 0
        %489 = vst [vmem:[#allocation2 + $0x40] sm:$0xf] 0
        %490 = vst [vmem:[#allocation2 + $0x44] sm:$0xf] 0
        %491 = vst [vmem:[#allocation2 + $0x48] sm:$0xf] 0
        %492 = vst [vmem:[#allocation2 + $0x4c] sm:$0xf] 0
        %493 = vst [vmem:[#allocation2 + $0x50] sm:$0xf] 0
        %494 = vst [vmem:[#allocation2 + $0x54] sm:$0xf] 0
        %495 = vst [vmem:[#allocation2 + $0x58] sm:$0xf] 0
        %496 = vst [vmem:[#allocation2 + $0x5c] sm:$0xf] 0
        %497 = vst [vmem:[#allocation2 + $0x60] sm:$0xf] 0
        %498 = vst [vmem:[#allocation2 + $0x64] sm:$0xf] 0
        %499 = vst [vmem:[#allocation2 + $0x68] sm:$0xf] 0
        %500 = vst [vmem:[#allocation2 + $0x6c] sm:$0xf] 0
        %501 = vst [vmem:[#allocation2 + $0x70] sm:$0xf] 0
        %502 = vst [vmem:[#allocation2 + $0x74] sm:$0xf] 0
        %503 = vst [vmem:[#allocation2 + $0x78] sm:$0xf] 0
        %504 = vst [vmem:[#allocation2 + $0x7c] sm:$0xf] 0
        %505 = vst [vmem:[#allocation2 + $0x80] sm:$0xf] 0
        %506 = vst [vmem:[#allocation2 + $0x84] sm:$0xf] 0
        %507 = vst [vmem:[#allocation2 + $0x88] sm:$0xf] 0
        %508 = vst [vmem:[#allocation2 + $0x8c] sm:$0xf] 0
        %v509 = vld [vmem:[%s471] sm:$0xf]
        %v510 = vld [vmem:[%s471 + $0x4] sm:$0xf]
        %v511 = vld [vmem:[%s471 + $0x8] sm:$0xf]
        %v512 = vld [vmem:[%s471 + $0xc] sm:$0xf]
        %v513 = vld [vmem:[%s471 + $0x10] sm:$0xf]
        %v514 = vld [vmem:[%s471 + $0x14] sm:$0xf]
        %v515 = vld [vmem:[%s471 + $0x18] sm:$0xf]
        %v516 = vld [vmem:[%s471 + $0x1c] sm:$0xf]
        %v517 = vld [vmem:[%s471 + $0x20] sm:$0xf]
        %v518 = vld [vmem:[%s471 + $0x24] sm:$0xf]
        %v519 = vld [vmem:[%s471 + $0x28] sm:$0xf]
        %v520 = vld [vmem:[%s471 + $0x2c] sm:$0xf]
        %v521 = vld [vmem:[%s471 + $0x30] sm:$0xf]
        %v522 = vld [vmem:[%s471 + $0x34] sm:$0xf]
        %v523 = vld [vmem:[%s471 + $0x38] sm:$0xf]
        %v524 = vld [vmem:[%s471 + $0x3c] sm:$0xf]
        %v525 = vld [vmem:[%s471 + $0x40] sm:$0xf]
        %v526 = vld [vmem:[%s471 + $0x44] sm:$0xf]
        %v527 = vld [vmem:[%s471 + $0x48] sm:$0xf]
        %v528 = vld [vmem:[%s471 + $0x4c] sm:$0xf]
        %v529 = vld [vmem:[%s471 + $0x50] sm:$0xf]
        %v530 = vld [vmem:[%s471 + $0x54] sm:$0xf]
        %v531 = vld [vmem:[%s471 + $0x58] sm:$0xf]
        %v532 = vld [vmem:[%s471 + $0x5c] sm:$0xf]
        %v533 = vld [vmem:[%s471 + $0x60] sm:$0xf]
        %v534 = vld [vmem:[%s471 + $0x64] sm:$0xf]
        %v535 = vld [vmem:[%s471 + $0x68] sm:$0xf]
        %v536 = vld [vmem:[%s471 + $0x6c] sm:$0xf]
        %v537 = vld [vmem:[%s471 + $0x70] sm:$0xf]
        %v538 = vld [vmem:[%s471 + $0x74] sm:$0xf]
        %v539 = vld [vmem:[%s471 + $0x78] sm:$0xf]
        %v540 = vld [vmem:[%s471 + $0x7c] sm:$0xf]
        %v541 = vld [vmem:[%s471 + $0x80] sm:$0xf]
        %v542 = vld [vmem:[%s471 + $0x84] sm:$0xf]
        %v543 = vld [vmem:[%s471 + $0x88] sm:$0xf]
        %v544 = vld [vmem:[%s471 + $0x8c] sm:$0xf]
        %vm545 = vcmask 60416
        %546 = vst.msk [vmem:[#allocation2] sm:$0xf] %vm545, %v509
        %547 = vst.msk [vmem:[#allocation2 + $0x4] sm:$0xf] %vm545, %v510
        %548 = vst.msk [vmem:[#allocation2 + $0x8] sm:$0xf] %vm545, %v511
        %549 = vst.msk [vmem:[#allocation2 + $0xc] sm:$0xf] %vm545, %v512
        %550 = vst.msk [vmem:[#allocation2 + $0x10] sm:$0xf] %vm545, %v513
        %551 = vst.msk [vmem:[#allocation2 + $0x14] sm:$0xf] %vm545, %v514
        %552 = vst.msk [vmem:[#allocation2 + $0x18] sm:$0xf] %vm545, %v515
        %553 = vst.msk [vmem:[#allocation2 + $0x1c] sm:$0xf] %vm545, %v516
        %554 = vst.msk [vmem:[#allocation2 + $0x20] sm:$0xf] %vm545, %v517
        %555 = vst.msk [vmem:[#allocation2 + $0x24] sm:$0xf] %vm545, %v518
        %556 = vst.msk [vmem:[#allocation2 + $0x28] sm:$0xf] %vm545, %v519
        %557 = vst.msk [vmem:[#allocation2 + $0x2c] sm:$0xf] %vm545, %v520
        %558 = vst.msk [vmem:[#allocation2 + $0x30] sm:$0xf] %vm545, %v521
        %559 = vst.msk [vmem:[#allocation2 + $0x34] sm:$0xf] %vm545, %v522
        %560 = vst.msk [vmem:[#allocation2 + $0x38] sm:$0xf] %vm545, %v523
        %561 = vst.msk [vmem:[#allocation2 + $0x3c] sm:$0xf] %vm545, %v524
        %562 = vst.msk [vmem:[#allocation2 + $0x40] sm:$0xf] %vm545, %v525
        %563 = vst.msk [vmem:[#allocation2 + $0x44] sm:$0xf] %vm545, %v526
        %564 = vst.msk [vmem:[#allocation2 + $0x48] sm:$0xf] %vm545, %v527
        %565 = vst.msk [vmem:[#allocation2 + $0x4c] sm:$0xf] %vm545, %v528
        %566 = vst.msk [vmem:[#allocation2 + $0x50] sm:$0xf] %vm545, %v529
        %567 = vst.msk [vmem:[#allocation2 + $0x54] sm:$0xf] %vm545, %v530
        %568 = vst.msk [vmem:[#allocation2 + $0x58] sm:$0xf] %vm545, %v531
        %569 = vst.msk [vmem:[#allocation2 + $0x5c] sm:$0xf] %vm545, %v532
        %570 = vst.msk [vmem:[#allocation2 + $0x60] sm:$0xf] %vm545, %v533
        %571 = vst.msk [vmem:[#allocation2 + $0x64] sm:$0xf] %vm545, %v534
        %572 = vst.msk [vmem:[#allocation2 + $0x68] sm:$0xf] %vm545, %v535
        %573 = vst.msk [vmem:[#allocation2 + $0x6c] sm:$0xf] %vm545, %v536
        %574 = vst.msk [vmem:[#allocation2 + $0x70] sm:$0xf] %vm545, %v537
        %575 = vst.msk [vmem:[#allocation2 + $0x74] sm:$0xf] %vm545, %v538
        %576 = vst.msk [vmem:[#allocation2 + $0x78] sm:$0xf] %vm545, %v539
        %577 = vst.msk [vmem:[#allocation2 + $0x7c] sm:$0xf] %vm545, %v540
        %578 = vst.msk [vmem:[#allocation2 + $0x80] sm:$0xf] %vm545, %v541
        %579 = vst.msk [vmem:[#allocation2 + $0x84] sm:$0xf] %vm545, %v542
        %580 = vst.msk [vmem:[#allocation2 + $0x88] sm:$0xf] %vm545, %v543
        %581 = vst.msk [vmem:[#allocation2 + $0x8c] sm:$0xf] %vm545, %v544
        %v582 = vld [vmem:[%s471] sm:$0xf]
        %v583 = vld [vmem:[%s471 + $0x4] sm:$0xf]
        %v584 = vld [vmem:[%s471 + $0x8] sm:$0xf]
        %v585 = vld [vmem:[%s471 + $0xc] sm:$0xf]
        %v586 = vld [vmem:[%s471 + $0x10] sm:$0xf]
        %v587 = vld [vmem:[%s471 + $0x14] sm:$0xf]
        %v588 = vld [vmem:[%s471 + $0x18] sm:$0xf]
        %v589 = vld [vmem:[%s471 + $0x1c] sm:$0xf]
        %v590 = vld [vmem:[%s471 + $0x20] sm:$0xf]
        %v591 = vld [vmem:[%s471 + $0x24] sm:$0xf]
        %v592 = vld [vmem:[%s471 + $0x28] sm:$0xf]
        %v593 = vld [vmem:[%s471 + $0x2c] sm:$0xf]
        %v594 = vld [vmem:[%s471 + $0x30] sm:$0xf]
        %v595 = vld [vmem:[%s471 + $0x34] sm:$0xf]
        %v596 = vld [vmem:[%s471 + $0x38] sm:$0xf]
        %v597 = vld [vmem:[%s471 + $0x3c] sm:$0xf]
        %v598 = vld [vmem:[%s471 + $0x40] sm:$0xf]
        %v599 = vld [vmem:[%s471 + $0x44] sm:$0xf]
        %v600 = vld [vmem:[%s471 + $0x48] sm:$0xf]
        %v601 = vld [vmem:[%s471 + $0x4c] sm:$0xf]
        %v602 = vld [vmem:[%s471 + $0x50] sm:$0xf]
        %v603 = vld [vmem:[%s471 + $0x54] sm:$0xf]
        %v604 = vld [vmem:[%s471 + $0x58] sm:$0xf]
        %v605 = vld [vmem:[%s471 + $0x5c] sm:$0xf]
        %v606 = vld [vmem:[%s471 + $0x60] sm:$0xf]
        %v607 = vld [vmem:[%s471 + $0x64] sm:$0xf]
        %v608 = vld [vmem:[%s471 + $0x68] sm:$0xf]
        %v609 = vld [vmem:[%s471 + $0x6c] sm:$0xf]
        %v610 = vld [vmem:[%s471 + $0x70] sm:$0xf]
        %v611 = vld [vmem:[%s471 + $0x74] sm:$0xf]
        %v612 = vld [vmem:[%s471 + $0x78] sm:$0xf]
        %v613 = vld [vmem:[%s471 + $0x7c] sm:$0xf]
        %v614 = vld [vmem:[%s471 + $0x80] sm:$0xf]
        %v615 = vld [vmem:[%s471 + $0x84] sm:$0xf]
        %v616 = vld [vmem:[%s471 + $0x88] sm:$0xf]
        %v617 = vld [vmem:[%s471 + $0x8c] sm:$0xf]
        %v618 = vld [vmem:[%s471 + $0x90] sm:$0x1]
        %vm619 = vsmask.f32 3328
        %vm620 = vsmask.f32 7440
        %vm621 = vmor %vm619, %vm620
        %v623 = vshrl.u32 %v582, 16
        %v625 = vrot.slane %v623, 4
        %v626 = vshll.u32 %v582, 16
        %v628 = vrot.slane %v626, 5
        %v629 = vor.u32 %v625, %v628
        %v630 = vrot.slane %v629, 4
        %v632 = vshll.u32 %v583, 16
        %v634 = vrot.slane %v632, 5
        %v635 = vsel %vm621, %v630, %v634
        %v636 = vshrl.u32 %v583, 16
        %v638 = vrot.slane %v636, 4
        %v639 = vor.u32 %v638, %v634
        %v640 = vrot.slane %v639, 4
        %v642 = vshll.u32 %v584, 16
        %v644 = vrot.slane %v642, 5
        %v645 = vsel %vm621, %v640, %v644
        %v646 = vshrl.u32 %v584, 16
        %v648 = vrot.slane %v646, 4
        %v649 = vor.u32 %v648, %v644
        %v650 = vrot.slane %v649, 4
        %v652 = vshll.u32 %v585, 16
        %v654 = vrot.slane %v652, 5
        %v655 = vsel %vm621, %v650, %v654
        %v656 = vshrl.u32 %v585, 16
        %v658 = vrot.slane %v656, 4
        %v659 = vor.u32 %v658, %v654
        %v660 = vrot.slane %v659, 4
        %v662 = vshll.u32 %v586, 16
        %v664 = vrot.slane %v662, 5
        %v665 = vsel %vm621, %v660, %v664
        %v666 = vshrl.u32 %v586, 16
        %v668 = vrot.slane %v666, 4
        %v669 = vor.u32 %v668, %v664
        %v670 = vrot.slane %v669, 4
        %v672 = vshll.u32 %v587, 16
        %v674 = vrot.slane %v672, 5
        %v675 = vsel %vm621, %v670, %v674
        %v676 = vshrl.u32 %v587, 16
        %v678 = vrot.slane %v676, 4
        %v679 = vor.u32 %v678, %v674
        %v680 = vrot.slane %v679, 4
        %v682 = vshll.u32 %v588, 16
        %v684 = vrot.slane %v682, 5
        %v685 = vsel %vm621, %v680, %v684
        %v686 = vshrl.u32 %v588, 16
        %v688 = vrot.slane %v686, 4
        %v689 = vor.u32 %v688, %v684
        %v690 = vrot.slane %v689, 4
        %v692 = vshll.u32 %v589, 16
        %v694 = vrot.slane %v692, 5
        %v695 = vsel %vm621, %v690, %v694
        %v696 = vshrl.u32 %v589, 16
        %v698 = vrot.slane %v696, 4
        %v699 = vor.u32 %v698, %v694
        %v700 = vrot.slane %v699, 4
        %v702 = vshll.u32 %v590, 16
        %v704 = vrot.slane %v702, 5
        %v705 = vsel %vm621, %v700, %v704
        %v706 = vshrl.u32 %v590, 16
        %v708 = vrot.slane %v706, 4
        %v709 = vor.u32 %v708, %v704
        %v710 = vrot.slane %v709, 4
        %v712 = vshll.u32 %v591, 16
        %v714 = vrot.slane %v712, 5
        %v715 = vsel %vm621, %v710, %v714
        %v716 = vshrl.u32 %v591, 16
        %v718 = vrot.slane %v716, 4
        %v719 = vor.u32 %v718, %v714
        %v720 = vrot.slane %v719, 4
        %v722 = vshll.u32 %v592, 16
        %v724 = vrot.slane %v722, 5
        %v725 = vsel %vm621, %v720, %v724
        %v726 = vshrl.u32 %v592, 16
        %v728 = vrot.slane %v726, 4
        %v729 = vor.u32 %v728, %v724
        %v730 = vrot.slane %v729, 4
        %v732 = vshll.u32 %v593, 16
        %v734 = vrot.slane %v732, 5
        %v735 = vsel %vm621, %v730, %v734
        %v736 = vshrl.u32 %v593, 16
        %v738 = vrot.slane %v736, 4
        %v739 = vor.u32 %v738, %v734
        %v740 = vrot.slane %v739, 4
        %v742 = vshll.u32 %v594, 16
        %v744 = vrot.slane %v742, 5
        %v745 = vsel %vm621, %v740, %v744
        %v746 = vshrl.u32 %v594, 16
        %v748 = vrot.slane %v746, 4
        %v749 = vor.u32 %v748, %v744
        %v750 = vrot.slane %v749, 4
        %v752 = vshll.u32 %v595, 16
        %v754 = vrot.slane %v752, 5
        %v755 = vsel %vm621, %v750, %v754
        %v756 = vshrl.u32 %v595, 16
        %v758 = vrot.slane %v756, 4
        %v759 = vor.u32 %v758, %v754
        %v760 = vrot.slane %v759, 4
        %v762 = vshll.u32 %v596, 16
        %v764 = vrot.slane %v762, 5
        %v765 = vsel %vm621, %v760, %v764
        %v766 = vshrl.u32 %v596, 16
        %v768 = vrot.slane %v766, 4
        %v769 = vor.u32 %v768, %v764
        %v770 = vrot.slane %v769, 4
        %v772 = vshll.u32 %v597, 16
        %v774 = vrot.slane %v772, 5
        %v775 = vsel %vm621, %v770, %v774
        %v776 = vshrl.u32 %v597, 16
        %v778 = vrot.slane %v776, 4
        %v779 = vor.u32 %v778, %v774
        %v780 = vrot.slane %v779, 4
        %v782 = vshll.u32 %v598, 16
        %v784 = vrot.slane %v782, 5
        %v785 = vsel %vm621, %v780, %v784
        %v786 = vshrl.u32 %v598, 16
        %v788 = vrot.slane %v786, 4
        %v789 = vor.u32 %v788, %v784
        %v790 = vrot.slane %v789, 4
        %v792 = vshll.u32 %v599, 16
        %v794 = vrot.slane %v792, 5
        %v795 = vsel %vm621, %v790, %v794
        %v796 = vshrl.u32 %v599, 16
        %v798 = vrot.slane %v796, 4
        %v799 = vor.u32 %v798, %v794
        %v800 = vrot.slane %v799, 4
        %v802 = vshll.u32 %v600, 16
        %v804 = vrot.slane %v802, 5
        %v805 = vsel %vm621, %v800, %v804
        %v806 = vshrl.u32 %v600, 16
        %v808 = vrot.slane %v806, 4
        %v809 = vor.u32 %v808, %v804
        %v810 = vrot.slane %v809, 4
        %v812 = vshll.u32 %v601, 16
        %v814 = vrot.slane %v812, 5
        %v815 = vsel %vm621, %v810, %v814
        %v816 = vshrl.u32 %v601, 16
        %v818 = vrot.slane %v816, 4
        %v819 = vor.u32 %v818, %v814
        %v820 = vrot.slane %v819, 4
        %v822 = vshll.u32 %v602, 16
        %v824 = vrot.slane %v822, 5
        %v825 = vsel %vm621, %v820, %v824
        %v826 = vshrl.u32 %v602, 16
        %v828 = vrot.slane %v826, 4
        %v829 = vor.u32 %v828, %v824
        %v830 = vrot.slane %v829, 4
        %v832 = vshll.u32 %v603, 16
        %v834 = vrot.slane %v832, 5
        %v835 = vsel %vm621, %v830, %v834
        %v836 = vshrl.u32 %v603, 16
        %v838 = vrot.slane %v836, 4
        %v839 = vor.u32 %v838, %v834
        %v840 = vrot.slane %v839, 4
        %v842 = vshll.u32 %v604, 16
        %v844 = vrot.slane %v842, 5
        %v845 = vsel %vm621, %v840, %v844
        %v846 = vshrl.u32 %v604, 16
        %v848 = vrot.slane %v846, 4
        %v849 = vor.u32 %v848, %v844
        %v850 = vrot.slane %v849, 4
        %v852 = vshll.u32 %v605, 16
        %v854 = vrot.slane %v852, 5
        %v855 = vsel %vm621, %v850, %v854
        %v856 = vshrl.u32 %v605, 16
        %v858 = vrot.slane %v856, 4
        %v859 = vor.u32 %v858, %v854
        %v860 = vrot.slane %v859, 4
        %v862 = vshll.u32 %v606, 16
        %v864 = vrot.slane %v862, 5
        %v865 = vsel %vm621, %v860, %v864
        %v866 = vshrl.u32 %v606, 16
        %v868 = vrot.slane %v866, 4
        %v869 = vor.u32 %v868, %v864
        %v870 = vrot.slane %v869, 4
        %v872 = vshll.u32 %v607, 16
        %v874 = vrot.slane %v872, 5
        %v875 = vsel %vm621, %v870, %v874
        %v876 = vshrl.u32 %v607, 16
        %v878 = vrot.slane %v876, 4
        %v879 = vor.u32 %v878, %v874
        %v880 = vrot.slane %v879, 4
        %v882 = vshll.u32 %v608, 16
        %v884 = vrot.slane %v882, 5
        %v885 = vsel %vm621, %v880, %v884
        %v886 = vshrl.u32 %v608, 16
        %v888 = vrot.slane %v886, 4
        %v889 = vor.u32 %v888, %v884
        %v890 = vrot.slane %v889, 4
        %v892 = vshll.u32 %v609, 16
        %v894 = vrot.slane %v892, 5
        %v895 = vsel %vm621, %v890, %v894
        %v896 = vshrl.u32 %v609, 16
        %v898 = vrot.slane %v896, 4
        %v899 = vor.u32 %v898, %v894
        %v900 = vrot.slane %v899, 4
        %v902 = vshll.u32 %v610, 16
        %v904 = vrot.slane %v902, 5
        %v905 = vsel %vm621, %v900, %v904
        %v906 = vshrl.u32 %v610, 16
        %v908 = vrot.slane %v906, 4
        %v909 = vor.u32 %v908, %v904
        %v910 = vrot.slane %v909, 4
        %v912 = vshll.u32 %v611, 16
        %v914 = vrot.slane %v912, 5
        %v915 = vsel %vm621, %v910, %v914
        %v916 = vshrl.u32 %v611, 16
        %v918 = vrot.slane %v916, 4
        %v919 = vor.u32 %v918, %v914
        %v920 = vrot.slane %v919, 4
        %v922 = vshll.u32 %v612, 16
        %v924 = vrot.slane %v922, 5
        %v925 = vsel %vm621, %v920, %v924
        %v926 = vshrl.u32 %v612, 16
        %v928 = vrot.slane %v926, 4
        %v929 = vor.u32 %v928, %v924
        %v930 = vrot.slane %v929, 4
        %v932 = vshll.u32 %v613, 16
        %v934 = vrot.slane %v932, 5
        %v935 = vsel %vm621, %v930, %v934
        %v936 = vshrl.u32 %v613, 16
        %v938 = vrot.slane %v936, 4
        %v939 = vor.u32 %v938, %v934
        %v940 = vrot.slane %v939, 4
        %v942 = vshll.u32 %v614, 16
        %v944 = vrot.slane %v942, 5
        %v945 = vsel %vm621, %v940, %v944
        %v946 = vshrl.u32 %v614, 16
        %v948 = vrot.slane %v946, 4
        %v949 = vor.u32 %v948, %v944
        %v950 = vrot.slane %v949, 4
        %v952 = vshll.u32 %v615, 16
        %v954 = vrot.slane %v952, 5
        %v955 = vsel %vm621, %v950, %v954
        %v956 = vshrl.u32 %v615, 16
        %v958 = vrot.slane %v956, 4
        %v959 = vor.u32 %v958, %v954
        %v960 = vrot.slane %v959, 4
        %v962 = vshll.u32 %v616, 16
        %v964 = vrot.slane %v962, 5
        %v965 = vsel %vm621, %v960, %v964
        %v966 = vshrl.u32 %v616, 16
        %v968 = vrot.slane %v966, 4
        %v969 = vor.u32 %v968, %v964
        %v970 = vrot.slane %v969, 4
        %v972 = vshll.u32 %v617, 16
        %v974 = vrot.slane %v972, 5
        %v975 = vsel %vm621, %v970, %v974
        %v976 = vshrl.u32 %v617, 16
        %v978 = vrot.slane %v976, 4
        %v979 = vor.u32 %v978, %v974
        %v980 = vrot.slane %v979, 4
        %v982 = vshll.u32 %v618, 16
        %v984 = vrot.slane %v982, 5
        %v985 = vsel %vm621, %v980, %v984
        %986 = vrot.lane.b32.xlu0 %v635, 8
        %v987 = vpop.permute.xlu0 %986
        %988 = vrot.lane.b32.xlu0 %v645, 8
        %v989 = vpop.permute.xlu0 %988
        %990 = vrot.lane.b32.xlu0 %v655, 8
        %v991 = vpop.permute.xlu0 %990
        %992 = vrot.lane.b32.xlu0 %v665, 8
        %v993 = vpop.permute.xlu0 %992
        %994 = vrot.lane.b32.xlu0 %v675, 8
        %v995 = vpop.permute.xlu0 %994
        %996 = vrot.lane.b32.xlu0 %v685, 8
        %v997 = vpop.permute.xlu0 %996
        %998 = vrot.lane.b32.xlu0 %v695, 8
        %v999 = vpop.permute.xlu0 %998
        %1000 = vrot.lane.b32.xlu0 %v705, 8
        %v1001 = vpop.permute.xlu0 %1000
        %1002 = vrot.lane.b32.xlu0 %v715, 8
        %v1003 = vpop.permute.xlu0 %1002
        %1004 = vrot.lane.b32.xlu0 %v725, 8
        %v1005 = vpop.permute.xlu0 %1004
        %1006 = vrot.lane.b32.xlu0 %v735, 8
        %v1007 = vpop.permute.xlu0 %1006
        %1008 = vrot.lane.b32.xlu0 %v745, 8
        %v1009 = vpop.permute.xlu0 %1008
        %1010 = vrot.lane.b32.xlu0 %v755, 8
        %v1011 = vpop.permute.xlu0 %1010
        %1012 = vrot.lane.b32.xlu0 %v765, 8
        %v1013 = vpop.permute.xlu0 %1012
        %1014 = vrot.lane.b32.xlu0 %v775, 8
        %v1015 = vpop.permute.xlu0 %1014
        %1016 = vrot.lane.b32.xlu0 %v785, 8
        %v1017 = vpop.permute.xlu0 %1016
        %1018 = vrot.lane.b32.xlu0 %v795, 8
        %v1019 = vpop.permute.xlu0 %1018
        %1020 = vrot.lane.b32.xlu0 %v805, 8
        %v1021 = vpop.permute.xlu0 %1020
        %1022 = vrot.lane.b32.xlu0 %v815, 8
        %v1023 = vpop.permute.xlu0 %1022
        %1024 = vrot.lane.b32.xlu0 %v825, 8
        %v1025 = vpop.permute.xlu0 %1024
        %1026 = vrot.lane.b32.xlu0 %v835, 8
        %v1027 = vpop.permute.xlu0 %1026
        %1028 = vrot.lane.b32.xlu0 %v845, 8
        %v1029 = vpop.permute.xlu0 %1028
        %1030 = vrot.lane.b32.xlu0 %v855, 8
        %v1031 = vpop.permute.xlu0 %1030
        %1032 = vrot.lane.b32.xlu0 %v865, 8
        %v1033 = vpop.permute.xlu0 %1032
        %1034 = vrot.lane.b32.xlu0 %v875, 8
        %v1035 = vpop.permute.xlu0 %1034
        %1036 = vrot.lane.b32.xlu0 %v885, 8
        %v1037 = vpop.permute.xlu0 %1036
        %1038 = vrot.lane.b32.xlu0 %v895, 8
        %v1039 = vpop.permute.xlu0 %1038
        %1040 = vrot.lane.b32.xlu0 %v905, 8
        %v1041 = vpop.permute.xlu0 %1040
        %1042 = vrot.lane.b32.xlu0 %v915, 8
        %v1043 = vpop.permute.xlu0 %1042
        %1044 = vrot.lane.b32.xlu0 %v925, 8
        %v1045 = vpop.permute.xlu0 %1044
        %1046 = vrot.lane.b32.xlu0 %v935, 8
        %v1047 = vpop.permute.xlu0 %1046
        %1048 = vrot.lane.b32.xlu0 %v945, 8
        %v1049 = vpop.permute.xlu0 %1048
        %1050 = vrot.lane.b32.xlu0 %v955, 8
        %v1051 = vpop.permute.xlu0 %1050
        %1052 = vrot.lane.b32.xlu0 %v965, 8
        %v1053 = vpop.permute.xlu0 %1052
        %1054 = vrot.lane.b32.xlu0 %v975, 8
        %v1055 = vpop.permute.xlu0 %1054
        %1056 = vrot.lane.b32.xlu0 %v985, 8
        %v1057 = vpop.permute.xlu0 %1056
        %vm1094 = vcmask 126016
        %1095 = vst.msk [vmem:[#allocation2] sm:$0xf] %vm1094, %v987
        %1096 = vst.msk [vmem:[#allocation2 + $0x4] sm:$0xf] %vm1094, %v989
        %1097 = vst.msk [vmem:[#allocation2 + $0x8] sm:$0xf] %vm1094, %v991
        %1098 = vst.msk [vmem:[#allocation2 + $0xc] sm:$0xf] %vm1094, %v993
        %1099 = vst.msk [vmem:[#allocation2 + $0x10] sm:$0xf] %vm1094, %v995
        %1100 = vst.msk [vmem:[#allocation2 + $0x14] sm:$0xf] %vm1094, %v997
        %1101 = vst.msk [vmem:[#allocation2 + $0x18] sm:$0xf] %vm1094, %v999
        %1102 = vst.msk [vmem:[#allocation2 + $0x1c] sm:$0xf] %vm1094, %v1001
        %1103 = vst.msk [vmem:[#allocation2 + $0x20] sm:$0xf] %vm1094, %v1003
        %1104 = vst.msk [vmem:[#allocation2 + $0x24] sm:$0xf] %vm1094, %v1005
        %1105 = vst.msk [vmem:[#allocation2 + $0x28] sm:$0xf] %vm1094, %v1007
        %1106 = vst.msk [vmem:[#allocation2 + $0x2c] sm:$0xf] %vm1094, %v1009
        %1107 = vst.msk [vmem:[#allocation2 + $0x30] sm:$0xf] %vm1094, %v1011
        %1108 = vst.msk [vmem:[#allocation2 + $0x34] sm:$0xf] %vm1094, %v1013
        %1109 = vst.msk [vmem:[#allocation2 + $0x38] sm:$0xf] %vm1094, %v1015
        %1110 = vst.msk [vmem:[#allocation2 + $0x3c] sm:$0xf] %vm1094, %v1017
        %1111 = vst.msk [vmem:[#allocation2 + $0x40] sm:$0xf] %vm1094, %v1019
        %1112 = vst.msk [vmem:[#allocation2 + $0x44] sm:$0xf] %vm1094, %v1021
        %1113 = vst.msk [vmem:[#allocation2 + $0x48] sm:$0xf] %vm1094, %v1023
        %1114 = vst.msk [vmem:[#allocation2 + $0x4c] sm:$0xf] %vm1094, %v1025
        %1115 = vst.msk [vmem:[#allocation2 + $0x50] sm:$0xf] %vm1094, %v1027
        %1116 = vst.msk [vmem:[#allocation2 + $0x54] sm:$0xf] %vm1094, %v1029
        %1117 = vst.msk [vmem:[#allocation2 + $0x58] sm:$0xf] %vm1094, %v1031
        %1118 = vst.msk [vmem:[#allocation2 + $0x5c] sm:$0xf] %vm1094, %v1033
        %1119 = vst.msk [vmem:[#allocation2 + $0x60] sm:$0xf] %vm1094, %v1035
        %1120 = vst.msk [vmem:[#allocation2 + $0x64] sm:$0xf] %vm1094, %v1037
        %1121 = vst.msk [vmem:[#allocation2 + $0x68] sm:$0xf] %vm1094, %v1039
        %1122 = vst.msk [vmem:[#allocation2 + $0x6c] sm:$0xf] %vm1094, %v1041
        %1123 = vst.msk [vmem:[#allocation2 + $0x70] sm:$0xf] %vm1094, %v1043
        %1124 = vst.msk [vmem:[#allocation2 + $0x74] sm:$0xf] %vm1094, %v1045
        %1125 = vst.msk [vmem:[#allocation2 + $0x78] sm:$0xf] %vm1094, %v1047
        %1126 = vst.msk [vmem:[#allocation2 + $0x7c] sm:$0xf] %vm1094, %v1049
        %1127 = vst.msk [vmem:[#allocation2 + $0x80] sm:$0xf] %vm1094, %v1051
        %1128 = vst.msk [vmem:[#allocation2 + $0x84] sm:$0xf] %vm1094, %v1053
        %1129 = vst.msk [vmem:[#allocation2 + $0x88] sm:$0xf] %vm1094, %v1055
        %1130 = vst.msk [vmem:[#allocation2 + $0x8c] sm:$0xf] %vm1094, %v1057
        %v1131 = vld [vmem:[%s471] sm:$0xe]
        %v1132 = vld [vmem:[%s471 + $0x4] sm:$0xf]
        %v1133 = vld [vmem:[%s471 + $0x8] sm:$0xf]
        %v1134 = vld [vmem:[%s471 + $0xc] sm:$0xf]
        %v1135 = vld [vmem:[%s471 + $0x10] sm:$0xf]
        %v1136 = vld [vmem:[%s471 + $0x14] sm:$0xf]
        %v1137 = vld [vmem:[%s471 + $0x18] sm:$0xf]
        %v1138 = vld [vmem:[%s471 + $0x1c] sm:$0xf]
        %v1139 = vld [vmem:[%s471 + $0x20] sm:$0xf]
        %v1140 = vld [vmem:[%s471 + $0x24] sm:$0xf]
        %v1141 = vld [vmem:[%s471 + $0x28] sm:$0xf]
        %v1142 = vld [vmem:[%s471 + $0x2c] sm:$0xf]
        %v1143 = vld [vmem:[%s471 + $0x30] sm:$0xf]
        %v1144 = vld [vmem:[%s471 + $0x34] sm:$0xf]
        %v1145 = vld [vmem:[%s471 + $0x38] sm:$0xf]
        %v1146 = vld [vmem:[%s471 + $0x3c] sm:$0xf]
        %v1147 = vld [vmem:[%s471 + $0x40] sm:$0xf]
        %v1148 = vld [vmem:[%s471 + $0x44] sm:$0xf]
        %v1149 = vld [vmem:[%s471 + $0x48] sm:$0xf]
        %v1150 = vld [vmem:[%s471 + $0x4c] sm:$0xf]
        %v1151 = vld [vmem:[%s471 + $0x50] sm:$0xf]
        %v1152 = vld [vmem:[%s471 + $0x54] sm:$0xf]
        %v1153 = vld [vmem:[%s471 + $0x58] sm:$0xf]
        %v1154 = vld [vmem:[%s471 + $0x5c] sm:$0xf]
        %v1155 = vld [vmem:[%s471 + $0x60] sm:$0xf]
        %v1156 = vld [vmem:[%s471 + $0x64] sm:$0xf]
        %v1157 = vld [vmem:[%s471 + $0x68] sm:$0xf]
        %v1158 = vld [vmem:[%s471 + $0x6c] sm:$0xf]
        %v1159 = vld [vmem:[%s471 + $0x70] sm:$0xf]
        %v1160 = vld [vmem:[%s471 + $0x74] sm:$0xf]
        %v1161 = vld [vmem:[%s471 + $0x78] sm:$0xf]
        %v1162 = vld [vmem:[%s471 + $0x7c] sm:$0xf]
        %v1163 = vld [vmem:[%s471 + $0x80] sm:$0xf]
        %v1164 = vld [vmem:[%s471 + $0x84] sm:$0xf]
        %v1165 = vld [vmem:[%s471 + $0x88] sm:$0xf]
        %v1166 = vld [vmem:[%s471 + $0x8c] sm:$0xf]
        %v1167 = vld [vmem:[%s471 + $0x90] sm:$0x1]
        %vm1205 = vcmask 1042432
        %vm1206 = vcmask 1046532
        %vm1207 = vmor %vm1205, %vm1206
        %v1208 = vrot.slane %v1131, 5
        %v1209 = vrot.slane %v1208, 4
        %v1210 = vrot.slane %v1132, 5
        %v1211 = vsel %vm1207, %v1209, %v1210
        %v1212 = vrot.slane %v1210, 4
        %v1213 = vrot.slane %v1133, 5
        %v1214 = vsel %vm1207, %v1212, %v1213
        %v1215 = vrot.slane %v1213, 4
        %v1216 = vrot.slane %v1134, 5
        %v1217 = vsel %vm1207, %v1215, %v1216
        %v1218 = vrot.slane %v1216, 4
        %v1219 = vrot.slane %v1135, 5
        %v1220 = vsel %vm1207, %v1218, %v1219
        %v1221 = vrot.slane %v1219, 4
        %v1222 = vrot.slane %v1136, 5
        %v1223 = vsel %vm1207, %v1221, %v1222
        %v1224 = vrot.slane %v1222, 4
        %v1225 = vrot.slane %v1137, 5
        %v1226 = vsel %vm1207, %v1224, %v1225
        %v1227 = vrot.slane %v1225, 4
        %v1228 = vrot.slane %v1138, 5
        %v1229 = vsel %vm1207, %v1227, %v1228
        %v1230 = vrot.slane %v1228, 4
        %v1231 = vrot.slane %v1139, 5
        %v1232 = vsel %vm1207, %v1230, %v1231
        %v1233 = vrot.slane %v1231, 4
        %v1234 = vrot.slane %v1140, 5
        %v1235 = vsel %vm1207, %v1233, %v1234
        %v1236 = vrot.slane %v1234, 4
        %v1237 = vrot.slane %v1141, 5
        %v1238 = vsel %vm1207, %v1236, %v1237
        %v1239 = vrot.slane %v1237, 4
        %v1240 = vrot.slane %v1142, 5
        %v1241 = vsel %vm1207, %v1239, %v1240
        %v1242 = vrot.slane %v1240, 4
        %v1243 = vrot.slane %v1143, 5
        %v1244 = vsel %vm1207, %v1242, %v1243
        %v1245 = vrot.slane %v1243, 4
        %v1246 = vrot.slane %v1144, 5
        %v1247 = vsel %vm1207, %v1245, %v1246
        %v1248 = vrot.slane %v1246, 4
        %v1249 = vrot.slane %v1145, 5
        %v1250 = vsel %vm1207, %v1248, %v1249
        %v1251 = vrot.slane %v1249, 4
        %v1252 = vrot.slane %v1146, 5
        %v1253 = vsel %vm1207, %v1251, %v1252
        %v1254 = vrot.slane %v1252, 4
        %v1255 = vrot.slane %v1147, 5
        %v1256 = vsel %vm1207, %v1254, %v1255
        %v1257 = vrot.slane %v1255, 4
        %v1258 = vrot.slane %v1148, 5
        %v1259 = vsel %vm1207, %v1257, %v1258
        %v1260 = vrot.slane %v1258, 4
        %v1261 = vrot.slane %v1149, 5
        %v1262 = vsel %vm1207, %v1260, %v1261
        %v1263 = vrot.slane %v1261, 4
        %v1264 = vrot.slane %v1150, 5
        %v1265 = vsel %vm1207, %v1263, %v1264
        %v1266 = vrot.slane %v1264, 4
        %v1267 = vrot.slane %v1151, 5
        %v1268 = vsel %vm1207, %v1266, %v1267
        %v1269 = vrot.slane %v1267, 4
        %v1270 = vrot.slane %v1152, 5
        %v1271 = vsel %vm1207, %v1269, %v1270
        %v1272 = vrot.slane %v1270, 4
        %v1273 = vrot.slane %v1153, 5
        %v1274 = vsel %vm1207, %v1272, %v1273
        %v1275 = vrot.slane %v1273, 4
        %v1276 = vrot.slane %v1154, 5
        %v1277 = vsel %vm1207, %v1275, %v1276
        %v1278 = vrot.slane %v1276, 4
        %v1279 = vrot.slane %v1155, 5
        %v1280 = vsel %vm1207, %v1278, %v1279
        %v1281 = vrot.slane %v1279, 4
        %v1282 = vrot.slane %v1156, 5
        %v1283 = vsel %vm1207, %v1281, %v1282
        %v1284 = vrot.slane %v1282, 4
        %v1285 = vrot.slane %v1157, 5
        %v1286 = vsel %vm1207, %v1284, %v1285
        %v1287 = vrot.slane %v1285, 4
        %v1288 = vrot.slane %v1158, 5
        %v1289 = vsel %vm1207, %v1287, %v1288
        %v1290 = vrot.slane %v1288, 4
        %v1291 = vrot.slane %v1159, 5
        %v1292 = vsel %vm1207, %v1290, %v1291
        %v1293 = vrot.slane %v1291, 4
        %v1294 = vrot.slane %v1160, 5
        %v1295 = vsel %vm1207, %v1293, %v1294
        %v1296 = vrot.slane %v1294, 4
        %v1297 = vrot.slane %v1161, 5
        %v1298 = vsel %vm1207, %v1296, %v1297
        %v1299 = vrot.slane %v1297, 4
        %v1300 = vrot.slane %v1162, 5
        %v1301 = vsel %vm1207, %v1299, %v1300
        %v1302 = vrot.slane %v1300, 4
        %v1303 = vrot.slane %v1163, 5
        %v1304 = vsel %vm1207, %v1302, %v1303
        %v1305 = vrot.slane %v1303, 4
        %v1306 = vrot.slane %v1164, 5
        %v1307 = vsel %vm1207, %v1305, %v1306
        %v1308 = vrot.slane %v1306, 4
        %v1309 = vrot.slane %v1165, 5
        %v1310 = vsel %vm1207, %v1308, %v1309
        %v1311 = vrot.slane %v1309, 4
        %v1312 = vrot.slane %v1166, 5
        %v1313 = vsel %vm1207, %v1311, %v1312
        %v1314 = vrot.slane %v1312, 4
        %v1315 = vrot.slane %v1167, 5
        %v1316 = vsel %vm1207, %v1314, %v1315
        %1317 = vrot.lane.b32.xlu0 %v1211, 16
        %v1318 = vpop.permute.xlu0 %1317
        %1319 = vrot.lane.b32.xlu0 %v1214, 16
        %v1320 = vpop.permute.xlu0 %1319
        %1321 = vrot.lane.b32.xlu0 %v1217, 16
        %v1322 = vpop.permute.xlu0 %1321
        %1323 = vrot.lane.b32.xlu0 %v1220, 16
        %v1324 = vpop.permute.xlu0 %1323
        %1325 = vrot.lane.b32.xlu0 %v1223, 16
        %v1326 = vpop.permute.xlu0 %1325
        %1327 = vrot.lane.b32.xlu0 %v1226, 16
        %v1328 = vpop.permute.xlu0 %1327
        %1329 = vrot.lane.b32.xlu0 %v1229, 16
        %v1330 = vpop.permute.xlu0 %1329
        %1331 = vrot.lane.b32.xlu0 %v1232, 16
        %v1332 = vpop.permute.xlu0 %1331
        %1333 = vrot.lane.b32.xlu0 %v1235, 16
        %v1334 = vpop.permute.xlu0 %1333
        %1335 = vrot.lane.b32.xlu0 %v1238, 16
        %v1336 = vpop.permute.xlu0 %1335
        %1337 = vrot.lane.b32.xlu0 %v1241, 16
        %v1338 = vpop.permute.xlu0 %1337
        %1339 = vrot.lane.b32.xlu0 %v1244, 16
        %v1340 = vpop.permute.xlu0 %1339
        %1341 = vrot.lane.b32.xlu0 %v1247, 16
        %v1342 = vpop.permute.xlu0 %1341
        %1343 = vrot.lane.b32.xlu0 %v1250, 16
        %v1344 = vpop.permute.xlu0 %1343
        %1345 = vrot.lane.b32.xlu0 %v1253, 16
        %v1346 = vpop.permute.xlu0 %1345
        %1347 = vrot.lane.b32.xlu0 %v1256, 16
        %v1348 = vpop.permute.xlu0 %1347
        %1349 = vrot.lane.b32.xlu0 %v1259, 16
        %v1350 = vpop.permute.xlu0 %1349
        %1351 = vrot.lane.b32.xlu0 %v1262, 16
        %v1352 = vpop.permute.xlu0 %1351
        %1353 = vrot.lane.b32.xlu0 %v1265, 16
        %v1354 = vpop.permute.xlu0 %1353
        %1355 = vrot.lane.b32.xlu0 %v1268, 16
        %v1356 = vpop.permute.xlu0 %1355
        %1357 = vrot.lane.b32.xlu0 %v1271, 16
        %v1358 = vpop.permute.xlu0 %1357
        %1359 = vrot.lane.b32.xlu0 %v1274, 16
        %v1360 = vpop.permute.xlu0 %1359
        %1361 = vrot.lane.b32.xlu0 %v1277, 16
        %v1362 = vpop.permute.xlu0 %1361
        %1363 = vrot.lane.b32.xlu0 %v1280, 16
        %v1364 = vpop.permute.xlu0 %1363
        %1365 = vrot.lane.b32.xlu0 %v1283, 16
        %v1366 = vpop.permute.xlu0 %1365
        %1367 = vrot.lane.b32.xlu0 %v1286, 16
        %v1368 = vpop.permute.xlu0 %1367
        %1369 = vrot.lane.b32.xlu0 %v1289, 16
        %v1370 = vpop.permute.xlu0 %1369
        %1371 = vrot.lane.b32.xlu0 %v1292, 16
        %v1372 = vpop.permute.xlu0 %1371
        %1373 = vrot.lane.b32.xlu0 %v1295, 16
        %v1374 = vpop.permute.xlu0 %1373
        %1375 = vrot.lane.b32.xlu0 %v1298, 16
        %v1376 = vpop.permute.xlu0 %1375
        %1377 = vrot.lane.b32.xlu0 %v1301, 16
        %v1378 = vpop.permute.xlu0 %1377
        %1379 = vrot.lane.b32.xlu0 %v1304, 16
        %v1380 = vpop.permute.xlu0 %1379
        %1381 = vrot.lane.b32.xlu0 %v1307, 16
        %v1382 = vpop.permute.xlu0 %1381
        %1383 = vrot.lane.b32.xlu0 %v1310, 16
        %v1384 = vpop.permute.xlu0 %1383
        %1385 = vrot.lane.b32.xlu0 %v1313, 16
        %v1386 = vpop.permute.xlu0 %1385
        %1387 = vrot.lane.b32.xlu0 %v1316, 16
        %v1388 = vpop.permute.xlu0 %1387
        %vm1425 = vcmask 191616
        %1426 = vst.msk [vmem:[#allocation2] sm:$0xf] %vm1425, %v1318
        %1427 = vst.msk [vmem:[#allocation2 + $0x4] sm:$0xf] %vm1425, %v1320
        %1428 = vst.msk [vmem:[#allocation2 + $0x8] sm:$0xf] %vm1425, %v1322
        %1429 = vst.msk [vmem:[#allocation2 + $0xc] sm:$0xf] %vm1425, %v1324
        %1430 = vst.msk [vmem:[#allocation2 + $0x10] sm:$0xf] %vm1425, %v1326
        %1431 = vst.msk [vmem:[#allocation2 + $0x14] sm:$0xf] %vm1425, %v1328
        %1432 = vst.msk [vmem:[#allocation2 + $0x18] sm:$0xf] %vm1425, %v1330
        %1433 = vst.msk [vmem:[#allocation2 + $0x1c] sm:$0xf] %vm1425, %v1332
        %1434 = vst.msk [vmem:[#allocation2 + $0x20] sm:$0xf] %vm1425, %v1334
        %1435 = vst.msk [vmem:[#allocation2 + $0x24] sm:$0xf] %vm1425, %v1336
        %1436 = vst.msk [vmem:[#allocation2 + $0x28] sm:$0xf] %vm1425, %v1338
        %1437 = vst.msk [vmem:[#allocation2 + $0x2c] sm:$0xf] %vm1425, %v1340
        %1438 = vst.msk [vmem:[#allocation2 + $0x30] sm:$0xf] %vm1425, %v1342
        %1439 = vst.msk [vmem:[#allocation2 + $0x34] sm:$0xf] %vm1425, %v1344
        %1440 = vst.msk [vmem:[#allocation2 + $0x38] sm:$0xf] %vm1425, %v1346
        %1441 = vst.msk [vmem:[#allocation2 + $0x3c] sm:$0xf] %vm1425, %v1348
        %1442 = vst.msk [vmem:[#allocation2 + $0x40] sm:$0xf] %vm1425, %v1350
        %1443 = vst.msk [vmem:[#allocation2 + $0x44] sm:$0xf] %vm1425, %v1352
        %1444 = vst.msk [vmem:[#allocation2 + $0x48] sm:$0xf] %vm1425, %v1354
        %1445 = vst.msk [vmem:[#allocation2 + $0x4c] sm:$0xf] %vm1425, %v1356
        %1446 = vst.msk [vmem:[#allocation2 + $0x50] sm:$0xf] %vm1425, %v1358
        %1447 = vst.msk [vmem:[#allocation2 + $0x54] sm:$0xf] %vm1425, %v1360
        %1448 = vst.msk [vmem:[#allocation2 + $0x58] sm:$0xf] %vm1425, %v1362
        %1449 = vst.msk [vmem:[#allocation2 + $0x5c] sm:$0xf] %vm1425, %v1364
        %1450 = vst.msk [vmem:[#allocation2 + $0x60] sm:$0xf] %vm1425, %v1366
        %1451 = vst.msk [vmem:[#allocation2 + $0x64] sm:$0xf] %vm1425, %v1368
        %1452 = vst.msk [vmem:[#allocation2 + $0x68] sm:$0xf] %vm1425, %v1370
        %1453 = vst.msk [vmem:[#allocation2 + $0x6c] sm:$0xf] %vm1425, %v1372
        %1454 = vst.msk [vmem:[#allocation2 + $0x70] sm:$0xf] %vm1425, %v1374
        %1455 = vst.msk [vmem:[#allocation2 + $0x74] sm:$0xf] %vm1425, %v1376
        %1456 = vst.msk [vmem:[#allocation2 + $0x78] sm:$0xf] %vm1425, %v1378
        %1457 = vst.msk [vmem:[#allocation2 + $0x7c] sm:$0xf] %vm1425, %v1380
        %1458 = vst.msk [vmem:[#allocation2 + $0x80] sm:$0xf] %vm1425, %v1382
        %1459 = vst.msk [vmem:[#allocation2 + $0x84] sm:$0xf] %vm1425, %v1384
        %1460 = vst.msk [vmem:[#allocation2 + $0x88] sm:$0xf] %vm1425, %v1386
        %1461 = vst.msk [vmem:[#allocation2 + $0x8c] sm:$0xf] %vm1425, %v1388
        %v1462 = vld [vmem:[%s471 + $0x8] sm:$0xe]
        %v1463 = vld [vmem:[%s471 + $0xc] sm:$0xf]
        %v1464 = vld [vmem:[%s471 + $0x10] sm:$0xf]
        %v1465 = vld [vmem:[%s471 + $0x14] sm:$0xf]
        %v1466 = vld [vmem:[%s471 + $0x18] sm:$0xf]
        %v1467 = vld [vmem:[%s471 + $0x1c] sm:$0xf]
        %v1468 = vld [vmem:[%s471 + $0x20] sm:$0xf]
        %v1469 = vld [vmem:[%s471 + $0x24] sm:$0xf]
        %v1470 = vld [vmem:[%s471 + $0x28] sm:$0xf]
        %v1471 = vld [vmem:[%s471 + $0x2c] sm:$0xf]
        %v1472 = vld [vmem:[%s471 + $0x30] sm:$0xf]
        %v1473 = vld [vmem:[%s471 + $0x34] sm:$0xf]
        %v1474 = vld [vmem:[%s471 + $0x38] sm:$0xf]
        %v1475 = vld [vmem:[%s471 + $0x3c] sm:$0xf]
        %v1476 = vld [vmem:[%s471 + $0x40] sm:$0xf]
        %v1477 = vld [vmem:[%s471 + $0x44] sm:$0xf]
        %v1478 = vld [vmem:[%s471 + $0x48] sm:$0xf]
        %v1479 = vld [vmem:[%s471 + $0x4c] sm:$0xf]
        %v1480 = vld [vmem:[%s471 + $0x50] sm:$0xf]
        %v1481 = vld [vmem:[%s471 + $0x54] sm:$0xf]
        %v1482 = vld [vmem:[%s471 + $0x58] sm:$0xf]
        %v1483 = vld [vmem:[%s471 + $0x5c] sm:$0xf]
        %v1484 = vld [vmem:[%s471 + $0x60] sm:$0xf]
        %v1485 = vld [vmem:[%s471 + $0x64] sm:$0xf]
        %v1486 = vld [vmem:[%s471 + $0x68] sm:$0xf]
        %v1487 = vld [vmem:[%s471 + $0x6c] sm:$0xf]
        %v1488 = vld [vmem:[%s471 + $0x70] sm:$0xf]
        %v1489 = vld [vmem:[%s471 + $0x74] sm:$0xf]
        %v1490 = vld [vmem:[%s471 + $0x78] sm:$0xf]
        %v1491 = vld [vmem:[%s471 + $0x7c] sm:$0xf]
        %v1492 = vld [vmem:[%s471 + $0x80] sm:$0xf]
        %v1493 = vld [vmem:[%s471 + $0x84] sm:$0xf]
        %v1494 = vld [vmem:[%s471 + $0x88] sm:$0xf]
        %v1495 = vld [vmem:[%s471 + $0x8c] sm:$0xf]
        %v1496 = vld [vmem:[%s471 + $0x90] sm:$0xf]
        %v1497 = vld [vmem:[%s471 + $0x94] sm:$0xf]
        %v1498 = vld [vmem:[%s471 + $0x98] sm:$0x1]
        %v1536 = vrot.slane %v1462, 5
        %v1537 = vrot.slane %v1536, 4
        %v1538 = vrot.slane %v1463, 5
        %v1539 = vsel %vm1207, %v1537, %v1538
        %v1540 = vrot.slane %v1538, 4
        %v1541 = vrot.slane %v1464, 5
        %v1542 = vsel %vm1207, %v1540, %v1541
        %v1543 = vrot.slane %v1541, 4
        %v1544 = vrot.slane %v1465, 5
        %v1545 = vsel %vm1207, %v1543, %v1544
        %v1546 = vrot.slane %v1544, 4
        %v1547 = vrot.slane %v1466, 5
        %v1548 = vsel %vm1207, %v1546, %v1547
        %v1549 = vrot.slane %v1547, 4
        %v1550 = vrot.slane %v1467, 5
        %v1551 = vsel %vm1207, %v1549, %v1550
        %v1552 = vrot.slane %v1550, 4
        %v1553 = vrot.slane %v1468, 5
        %v1554 = vsel %vm1207, %v1552, %v1553
        %v1555 = vrot.slane %v1553, 4
        %v1556 = vrot.slane %v1469, 5
        %v1557 = vsel %vm1207, %v1555, %v1556
        %v1558 = vrot.slane %v1556, 4
        %v1559 = vrot.slane %v1470, 5
        %v1560 = vsel %vm1207, %v1558, %v1559
        %v1561 = vrot.slane %v1559, 4
        %v1562 = vrot.slane %v1471, 5
        %v1563 = vsel %vm1207, %v1561, %v1562
        %v1564 = vrot.slane %v1562, 4
        %v1565 = vrot.slane %v1472, 5
        %v1566 = vsel %vm1207, %v1564, %v1565
        %v1567 = vrot.slane %v1565, 4
        %v1568 = vrot.slane %v1473, 5
        %v1569 = vsel %vm1207, %v1567, %v1568
        %v1570 = vrot.slane %v1568, 4
        %v1571 = vrot.slane %v1474, 5
        %v1572 = vsel %vm1207, %v1570, %v1571
        %v1573 = vrot.slane %v1571, 4
        %v1574 = vrot.slane %v1475, 5
        %v1575 = vsel %vm1207, %v1573, %v1574
        %v1576 = vrot.slane %v1574, 4
        %v1577 = vrot.slane %v1476, 5
        %v1578 = vsel %vm1207, %v1576, %v1577
        %v1579 = vrot.slane %v1577, 4
        %v1580 = vrot.slane %v1477, 5
        %v1581 = vsel %vm1207, %v1579, %v1580
        %v1582 = vrot.slane %v1580, 4
        %v1583 = vrot.slane %v1478, 5
        %v1584 = vsel %vm1207, %v1582, %v1583
        %v1585 = vrot.slane %v1583, 4
        %v1586 = vrot.slane %v1479, 5
        %v1587 = vsel %vm1207, %v1585, %v1586
        %v1588 = vrot.slane %v1586, 4
        %v1589 = vrot.slane %v1480, 5
        %v1590 = vsel %vm1207, %v1588, %v1589
        %v1591 = vrot.slane %v1589, 4
        %v1592 = vrot.slane %v1481, 5
        %v1593 = vsel %vm1207, %v1591, %v1592
        %v1594 = vrot.slane %v1592, 4
        %v1595 = vrot.slane %v1482, 5
        %v1596 = vsel %vm1207, %v1594, %v1595
        %v1597 = vrot.slane %v1595, 4
        %v1598 = vrot.slane %v1483, 5
        %v1599 = vsel %vm1207, %v1597, %v1598
        %v1600 = vrot.slane %v1598, 4
        %v1601 = vrot.slane %v1484, 5
        %v1602 = vsel %vm1207, %v1600, %v1601
        %v1603 = vrot.slane %v1601, 4
        %v1604 = vrot.slane %v1485, 5
        %v1605 = vsel %vm1207, %v1603, %v1604
        %v1606 = vrot.slane %v1604, 4
        %v1607 = vrot.slane %v1486, 5
        %v1608 = vsel %vm1207, %v1606, %v1607
        %v1609 = vrot.slane %v1607, 4
        %v1610 = vrot.slane %v1487, 5
        %v1611 = vsel %vm1207, %v1609, %v1610
        %v1612 = vrot.slane %v1610, 4
        %v1613 = vrot.slane %v1488, 5
        %v1614 = vsel %vm1207, %v1612, %v1613
        %v1615 = vrot.slane %v1613, 4
        %v1616 = vrot.slane %v1489, 5
        %v1617 = vsel %vm1207, %v1615, %v1616
        %v1618 = vrot.slane %v1616, 4
        %v1619 = vrot.slane %v1490, 5
        %v1620 = vsel %vm1207, %v1618, %v1619
        %v1621 = vrot.slane %v1619, 4
        %v1622 = vrot.slane %v1491, 5
        %v1623 = vsel %vm1207, %v1621, %v1622
        %v1624 = vrot.slane %v1622, 4
        %v1625 = vrot.slane %v1492, 5
        %v1626 = vsel %vm1207, %v1624, %v1625
        %v1627 = vrot.slane %v1625, 4
        %v1628 = vrot.slane %v1493, 5
        %v1629 = vsel %vm1207, %v1627, %v1628
        %v1630 = vrot.slane %v1628, 4
        %v1631 = vrot.slane %v1494, 5
        %v1632 = vsel %vm1207, %v1630, %v1631
        %v1633 = vrot.slane %v1631, 4
        %v1634 = vrot.slane %v1495, 5
        %v1635 = vsel %vm1207, %v1633, %v1634
        %v1636 = vrot.slane %v1634, 4
        %v1637 = vrot.slane %v1496, 5
        %v1638 = vsel %vm1207, %v1636, %v1637
        %v1639 = vrot.slane %v1637, 4
        %v1640 = vrot.slane %v1497, 5
        %v1641 = vsel %vm1207, %v1639, %v1640
        %v1642 = vrot.slane %v1640, 4
        %v1643 = vrot.slane %v1498, 5
        %v1644 = vsel %vm1207, %v1642, %v1643
        %1645 = vrot.lane.b32.xlu0 %v1539, 24
        %v1646 = vpop.permute.xlu0 %1645
        %1647 = vrot.lane.b32.xlu0 %v1542, 24
        %v1648 = vpop.permute.xlu0 %1647
        %1649 = vrot.lane.b32.xlu0 %v1545, 24
        %v1650 = vpop.permute.xlu0 %1649
        %1651 = vrot.lane.b32.xlu0 %v1548, 24
        %v1652 = vpop.permute.xlu0 %1651
        %1653 = vrot.lane.b32.xlu0 %v1551, 24
        %v1654 = vpop.permute.xlu0 %1653
        %1655 = vrot.lane.b32.xlu0 %v1554, 24
        %v1656 = vpop.permute.xlu0 %1655
        %1657 = vrot.lane.b32.xlu0 %v1557, 24
        %v1658 = vpop.permute.xlu0 %1657
        %1659 = vrot.lane.b32.xlu0 %v1560, 24
        %v1660 = vpop.permute.xlu0 %1659
        %1661 = vrot.lane.b32.xlu0 %v1563, 24
        %v1662 = vpop.permute.xlu0 %1661
        %1663 = vrot.lane.b32.xlu0 %v1566, 24
        %v1664 = vpop.permute.xlu0 %1663
        %1665 = vrot.lane.b32.xlu0 %v1569, 24
        %v1666 = vpop.permute.xlu0 %1665
        %1667 = vrot.lane.b32.xlu0 %v1572, 24
        %v1668 = vpop.permute.xlu0 %1667
        %1669 = vrot.lane.b32.xlu0 %v1575, 24
        %v1670 = vpop.permute.xlu0 %1669
        %1671 = vrot.lane.b32.xlu0 %v1578, 24
        %v1672 = vpop.permute.xlu0 %1671
        %1673 = vrot.lane.b32.xlu0 %v1581, 24
        %v1674 = vpop.permute.xlu0 %1673
        %1675 = vrot.lane.b32.xlu0 %v1584, 24
        %v1676 = vpop.permute.xlu0 %1675
        %1677 = vrot.lane.b32.xlu0 %v1587, 24
        %v1678 = vpop.permute.xlu0 %1677
        %1679 = vrot.lane.b32.xlu0 %v1590, 24
        %v1680 = vpop.permute.xlu0 %1679
        %1681 = vrot.lane.b32.xlu0 %v1593, 24
        %v1682 = vpop.permute.xlu0 %1681
        %1683 = vrot.lane.b32.xlu0 %v1596, 24
        %v1684 = vpop.permute.xlu0 %1683
        %1685 = vrot.lane.b32.xlu0 %v1599, 24
        %v1686 = vpop.permute.xlu0 %1685
        %1687 = vrot.lane.b32.xlu0 %v1602, 24
        %v1688 = vpop.permute.xlu0 %1687
        %1689 = vrot.lane.b32.xlu0 %v1605, 24
        %v1690 = vpop.permute.xlu0 %1689
        %1691 = vrot.lane.b32.xlu0 %v1608, 24
        %v1692 = vpop.permute.xlu0 %1691
        %1693 = vrot.lane.b32.xlu0 %v1611, 24
        %v1694 = vpop.permute.xlu0 %1693
        %1695 = vrot.lane.b32.xlu0 %v1614, 24
        %v1696 = vpop.permute.xlu0 %1695
        %1697 = vrot.lane.b32.xlu0 %v1617, 24
        %v1698 = vpop.permute.xlu0 %1697
        %1699 = vrot.lane.b32.xlu0 %v1620, 24
        %v1700 = vpop.permute.xlu0 %1699
        %1701 = vrot.lane.b32.xlu0 %v1623, 24
        %v1702 = vpop.permute.xlu0 %1701
        %1703 = vrot.lane.b32.xlu0 %v1626, 24
        %v1704 = vpop.permute.xlu0 %1703
        %1705 = vrot.lane.b32.xlu0 %v1629, 24
        %v1706 = vpop.permute.xlu0 %1705
        %1707 = vrot.lane.b32.xlu0 %v1632, 24
        %v1708 = vpop.permute.xlu0 %1707
        %1709 = vrot.lane.b32.xlu0 %v1635, 24
        %v1710 = vpop.permute.xlu0 %1709
        %1711 = vrot.lane.b32.xlu0 %v1638, 24
        %v1712 = vpop.permute.xlu0 %1711
        %1713 = vrot.lane.b32.xlu0 %v1641, 24
        %v1714 = vpop.permute.xlu0 %1713
        %1715 = vrot.lane.b32.xlu0 %v1644, 24
        %v1716 = vpop.permute.xlu0 %1715
        %vm1753 = vcmask 257216
        %1754 = vst.msk [vmem:[#allocation2] sm:$0xf] %vm1753, %v1646
        %1755 = vst.msk [vmem:[#allocation2 + $0x4] sm:$0xf] %vm1753, %v1648
        %1756 = vst.msk [vmem:[#allocation2 + $0x8] sm:$0xf] %vm1753, %v1650
        %1757 = vst.msk [vmem:[#allocation2 + $0xc] sm:$0xf] %vm1753, %v1652
        %1758 = vst.msk [vmem:[#allocation2 + $0x10] sm:$0xf] %vm1753, %v1654
        %1759 = vst.msk [vmem:[#allocation2 + $0x14] sm:$0xf] %vm1753, %v1656
        %1760 = vst.msk [vmem:[#allocation2 + $0x18] sm:$0xf] %vm1753, %v1658
        %1761 = vst.msk [vmem:[#allocation2 + $0x1c] sm:$0xf] %vm1753, %v1660
        %1762 = vst.msk [vmem:[#allocation2 + $0x20] sm:$0xf] %vm1753, %v1662
        %1763 = vst.msk [vmem:[#allocation2 + $0x24] sm:$0xf] %vm1753, %v1664
        %1764 = vst.msk [vmem:[#allocation2 + $0x28] sm:$0xf] %vm1753, %v1666
        %1765 = vst.msk [vmem:[#allocation2 + $0x2c] sm:$0xf] %vm1753, %v1668
        %1766 = vst.msk [vmem:[#allocation2 + $0x30] sm:$0xf] %vm1753, %v1670
        %1767 = vst.msk [vmem:[#allocation2 + $0x34] sm:$0xf] %vm1753, %v1672
        %1768 = vst.msk [vmem:[#allocation2 + $0x38] sm:$0xf] %vm1753, %v1674
        %1769 = vst.msk [vmem:[#allocation2 + $0x3c] sm:$0xf] %vm1753, %v1676
        %1770 = vst.msk [vmem:[#allocation2 + $0x40] sm:$0xf] %vm1753, %v1678
        %1771 = vst.msk [vmem:[#allocation2 + $0x44] sm:$0xf] %vm1753, %v1680
        %1772 = vst.msk [vmem:[#allocation2 + $0x48] sm:$0xf] %vm1753, %v1682
        %1773 = vst.msk [vmem:[#allocation2 + $0x4c] sm:$0xf] %vm1753, %v1684
        %1774 = vst.msk [vmem:[#allocation2 + $0x50] sm:$0xf] %vm1753, %v1686
        %1775 = vst.msk [vmem:[#allocation2 + $0x54] sm:$0xf] %vm1753, %v1688
        %1776 = vst.msk [vmem:[#allocation2 + $0x58] sm:$0xf] %vm1753, %v1690
        %1777 = vst.msk [vmem:[#allocation2 + $0x5c] sm:$0xf] %vm1753, %v1692
        %1778 = vst.msk [vmem:[#allocation2 + $0x60] sm:$0xf] %vm1753, %v1694
        %1779 = vst.msk [vmem:[#allocation2 + $0x64] sm:$0xf] %vm1753, %v1696
        %1780 = vst.msk [vmem:[#allocation2 + $0x68] sm:$0xf] %vm1753, %v1698
        %1781 = vst.msk [vmem:[#allocation2 + $0x6c] sm:$0xf] %vm1753, %v1700
        %1782 = vst.msk [vmem:[#allocation2 + $0x70] sm:$0xf] %vm1753, %v1702
        %1783 = vst.msk [vmem:[#allocation2 + $0x74] sm:$0xf] %vm1753, %v1704
        %1784 = vst.msk [vmem:[#allocation2 + $0x78] sm:$0xf] %vm1753, %v1706
        %1785 = vst.msk [vmem:[#allocation2 + $0x7c] sm:$0xf] %vm1753, %v1708
        %1786 = vst.msk [vmem:[#allocation2 + $0x80] sm:$0xf] %vm1753, %v1710
        %1787 = vst.msk [vmem:[#allocation2 + $0x84] sm:$0xf] %vm1753, %v1712
        %1788 = vst.msk [vmem:[#allocation2 + $0x88] sm:$0xf] %vm1753, %v1714
        %1789 = vst.msk [vmem:[#allocation2 + $0x8c] sm:$0xf] %vm1753, %v1716
        %v1790 = vld [vmem:[%s471 + $0x8] sm:$0xe]
        %v1791 = vld [vmem:[%s471 + $0xc] sm:$0xf]
        %v1792 = vld [vmem:[%s471 + $0x10] sm:$0xf]
        %v1793 = vld [vmem:[%s471 + $0x14] sm:$0xf]
        %v1794 = vld [vmem:[%s471 + $0x18] sm:$0xf]
        %v1795 = vld [vmem:[%s471 + $0x1c] sm:$0xf]
        %v1796 = vld [vmem:[%s471 + $0x20] sm:$0xf]
        %v1797 = vld [vmem:[%s471 + $0x24] sm:$0xf]
        %v1798 = vld [vmem:[%s471 + $0x28] sm:$0xf]
        %v1799 = vld [vmem:[%s471 + $0x2c] sm:$0xf]
        %v1800 = vld [vmem:[%s471 + $0x30] sm:$0xf]
        %v1801 = vld [vmem:[%s471 + $0x34] sm:$0xf]
        %v1802 = vld [vmem:[%s471 + $0x38] sm:$0xf]
        %v1803 = vld [vmem:[%s471 + $0x3c] sm:$0xf]
        %v1804 = vld [vmem:[%s471 + $0x40] sm:$0xf]
        %v1805 = vld [vmem:[%s471 + $0x44] sm:$0xf]
        %v1806 = vld [vmem:[%s471 + $0x48] sm:$0xf]
        %v1807 = vld [vmem:[%s471 + $0x4c] sm:$0xf]
        %v1808 = vld [vmem:[%s471 + $0x50] sm:$0xf]
        %v1809 = vld [vmem:[%s471 + $0x54] sm:$0xf]
        %v1810 = vld [vmem:[%s471 + $0x58] sm:$0xf]
        %v1811 = vld [vmem:[%s471 + $0x5c] sm:$0xf]
        %v1812 = vld [vmem:[%s471 + $0x60] sm:$0xf]
        %v1813 = vld [vmem:[%s471 + $0x64] sm:$0xf]
        %v1814 = vld [vmem:[%s471 + $0x68] sm:$0xf]
        %v1815 = vld [vmem:[%s471 + $0x6c] sm:$0xf]
        %v1816 = vld [vmem:[%s471 + $0x70] sm:$0xf]
        %v1817 = vld [vmem:[%s471 + $0x74] sm:$0xf]
        %v1818 = vld [vmem:[%s471 + $0x78] sm:$0xf]
        %v1819 = vld [vmem:[%s471 + $0x7c] sm:$0xf]
        %v1820 = vld [vmem:[%s471 + $0x80] sm:$0xf]
        %v1821 = vld [vmem:[%s471 + $0x84] sm:$0xf]
        %v1822 = vld [vmem:[%s471 + $0x88] sm:$0xf]
        %v1823 = vld [vmem:[%s471 + $0x8c] sm:$0xf]
        %v1824 = vld [vmem:[%s471 + $0x90] sm:$0xf]
        %v1825 = vld [vmem:[%s471 + $0x94] sm:$0xf]
        %v1826 = vld [vmem:[%s471 + $0x98] sm:$0x3]
        %vm1827 = vsmask.f32 2304
        %vm1828 = vsmask.f32 6416
        %vm1829 = vmor %vm1827, %vm1828
        %v1831 = vshrl.u32 %v1790, 16
        %v1833 = vrot.slane %v1831, 5
        %v1834 = vshll.u32 %v1790, 16
        %v1836 = vrot.slane %v1834, 6
        %v1837 = vor.u32 %v1833, %v1836
        %v1838 = vrot.slane %v1837, 4
        %v1840 = vshrl.u32 %v1791, 16
        %v1842 = vrot.slane %v1840, 5
        %v1843 = vshll.u32 %v1791, 16
        %v1845 = vrot.slane %v1843, 6
        %v1846 = vor.u32 %v1842, %v1845
        %v1847 = vsel %vm1829, %v1838, %v1846
        %v1848 = vrot.slane %v1846, 4
        %v1850 = vshrl.u32 %v1792, 16
        %v1852 = vrot.slane %v1850, 5
        %v1853 = vshll.u32 %v1792, 16
        %v1855 = vrot.slane %v1853, 6
        %v1856 = vor.u32 %v1852, %v1855
        %v1857 = vsel %vm1829, %v1848, %v1856
        %v1858 = vrot.slane %v1856, 4
        %v1860 = vshrl.u32 %v1793, 16
        %v1862 = vrot.slane %v1860, 5
        %v1863 = vshll.u32 %v1793, 16
        %v1865 = vrot.slane %v1863, 6
        %v1866 = vor.u32 %v1862, %v1865
        %v1867 = vsel %vm1829, %v1858, %v1866
        %v1868 = vrot.slane %v1866, 4
        %v1870 = vshrl.u32 %v1794, 16
        %v1872 = vrot.slane %v1870, 5
        %v1873 = vshll.u32 %v1794, 16
        %v1875 = vrot.slane %v1873, 6
        %v1876 = vor.u32 %v1872, %v1875
        %v1877 = vsel %vm1829, %v1868, %v1876
        %v1878 = vrot.slane %v1876, 4
        %v1880 = vshrl.u32 %v1795, 16
        %v1882 = vrot.slane %v1880, 5
        %v1883 = vshll.u32 %v1795, 16
        %v1885 = vrot.slane %v1883, 6
        %v1886 = vor.u32 %v1882, %v1885
        %v1887 = vsel %vm1829, %v1878, %v1886
        %v1888 = vrot.slane %v1886, 4
        %v1890 = vshrl.u32 %v1796, 16
        %v1892 = vrot.slane %v1890, 5
        %v1893 = vshll.u32 %v1796, 16
        %v1895 = vrot.slane %v1893, 6
        %v1896 = vor.u32 %v1892, %v1895
        %v1897 = vsel %vm1829, %v1888, %v1896
        %v1898 = vrot.slane %v1896, 4
        %v1900 = vshrl.u32 %v1797, 16
        %v1902 = vrot.slane %v1900, 5
        %v1903 = vshll.u32 %v1797, 16
        %v1905 = vrot.slane %v1903, 6
        %v1906 = vor.u32 %v1902, %v1905
        %v1907 = vsel %vm1829, %v1898, %v1906
        %v1908 = vrot.slane %v1906, 4
        %v1910 = vshrl.u32 %v1798, 16
        %v1912 = vrot.slane %v1910, 5
        %v1913 = vshll.u32 %v1798, 16
        %v1915 = vrot.slane %v1913, 6
        %v1916 = vor.u32 %v1912, %v1915
        %v1917 = vsel %vm1829, %v1908, %v1916
        %v1918 = vrot.slane %v1916, 4
        %v1920 = vshrl.u32 %v1799, 16
        %v1922 = vrot.slane %v1920, 5
        %v1923 = vshll.u32 %v1799, 16
        %v1925 = vrot.slane %v1923, 6
        %v1926 = vor.u32 %v1922, %v1925
        %v1927 = vsel %vm1829, %v1918, %v1926
        %v1928 = vrot.slane %v1926, 4
        %v1930 = vshrl.u32 %v1800, 16
        %v1932 = vrot.slane %v1930, 5
        %v1933 = vshll.u32 %v1800, 16
        %v1935 = vrot.slane %v1933, 6
        %v1936 = vor.u32 %v1932, %v1935
        %v1937 = vsel %vm1829, %v1928, %v1936
        %v1938 = vrot.slane %v1936, 4
        %v1940 = vshrl.u32 %v1801, 16
        %v1942 = vrot.slane %v1940, 5
        %v1943 = vshll.u32 %v1801, 16
        %v1945 = vrot.slane %v1943, 6
        %v1946 = vor.u32 %v1942, %v1945
        %v1947 = vsel %vm1829, %v1938, %v1946
        %v1948 = vrot.slane %v1946, 4
        %v1950 = vshrl.u32 %v1802, 16
        %v1952 = vrot.slane %v1950, 5
        %v1953 = vshll.u32 %v1802, 16
        %v1955 = vrot.slane %v1953, 6
        %v1956 = vor.u32 %v1952, %v1955
        %v1957 = vsel %vm1829, %v1948, %v1956
        %v1958 = vrot.slane %v1956, 4
        %v1960 = vshrl.u32 %v1803, 16
        %v1962 = vrot.slane %v1960, 5
        %v1963 = vshll.u32 %v1803, 16
        %v1965 = vrot.slane %v1963, 6
        %v1966 = vor.u32 %v1962, %v1965
        %v1967 = vsel %vm1829, %v1958, %v1966
        %v1968 = vrot.slane %v1966, 4
        %v1970 = vshrl.u32 %v1804, 16
        %v1972 = vrot.slane %v1970, 5
        %v1973 = vshll.u32 %v1804, 16
        %v1975 = vrot.slane %v1973, 6
        %v1976 = vor.u32 %v1972, %v1975
        %v1977 = vsel %vm1829, %v1968, %v1976
        %v1978 = vrot.slane %v1976, 4
        %v1980 = vshrl.u32 %v1805, 16
        %v1982 = vrot.slane %v1980, 5
        %v1983 = vshll.u32 %v1805, 16
        %v1985 = vrot.slane %v1983, 6
        %v1986 = vor.u32 %v1982, %v1985
        %v1987 = vsel %vm1829, %v1978, %v1986
        %v1988 = vrot.slane %v1986, 4
        %v1990 = vshrl.u32 %v1806, 16
        %v1992 = vrot.slane %v1990, 5
        %v1993 = vshll.u32 %v1806, 16
        %v1995 = vrot.slane %v1993, 6
        %v1996 = vor.u32 %v1992, %v1995
        %v1997 = vsel %vm1829, %v1988, %v1996
        %v1998 = vrot.slane %v1996, 4
        %v2000 = vshrl.u32 %v1807, 16
        %v2002 = vrot.slane %v2000, 5
        %v2003 = vshll.u32 %v1807, 16
        %v2005 = vrot.slane %v2003, 6
        %v2006 = vor.u32 %v2002, %v2005
        %v2007 = vsel %vm1829, %v1998, %v2006
        %v2008 = vrot.slane %v2006, 4
        %v2010 = vshrl.u32 %v1808, 16
        %v2012 = vrot.slane %v2010, 5
        %v2013 = vshll.u32 %v1808, 16
        %v2015 = vrot.slane %v2013, 6
        %v2016 = vor.u32 %v2012, %v2015
        %v2017 = vsel %vm1829, %v2008, %v2016
        %v2018 = vrot.slane %v2016, 4
        %v2020 = vshrl.u32 %v1809, 16
        %v2022 = vrot.slane %v2020, 5
        %v2023 = vshll.u32 %v1809, 16
        %v2025 = vrot.slane %v2023, 6
        %v2026 = vor.u32 %v2022, %v2025
        %v2027 = vsel %vm1829, %v2018, %v2026
        %v2028 = vrot.slane %v2026, 4
        %v2030 = vshrl.u32 %v1810, 16
        %v2032 = vrot.slane %v2030, 5
        %v2033 = vshll.u32 %v1810, 16
        %v2035 = vrot.slane %v2033, 6
        %v2036 = vor.u32 %v2032, %v2035
        %v2037 = vsel %vm1829, %v2028, %v2036
        %v2038 = vrot.slane %v2036, 4
        %v2040 = vshrl.u32 %v1811, 16
        %v2042 = vrot.slane %v2040, 5
        %v2043 = vshll.u32 %v1811, 16
        %v2045 = vrot.slane %v2043, 6
        %v2046 = vor.u32 %v2042, %v2045
        %v2047 = vsel %vm1829, %v2038, %v2046
        %v2048 = vrot.slane %v2046, 4
        %v2050 = vshrl.u32 %v1812, 16
        %v2052 = vrot.slane %v2050, 5
        %v2053 = vshll.u32 %v1812, 16
        %v2055 = vrot.slane %v2053, 6
        %v2056 = vor.u32 %v2052, %v2055
        %v2057 = vsel %vm1829, %v2048, %v2056
        %v2058 = vrot.slane %v2056, 4
        %v2060 = vshrl.u32 %v1813, 16
        %v2062 = vrot.slane %v2060, 5
        %v2063 = vshll.u32 %v1813, 16
        %v2065 = vrot.slane %v2063, 6
        %v2066 = vor.u32 %v2062, %v2065
        %v2067 = vsel %vm1829, %v2058, %v2066
        %v2068 = vrot.slane %v2066, 4
        %v2070 = vshrl.u32 %v1814, 16
        %v2072 = vrot.slane %v2070, 5
        %v2073 = vshll.u32 %v1814, 16
        %v2075 = vrot.slane %v2073, 6
        %v2076 = vor.u32 %v2072, %v2075
        %v2077 = vsel %vm1829, %v2068, %v2076
        %v2078 = vrot.slane %v2076, 4
        %v2080 = vshrl.u32 %v1815, 16
        %v2082 = vrot.slane %v2080, 5
        %v2083 = vshll.u32 %v1815, 16
        %v2085 = vrot.slane %v2083, 6
        %v2086 = vor.u32 %v2082, %v2085
        %v2087 = vsel %vm1829, %v2078, %v2086
        %v2088 = vrot.slane %v2086, 4
        %v2090 = vshrl.u32 %v1816, 16
        %v2092 = vrot.slane %v2090, 5
        %v2093 = vshll.u32 %v1816, 16
        %v2095 = vrot.slane %v2093, 6
        %v2096 = vor.u32 %v2092, %v2095
        %v2097 = vsel %vm1829, %v2088, %v2096
        %v2098 = vrot.slane %v2096, 4
        %v2100 = vshrl.u32 %v1817, 16
        %v2102 = vrot.slane %v2100, 5
        %v2103 = vshll.u32 %v1817, 16
        %v2105 = vrot.slane %v2103, 6
        %v2106 = vor.u32 %v2102, %v2105
        %v2107 = vsel %vm1829, %v2098, %v2106
        %v2108 = vrot.slane %v2106, 4
        %v2110 = vshrl.u32 %v1818, 16
        %v2112 = vrot.slane %v2110, 5
        %v2113 = vshll.u32 %v1818, 16
        %v2115 = vrot.slane %v2113, 6
        %v2116 = vor.u32 %v2112, %v2115
        %v2117 = vsel %vm1829, %v2108, %v2116
        %v2118 = vrot.slane %v2116, 4
        %v2120 = vshrl.u32 %v1819, 16
        %v2122 = vrot.slane %v2120, 5
        %v2123 = vshll.u32 %v1819, 16
        %v2125 = vrot.slane %v2123, 6
        %v2126 = vor.u32 %v2122, %v2125
        %v2127 = vsel %vm1829, %v2118, %v2126
        %v2128 = vrot.slane %v2126, 4
        %v2130 = vshrl.u32 %v1820, 16
        %v2132 = vrot.slane %v2130, 5
        %v2133 = vshll.u32 %v1820, 16
        %v2135 = vrot.slane %v2133, 6
        %v2136 = vor.u32 %v2132, %v2135
        %v2137 = vsel %vm1829, %v2128, %v2136
        %v2138 = vrot.slane %v2136, 4
        %v2140 = vshrl.u32 %v1821, 16
        %v2142 = vrot.slane %v2140, 5
        %v2143 = vshll.u32 %v1821, 16
        %v2145 = vrot.slane %v2143, 6
        %v2146 = vor.u32 %v2142, %v2145
        %v2147 = vsel %vm1829, %v2138, %v2146
        %v2148 = vrot.slane %v2146, 4
        %v2150 = vshrl.u32 %v1822, 16
        %v2152 = vrot.slane %v2150, 5
        %v2153 = vshll.u32 %v1822, 16
        %v2155 = vrot.slane %v2153, 6
        %v2156 = vor.u32 %v2152, %v2155
        %v2157 = vsel %vm1829, %v2148, %v2156
        %v2158 = vrot.slane %v2156, 4
        %v2160 = vshrl.u32 %v1823, 16
        %v2162 = vrot.slane %v2160, 5
        %v2163 = vshll.u32 %v1823, 16
        %v2165 = vrot.slane %v2163, 6
        %v2166 = vor.u32 %v2162, %v2165
        %v2167 = vsel %vm1829, %v2158, %v2166
        %v2168 = vrot.slane %v2166, 4
        %v2170 = vshrl.u32 %v1824, 16
        %v2172 = vrot.slane %v2170, 5
        %v2173 = vshll.u32 %v1824, 16
        %v2175 = vrot.slane %v2173, 6
        %v2176 = vor.u32 %v2172, %v2175
        %v2177 = vsel %vm1829, %v2168, %v2176
        %v2178 = vrot.slane %v2176, 4
        %v2180 = vshrl.u32 %v1825, 16
        %v2182 = vrot.slane %v2180, 5
        %v2183 = vshll.u32 %v1825, 16
        %v2185 = vrot.slane %v2183, 6
        %v2186 = vor.u32 %v2182, %v2185
        %v2187 = vsel %vm1829, %v2178, %v2186
        %v2188 = vrot.slane %v2186, 4
        %v2190 = vshrl.u32 %v1826, 16
        %v2192 = vrot.slane %v2190, 5
        %v2193 = vshll.u32 %v1826, 16
        %v2195 = vrot.slane %v2193, 6
        %v2196 = vor.u32 %v2192, %v2195
        %v2197 = vsel %vm1829, %v2188, %v2196
        %2198 = vrot.lane.b32.xlu0 %v1847, 32
        %v2199 = vpop.permute.xlu0 %2198
        %2200 = vrot.lane.b32.xlu0 %v1857, 32
        %v2201 = vpop.permute.xlu0 %2200
        %2202 = vrot.lane.b32.xlu0 %v1867, 32
        %v2203 = vpop.permute.xlu0 %2202
        %2204 = vrot.lane.b32.xlu0 %v1877, 32
        %v2205 = vpop.permute.xlu0 %2204
        %2206 = vrot.lane.b32.xlu0 %v1887, 32
        %v2207 = vpop.permute.xlu0 %2206
        %2208 = vrot.lane.b32.xlu0 %v1897, 32
        %v2209 = vpop.permute.xlu0 %2208
        %2210 = vrot.lane.b32.xlu0 %v1907, 32
        %v2211 = vpop.permute.xlu0 %2210
        %2212 = vrot.lane.b32.xlu0 %v1917, 32
        %v2213 = vpop.permute.xlu0 %2212
        %2214 = vrot.lane.b32.xlu0 %v1927, 32
        %v2215 = vpop.permute.xlu0 %2214
        %2216 = vrot.lane.b32.xlu0 %v1937, 32
        %v2217 = vpop.permute.xlu0 %2216
        %2218 = vrot.lane.b32.xlu0 %v1947, 32
        %v2219 = vpop.permute.xlu0 %2218
        %2220 = vrot.lane.b32.xlu0 %v1957, 32
        %v2221 = vpop.permute.xlu0 %2220
        %2222 = vrot.lane.b32.xlu0 %v1967, 32
        %v2223 = vpop.permute.xlu0 %2222
        %2224 = vrot.lane.b32.xlu0 %v1977, 32
        %v2225 = vpop.permute.xlu0 %2224
        %2226 = vrot.lane.b32.xlu0 %v1987, 32
        %v2227 = vpop.permute.xlu0 %2226
        %2228 = vrot.lane.b32.xlu0 %v1997, 32
        %v2229 = vpop.permute.xlu0 %2228
        %2230 = vrot.lane.b32.xlu0 %v2007, 32
        %v2231 = vpop.permute.xlu0 %2230
        %2232 = vrot.lane.b32.xlu0 %v2017, 32
        %v2233 = vpop.permute.xlu0 %2232
        %2234 = vrot.lane.b32.xlu0 %v2027, 32
        %v2235 = vpop.permute.xlu0 %2234
        %2236 = vrot.lane.b32.xlu0 %v2037, 32
        %v2237 = vpop.permute.xlu0 %2236
        %2238 = vrot.lane.b32.xlu0 %v2047, 32
        %v2239 = vpop.permute.xlu0 %2238
        %2240 = vrot.lane.b32.xlu0 %v2057, 32
        %v2241 = vpop.permute.xlu0 %2240
        %2242 = vrot.lane.b32.xlu0 %v2067, 32
        %v2243 = vpop.permute.xlu0 %2242
        %2244 = vrot.lane.b32.xlu0 %v2077, 32
        %v2245 = vpop.permute.xlu0 %2244
        %2246 = vrot.lane.b32.xlu0 %v2087, 32
        %v2247 = vpop.permute.xlu0 %2246
        %2248 = vrot.lane.b32.xlu0 %v2097, 32
        %v2249 = vpop.permute.xlu0 %2248
        %2250 = vrot.lane.b32.xlu0 %v2107, 32
        %v2251 = vpop.permute.xlu0 %2250
        %2252 = vrot.lane.b32.xlu0 %v2117, 32
        %v2253 = vpop.permute.xlu0 %2252
        %2254 = vrot.lane.b32.xlu0 %v2127, 32
        %v2255 = vpop.permute.xlu0 %2254
        %2256 = vrot.lane.b32.xlu0 %v2137, 32
        %v2257 = vpop.permute.xlu0 %2256
        %2258 = vrot.lane.b32.xlu0 %v2147, 32
        %v2259 = vpop.permute.xlu0 %2258
        %2260 = vrot.lane.b32.xlu0 %v2157, 32
        %v2261 = vpop.permute.xlu0 %2260
        %2262 = vrot.lane.b32.xlu0 %v2167, 32
        %v2263 = vpop.permute.xlu0 %2262
        %2264 = vrot.lane.b32.xlu0 %v2177, 32
        %v2265 = vpop.permute.xlu0 %2264
        %2266 = vrot.lane.b32.xlu0 %v2187, 32
        %v2267 = vpop.permute.xlu0 %2266
        %2268 = vrot.lane.b32.xlu0 %v2197, 32
        %v2269 = vpop.permute.xlu0 %2268
        %vm2306 = vcmask 322816
        %2307 = vst.msk [vmem:[#allocation2] sm:$0xf] %vm2306, %v2199
        %2308 = vst.msk [vmem:[#allocation2 + $0x4] sm:$0xf] %vm2306, %v2201
        %2309 = vst.msk [vmem:[#allocation2 + $0x8] sm:$0xf] %vm2306, %v2203
        %2310 = vst.msk [vmem:[#allocation2 + $0xc] sm:$0xf] %vm2306, %v2205
        %2311 = vst.msk [vmem:[#allocation2 + $0x10] sm:$0xf] %vm2306, %v2207
        %2312 = vst.msk [vmem:[#allocation2 + $0x14] sm:$0xf] %vm2306, %v2209
        %2313 = vst.msk [vmem:[#allocation2 + $0x18] sm:$0xf] %vm2306, %v2211
        %2314 = vst.msk [vmem:[#allocation2 + $0x1c] sm:$0xf] %vm2306, %v2213
        %2315 = vst.msk [vmem:[#allocation2 + $0x20] sm:$0xf] %vm2306, %v2215
        %2316 = vst.msk [vmem:[#allocation2 + $0x24] sm:$0xf] %vm2306, %v2217
        %2317 = vst.msk [vmem:[#allocation2 + $0x28] sm:$0xf] %vm2306, %v2219
        %2318 = vst.msk [vmem:[#allocation2 + $0x2c] sm:$0xf] %vm2306, %v2221
        %2319 = vst.msk [vmem:[#allocation2 + $0x30] sm:$0xf] %vm2306, %v2223
        %2320 = vst.msk [vmem:[#allocation2 + $0x34] sm:$0xf] %vm2306, %v2225
        %2321 = vst.msk [vmem:[#allocation2 + $0x38] sm:$0xf] %vm2306, %v2227
        %2322 = vst.msk [vmem:[#allocation2 + $0x3c] sm:$0xf] %vm2306, %v2229
        %2323 = vst.msk [vmem:[#allocation2 + $0x40] sm:$0xf] %vm2306, %v2231
        %2324 = vst.msk [vmem:[#allocation2 + $0x44] sm:$0xf] %vm2306, %v2233
        %2325 = vst.msk [vmem:[#allocation2 + $0x48] sm:$0xf] %vm2306, %v2235
        %2326 = vst.msk [vmem:[#allocation2 + $0x4c] sm:$0xf] %vm2306, %v2237
        %2327 = vst.msk [vmem:[#allocation2 + $0x50] sm:$0xf] %vm2306, %v2239
        %2328 = vst.msk [vmem:[#allocation2 + $0x54] sm:$0xf] %vm2306, %v2241
        %2329 = vst.msk [vmem:[#allocation2 + $0x58] sm:$0xf] %vm2306, %v2243
        %2330 = vst.msk [vmem:[#allocation2 + $0x5c] sm:$0xf] %vm2306, %v2245
        %2331 = vst.msk [vmem:[#allocation2 + $0x60] sm:$0xf] %vm2306, %v2247
        %2332 = vst.msk [vmem:[#allocation2 + $0x64] sm:$0xf] %vm2306, %v2249
        %2333 = vst.msk [vmem:[#allocation2 + $0x68] sm:$0xf] %vm2306, %v2251
        %2334 = vst.msk [vmem:[#allocation2 + $0x6c] sm:$0xf] %vm2306, %v2253
        %2335 = vst.msk [vmem:[#allocation2 + $0x70] sm:$0xf] %vm2306, %v2255
        %2336 = vst.msk [vmem:[#allocation2 + $0x74] sm:$0xf] %vm2306, %v2257
        %2337 = vst.msk [vmem:[#allocation2 + $0x78] sm:$0xf] %vm2306, %v2259
        %2338 = vst.msk [vmem:[#allocation2 + $0x7c] sm:$0xf] %vm2306, %v2261
        %2339 = vst.msk [vmem:[#allocation2 + $0x80] sm:$0xf] %vm2306, %v2263
        %2340 = vst.msk [vmem:[#allocation2 + $0x84] sm:$0xf] %vm2306, %v2265
        %2341 = vst.msk [vmem:[#allocation2 + $0x88] sm:$0xf] %vm2306, %v2267
        %2342 = vst.msk [vmem:[#allocation2 + $0x8c] sm:$0xf] %vm2306, %v2269
        %v2343 = vld [vmem:[%s471 + $0x8] sm:$0xc]
        %v2344 = vld [vmem:[%s471 + $0xc] sm:$0xf]
        %v2345 = vld [vmem:[%s471 + $0x10] sm:$0xf]
        %v2346 = vld [vmem:[%s471 + $0x14] sm:$0xf]
        %v2347 = vld [vmem:[%s471 + $0x18] sm:$0xf]
        %v2348 = vld [vmem:[%s471 + $0x1c] sm:$0xf]
        %v2349 = vld [vmem:[%s471 + $0x20] sm:$0xf]
        %v2350 = vld [vmem:[%s471 + $0x24] sm:$0xf]
        %v2351 = vld [vmem:[%s471 + $0x28] sm:$0xf]
        %v2352 = vld [vmem:[%s471 + $0x2c] sm:$0xf]
        %v2353 = vld [vmem:[%s471 + $0x30] sm:$0xf]
        %v2354 = vld [vmem:[%s471 + $0x34] sm:$0xf]
        %v2355 = vld [vmem:[%s471 + $0x38] sm:$0xf]
        %v2356 = vld [vmem:[%s471 + $0x3c] sm:$0xf]
        %v2357 = vld [vmem:[%s471 + $0x40] sm:$0xf]
        %v2358 = vld [vmem:[%s471 + $0x44] sm:$0xf]
        %v2359 = vld [vmem:[%s471 + $0x48] sm:$0xf]
        %v2360 = vld [vmem:[%s471 + $0x4c] sm:$0xf]
        %v2361 = vld [vmem:[%s471 + $0x50] sm:$0xf]
        %v2362 = vld [vmem:[%s471 + $0x54] sm:$0xf]
        %v2363 = vld [vmem:[%s471 + $0x58] sm:$0xf]
        %v2364 = vld [vmem:[%s471 + $0x5c] sm:$0xf]
        %v2365 = vld [vmem:[%s471 + $0x60] sm:$0xf]
        %v2366 = vld [vmem:[%s471 + $0x64] sm:$0xf]
        %v2367 = vld [vmem:[%s471 + $0x68] sm:$0xf]
        %v2368 = vld [vmem:[%s471 + $0x6c] sm:$0xf]
        %v2369 = vld [vmem:[%s471 + $0x70] sm:$0xf]
        %v2370 = vld [vmem:[%s471 + $0x74] sm:$0xf]
        %v2371 = vld [vmem:[%s471 + $0x78] sm:$0xf]
        %v2372 = vld [vmem:[%s471 + $0x7c] sm:$0xf]
        %v2373 = vld [vmem:[%s471 + $0x80] sm:$0xf]
        %v2374 = vld [vmem:[%s471 + $0x84] sm:$0xf]
        %v2375 = vld [vmem:[%s471 + $0x88] sm:$0xf]
        %v2376 = vld [vmem:[%s471 + $0x8c] sm:$0xf]
        %v2377 = vld [vmem:[%s471 + $0x90] sm:$0xf]
        %v2378 = vld [vmem:[%s471 + $0x94] sm:$0xf]
        %v2379 = vld [vmem:[%s471 + $0x98] sm:$0x3]
        %vm2417 = vcmask 1041408
        %vm2418 = vcmask 1045508
        %vm2419 = vmor %vm2417, %vm2418
        %v2420 = vrot.slane %v2343, 6
        %v2421 = vrot.slane %v2420, 4
        %v2422 = vrot.slane %v2344, 6
        %v2423 = vsel %vm2419, %v2421, %v2422
        %v2424 = vrot.slane %v2422, 4
        %v2425 = vrot.slane %v2345, 6
        %v2426 = vsel %vm2419, %v2424, %v2425
        %v2427 = vrot.slane %v2425, 4
        %v2428 = vrot.slane %v2346, 6
        %v2429 = vsel %vm2419, %v2427, %v2428
        %v2430 = vrot.slane %v2428, 4
        %v2431 = vrot.slane %v2347, 6
        %v2432 = vsel %vm2419, %v2430, %v2431
        %v2433 = vrot.slane %v2431, 4
        %v2434 = vrot.slane %v2348, 6
        %v2435 = vsel %vm2419, %v2433, %v2434
        %v2436 = vrot.slane %v2434, 4
        %v2437 = vrot.slane %v2349, 6
        %v2438 = vsel %vm2419, %v2436, %v2437
        %v2439 = vrot.slane %v2437, 4
        %v2440 = vrot.slane %v2350, 6
        %v2441 = vsel %vm2419, %v2439, %v2440
        %v2442 = vrot.slane %v2440, 4
        %v2443 = vrot.slane %v2351, 6
        %v2444 = vsel %vm2419, %v2442, %v2443
        %v2445 = vrot.slane %v2443, 4
        %v2446 = vrot.slane %v2352, 6
        %v2447 = vsel %vm2419, %v2445, %v2446
        %v2448 = vrot.slane %v2446, 4
        %v2449 = vrot.slane %v2353, 6
        %v2450 = vsel %vm2419, %v2448, %v2449
        %v2451 = vrot.slane %v2449, 4
        %v2452 = vrot.slane %v2354, 6
        %v2453 = vsel %vm2419, %v2451, %v2452
        %v2454 = vrot.slane %v2452, 4
        %v2455 = vrot.slane %v2355, 6
        %v2456 = vsel %vm2419, %v2454, %v2455
        %v2457 = vrot.slane %v2455, 4
        %v2458 = vrot.slane %v2356, 6
        %v2459 = vsel %vm2419, %v2457, %v2458
        %v2460 = vrot.slane %v2458, 4
        %v2461 = vrot.slane %v2357, 6
        %v2462 = vsel %vm2419, %v2460, %v2461
        %v2463 = vrot.slane %v2461, 4
        %v2464 = vrot.slane %v2358, 6
        %v2465 = vsel %vm2419, %v2463, %v2464
        %v2466 = vrot.slane %v2464, 4
        %v2467 = vrot.slane %v2359, 6
        %v2468 = vsel %vm2419, %v2466, %v2467
        %v2469 = vrot.slane %v2467, 4
        %v2470 = vrot.slane %v2360, 6
        %v2471 = vsel %vm2419, %v2469, %v2470
        %v2472 = vrot.slane %v2470, 4
        %v2473 = vrot.slane %v2361, 6
        %v2474 = vsel %vm2419, %v2472, %v2473
        %v2475 = vrot.slane %v2473, 4
        %v2476 = vrot.slane %v2362, 6
        %v2477 = vsel %vm2419, %v2475, %v2476
        %v2478 = vrot.slane %v2476, 4
        %v2479 = vrot.slane %v2363, 6
        %v2480 = vsel %vm2419, %v2478, %v2479
        %v2481 = vrot.slane %v2479, 4
        %v2482 = vrot.slane %v2364, 6
        %v2483 = vsel %vm2419, %v2481, %v2482
        %v2484 = vrot.slane %v2482, 4
        %v2485 = vrot.slane %v2365, 6
        %v2486 = vsel %vm2419, %v2484, %v2485
        %v2487 = vrot.slane %v2485, 4
        %v2488 = vrot.slane %v2366, 6
        %v2489 = vsel %vm2419, %v2487, %v2488
        %v2490 = vrot.slane %v2488, 4
        %v2491 = vrot.slane %v2367, 6
        %v2492 = vsel %vm2419, %v2490, %v2491
        %v2493 = vrot.slane %v2491, 4
        %v2494 = vrot.slane %v2368, 6
        %v2495 = vsel %vm2419, %v2493, %v2494
        %v2496 = vrot.slane %v2494, 4
        %v2497 = vrot.slane %v2369, 6
        %v2498 = vsel %vm2419, %v2496, %v2497
        %v2499 = vrot.slane %v2497, 4
        %v2500 = vrot.slane %v2370, 6
        %v2501 = vsel %vm2419, %v2499, %v2500
        %v2502 = vrot.slane %v2500, 4
        %v2503 = vrot.slane %v2371, 6
        %v2504 = vsel %vm2419, %v2502, %v2503
        %v2505 = vrot.slane %v2503, 4
        %v2506 = vrot.slane %v2372, 6
        %v2507 = vsel %vm2419, %v2505, %v2506
        %v2508 = vrot.slane %v2506, 4
        %v2509 = vrot.slane %v2373, 6
        %v2510 = vsel %vm2419, %v2508, %v2509
        %v2511 = vrot.slane %v2509, 4
        %v2512 = vrot.slane %v2374, 6
        %v2513 = vsel %vm2419, %v2511, %v2512
        %v2514 = vrot.slane %v2512, 4
        %v2515 = vrot.slane %v2375, 6
        %v2516 = vsel %vm2419, %v2514, %v2515
        %v2517 = vrot.slane %v2515, 4
        %v2518 = vrot.slane %v2376, 6
        %v2519 = vsel %vm2419, %v2517, %v2518
        %v2520 = vrot.slane %v2518, 4
        %v2521 = vrot.slane %v2377, 6
        %v2522 = vsel %vm2419, %v2520, %v2521
        %v2523 = vrot.slane %v2521, 4
        %v2524 = vrot.slane %v2378, 6
        %v2525 = vsel %vm2419, %v2523, %v2524
        %v2526 = vrot.slane %v2524, 4
        %v2527 = vrot.slane %v2379, 6
        %v2528 = vsel %vm2419, %v2526, %v2527
        %2529 = vrot.lane.b32.xlu0 %v2423, 40
        %v2530 = vpop.permute.xlu0 %2529
        %2531 = vrot.lane.b32.xlu0 %v2426, 40
        %v2532 = vpop.permute.xlu0 %2531
        %2533 = vrot.lane.b32.xlu0 %v2429, 40
        %v2534 = vpop.permute.xlu0 %2533
        %2535 = vrot.lane.b32.xlu0 %v2432, 40
        %v2536 = vpop.permute.xlu0 %2535
        %2537 = vrot.lane.b32.xlu0 %v2435, 40
        %v2538 = vpop.permute.xlu0 %2537
        %2539 = vrot.lane.b32.xlu0 %v2438, 40
        %v2540 = vpop.permute.xlu0 %2539
        %2541 = vrot.lane.b32.xlu0 %v2441, 40
        %v2542 = vpop.permute.xlu0 %2541
        %2543 = vrot.lane.b32.xlu0 %v2444, 40
        %v2544 = vpop.permute.xlu0 %2543
        %2545 = vrot.lane.b32.xlu0 %v2447, 40
        %v2546 = vpop.permute.xlu0 %2545
        %2547 = vrot.lane.b32.xlu0 %v2450, 40
        %v2548 = vpop.permute.xlu0 %2547
        %2549 = vrot.lane.b32.xlu0 %v2453, 40
        %v2550 = vpop.permute.xlu0 %2549
        %2551 = vrot.lane.b32.xlu0 %v2456, 40
        %v2552 = vpop.permute.xlu0 %2551
        %2553 = vrot.lane.b32.xlu0 %v2459, 40
        %v2554 = vpop.permute.xlu0 %2553
        %2555 = vrot.lane.b32.xlu0 %v2462, 40
        %v2556 = vpop.permute.xlu0 %2555
        %2557 = vrot.lane.b32.xlu0 %v2465, 40
        %v2558 = vpop.permute.xlu0 %2557
        %2559 = vrot.lane.b32.xlu0 %v2468, 40
        %v2560 = vpop.permute.xlu0 %2559
        %2561 = vrot.lane.b32.xlu0 %v2471, 40
        %v2562 = vpop.permute.xlu0 %2561
        %2563 = vrot.lane.b32.xlu0 %v2474, 40
        %v2564 = vpop.permute.xlu0 %2563
        %2565 = vrot.lane.b32.xlu0 %v2477, 40
        %v2566 = vpop.permute.xlu0 %2565
        %2567 = vrot.lane.b32.xlu0 %v2480, 40
        %v2568 = vpop.permute.xlu0 %2567
        %2569 = vrot.lane.b32.xlu0 %v2483, 40
        %v2570 = vpop.permute.xlu0 %2569
        %2571 = vrot.lane.b32.xlu0 %v2486, 40
        %v2572 = vpop.permute.xlu0 %2571
        %2573 = vrot.lane.b32.xlu0 %v2489, 40
        %v2574 = vpop.permute.xlu0 %2573
        %2575 = vrot.lane.b32.xlu0 %v2492, 40
        %v2576 = vpop.permute.xlu0 %2575
        %2577 = vrot.lane.b32.xlu0 %v2495, 40
        %v2578 = vpop.permute.xlu0 %2577
        %2579 = vrot.lane.b32.xlu0 %v2498, 40
        %v2580 = vpop.permute.xlu0 %2579
        %2581 = vrot.lane.b32.xlu0 %v2501, 40
        %v2582 = vpop.permute.xlu0 %2581
        %2583 = vrot.lane.b32.xlu0 %v2504, 40
        %v2584 = vpop.permute.xlu0 %2583
        %2585 = vrot.lane.b32.xlu0 %v2507, 40
        %v2586 = vpop.permute.xlu0 %2585
        %2587 = vrot.lane.b32.xlu0 %v2510, 40
        %v2588 = vpop.permute.xlu0 %2587
        %2589 = vrot.lane.b32.xlu0 %v2513, 40
        %v2590 = vpop.permute.xlu0 %2589
        %2591 = vrot.lane.b32.xlu0 %v2516, 40
        %v2592 = vpop.permute.xlu0 %2591
        %2593 = vrot.lane.b32.xlu0 %v2519, 40
        %v2594 = vpop.permute.xlu0 %2593
        %2595 = vrot.lane.b32.xlu0 %v2522, 40
        %v2596 = vpop.permute.xlu0 %2595
        %2597 = vrot.lane.b32.xlu0 %v2525, 40
        %v2598 = vpop.permute.xlu0 %2597
        %2599 = vrot.lane.b32.xlu0 %v2528, 40
        %v2600 = vpop.permute.xlu0 %2599
        %vm2637 = vcmask 388416
        %2638 = vst.msk [vmem:[#allocation2] sm:$0xf] %vm2637, %v2530
        %2639 = vst.msk [vmem:[#allocation2 + $0x4] sm:$0xf] %vm2637, %v2532
        %2640 = vst.msk [vmem:[#allocation2 + $0x8] sm:$0xf] %vm2637, %v2534
        %2641 = vst.msk [vmem:[#allocation2 + $0xc] sm:$0xf] %vm2637, %v2536
        %2642 = vst.msk [vmem:[#allocation2 + $0x10] sm:$0xf] %vm2637, %v2538
        %2643 = vst.msk [vmem:[#allocation2 + $0x14] sm:$0xf] %vm2637, %v2540
        %2644 = vst.msk [vmem:[#allocation2 + $0x18] sm:$0xf] %vm2637, %v2542
        %2645 = vst.msk [vmem:[#allocation2 + $0x1c] sm:$0xf] %vm2637, %v2544
        %2646 = vst.msk [vmem:[#allocation2 + $0x20] sm:$0xf] %vm2637, %v2546
        %2647 = vst.msk [vmem:[#allocation2 + $0x24] sm:$0xf] %vm2637, %v2548
        %2648 = vst.msk [vmem:[#allocation2 + $0x28] sm:$0xf] %vm2637, %v2550
        %2649 = vst.msk [vmem:[#allocation2 + $0x2c] sm:$0xf] %vm2637, %v2552
        %2650 = vst.msk [vmem:[#allocation2 + $0x30] sm:$0xf] %vm2637, %v2554
        %2651 = vst.msk [vmem:[#allocation2 + $0x34] sm:$0xf] %vm2637, %v2556
        %2652 = vst.msk [vmem:[#allocation2 + $0x38] sm:$0xf] %vm2637, %v2558
        %2653 = vst.msk [vmem:[#allocation2 + $0x3c] sm:$0xf] %vm2637, %v2560
        %2654 = vst.msk [vmem:[#allocation2 + $0x40] sm:$0xf] %vm2637, %v2562
        %2655 = vst.msk [vmem:[#allocation2 + $0x44] sm:$0xf] %vm2637, %v2564
        %2656 = vst.msk [vmem:[#allocation2 + $0x48] sm:$0xf] %vm2637, %v2566
        %2657 = vst.msk [vmem:[#allocation2 + $0x4c] sm:$0xf] %vm2637, %v2568
        %2658 = vst.msk [vmem:[#allocation2 + $0x50] sm:$0xf] %vm2637, %v2570
        %2659 = vst.msk [vmem:[#allocation2 + $0x54] sm:$0xf] %vm2637, %v2572
        %2660 = vst.msk [vmem:[#allocation2 + $0x58] sm:$0xf] %vm2637, %v2574
        %2661 = vst.msk [vmem:[#allocation2 + $0x5c] sm:$0xf] %vm2637, %v2576
        %2662 = vst.msk [vmem:[#allocation2 + $0x60] sm:$0xf] %vm2637, %v2578
        %2663 = vst.msk [vmem:[#allocation2 + $0x64] sm:$0xf] %vm2637, %v2580
        %2664 = vst.msk [vmem:[#allocation2 + $0x68] sm:$0xf] %vm2637, %v2582
        %2665 = vst.msk [vmem:[#allocation2 + $0x6c] sm:$0xf] %vm2637, %v2584
        %2666 = vst.msk [vmem:[#allocation2 + $0x70] sm:$0xf] %vm2637, %v2586
        %2667 = vst.msk [vmem:[#allocation2 + $0x74] sm:$0xf] %vm2637, %v2588
        %2668 = vst.msk [vmem:[#allocation2 + $0x78] sm:$0xf] %vm2637, %v2590
        %2669 = vst.msk [vmem:[#allocation2 + $0x7c] sm:$0xf] %vm2637, %v2592
        %2670 = vst.msk [vmem:[#allocation2 + $0x80] sm:$0xf] %vm2637, %v2594
        %2671 = vst.msk [vmem:[#allocation2 + $0x84] sm:$0xf] %vm2637, %v2596
        %2672 = vst.msk [vmem:[#allocation2 + $0x88] sm:$0xf] %vm2637, %v2598
        %2673 = vst.msk [vmem:[#allocation2 + $0x8c] sm:$0xf] %vm2637, %v2600
        %v2674 = vld [vmem:[%s471 + $0x10] sm:$0xc]
        %v2675 = vld [vmem:[%s471 + $0x14] sm:$0xf]
        %v2676 = vld [vmem:[%s471 + $0x18] sm:$0xf]
        %v2677 = vld [vmem:[%s471 + $0x1c] sm:$0xf]
        %v2678 = vld [vmem:[%s471 + $0x20] sm:$0xf]
        %v2679 = vld [vmem:[%s471 + $0x24] sm:$0xf]
        %v2680 = vld [vmem:[%s471 + $0x28] sm:$0xf]
        %v2681 = vld [vmem:[%s471 + $0x2c] sm:$0xf]
        %v2682 = vld [vmem:[%s471 + $0x30] sm:$0xf]
        %v2683 = vld [vmem:[%s471 + $0x34] sm:$0xf]
        %v2684 = vld [vmem:[%s471 + $0x38] sm:$0xf]
        %v2685 = vld [vmem:[%s471 + $0x3c] sm:$0xf]
        %v2686 = vld [vmem:[%s471 + $0x40] sm:$0xf]
        %v2687 = vld [vmem:[%s471 + $0x44] sm:$0xf]
        %v2688 = vld [vmem:[%s471 + $0x48] sm:$0xf]
        %v2689 = vld [vmem:[%s471 + $0x4c] sm:$0xf]
        %v2690 = vld [vmem:[%s471 + $0x50] sm:$0xf]
        %v2691 = vld [vmem:[%s471 + $0x54] sm:$0xf]
        %v2692 = vld [vmem:[%s471 + $0x58] sm:$0xf]
        %v2693 = vld [vmem:[%s471 + $0x5c] sm:$0xf]
        %v2694 = vld [vmem:[%s471 + $0x60] sm:$0xf]
        %v2695 = vld [vmem:[%s471 + $0x64] sm:$0xf]
        %v2696 = vld [vmem:[%s471 + $0x68] sm:$0xf]
        %v2697 = vld [vmem:[%s471 + $0x6c] sm:$0xf]
        %v2698 = vld [vmem:[%s471 + $0x70] sm:$0xf]
        %v2699 = vld [vmem:[%s471 + $0x74] sm:$0xf]
        %v2700 = vld [vmem:[%s471 + $0x78] sm:$0xf]
        %v2701 = vld [vmem:[%s471 + $0x7c] sm:$0xf]
        %v2702 = vld [vmem:[%s471 + $0x80] sm:$0xf]
        %v2703 = vld [vmem:[%s471 + $0x84] sm:$0xf]
        %v2704 = vld [vmem:[%s471 + $0x88] sm:$0xf]
        %v2705 = vld [vmem:[%s471 + $0x8c] sm:$0xf]
        %v2706 = vld [vmem:[%s471 + $0x90] sm:$0xf]
        %v2707 = vld [vmem:[%s471 + $0x94] sm:$0xf]
        %v2708 = vld [vmem:[%s471 + $0x98] sm:$0xf]
        %v2709 = vld [vmem:[%s471 + $0x9c] sm:$0xf]
        %v2710 = vld [vmem:[%s471 + $0xa0] sm:$0x3]
        %v2748 = vrot.slane %v2674, 6
        %v2749 = vrot.slane %v2748, 4
        %v2750 = vrot.slane %v2675, 6
        %v2751 = vsel %vm2419, %v2749, %v2750
        %v2752 = vrot.slane %v2750, 4
        %v2753 = vrot.slane %v2676, 6
        %v2754 = vsel %vm2419, %v2752, %v2753
        %v2755 = vrot.slane %v2753, 4
        %v2756 = vrot.slane %v2677, 6
        %v2757 = vsel %vm2419, %v2755, %v2756
        %v2758 = vrot.slane %v2756, 4
        %v2759 = vrot.slane %v2678, 6
        %v2760 = vsel %vm2419, %v2758, %v2759
        %v2761 = vrot.slane %v2759, 4
        %v2762 = vrot.slane %v2679, 6
        %v2763 = vsel %vm2419, %v2761, %v2762
        %v2764 = vrot.slane %v2762, 4
        %v2765 = vrot.slane %v2680, 6
        %v2766 = vsel %vm2419, %v2764, %v2765
        %v2767 = vrot.slane %v2765, 4
        %v2768 = vrot.slane %v2681, 6
        %v2769 = vsel %vm2419, %v2767, %v2768
        %v2770 = vrot.slane %v2768, 4
        %v2771 = vrot.slane %v2682, 6
        %v2772 = vsel %vm2419, %v2770, %v2771
        %v2773 = vrot.slane %v2771, 4
        %v2774 = vrot.slane %v2683, 6
        %v2775 = vsel %vm2419, %v2773, %v2774
        %v2776 = vrot.slane %v2774, 4
        %v2777 = vrot.slane %v2684, 6
        %v2778 = vsel %vm2419, %v2776, %v2777
        %v2779 = vrot.slane %v2777, 4
        %v2780 = vrot.slane %v2685, 6
        %v2781 = vsel %vm2419, %v2779, %v2780
        %v2782 = vrot.slane %v2780, 4
        %v2783 = vrot.slane %v2686, 6
        %v2784 = vsel %vm2419, %v2782, %v2783
        %v2785 = vrot.slane %v2783, 4
        %v2786 = vrot.slane %v2687, 6
        %v2787 = vsel %vm2419, %v2785, %v2786
        %v2788 = vrot.slane %v2786, 4
        %v2789 = vrot.slane %v2688, 6
        %v2790 = vsel %vm2419, %v2788, %v2789
        %v2791 = vrot.slane %v2789, 4
        %v2792 = vrot.slane %v2689, 6
        %v2793 = vsel %vm2419, %v2791, %v2792
        %v2794 = vrot.slane %v2792, 4
        %v2795 = vrot.slane %v2690, 6
        %v2796 = vsel %vm2419, %v2794, %v2795
        %v2797 = vrot.slane %v2795, 4
        %v2798 = vrot.slane %v2691, 6
        %v2799 = vsel %vm2419, %v2797, %v2798
        %v2800 = vrot.slane %v2798, 4
        %v2801 = vrot.slane %v2692, 6
        %v2802 = vsel %vm2419, %v2800, %v2801
        %v2803 = vrot.slane %v2801, 4
        %v2804 = vrot.slane %v2693, 6
        %v2805 = vsel %vm2419, %v2803, %v2804
        %v2806 = vrot.slane %v2804, 4
        %v2807 = vrot.slane %v2694, 6
        %v2808 = vsel %vm2419, %v2806, %v2807
        %v2809 = vrot.slane %v2807, 4
        %v2810 = vrot.slane %v2695, 6
        %v2811 = vsel %vm2419, %v2809, %v2810
        %v2812 = vrot.slane %v2810, 4
        %v2813 = vrot.slane %v2696, 6
        %v2814 = vsel %vm2419, %v2812, %v2813
        %v2815 = vrot.slane %v2813, 4
        %v2816 = vrot.slane %v2697, 6
        %v2817 = vsel %vm2419, %v2815, %v2816
        %v2818 = vrot.slane %v2816, 4
        %v2819 = vrot.slane %v2698, 6
        %v2820 = vsel %vm2419, %v2818, %v2819
        %v2821 = vrot.slane %v2819, 4
        %v2822 = vrot.slane %v2699, 6
        %v2823 = vsel %vm2419, %v2821, %v2822
        %v2824 = vrot.slane %v2822, 4
        %v2825 = vrot.slane %v2700, 6
        %v2826 = vsel %vm2419, %v2824, %v2825
        %v2827 = vrot.slane %v2825, 4
        %v2828 = vrot.slane %v2701, 6
        %v2829 = vsel %vm2419, %v2827, %v2828
        %v2830 = vrot.slane %v2828, 4
        %v2831 = vrot.slane %v2702, 6
        %v2832 = vsel %vm2419, %v2830, %v2831
        %v2833 = vrot.slane %v2831, 4
        %v2834 = vrot.slane %v2703, 6
        %v2835 = vsel %vm2419, %v2833, %v2834
        %v2836 = vrot.slane %v2834, 4
        %v2837 = vrot.slane %v2704, 6
        %v2838 = vsel %vm2419, %v2836, %v2837
        %v2839 = vrot.slane %v2837, 4
        %v2840 = vrot.slane %v2705, 6
        %v2841 = vsel %vm2419, %v2839, %v2840
        %v2842 = vrot.slane %v2840, 4
        %v2843 = vrot.slane %v2706, 6
        %v2844 = vsel %vm2419, %v2842, %v2843
        %v2845 = vrot.slane %v2843, 4
        %v2846 = vrot.slane %v2707, 6
        %v2847 = vsel %vm2419, %v2845, %v2846
        %v2848 = vrot.slane %v2846, 4
        %v2849 = vrot.slane %v2708, 6
        %v2850 = vsel %vm2419, %v2848, %v2849
        %v2851 = vrot.slane %v2849, 4
        %v2852 = vrot.slane %v2709, 6
        %v2853 = vsel %vm2419, %v2851, %v2852
        %v2854 = vrot.slane %v2852, 4
        %v2855 = vrot.slane %v2710, 6
        %v2856 = vsel %vm2419, %v2854, %v2855
        %2857 = vrot.lane.b32.xlu0 %v2751, 48
        %v2858 = vpop.permute.xlu0 %2857
        %2859 = vrot.lane.b32.xlu0 %v2754, 48
        %v2860 = vpop.permute.xlu0 %2859
        %2861 = vrot.lane.b32.xlu0 %v2757, 48
        %v2862 = vpop.permute.xlu0 %2861
        %2863 = vrot.lane.b32.xlu0 %v2760, 48
        %v2864 = vpop.permute.xlu0 %2863
        %2865 = vrot.lane.b32.xlu0 %v2763, 48
        %v2866 = vpop.permute.xlu0 %2865
        %2867 = vrot.lane.b32.xlu0 %v2766, 48
        %v2868 = vpop.permute.xlu0 %2867
        %2869 = vrot.lane.b32.xlu0 %v2769, 48
        %v2870 = vpop.permute.xlu0 %2869
        %2871 = vrot.lane.b32.xlu0 %v2772, 48
        %v2872 = vpop.permute.xlu0 %2871
        %2873 = vrot.lane.b32.xlu0 %v2775, 48
        %v2874 = vpop.permute.xlu0 %2873
        %2875 = vrot.lane.b32.xlu0 %v2778, 48
        %v2876 = vpop.permute.xlu0 %2875
        %2877 = vrot.lane.b32.xlu0 %v2781, 48
        %v2878 = vpop.permute.xlu0 %2877
        %2879 = vrot.lane.b32.xlu0 %v2784, 48
        %v2880 = vpop.permute.xlu0 %2879
        %2881 = vrot.lane.b32.xlu0 %v2787, 48
        %v2882 = vpop.permute.xlu0 %2881
        %2883 = vrot.lane.b32.xlu0 %v2790, 48
        %v2884 = vpop.permute.xlu0 %2883
        %2885 = vrot.lane.b32.xlu0 %v2793, 48
        %v2886 = vpop.permute.xlu0 %2885
        %2887 = vrot.lane.b32.xlu0 %v2796, 48
        %v2888 = vpop.permute.xlu0 %2887
        %2889 = vrot.lane.b32.xlu0 %v2799, 48
        %v2890 = vpop.permute.xlu0 %2889
        %2891 = vrot.lane.b32.xlu0 %v2802, 48
        %v2892 = vpop.permute.xlu0 %2891
        %2893 = vrot.lane.b32.xlu0 %v2805, 48
        %v2894 = vpop.permute.xlu0 %2893
        %2895 = vrot.lane.b32.xlu0 %v2808, 48
        %v2896 = vpop.permute.xlu0 %2895
        %2897 = vrot.lane.b32.xlu0 %v2811, 48
        %v2898 = vpop.permute.xlu0 %2897
        %2899 = vrot.lane.b32.xlu0 %v2814, 48
        %v2900 = vpop.permute.xlu0 %2899
        %2901 = vrot.lane.b32.xlu0 %v2817, 48
        %v2902 = vpop.permute.xlu0 %2901
        %2903 = vrot.lane.b32.xlu0 %v2820, 48
        %v2904 = vpop.permute.xlu0 %2903
        %2905 = vrot.lane.b32.xlu0 %v2823, 48
        %v2906 = vpop.permute.xlu0 %2905
        %2907 = vrot.lane.b32.xlu0 %v2826, 48
        %v2908 = vpop.permute.xlu0 %2907
        %2909 = vrot.lane.b32.xlu0 %v2829, 48
        %v2910 = vpop.permute.xlu0 %2909
        %2911 = vrot.lane.b32.xlu0 %v2832, 48
        %v2912 = vpop.permute.xlu0 %2911
        %2913 = vrot.lane.b32.xlu0 %v2835, 48
        %v2914 = vpop.permute.xlu0 %2913
        %2915 = vrot.lane.b32.xlu0 %v2838, 48
        %v2916 = vpop.permute.xlu0 %2915
        %2917 = vrot.lane.b32.xlu0 %v2841, 48
        %v2918 = vpop.permute.xlu0 %2917
        %2919 = vrot.lane.b32.xlu0 %v2844, 48
        %v2920 = vpop.permute.xlu0 %2919
        %2921 = vrot.lane.b32.xlu0 %v2847, 48
        %v2922 = vpop.permute.xlu0 %2921
        %2923 = vrot.lane.b32.xlu0 %v2850, 48
        %v2924 = vpop.permute.xlu0 %2923
        %2925 = vrot.lane.b32.xlu0 %v2853, 48
        %v2926 = vpop.permute.xlu0 %2925
        %2927 = vrot.lane.b32.xlu0 %v2856, 48
        %v2928 = vpop.permute.xlu0 %2927
        %vm2965 = vcmask 454016
        %2966 = vst.msk [vmem:[#allocation2] sm:$0xf] %vm2965, %v2858
        %2967 = vst.msk [vmem:[#allocation2 + $0x4] sm:$0xf] %vm2965, %v2860
        %2968 = vst.msk [vmem:[#allocation2 + $0x8] sm:$0xf] %vm2965, %v2862
        %2969 = vst.msk [vmem:[#allocation2 + $0xc] sm:$0xf] %vm2965, %v2864
        %2970 = vst.msk [vmem:[#allocation2 + $0x10] sm:$0xf] %vm2965, %v2866
        %2971 = vst.msk [vmem:[#allocation2 + $0x14] sm:$0xf] %vm2965, %v2868
        %2972 = vst.msk [vmem:[#allocation2 + $0x18] sm:$0xf] %vm2965, %v2870
        %2973 = vst.msk [vmem:[#allocation2 + $0x1c] sm:$0xf] %vm2965, %v2872
        %2974 = vst.msk [vmem:[#allocation2 + $0x20] sm:$0xf] %vm2965, %v2874
        %2975 = vst.msk [vmem:[#allocation2 + $0x24] sm:$0xf] %vm2965, %v2876
        %2976 = vst.msk [vmem:[#allocation2 + $0x28] sm:$0xf] %vm2965, %v2878
        %2977 = vst.msk [vmem:[#allocation2 + $0x2c] sm:$0xf] %vm2965, %v2880
        %2978 = vst.msk [vmem:[#allocation2 + $0x30] sm:$0xf] %vm2965, %v2882
        %2979 = vst.msk [vmem:[#allocation2 + $0x34] sm:$0xf] %vm2965, %v2884
        %2980 = vst.msk [vmem:[#allocation2 + $0x38] sm:$0xf] %vm2965, %v2886
        %2981 = vst.msk [vmem:[#allocation2 + $0x3c] sm:$0xf] %vm2965, %v2888
        %2982 = vst.msk [vmem:[#allocation2 + $0x40] sm:$0xf] %vm2965, %v2890
        %2983 = vst.msk [vmem:[#allocation2 + $0x44] sm:$0xf] %vm2965, %v2892
        %2984 = vst.msk [vmem:[#allocation2 + $0x48] sm:$0xf] %vm2965, %v2894
        %2985 = vst.msk [vmem:[#allocation2 + $0x4c] sm:$0xf] %vm2965, %v2896
        %2986 = vst.msk [vmem:[#allocation2 + $0x50] sm:$0xf] %vm2965, %v2898
        %2987 = vst.msk [vmem:[#allocation2 + $0x54] sm:$0xf] %vm2965, %v2900
        %2988 = vst.msk [vmem:[#allocation2 + $0x58] sm:$0xf] %vm2965, %v2902
        %2989 = vst.msk [vmem:[#allocation2 + $0x5c] sm:$0xf] %vm2965, %v2904
        %2990 = vst.msk [vmem:[#allocation2 + $0x60] sm:$0xf] %vm2965, %v2906
        %2991 = vst.msk [vmem:[#allocation2 + $0x64] sm:$0xf] %vm2965, %v2908
        %2992 = vst.msk [vmem:[#allocation2 + $0x68] sm:$0xf] %vm2965, %v2910
        %2993 = vst.msk [vmem:[#allocation2 + $0x6c] sm:$0xf] %vm2965, %v2912
        %2994 = vst.msk [vmem:[#allocation2 + $0x70] sm:$0xf] %vm2965, %v2914
        %2995 = vst.msk [vmem:[#allocation2 + $0x74] sm:$0xf] %vm2965, %v2916
        %2996 = vst.msk [vmem:[#allocation2 + $0x78] sm:$0xf] %vm2965, %v2918
        %2997 = vst.msk [vmem:[#allocation2 + $0x7c] sm:$0xf] %vm2965, %v2920
        %2998 = vst.msk [vmem:[#allocation2 + $0x80] sm:$0xf] %vm2965, %v2922
        %2999 = vst.msk [vmem:[#allocation2 + $0x84] sm:$0xf] %vm2965, %v2924
        %3000 = vst.msk [vmem:[#allocation2 + $0x88] sm:$0xf] %vm2965, %v2926
        %3001 = vst.msk [vmem:[#allocation2 + $0x8c] sm:$0xf] %vm2965, %v2928
        %v3002 = vld [vmem:[%s471 + $0x10] sm:$0xc]
        %v3003 = vld [vmem:[%s471 + $0x14] sm:$0xf]
        %v3004 = vld [vmem:[%s471 + $0x18] sm:$0xf]
        %v3005 = vld [vmem:[%s471 + $0x1c] sm:$0xf]
        %v3006 = vld [vmem:[%s471 + $0x20] sm:$0xf]
        %v3007 = vld [vmem:[%s471 + $0x24] sm:$0xf]
        %v3008 = vld [vmem:[%s471 + $0x28] sm:$0xf]
        %v3009 = vld [vmem:[%s471 + $0x2c] sm:$0xf]
        %v3010 = vld [vmem:[%s471 + $0x30] sm:$0xf]
        %v3011 = vld [vmem:[%s471 + $0x34] sm:$0xf]
        %v3012 = vld [vmem:[%s471 + $0x38] sm:$0xf]
        %v3013 = vld [vmem:[%s471 + $0x3c] sm:$0xf]
        %v3014 = vld [vmem:[%s471 + $0x40] sm:$0xf]
        %v3015 = vld [vmem:[%s471 + $0x44] sm:$0xf]
        %v3016 = vld [vmem:[%s471 + $0x48] sm:$0xf]
        %v3017 = vld [vmem:[%s471 + $0x4c] sm:$0xf]
        %v3018 = vld [vmem:[%s471 + $0x50] sm:$0xf]
        %v3019 = vld [vmem:[%s471 + $0x54] sm:$0xf]
        %v3020 = vld [vmem:[%s471 + $0x58] sm:$0xf]
        %v3021 = vld [vmem:[%s471 + $0x5c] sm:$0xf]
        %v3022 = vld [vmem:[%s471 + $0x60] sm:$0xf]
        %v3023 = vld [vmem:[%s471 + $0x64] sm:$0xf]
        %v3024 = vld [vmem:[%s471 + $0x68] sm:$0xf]
        %v3025 = vld [vmem:[%s471 + $0x6c] sm:$0xf]
        %v3026 = vld [vmem:[%s471 + $0x70] sm:$0xf]
        %v3027 = vld [vmem:[%s471 + $0x74] sm:$0xf]
        %v3028 = vld [vmem:[%s471 + $0x78] sm:$0xf]
        %v3029 = vld [vmem:[%s471 + $0x7c] sm:$0xf]
        %v3030 = vld [vmem:[%s471 + $0x80] sm:$0xf]
        %v3031 = vld [vmem:[%s471 + $0x84] sm:$0xf]
        %v3032 = vld [vmem:[%s471 + $0x88] sm:$0xf]
        %v3033 = vld [vmem:[%s471 + $0x8c] sm:$0xf]
        %v3034 = vld [vmem:[%s471 + $0x90] sm:$0xf]
        %v3035 = vld [vmem:[%s471 + $0x94] sm:$0xf]
        %v3036 = vld [vmem:[%s471 + $0x98] sm:$0xf]
        %v3037 = vld [vmem:[%s471 + $0x9c] sm:$0xf]
        %v3038 = vld [vmem:[%s471 + $0xa0] sm:$0x7]
        %vm3039 = vsmask.f32 1280
        %vm3040 = vsmask.f32 5392
        %vm3041 = vmor %vm3039, %vm3040
        %v3043 = vshrl.u32 %v3002, 16
        %v3045 = vrot.slane %v3043, 6
        %v3046 = vshll.u32 %v3002, 16
        %v3048 = vrot.slane %v3046, 7
        %v3049 = vor.u32 %v3045, %v3048
        %v3050 = vrot.slane %v3049, 4
        %v3052 = vshrl.u32 %v3003, 16
        %v3054 = vrot.slane %v3052, 6
        %v3055 = vshll.u32 %v3003, 16
        %v3057 = vrot.slane %v3055, 7
        %v3058 = vor.u32 %v3054, %v3057
        %v3059 = vsel %vm3041, %v3050, %v3058
        %v3060 = vrot.slane %v3058, 4
        %v3062 = vshrl.u32 %v3004, 16
        %v3064 = vrot.slane %v3062, 6
        %v3065 = vshll.u32 %v3004, 16
        %v3067 = vrot.slane %v3065, 7
        %v3068 = vor.u32 %v3064, %v3067
        %v3069 = vsel %vm3041, %v3060, %v3068
        %v3070 = vrot.slane %v3068, 4
        %v3072 = vshrl.u32 %v3005, 16
        %v3074 = vrot.slane %v3072, 6
        %v3075 = vshll.u32 %v3005, 16
        %v3077 = vrot.slane %v3075, 7
        %v3078 = vor.u32 %v3074, %v3077
        %v3079 = vsel %vm3041, %v3070, %v3078
        %v3080 = vrot.slane %v3078, 4
        %v3082 = vshrl.u32 %v3006, 16
        %v3084 = vrot.slane %v3082, 6
        %v3085 = vshll.u32 %v3006, 16
        %v3087 = vrot.slane %v3085, 7
        %v3088 = vor.u32 %v3084, %v3087
        %v3089 = vsel %vm3041, %v3080, %v3088
        %v3090 = vrot.slane %v3088, 4
        %v3092 = vshrl.u32 %v3007, 16
        %v3094 = vrot.slane %v3092, 6
        %v3095 = vshll.u32 %v3007, 16
        %v3097 = vrot.slane %v3095, 7
        %v3098 = vor.u32 %v3094, %v3097
        %v3099 = vsel %vm3041, %v3090, %v3098
        %v3100 = vrot.slane %v3098, 4
        %v3102 = vshrl.u32 %v3008, 16
        %v3104 = vrot.slane %v3102, 6
        %v3105 = vshll.u32 %v3008, 16
        %v3107 = vrot.slane %v3105, 7
        %v3108 = vor.u32 %v3104, %v3107
        %v3109 = vsel %vm3041, %v3100, %v3108
        %v3110 = vrot.slane %v3108, 4
        %v3112 = vshrl.u32 %v3009, 16
        %v3114 = vrot.slane %v3112, 6
        %v3115 = vshll.u32 %v3009, 16
        %v3117 = vrot.slane %v3115, 7
        %v3118 = vor.u32 %v3114, %v3117
        %v3119 = vsel %vm3041, %v3110, %v3118
        %v3120 = vrot.slane %v3118, 4
        %v3122 = vshrl.u32 %v3010, 16
        %v3124 = vrot.slane %v3122, 6
        %v3125 = vshll.u32 %v3010, 16
        %v3127 = vrot.slane %v3125, 7
        %v3128 = vor.u32 %v3124, %v3127
        %v3129 = vsel %vm3041, %v3120, %v3128
        %v3130 = vrot.slane %v3128, 4
        %v3132 = vshrl.u32 %v3011, 16
        %v3134 = vrot.slane %v3132, 6
        %v3135 = vshll.u32 %v3011, 16
        %v3137 = vrot.slane %v3135, 7
        %v3138 = vor.u32 %v3134, %v3137
        %v3139 = vsel %vm3041, %v3130, %v3138
        %v3140 = vrot.slane %v3138, 4
        %v3142 = vshrl.u32 %v3012, 16
        %v3144 = vrot.slane %v3142, 6
        %v3145 = vshll.u32 %v3012, 16
        %v3147 = vrot.slane %v3145, 7
        %v3148 = vor.u32 %v3144, %v3147
        %v3149 = vsel %vm3041, %v3140, %v3148
        %v3150 = vrot.slane %v3148, 4
        %v3152 = vshrl.u32 %v3013, 16
        %v3154 = vrot.slane %v3152, 6
        %v3155 = vshll.u32 %v3013, 16
        %v3157 = vrot.slane %v3155, 7
        %v3158 = vor.u32 %v3154, %v3157
        %v3159 = vsel %vm3041, %v3150, %v3158
        %v3160 = vrot.slane %v3158, 4
        %v3162 = vshrl.u32 %v3014, 16
        %v3164 = vrot.slane %v3162, 6
        %v3165 = vshll.u32 %v3014, 16
        %v3167 = vrot.slane %v3165, 7
        %v3168 = vor.u32 %v3164, %v3167
        %v3169 = vsel %vm3041, %v3160, %v3168
        %v3170 = vrot.slane %v3168, 4
        %v3172 = vshrl.u32 %v3015, 16
        %v3174 = vrot.slane %v3172, 6
        %v3175 = vshll.u32 %v3015, 16
        %v3177 = vrot.slane %v3175, 7
        %v3178 = vor.u32 %v3174, %v3177
        %v3179 = vsel %vm3041, %v3170, %v3178
        %v3180 = vrot.slane %v3178, 4
        %v3182 = vshrl.u32 %v3016, 16
        %v3184 = vrot.slane %v3182, 6
        %v3185 = vshll.u32 %v3016, 16
        %v3187 = vrot.slane %v3185, 7
        %v3188 = vor.u32 %v3184, %v3187
        %v3189 = vsel %vm3041, %v3180, %v3188
        %v3190 = vrot.slane %v3188, 4
        %v3192 = vshrl.u32 %v3017, 16
        %v3194 = vrot.slane %v3192, 6
        %v3195 = vshll.u32 %v3017, 16
        %v3197 = vrot.slane %v3195, 7
        %v3198 = vor.u32 %v3194, %v3197
        %v3199 = vsel %vm3041, %v3190, %v3198
        %v3200 = vrot.slane %v3198, 4
        %v3202 = vshrl.u32 %v3018, 16
        %v3204 = vrot.slane %v3202, 6
        %v3205 = vshll.u32 %v3018, 16
        %v3207 = vrot.slane %v3205, 7
        %v3208 = vor.u32 %v3204, %v3207
        %v3209 = vsel %vm3041, %v3200, %v3208
        %v3210 = vrot.slane %v3208, 4
        %v3212 = vshrl.u32 %v3019, 16
        %v3214 = vrot.slane %v3212, 6
        %v3215 = vshll.u32 %v3019, 16
        %v3217 = vrot.slane %v3215, 7
        %v3218 = vor.u32 %v3214, %v3217
        %v3219 = vsel %vm3041, %v3210, %v3218
        %v3220 = vrot.slane %v3218, 4
        %v3222 = vshrl.u32 %v3020, 16
        %v3224 = vrot.slane %v3222, 6
        %v3225 = vshll.u32 %v3020, 16
        %v3227 = vrot.slane %v3225, 7
        %v3228 = vor.u32 %v3224, %v3227
        %v3229 = vsel %vm3041, %v3220, %v3228
        %v3230 = vrot.slane %v3228, 4
        %v3232 = vshrl.u32 %v3021, 16
        %v3234 = vrot.slane %v3232, 6
        %v3235 = vshll.u32 %v3021, 16
        %v3237 = vrot.slane %v3235, 7
        %v3238 = vor.u32 %v3234, %v3237
        %v3239 = vsel %vm3041, %v3230, %v3238
        %v3240 = vrot.slane %v3238, 4
        %v3242 = vshrl.u32 %v3022, 16
        %v3244 = vrot.slane %v3242, 6
        %v3245 = vshll.u32 %v3022, 16
        %v3247 = vrot.slane %v3245, 7
        %v3248 = vor.u32 %v3244, %v3247
        %v3249 = vsel %vm3041, %v3240, %v3248
        %v3250 = vrot.slane %v3248, 4
        %v3252 = vshrl.u32 %v3023, 16
        %v3254 = vrot.slane %v3252, 6
        %v3255 = vshll.u32 %v3023, 16
        %v3257 = vrot.slane %v3255, 7
        %v3258 = vor.u32 %v3254, %v3257
        %v3259 = vsel %vm3041, %v3250, %v3258
        %v3260 = vrot.slane %v3258, 4
        %v3262 = vshrl.u32 %v3024, 16
        %v3264 = vrot.slane %v3262, 6
        %v3265 = vshll.u32 %v3024, 16
        %v3267 = vrot.slane %v3265, 7
        %v3268 = vor.u32 %v3264, %v3267
        %v3269 = vsel %vm3041, %v3260, %v3268
        %v3270 = vrot.slane %v3268, 4
        %v3272 = vshrl.u32 %v3025, 16
        %v3274 = vrot.slane %v3272, 6
        %v3275 = vshll.u32 %v3025, 16
        %v3277 = vrot.slane %v3275, 7
        %v3278 = vor.u32 %v3274, %v3277
        %v3279 = vsel %vm3041, %v3270, %v3278
        %v3280 = vrot.slane %v3278, 4
        %v3282 = vshrl.u32 %v3026, 16
        %v3284 = vrot.slane %v3282, 6
        %v3285 = vshll.u32 %v3026, 16
        %v3287 = vrot.slane %v3285, 7
        %v3288 = vor.u32 %v3284, %v3287
        %v3289 = vsel %vm3041, %v3280, %v3288
        %v3290 = vrot.slane %v3288, 4
        %v3292 = vshrl.u32 %v3027, 16
        %v3294 = vrot.slane %v3292, 6
        %v3295 = vshll.u32 %v3027, 16
        %v3297 = vrot.slane %v3295, 7
        %v3298 = vor.u32 %v3294, %v3297
        %v3299 = vsel %vm3041, %v3290, %v3298
        %v3300 = vrot.slane %v3298, 4
        %v3302 = vshrl.u32 %v3028, 16
        %v3304 = vrot.slane %v3302, 6
        %v3305 = vshll.u32 %v3028, 16
        %v3307 = vrot.slane %v3305, 7
        %v3308 = vor.u32 %v3304, %v3307
        %v3309 = vsel %vm3041, %v3300, %v3308
        %v3310 = vrot.slane %v3308, 4
        %v3312 = vshrl.u32 %v3029, 16
        %v3314 = vrot.slane %v3312, 6
        %v3315 = vshll.u32 %v3029, 16
        %v3317 = vrot.slane %v3315, 7
        %v3318 = vor.u32 %v3314, %v3317
        %v3319 = vsel %vm3041, %v3310, %v3318
        %v3320 = vrot.slane %v3318, 4
        %v3322 = vshrl.u32 %v3030, 16
        %v3324 = vrot.slane %v3322, 6
        %v3325 = vshll.u32 %v3030, 16
        %v3327 = vrot.slane %v3325, 7
        %v3328 = vor.u32 %v3324, %v3327
        %v3329 = vsel %vm3041, %v3320, %v3328
        %v3330 = vrot.slane %v3328, 4
        %v3332 = vshrl.u32 %v3031, 16
        %v3334 = vrot.slane %v3332, 6
        %v3335 = vshll.u32 %v3031, 16
        %v3337 = vrot.slane %v3335, 7
        %v3338 = vor.u32 %v3334, %v3337
        %v3339 = vsel %vm3041, %v3330, %v3338
        %v3340 = vrot.slane %v3338, 4
        %v3342 = vshrl.u32 %v3032, 16
        %v3344 = vrot.slane %v3342, 6
        %v3345 = vshll.u32 %v3032, 16
        %v3347 = vrot.slane %v3345, 7
        %v3348 = vor.u32 %v3344, %v3347
        %v3349 = vsel %vm3041, %v3340, %v3348
        %v3350 = vrot.slane %v3348, 4
        %v3352 = vshrl.u32 %v3033, 16
        %v3354 = vrot.slane %v3352, 6
        %v3355 = vshll.u32 %v3033, 16
        %v3357 = vrot.slane %v3355, 7
        %v3358 = vor.u32 %v3354, %v3357
        %v3359 = vsel %vm3041, %v3350, %v3358
        %v3360 = vrot.slane %v3358, 4
        %v3362 = vshrl.u32 %v3034, 16
        %v3364 = vrot.slane %v3362, 6
        %v3365 = vshll.u32 %v3034, 16
        %v3367 = vrot.slane %v3365, 7
        %v3368 = vor.u32 %v3364, %v3367
        %v3369 = vsel %vm3041, %v3360, %v3368
        %v3370 = vrot.slane %v3368, 4
        %v3372 = vshrl.u32 %v3035, 16
        %v3374 = vrot.slane %v3372, 6
        %v3375 = vshll.u32 %v3035, 16
        %v3377 = vrot.slane %v3375, 7
        %v3378 = vor.u32 %v3374, %v3377
        %v3379 = vsel %vm3041, %v3370, %v3378
        %v3380 = vrot.slane %v3378, 4
        %v3382 = vshrl.u32 %v3036, 16
        %v3384 = vrot.slane %v3382, 6
        %v3385 = vshll.u32 %v3036, 16
        %v3387 = vrot.slane %v3385, 7
        %v3388 = vor.u32 %v3384, %v3387
        %v3389 = vsel %vm3041, %v3380, %v3388
        %v3390 = vrot.slane %v3388, 4
        %v3392 = vshrl.u32 %v3037, 16
        %v3394 = vrot.slane %v3392, 6
        %v3395 = vshll.u32 %v3037, 16
        %v3397 = vrot.slane %v3395, 7
        %v3398 = vor.u32 %v3394, %v3397
        %v3399 = vsel %vm3041, %v3390, %v3398
        %v3400 = vrot.slane %v3398, 4
        %v3402 = vshrl.u32 %v3038, 16
        %v3404 = vrot.slane %v3402, 6
        %v3405 = vshll.u32 %v3038, 16
        %v3407 = vrot.slane %v3405, 7
        %v3408 = vor.u32 %v3404, %v3407
        %v3409 = vsel %vm3041, %v3400, %v3408
        %3410 = vrot.lane.b32.xlu0 %v3059, 56
        %v3411 = vpop.permute.xlu0 %3410
        %3412 = vrot.lane.b32.xlu0 %v3069, 56
        %v3413 = vpop.permute.xlu0 %3412
        %3414 = vrot.lane.b32.xlu0 %v3079, 56
        %v3415 = vpop.permute.xlu0 %3414
        %3416 = vrot.lane.b32.xlu0 %v3089, 56
        %v3417 = vpop.permute.xlu0 %3416
        %3418 = vrot.lane.b32.xlu0 %v3099, 56
        %v3419 = vpop.permute.xlu0 %3418
        %3420 = vrot.lane.b32.xlu0 %v3109, 56
        %v3421 = vpop.permute.xlu0 %3420
        %3422 = vrot.lane.b32.xlu0 %v3119, 56
        %v3423 = vpop.permute.xlu0 %3422
        %3424 = vrot.lane.b32.xlu0 %v3129, 56
        %v3425 = vpop.permute.xlu0 %3424
        %3426 = vrot.lane.b32.xlu0 %v3139, 56
        %v3427 = vpop.permute.xlu0 %3426
        %3428 = vrot.lane.b32.xlu0 %v3149, 56
        %v3429 = vpop.permute.xlu0 %3428
        %3430 = vrot.lane.b32.xlu0 %v3159, 56
        %v3431 = vpop.permute.xlu0 %3430
        %3432 = vrot.lane.b32.xlu0 %v3169, 56
        %v3433 = vpop.permute.xlu0 %3432
        %3434 = vrot.lane.b32.xlu0 %v3179, 56
        %v3435 = vpop.permute.xlu0 %3434
        %3436 = vrot.lane.b32.xlu0 %v3189, 56
        %v3437 = vpop.permute.xlu0 %3436
        %3438 = vrot.lane.b32.xlu0 %v3199, 56
        %v3439 = vpop.permute.xlu0 %3438
        %3440 = vrot.lane.b32.xlu0 %v3209, 56
        %v3441 = vpop.permute.xlu0 %3440
        %3442 = vrot.lane.b32.xlu0 %v3219, 56
        %v3443 = vpop.permute.xlu0 %3442
        %3444 = vrot.lane.b32.xlu0 %v3229, 56
        %v3445 = vpop.permute.xlu0 %3444
        %3446 = vrot.lane.b32.xlu0 %v3239, 56
        %v3447 = vpop.permute.xlu0 %3446
        %3448 = vrot.lane.b32.xlu0 %v3249, 56
        %v3449 = vpop.permute.xlu0 %3448
        %3450 = vrot.lane.b32.xlu0 %v3259, 56
        %v3451 = vpop.permute.xlu0 %3450
        %3452 = vrot.lane.b32.xlu0 %v3269, 56
        %v3453 = vpop.permute.xlu0 %3452
        %3454 = vrot.lane.b32.xlu0 %v3279, 56
        %v3455 = vpop.permute.xlu0 %3454
        %3456 = vrot.lane.b32.xlu0 %v3289, 56
        %v3457 = vpop.permute.xlu0 %3456
        %3458 = vrot.lane.b32.xlu0 %v3299, 56
        %v3459 = vpop.permute.xlu0 %3458
        %3460 = vrot.lane.b32.xlu0 %v3309, 56
        %v3461 = vpop.permute.xlu0 %3460
        %3462 = vrot.lane.b32.xlu0 %v3319, 56
        %v3463 = vpop.permute.xlu0 %3462
        %3464 = vrot.lane.b32.xlu0 %v3329, 56
        %v3465 = vpop.permute.xlu0 %3464
        %3466 = vrot.lane.b32.xlu0 %v3339, 56
        %v3467 = vpop.permute.xlu0 %3466
        %3468 = vrot.lane.b32.xlu0 %v3349, 56
        %v3469 = vpop.permute.xlu0 %3468
        %3470 = vrot.lane.b32.xlu0 %v3359, 56
        %v3471 = vpop.permute.xlu0 %3470
        %3472 = vrot.lane.b32.xlu0 %v3369, 56
        %v3473 = vpop.permute.xlu0 %3472
        %3474 = vrot.lane.b32.xlu0 %v3379, 56
        %v3475 = vpop.permute.xlu0 %3474
        %3476 = vrot.lane.b32.xlu0 %v3389, 56
        %v3477 = vpop.permute.xlu0 %3476
        %3478 = vrot.lane.b32.xlu0 %v3399, 56
        %v3479 = vpop.permute.xlu0 %3478
        %3480 = vrot.lane.b32.xlu0 %v3409, 56
        %v3481 = vpop.permute.xlu0 %3480
        %vm3518 = vcmask 519616
        %3519 = vst.msk [vmem:[#allocation2] sm:$0xf] %vm3518, %v3411
        %3520 = vst.msk [vmem:[#allocation2 + $0x4] sm:$0xf] %vm3518, %v3413
        %3521 = vst.msk [vmem:[#allocation2 + $0x8] sm:$0xf] %vm3518, %v3415
        %3522 = vst.msk [vmem:[#allocation2 + $0xc] sm:$0xf] %vm3518, %v3417
        %3523 = vst.msk [vmem:[#allocation2 + $0x10] sm:$0xf] %vm3518, %v3419
        %3524 = vst.msk [vmem:[#allocation2 + $0x14] sm:$0xf] %vm3518, %v3421
        %3525 = vst.msk [vmem:[#allocation2 + $0x18] sm:$0xf] %vm3518, %v3423
        %3526 = vst.msk [vmem:[#allocation2 + $0x1c] sm:$0xf] %vm3518, %v3425
        %3527 = vst.msk [vmem:[#allocation2 + $0x20] sm:$0xf] %vm3518, %v3427
        %3528 = vst.msk [vmem:[#allocation2 + $0x24] sm:$0xf] %vm3518, %v3429
        %3529 = vst.msk [vmem:[#allocation2 + $0x28] sm:$0xf] %vm3518, %v3431
        %3530 = vst.msk [vmem:[#allocation2 + $0x2c] sm:$0xf] %vm3518, %v3433
        %3531 = vst.msk [vmem:[#allocation2 + $0x30] sm:$0xf] %vm3518, %v3435
        %3532 = vst.msk [vmem:[#allocation2 + $0x34] sm:$0xf] %vm3518, %v3437
        %3533 = vst.msk [vmem:[#allocation2 + $0x38] sm:$0xf] %vm3518, %v3439
        %3534 = vst.msk [vmem:[#allocation2 + $0x3c] sm:$0xf] %vm3518, %v3441
        %3535 = vst.msk [vmem:[#allocation2 + $0x40] sm:$0xf] %vm3518, %v3443
        %3536 = vst.msk [vmem:[#allocation2 + $0x44] sm:$0xf] %vm3518, %v3445
        %3537 = vst.msk [vmem:[#allocation2 + $0x48] sm:$0xf] %vm3518, %v3447
        %3538 = vst.msk [vmem:[#allocation2 + $0x4c] sm:$0xf] %vm3518, %v3449
        %3539 = vst.msk [vmem:[#allocation2 + $0x50] sm:$0xf] %vm3518, %v3451
        %3540 = vst.msk [vmem:[#allocation2 + $0x54] sm:$0xf] %vm3518, %v3453
        %3541 = vst.msk [vmem:[#allocation2 + $0x58] sm:$0xf] %vm3518, %v3455
        %3542 = vst.msk [vmem:[#allocation2 + $0x5c] sm:$0xf] %vm3518, %v3457
        %3543 = vst.msk [vmem:[#allocation2 + $0x60] sm:$0xf] %vm3518, %v3459
        %3544 = vst.msk [vmem:[#allocation2 + $0x64] sm:$0xf] %vm3518, %v3461
        %3545 = vst.msk [vmem:[#allocation2 + $0x68] sm:$0xf] %vm3518, %v3463
        %3546 = vst.msk [vmem:[#allocation2 + $0x6c] sm:$0xf] %vm3518, %v3465
        %3547 = vst.msk [vmem:[#allocation2 + $0x70] sm:$0xf] %vm3518, %v3467
        %3548 = vst.msk [vmem:[#allocation2 + $0x74] sm:$0xf] %vm3518, %v3469
        %3549 = vst.msk [vmem:[#allocation2 + $0x78] sm:$0xf] %vm3518, %v3471
        %3550 = vst.msk [vmem:[#allocation2 + $0x7c] sm:$0xf] %vm3518, %v3473
        %3551 = vst.msk [vmem:[#allocation2 + $0x80] sm:$0xf] %vm3518, %v3475
        %3552 = vst.msk [vmem:[#allocation2 + $0x84] sm:$0xf] %vm3518, %v3477
        %3553 = vst.msk [vmem:[#allocation2 + $0x88] sm:$0xf] %vm3518, %v3479
        %3554 = vst.msk [vmem:[#allocation2 + $0x8c] sm:$0xf] %vm3518, %v3481
        %v3555 = vld [vmem:[%s471 + $0x10] sm:$0x8]
        %v3556 = vld [vmem:[%s471 + $0x14] sm:$0xf]
        %v3557 = vld [vmem:[%s471 + $0x18] sm:$0xf]
        %v3558 = vld [vmem:[%s471 + $0x1c] sm:$0xf]
        %v3559 = vld [vmem:[%s471 + $0x20] sm:$0xf]
        %v3560 = vld [vmem:[%s471 + $0x24] sm:$0xf]
        %v3561 = vld [vmem:[%s471 + $0x28] sm:$0xf]
        %v3562 = vld [vmem:[%s471 + $0x2c] sm:$0xf]
        %v3563 = vld [vmem:[%s471 + $0x30] sm:$0xf]
        %v3564 = vld [vmem:[%s471 + $0x34] sm:$0xf]
        %v3565 = vld [vmem:[%s471 + $0x38] sm:$0xf]
        %v3566 = vld [vmem:[%s471 + $0x3c] sm:$0xf]
        %v3567 = vld [vmem:[%s471 + $0x40] sm:$0xf]
        %v3568 = vld [vmem:[%s471 + $0x44] sm:$0xf]
        %v3569 = vld [vmem:[%s471 + $0x48] sm:$0xf]
        %v3570 = vld [vmem:[%s471 + $0x4c] sm:$0xf]
        %v3571 = vld [vmem:[%s471 + $0x50] sm:$0xf]
        %v3572 = vld [vmem:[%s471 + $0x54] sm:$0xf]
        %v3573 = vld [vmem:[%s471 + $0x58] sm:$0xf]
        %v3574 = vld [vmem:[%s471 + $0x5c] sm:$0xf]
        %v3575 = vld [vmem:[%s471 + $0x60] sm:$0xf]
        %v3576 = vld [vmem:[%s471 + $0x64] sm:$0xf]
        %v3577 = vld [vmem:[%s471 + $0x68] sm:$0xf]
        %v3578 = vld [vmem:[%s471 + $0x6c] sm:$0xf]
        %v3579 = vld [vmem:[%s471 + $0x70] sm:$0xf]
        %v3580 = vld [vmem:[%s471 + $0x74] sm:$0xf]
        %v3581 = vld [vmem:[%s471 + $0x78] sm:$0xf]
        %v3582 = vld [vmem:[%s471 + $0x7c] sm:$0xf]
        %v3583 = vld [vmem:[%s471 + $0x80] sm:$0xf]
        %v3584 = vld [vmem:[%s471 + $0x84] sm:$0xf]
        %v3585 = vld [vmem:[%s471 + $0x88] sm:$0xf]
        %v3586 = vld [vmem:[%s471 + $0x8c] sm:$0xf]
        %v3587 = vld [vmem:[%s471 + $0x90] sm:$0xf]
        %v3588 = vld [vmem:[%s471 + $0x94] sm:$0xf]
        %v3589 = vld [vmem:[%s471 + $0x98] sm:$0xf]
        %v3590 = vld [vmem:[%s471 + $0x9c] sm:$0xf]
        %v3591 = vld [vmem:[%s471 + $0xa0] sm:$0x7]
        %vm3629 = vcmask 1040384
        %vm3630 = vcmask 1044484
        %vm3631 = vmor %vm3629, %vm3630
        %v3632 = vrot.slane %v3555, 7
        %v3633 = vrot.slane %v3632, 4
        %v3634 = vrot.slane %v3556, 7
        %v3635 = vsel %vm3631, %v3633, %v3634
        %v3636 = vrot.slane %v3634, 4
        %v3637 = vrot.slane %v3557, 7
        %v3638 = vsel %vm3631, %v3636, %v3637
        %v3639 = vrot.slane %v3637, 4
        %v3640 = vrot.slane %v3558, 7
        %v3641 = vsel %vm3631, %v3639, %v3640
        %v3642 = vrot.slane %v3640, 4
        %v3643 = vrot.slane %v3559, 7
        %v3644 = vsel %vm3631, %v3642, %v3643
        %v3645 = vrot.slane %v3643, 4
        %v3646 = vrot.slane %v3560, 7
        %v3647 = vsel %vm3631, %v3645, %v3646
        %v3648 = vrot.slane %v3646, 4
        %v3649 = vrot.slane %v3561, 7
        %v3650 = vsel %vm3631, %v3648, %v3649
        %v3651 = vrot.slane %v3649, 4
        %v3652 = vrot.slane %v3562, 7
        %v3653 = vsel %vm3631, %v3651, %v3652
        %v3654 = vrot.slane %v3652, 4
        %v3655 = vrot.slane %v3563, 7
        %v3656 = vsel %vm3631, %v3654, %v3655
        %v3657 = vrot.slane %v3655, 4
        %v3658 = vrot.slane %v3564, 7
        %v3659 = vsel %vm3631, %v3657, %v3658
        %v3660 = vrot.slane %v3658, 4
        %v3661 = vrot.slane %v3565, 7
        %v3662 = vsel %vm3631, %v3660, %v3661
        %v3663 = vrot.slane %v3661, 4
        %v3664 = vrot.slane %v3566, 7
        %v3665 = vsel %vm3631, %v3663, %v3664
        %v3666 = vrot.slane %v3664, 4
        %v3667 = vrot.slane %v3567, 7
        %v3668 = vsel %vm3631, %v3666, %v3667
        %v3669 = vrot.slane %v3667, 4
        %v3670 = vrot.slane %v3568, 7
        %v3671 = vsel %vm3631, %v3669, %v3670
        %v3672 = vrot.slane %v3670, 4
        %v3673 = vrot.slane %v3569, 7
        %v3674 = vsel %vm3631, %v3672, %v3673
        %v3675 = vrot.slane %v3673, 4
        %v3676 = vrot.slane %v3570, 7
        %v3677 = vsel %vm3631, %v3675, %v3676
        %v3678 = vrot.slane %v3676, 4
        %v3679 = vrot.slane %v3571, 7
        %v3680 = vsel %vm3631, %v3678, %v3679
        %v3681 = vrot.slane %v3679, 4
        %v3682 = vrot.slane %v3572, 7
        %v3683 = vsel %vm3631, %v3681, %v3682
        %v3684 = vrot.slane %v3682, 4
        %v3685 = vrot.slane %v3573, 7
        %v3686 = vsel %vm3631, %v3684, %v3685
        %v3687 = vrot.slane %v3685, 4
        %v3688 = vrot.slane %v3574, 7
        %v3689 = vsel %vm3631, %v3687, %v3688
        %v3690 = vrot.slane %v3688, 4
        %v3691 = vrot.slane %v3575, 7
        %v3692 = vsel %vm3631, %v3690, %v3691
        %v3693 = vrot.slane %v3691, 4
        %v3694 = vrot.slane %v3576, 7
        %v3695 = vsel %vm3631, %v3693, %v3694
        %v3696 = vrot.slane %v3694, 4
        %v3697 = vrot.slane %v3577, 7
        %v3698 = vsel %vm3631, %v3696, %v3697
        %v3699 = vrot.slane %v3697, 4
        %v3700 = vrot.slane %v3578, 7
        %v3701 = vsel %vm3631, %v3699, %v3700
        %v3702 = vrot.slane %v3700, 4
        %v3703 = vrot.slane %v3579, 7
        %v3704 = vsel %vm3631, %v3702, %v3703
        %v3705 = vrot.slane %v3703, 4
        %v3706 = vrot.slane %v3580, 7
        %v3707 = vsel %vm3631, %v3705, %v3706
        %v3708 = vrot.slane %v3706, 4
        %v3709 = vrot.slane %v3581, 7
        %v3710 = vsel %vm3631, %v3708, %v3709
        %v3711 = vrot.slane %v3709, 4
        %v3712 = vrot.slane %v3582, 7
        %v3713 = vsel %vm3631, %v3711, %v3712
        %v3714 = vrot.slane %v3712, 4
        %v3715 = vrot.slane %v3583, 7
        %v3716 = vsel %vm3631, %v3714, %v3715
        %v3717 = vrot.slane %v3715, 4
        %v3718 = vrot.slane %v3584, 7
        %v3719 = vsel %vm3631, %v3717, %v3718
        %v3720 = vrot.slane %v3718, 4
        %v3721 = vrot.slane %v3585, 7
        %v3722 = vsel %vm3631, %v3720, %v3721
        %v3723 = vrot.slane %v3721, 4
        %v3724 = vrot.slane %v3586, 7
        %v3725 = vsel %vm3631, %v3723, %v3724
        %v3726 = vrot.slane %v3724, 4
        %v3727 = vrot.slane %v3587, 7
        %v3728 = vsel %vm3631, %v3726, %v3727
        %v3729 = vrot.slane %v3727, 4
        %v3730 = vrot.slane %v3588, 7
        %v3731 = vsel %vm3631, %v3729, %v3730
        %v3732 = vrot.slane %v3730, 4
        %v3733 = vrot.slane %v3589, 7
        %v3734 = vsel %vm3631, %v3732, %v3733
        %v3735 = vrot.slane %v3733, 4
        %v3736 = vrot.slane %v3590, 7
        %v3737 = vsel %vm3631, %v3735, %v3736
        %v3738 = vrot.slane %v3736, 4
        %v3739 = vrot.slane %v3591, 7
        %v3740 = vsel %vm3631, %v3738, %v3739
        %3741 = vrot.lane.b32.xlu0 %v3635, 64
        %v3742 = vpop.permute.xlu0 %3741
        %3743 = vrot.lane.b32.xlu0 %v3638, 64
        %v3744 = vpop.permute.xlu0 %3743
        %3745 = vrot.lane.b32.xlu0 %v3641, 64
        %v3746 = vpop.permute.xlu0 %3745
        %3747 = vrot.lane.b32.xlu0 %v3644, 64
        %v3748 = vpop.permute.xlu0 %3747
        %3749 = vrot.lane.b32.xlu0 %v3647, 64
        %v3750 = vpop.permute.xlu0 %3749
        %3751 = vrot.lane.b32.xlu0 %v3650, 64
        %v3752 = vpop.permute.xlu0 %3751
        %3753 = vrot.lane.b32.xlu0 %v3653, 64
        %v3754 = vpop.permute.xlu0 %3753
        %3755 = vrot.lane.b32.xlu0 %v3656, 64
        %v3756 = vpop.permute.xlu0 %3755
        %3757 = vrot.lane.b32.xlu0 %v3659, 64
        %v3758 = vpop.permute.xlu0 %3757
        %3759 = vrot.lane.b32.xlu0 %v3662, 64
        %v3760 = vpop.permute.xlu0 %3759
        %3761 = vrot.lane.b32.xlu0 %v3665, 64
        %v3762 = vpop.permute.xlu0 %3761
        %3763 = vrot.lane.b32.xlu0 %v3668, 64
        %v3764 = vpop.permute.xlu0 %3763
        %3765 = vrot.lane.b32.xlu0 %v3671, 64
        %v3766 = vpop.permute.xlu0 %3765
        %3767 = vrot.lane.b32.xlu0 %v3674, 64
        %v3768 = vpop.permute.xlu0 %3767
        %3769 = vrot.lane.b32.xlu0 %v3677, 64
        %v3770 = vpop.permute.xlu0 %3769
        %3771 = vrot.lane.b32.xlu0 %v3680, 64
        %v3772 = vpop.permute.xlu0 %3771
        %3773 = vrot.lane.b32.xlu0 %v3683, 64
        %v3774 = vpop.permute.xlu0 %3773
        %3775 = vrot.lane.b32.xlu0 %v3686, 64
        %v3776 = vpop.permute.xlu0 %3775
        %3777 = vrot.lane.b32.xlu0 %v3689, 64
        %v3778 = vpop.permute.xlu0 %3777
        %3779 = vrot.lane.b32.xlu0 %v3692, 64
        %v3780 = vpop.permute.xlu0 %3779
        %3781 = vrot.lane.b32.xlu0 %v3695, 64
        %v3782 = vpop.permute.xlu0 %3781
        %3783 = vrot.lane.b32.xlu0 %v3698, 64
        %v3784 = vpop.permute.xlu0 %3783
        %3785 = vrot.lane.b32.xlu0 %v3701, 64
        %v3786 = vpop.permute.xlu0 %3785
        %3787 = vrot.lane.b32.xlu0 %v3704, 64
        %v3788 = vpop.permute.xlu0 %3787
        %3789 = vrot.lane.b32.xlu0 %v3707, 64
        %v3790 = vpop.permute.xlu0 %3789
        %3791 = vrot.lane.b32.xlu0 %v3710, 64
        %v3792 = vpop.permute.xlu0 %3791
        %3793 = vrot.lane.b32.xlu0 %v3713, 64
        %v3794 = vpop.permute.xlu0 %3793
        %3795 = vrot.lane.b32.xlu0 %v3716, 64
        %v3796 = vpop.permute.xlu0 %3795
        %3797 = vrot.lane.b32.xlu0 %v3719, 64
        %v3798 = vpop.permute.xlu0 %3797
        %3799 = vrot.lane.b32.xlu0 %v3722, 64
        %v3800 = vpop.permute.xlu0 %3799
        %3801 = vrot.lane.b32.xlu0 %v3725, 64
        %v3802 = vpop.permute.xlu0 %3801
        %3803 = vrot.lane.b32.xlu0 %v3728, 64
        %v3804 = vpop.permute.xlu0 %3803
        %3805 = vrot.lane.b32.xlu0 %v3731, 64
        %v3806 = vpop.permute.xlu0 %3805
        %3807 = vrot.lane.b32.xlu0 %v3734, 64
        %v3808 = vpop.permute.xlu0 %3807
        %3809 = vrot.lane.b32.xlu0 %v3737, 64
        %v3810 = vpop.permute.xlu0 %3809
        %3811 = vrot.lane.b32.xlu0 %v3740, 64
        %v3812 = vpop.permute.xlu0 %3811
        %vm3849 = vcmask 585216
        %3850 = vst.msk [vmem:[#allocation2] sm:$0xf] %vm3849, %v3742
        %3851 = vst.msk [vmem:[#allocation2 + $0x4] sm:$0xf] %vm3849, %v3744
        %3852 = vst.msk [vmem:[#allocation2 + $0x8] sm:$0xf] %vm3849, %v3746
        %3853 = vst.msk [vmem:[#allocation2 + $0xc] sm:$0xf] %vm3849, %v3748
        %3854 = vst.msk [vmem:[#allocation2 + $0x10] sm:$0xf] %vm3849, %v3750
        %3855 = vst.msk [vmem:[#allocation2 + $0x14] sm:$0xf] %vm3849, %v3752
        %3856 = vst.msk [vmem:[#allocation2 + $0x18] sm:$0xf] %vm3849, %v3754
        %3857 = vst.msk [vmem:[#allocation2 + $0x1c] sm:$0xf] %vm3849, %v3756
        %3858 = vst.msk [vmem:[#allocation2 + $0x20] sm:$0xf] %vm3849, %v3758
        %3859 = vst.msk [vmem:[#allocation2 + $0x24] sm:$0xf] %vm3849, %v3760
        %3860 = vst.msk [vmem:[#allocation2 + $0x28] sm:$0xf] %vm3849, %v3762
        %3861 = vst.msk [vmem:[#allocation2 + $0x2c] sm:$0xf] %vm3849, %v3764
        %3862 = vst.msk [vmem:[#allocation2 + $0x30] sm:$0xf] %vm3849, %v3766
        %3863 = vst.msk [vmem:[#allocation2 + $0x34] sm:$0xf] %vm3849, %v3768
        %3864 = vst.msk [vmem:[#allocation2 + $0x38] sm:$0xf] %vm3849, %v3770
        %3865 = vst.msk [vmem:[#allocation2 + $0x3c] sm:$0xf] %vm3849, %v3772
        %3866 = vst.msk [vmem:[#allocation2 + $0x40] sm:$0xf] %vm3849, %v3774
        %3867 = vst.msk [vmem:[#allocation2 + $0x44] sm:$0xf] %vm3849, %v3776
        %3868 = vst.msk [vmem:[#allocation2 + $0x48] sm:$0xf] %vm3849, %v3778
        %3869 = vst.msk [vmem:[#allocation2 + $0x4c] sm:$0xf] %vm3849, %v3780
        %3870 = vst.msk [vmem:[#allocation2 + $0x50] sm:$0xf] %vm3849, %v3782
        %3871 = vst.msk [vmem:[#allocation2 + $0x54] sm:$0xf] %vm3849, %v3784
        %3872 = vst.msk [vmem:[#allocation2 + $0x58] sm:$0xf] %vm3849, %v3786
        %3873 = vst.msk [vmem:[#allocation2 + $0x5c] sm:$0xf] %vm3849, %v3788
        %3874 = vst.msk [vmem:[#allocation2 + $0x60] sm:$0xf] %vm3849, %v3790
        %3875 = vst.msk [vmem:[#allocation2 + $0x64] sm:$0xf] %vm3849, %v3792
        %3876 = vst.msk [vmem:[#allocation2 + $0x68] sm:$0xf] %vm3849, %v3794
        %3877 = vst.msk [vmem:[#allocation2 + $0x6c] sm:$0xf] %vm3849, %v3796
        %3878 = vst.msk [vmem:[#allocation2 + $0x70] sm:$0xf] %vm3849, %v3798
        %3879 = vst.msk [vmem:[#allocation2 + $0x74] sm:$0xf] %vm3849, %v3800
        %3880 = vst.msk [vmem:[#allocation2 + $0x78] sm:$0xf] %vm3849, %v3802
        %3881 = vst.msk [vmem:[#allocation2 + $0x7c] sm:$0xf] %vm3849, %v3804
        %3882 = vst.msk [vmem:[#allocation2 + $0x80] sm:$0xf] %vm3849, %v3806
        %3883 = vst.msk [vmem:[#allocation2 + $0x84] sm:$0xf] %vm3849, %v3808
        %3884 = vst.msk [vmem:[#allocation2 + $0x88] sm:$0xf] %vm3849, %v3810
        %3885 = vst.msk [vmem:[#allocation2 + $0x8c] sm:$0xf] %vm3849, %v3812
        %v3886 = vld [vmem:[#allocation2] sm:$0xf]
        %v3887 = vld [vmem:[#allocation2 + $0x4] sm:$0xf]
        %v3888 = vld [vmem:[#allocation2 + $0x8] sm:$0xf]
        %v3889 = vld [vmem:[#allocation2 + $0xc] sm:$0xf]
        %v3890 = vld [vmem:[#allocation2 + $0x10] sm:$0xf]
        %v3891 = vld [vmem:[#allocation2 + $0x14] sm:$0xf]
        %v3892 = vld [vmem:[#allocation2 + $0x18] sm:$0xf]
        %v3893 = vld [vmem:[#allocation2 + $0x1c] sm:$0xf]
        %v3894 = vld [vmem:[#allocation2 + $0x20] sm:$0xf]
        %v3895 = vld [vmem:[#allocation2 + $0x24] sm:$0xf]
        %v3896 = vld [vmem:[#allocation2 + $0x28] sm:$0xf]
        %v3897 = vld [vmem:[#allocation2 + $0x2c] sm:$0xf]
        %v3898 = vld [vmem:[#allocation2 + $0x30] sm:$0xf]
        %v3899 = vld [vmem:[#allocation2 + $0x34] sm:$0xf]
        %v3900 = vld [vmem:[#allocation2 + $0x38] sm:$0xf]
        %v3901 = vld [vmem:[#allocation2 + $0x3c] sm:$0xf]
        %v3902 = vld [vmem:[#allocation2 + $0x40] sm:$0xf]
        %v3903 = vld [vmem:[#allocation2 + $0x44] sm:$0xf]
        %v3904 = vld [vmem:[#allocation2 + $0x48] sm:$0xf]
        %v3905 = vld [vmem:[#allocation2 + $0x4c] sm:$0xf]
        %v3906 = vld [vmem:[#allocation2 + $0x50] sm:$0xf]
        %v3907 = vld [vmem:[#allocation2 + $0x54] sm:$0xf]
        %v3908 = vld [vmem:[#allocation2 + $0x58] sm:$0xf]
        %v3909 = vld [vmem:[#allocation2 + $0x5c] sm:$0xf]
        %v3910 = vld [vmem:[#allocation2 + $0x60] sm:$0xf]
        %v3911 = vld [vmem:[#allocation2 + $0x64] sm:$0xf]
        %v3912 = vld [vmem:[#allocation2 + $0x68] sm:$0xf]
        %v3913 = vld [vmem:[#allocation2 + $0x6c] sm:$0xf]
        %v3914 = vld [vmem:[#allocation2 + $0x70] sm:$0xf]
        %v3915 = vld [vmem:[#allocation2 + $0x74] sm:$0xf]
        %v3916 = vld [vmem:[#allocation2 + $0x78] sm:$0xf]
        %v3917 = vld [vmem:[#allocation2 + $0x7c] sm:$0xf]
        %v3918 = vld [vmem:[#allocation2 + $0x80] sm:$0xf]
        %v3919 = vld [vmem:[#allocation2 + $0x84] sm:$0xf]
        %v3920 = vld [vmem:[#allocation2 + $0x88] sm:$0xf]
        %v3921 = vld [vmem:[#allocation2 + $0x8c] sm:$0xf]
        %v3922 = vld [vmem:[%s1] sm:$0xf]
        %v3923 = vld [vmem:[%s1 + $0x4] sm:$0xf]
        %v3924 = vld [vmem:[%s1 + $0x8] sm:$0xf]
        %v3925 = vld [vmem:[%s1 + $0xc] sm:$0xf]
        %v3926 = vld [vmem:[%s1 + $0x10] sm:$0xf]
        %v3927 = vld [vmem:[%s1 + $0x14] sm:$0xf]
        %v3928 = vld [vmem:[%s1 + $0x18] sm:$0xf]
        %v3929 = vld [vmem:[%s1 + $0x1c] sm:$0xf]
        %v3930 = vld [vmem:[%s1 + $0x20] sm:$0xf]
        %v3931 = vld [vmem:[%s1 + $0x24] sm:$0xf]
        %v3932 = vld [vmem:[%s1 + $0x28] sm:$0xf]
        %v3933 = vld [vmem:[%s1 + $0x2c] sm:$0xf]
        %v3934 = vld [vmem:[%s1 + $0x30] sm:$0xf]
        %v3935 = vld [vmem:[%s1 + $0x34] sm:$0xf]
        %v3936 = vld [vmem:[%s1 + $0x38] sm:$0xf]
        %v3937 = vld [vmem:[%s1 + $0x3c] sm:$0xf]
        %v3938 = vld [vmem:[%s2] sm:$0x1]
        %v3940 = vperm.slane %v3938, 0
        %v3978 = vunpack.c.l.b16 %v3886
        %v3979 = vunpack.c.l.b16 %v3887
        %v3980 = vunpack.c.l.b16 %v3888
        %v3981 = vunpack.c.l.b16 %v3889
        %v3982 = vunpack.c.l.b16 %v3890
        %v3983 = vunpack.c.l.b16 %v3891
        %v3984 = vunpack.c.l.b16 %v3892
        %v3985 = vunpack.c.l.b16 %v3893
        %v3986 = vunpack.c.l.b16 %v3894
        %v3987 = vunpack.c.l.b16 %v3895
        %v3988 = vunpack.c.l.b16 %v3896
        %v3989 = vunpack.c.l.b16 %v3897
        %v3990 = vunpack.c.l.b16 %v3898
        %v3991 = vunpack.c.l.b16 %v3899
        %v3992 = vunpack.c.l.b16 %v3900
        %v3993 = vunpack.c.l.b16 %v3901
        %v3994 = vunpack.c.l.b16 %v3902
        %v3995 = vunpack.c.l.b16 %v3903
        %v3996 = vunpack.c.l.b16 %v3904
        %v3997 = vunpack.c.l.b16 %v3905
        %v3998 = vunpack.c.l.b16 %v3906
        %v3999 = vunpack.c.l.b16 %v3907
        %v4000 = vunpack.c.l.b16 %v3908
        %v4001 = vunpack.c.l.b16 %v3909
        %v4002 = vunpack.c.l.b16 %v3910
        %v4003 = vunpack.c.l.b16 %v3911
        %v4004 = vunpack.c.l.b16 %v3912
        %v4005 = vunpack.c.l.b16 %v3913
        %v4006 = vunpack.c.l.b16 %v3914
        %v4007 = vunpack.c.l.b16 %v3915
        %v4008 = vunpack.c.l.b16 %v3916
        %v4009 = vunpack.c.l.b16 %v3917
        %v4010 = vunpack.c.l.b16 %v3918
        %v4011 = vunpack.c.l.b16 %v3919
        %v4012 = vunpack.c.l.b16 %v3920
        %v4013 = vunpack.c.l.b16 %v3921
        %v4014 = vpack.c.b16 %v3979, %v3978
        %v4015 = vpack.c.b16 %v3981, %v3980
        %v4016 = vpack.c.b16 %v3983, %v3982
        %v4017 = vpack.c.b16 %v3985, %v3984
        %v4018 = vpack.c.b16 %v3987, %v3986
        %v4019 = vpack.c.b16 %v3989, %v3988
        %v4020 = vpack.c.b16 %v3991, %v3990
        %v4021 = vpack.c.b16 %v3993, %v3992
        %v4022 = vpack.c.b16 %v3995, %v3994
        %v4023 = vpack.c.b16 %v3997, %v3996
        %v4024 = vpack.c.b16 %v3999, %v3998
        %v4025 = vpack.c.b16 %v4001, %v4000
        %v4026 = vpack.c.b16 %v4003, %v4002
        %v4027 = vpack.c.b16 %v4005, %v4004
        %v4028 = vpack.c.b16 %v4007, %v4006
        %v4029 = vpack.c.b16 %v4009, %v4008
        %v4030 = vpack.c.b16 %v4011, %v4010
        %v4031 = vpack.c.b16 %v4013, %v4012
        %v4066 = vunpack.c.l.b16 %v3922
        %v4067 = vunpack.c.l.b16 %v3923
        %v4068 = vunpack.c.l.b16 %v3924
        %v4069 = vunpack.c.l.b16 %v3925
        %v4070 = vunpack.c.l.b16 %v3926
        %v4071 = vunpack.c.l.b16 %v3927
        %v4072 = vunpack.c.l.b16 %v3928
        %v4073 = vunpack.c.l.b16 %v3929
        %v4074 = vunpack.c.l.b16 %v3930
        %v4075 = vunpack.c.l.b16 %v3931
        %v4076 = vunpack.c.l.b16 %v3932
        %v4077 = vunpack.c.l.b16 %v3933
        %v4078 = vunpack.c.l.b16 %v3934
        %v4079 = vunpack.c.l.b16 %v3935
        %v4080 = vunpack.c.l.b16 %v3936
        %v4081 = vunpack.c.l.b16 %v3937
        %v4082 = vpack.c.b16 %v4067, %v4066
        %v4083 = vpack.c.b16 %v4069, %v4068
        %v4084 = vpack.c.b16 %v4071, %v4070
        %v4085 = vpack.c.b16 %v4073, %v4072
        %v4086 = vpack.c.b16 %v4075, %v4074
        %v4087 = vpack.c.b16 %v4077, %v4076
        %v4088 = vpack.c.b16 %v4079, %v4078
        %v4089 = vpack.c.b16 %v4081, %v4080
        %4098 = vmatpush.bf16.msra.mxu0 %v4089
        %4099 = vmatpush.bf16.msra.mxu0 %v4088
        %4100 = vmatpush.bf16.msra.mxu0 %v4087
        %4101 = vmatpush.bf16.msra.mxu0 %v4086
        %4102 = vmatpush.bf16.msra.mxu0 %v4085
        %4103 = vmatpush.bf16.msra.mxu0 %v4084
        %4104 = vmatpush.bf16.msra.mxu0 %v4083
        %4105 = vmatpush.bf16.msra.mxu0 %v4082
        %4106 = vmatmul.bf16.gmra.mxu0 %v4014
        %v4107 = vpop.f32.mrf.mxu0
        %v4108 = vadd.f32 %v3940, %v4107
        %v4109 = vpop.f32.mrf.mxu0
        %v4110 = vadd.f32 %v3940, %v4109
        %4111 = vmatmul.bf16.gmra.mxu0 %v4015
        %v4112 = vpop.f32.mrf.mxu0
        %v4113 = vadd.f32 %v3940, %v4112
        %v4114 = vpop.f32.mrf.mxu0
        %v4115 = vadd.f32 %v3940, %v4114
        %4116 = vmatmul.bf16.gmra.mxu0 %v4016
        %v4117 = vpop.f32.mrf.mxu0
        %v4118 = vadd.f32 %v3940, %v4117
        %v4119 = vpop.f32.mrf.mxu0
        %v4120 = vadd.f32 %v3940, %v4119
        %4121 = vmatmul.bf16.gmra.mxu0 %v4017
        %v4122 = vpop.f32.mrf.mxu0
        %v4123 = vadd.f32 %v3940, %v4122
        %v4124 = vpop.f32.mrf.mxu0
        %v4125 = vadd.f32 %v3940, %v4124
        %4126 = vmatmul.bf16.gmra.mxu0 %v4018
        %v4127 = vpop.f32.mrf.mxu0
        %v4128 = vadd.f32 %v3940, %v4127
        %v4129 = vpop.f32.mrf.mxu0
        %v4130 = vadd.f32 %v3940, %v4129
        %4131 = vmatmul.bf16.gmra.mxu0 %v4019
        %v4132 = vpop.f32.mrf.mxu0
        %v4133 = vadd.f32 %v3940, %v4132
        %v4134 = vpop.f32.mrf.mxu0
        %v4135 = vadd.f32 %v3940, %v4134
        %4136 = vmatmul.bf16.gmra.mxu0 %v4020
        %v4137 = vpop.f32.mrf.mxu0
        %v4138 = vadd.f32 %v3940, %v4137
        %v4139 = vpop.f32.mrf.mxu0
        %v4140 = vadd.f32 %v3940, %v4139
        %4141 = vmatmul.bf16.gmra.mxu0 %v4021
        %v4142 = vpop.f32.mrf.mxu0
        %v4143 = vadd.f32 %v3940, %v4142
        %v4144 = vpop.f32.mrf.mxu0
        %v4145 = vadd.f32 %v3940, %v4144
        %4146 = vmatmul.bf16.gmra.mxu0 %v4022
        %v4147 = vpop.f32.mrf.mxu0
        %v4148 = vadd.f32 %v3940, %v4147
        %v4149 = vpop.f32.mrf.mxu0
        %v4150 = vadd.f32 %v3940, %v4149
        %4151 = vmatmul.bf16.gmra.mxu0 %v4023
        %v4152 = vpop.f32.mrf.mxu0
        %v4153 = vadd.f32 %v3940, %v4152
        %v4154 = vpop.f32.mrf.mxu0
        %v4155 = vadd.f32 %v3940, %v4154
        %4156 = vmatmul.bf16.gmra.mxu0 %v4024
        %v4157 = vpop.f32.mrf.mxu0
        %v4158 = vadd.f32 %v3940, %v4157
        %v4159 = vpop.f32.mrf.mxu0
        %v4160 = vadd.f32 %v3940, %v4159
        %4161 = vmatmul.bf16.gmra.mxu0 %v4025
        %v4162 = vpop.f32.mrf.mxu0
        %v4163 = vadd.f32 %v3940, %v4162
        %v4164 = vpop.f32.mrf.mxu0
        %v4165 = vadd.f32 %v3940, %v4164
        %4166 = vmatmul.bf16.gmra.mxu0 %v4026
        %v4167 = vpop.f32.mrf.mxu0
        %v4168 = vadd.f32 %v3940, %v4167
        %v4169 = vpop.f32.mrf.mxu0
        %v4170 = vadd.f32 %v3940, %v4169
        %4171 = vmatmul.bf16.gmra.mxu0 %v4027
        %v4172 = vpop.f32.mrf.mxu0
        %v4173 = vadd.f32 %v3940, %v4172
        %v4174 = vpop.f32.mrf.mxu0
        %v4175 = vadd.f32 %v3940, %v4174
        %4176 = vmatmul.bf16.gmra.mxu0 %v4028
        %v4177 = vpop.f32.mrf.mxu0
        %v4178 = vadd.f32 %v3940, %v4177
        %v4179 = vpop.f32.mrf.mxu0
        %v4180 = vadd.f32 %v3940, %v4179
        %4181 = vmatmul.bf16.gmra.mxu0 %v4029
        %v4182 = vpop.f32.mrf.mxu0
        %v4183 = vadd.f32 %v3940, %v4182
        %v4184 = vpop.f32.mrf.mxu0
        %v4185 = vadd.f32 %v3940, %v4184
        %4186 = vmatmul.bf16.gmra.mxu0 %v4030
        %v4187 = vpop.f32.mrf.mxu0
        %v4188 = vadd.f32 %v3940, %v4187
        %v4189 = vpop.f32.mrf.mxu0
        %v4190 = vadd.f32 %v3940, %v4189
        %4191 = vmatmul.bf16.gmra.mxu0 %v4031
        %v4192 = vpop.f32.mrf.mxu0
        %v4193 = vadd.f32 %v3940, %v4192
        %v4194 = vpop.f32.mrf.mxu0
        %v4195 = vadd.f32 %v3940, %v4194
        %4196 = vdwg.mxu0
        %v4197 = vmax.f32 %v4108, 0.0
        %v4198 = vmax.f32 %v4110, 0.0
        %v4199 = vmax.f32 %v4113, 0.0
        %v4200 = vmax.f32 %v4115, 0.0
        %v4201 = vmax.f32 %v4118, 0.0
        %v4202 = vmax.f32 %v4120, 0.0
        %v4203 = vmax.f32 %v4123, 0.0
        %v4204 = vmax.f32 %v4125, 0.0
        %v4205 = vmax.f32 %v4128, 0.0
        %v4206 = vmax.f32 %v4130, 0.0
        %v4207 = vmax.f32 %v4133, 0.0
        %v4208 = vmax.f32 %v4135, 0.0
        %v4209 = vmax.f32 %v4138, 0.0
        %v4210 = vmax.f32 %v4140, 0.0
        %v4211 = vmax.f32 %v4143, 0.0
        %v4212 = vmax.f32 %v4145, 0.0
        %v4213 = vmax.f32 %v4148, 0.0
        %v4214 = vmax.f32 %v4150, 0.0
        %v4215 = vmax.f32 %v4153, 0.0
        %v4216 = vmax.f32 %v4155, 0.0
        %v4217 = vmax.f32 %v4158, 0.0
        %v4218 = vmax.f32 %v4160, 0.0
        %v4219 = vmax.f32 %v4163, 0.0
        %v4220 = vmax.f32 %v4165, 0.0
        %v4221 = vmax.f32 %v4168, 0.0
        %v4222 = vmax.f32 %v4170, 0.0
        %v4223 = vmax.f32 %v4173, 0.0
        %v4224 = vmax.f32 %v4175, 0.0
        %v4225 = vmax.f32 %v4178, 0.0
        %v4226 = vmax.f32 %v4180, 0.0
        %v4227 = vmax.f32 %v4183, 0.0
        %v4228 = vmax.f32 %v4185, 0.0
        %v4229 = vmax.f32 %v4188, 0.0
        %v4230 = vmax.f32 %v4190, 0.0
        %v4231 = vmax.f32 %v4193, 0.0
        %v4232 = vmax.f32 %v4195, 0.0
        %vm4233 = vcmask 523264
        %4234 = vst.msk [vmem:[#allocation3] sm:$0xff] %vm4233, %v4197
        %4235 = vst.msk [vmem:[#allocation3 + $0x8] sm:$0xff] %vm4233, %v4198
        %4236 = vst.msk [vmem:[#allocation3 + $0x10] sm:$0xff] %vm4233, %v4199
        %4237 = vst.msk [vmem:[#allocation3 + $0x18] sm:$0xff] %vm4233, %v4200
        %4238 = vst.msk [vmem:[#allocation3 + $0x20] sm:$0xff] %vm4233, %v4201
        %4239 = vst.msk [vmem:[#allocation3 + $0x28] sm:$0xff] %vm4233, %v4202
        %4240 = vst.msk [vmem:[#allocation3 + $0x30] sm:$0xff] %vm4233, %v4203
        %4241 = vst.msk [vmem:[#allocation3 + $0x38] sm:$0xff] %vm4233, %v4204
        %4242 = vst.msk [vmem:[#allocation3 + $0x40] sm:$0xff] %vm4233, %v4205
        %4243 = vst.msk [vmem:[#allocation3 + $0x48] sm:$0xff] %vm4233, %v4206
        %4244 = vst.msk [vmem:[#allocation3 + $0x50] sm:$0xff] %vm4233, %v4207
        %4245 = vst.msk [vmem:[#allocation3 + $0x58] sm:$0xff] %vm4233, %v4208
        %4246 = vst.msk [vmem:[#allocation3 + $0x60] sm:$0xff] %vm4233, %v4209
        %4247 = vst.msk [vmem:[#allocation3 + $0x68] sm:$0xff] %vm4233, %v4210
        %4248 = vst.msk [vmem:[#allocation3 + $0x70] sm:$0xff] %vm4233, %v4211
        %4249 = vst.msk [vmem:[#allocation3 + $0x78] sm:$0xff] %vm4233, %v4212
        %4250 = vst.msk [vmem:[#allocation3 + $0x80] sm:$0xff] %vm4233, %v4213
        %4251 = vst.msk [vmem:[#allocation3 + $0x88] sm:$0xff] %vm4233, %v4214
        %4252 = vst.msk [vmem:[#allocation3 + $0x90] sm:$0xff] %vm4233, %v4215
        %4253 = vst.msk [vmem:[#allocation3 + $0x98] sm:$0xff] %vm4233, %v4216
        %4254 = vst.msk [vmem:[#allocation3 + $0xa0] sm:$0xff] %vm4233, %v4217
        %4255 = vst.msk [vmem:[#allocation3 + $0xa8] sm:$0xff] %vm4233, %v4218
        %4256 = vst.msk [vmem:[#allocation3 + $0xb0] sm:$0xff] %vm4233, %v4219
        %4257 = vst.msk [vmem:[#allocation3 + $0xb8] sm:$0xff] %vm4233, %v4220
        %4258 = vst.msk [vmem:[#allocation3 + $0xc0] sm:$0xff] %vm4233, %v4221
        %4259 = vst.msk [vmem:[#allocation3 + $0xc8] sm:$0xff] %vm4233, %v4222
        %4260 = vst.msk [vmem:[#allocation3 + $0xd0] sm:$0xff] %vm4233, %v4223
        %4261 = vst.msk [vmem:[#allocation3 + $0xd8] sm:$0xff] %vm4233, %v4224
        %4262 = vst.msk [vmem:[#allocation3 + $0xe0] sm:$0xff] %vm4233, %v4225
        %4263 = vst.msk [vmem:[#allocation3 + $0xe8] sm:$0xff] %vm4233, %v4226
        %4264 = vst.msk [vmem:[#allocation3 + $0xf0] sm:$0xff] %vm4233, %v4227
        %4265 = vst.msk [vmem:[#allocation3 + $0xf8] sm:$0xff] %vm4233, %v4228
        %4266 = vst.msk [vmem:[#allocation3 + $0x100] sm:$0xff] %vm4233, %v4229
        %4267 = vst.msk [vmem:[#allocation3 + $0x108] sm:$0xff] %vm4233, %v4230
        %4268 = vst.msk [vmem:[#allocation3 + $0x110] sm:$0xff] %vm4233, %v4231
        %4269 = vst.msk [vmem:[#allocation3 + $0x118] sm:$0xff] %vm4233, %v4232
        %vm4270 = vcmask 519168
        %4271 = vst.msk [vmem:[#allocation4] sm:$0xf] %vm4270, 0
        %4272 = vst.msk [vmem:[#allocation4 + $0x4] sm:$0xf] %vm4270, 0
        %4273 = vst.msk [vmem:[#allocation4 + $0x8] sm:$0xf] %vm4270, 0
        %4274 = vst.msk [vmem:[#allocation4 + $0xc] sm:$0xf] %vm4270, 0
        %4275 = vst.msk [vmem:[#allocation4 + $0x10] sm:$0xf] %vm4270, 0
        %4276 = vst.msk [vmem:[#allocation4 + $0x14] sm:$0xf] %vm4270, 0
        %4277 = vst.msk [vmem:[#allocation4 + $0x18] sm:$0xf] %vm4270, 0
        %4278 = vst.msk [vmem:[#allocation4 + $0x1c] sm:$0xf] %vm4270, 0
        %4279 = vst.msk [vmem:[#allocation4 + $0x20] sm:$0xf] %vm4270, 0
        %4280 = vst.msk [vmem:[#allocation4 + $0x24] sm:$0xf] %vm4270, 0
        %4281 = vst.msk [vmem:[#allocation4 + $0x28] sm:$0xf] %vm4270, 0
        %4282 = vst.msk [vmem:[#allocation4 + $0x2c] sm:$0xf] %vm4270, 0
        %4283 = vst.msk [vmem:[#allocation4 + $0x30] sm:$0xf] %vm4270, 0
        %vm4284 = vcmask 518144
        %4285 = vst.msk [vmem:[#allocation4 + $0x34] sm:$0x7] %vm4284, 0
        %v4286 = vld [vmem:[#allocation3] ss:$2 sm:$0xff]
        %s4287 = scalar_lea.vmem [#allocation3], 1
        %v4288 = vld [vmem:[%s4287] ss:$2 sm:$0xff]
        %s4289 = scalar_lea.vmem [#allocation3], 18
        %v4290 = vld [vmem:[%s4289] ss:$2 sm:$0xff]
        %s4291 = scalar_lea.vmem [#allocation3], 19
        %v4292 = vld [vmem:[%s4291] ss:$2 sm:$0xff]
        %v4293 = vmax.f32 %v4286, %v4288
        %v4294 = vmax.f32 %v4290, %v4292
        %v4295 = vmax.f32 %v4293, %v4294
        %v4296 = vpack.c.bf16 %v4295, %v4295
        %v4298 = vshrl.u32 %v4296, 16
        %v4300 = vrot.slane %v4298, 6
        %v4301 = vshll.u32 %v4296, 16
        %v4303 = vrot.slane %v4301, 7
        %v4304 = vor.u32 %v4300, %v4303
        %v4305 = vrot.slane %v4304, 4
        %vm4308 = vcmask 519169
        %vm4309 = vsmask.f32 7942
        %vm4310 = vmand %vm4308, %vm4309
        %v4311 = vld [vmem:[#allocation4 + $0x4] sm:$0xe]
        %v4312 = vsel %vm4310, %v4304, %v4311
        %4313 = vst [vmem:[#allocation4 + $0x4] sm:$0xe] %v4312
        %vm4314 = vcmask 517120
        %vm4315 = vmand %vm4314, %vm3039
        %v4316 = vld [vmem:[#allocation4 + $0x8] sm:$0x3]
        %v4317 = vsel %vm4315, %v4305, %v4316
        %4318 = vst [vmem:[#allocation4 + $0x8] sm:$0x3] %v4317
        %s4319 = scalar_lea.vmem [#allocation3], 36
        %v4320 = vld [vmem:[%s4319] ss:$2 sm:$0xff]
        %s4321 = scalar_lea.vmem [#allocation3], 37
        %v4322 = vld [vmem:[%s4321] ss:$2 sm:$0xff]
        %s4323 = scalar_lea.vmem [#allocation3], 54
        %v4324 = vld [vmem:[%s4323] ss:$2 sm:$0xff]
        %s4325 = scalar_lea.vmem [#allocation3], 55
        %v4326 = vld [vmem:[%s4325] ss:$2 sm:$0xff]
        %v4327 = vmax.f32 %v4320, %v4322
        %v4328 = vmax.f32 %v4324, %v4326
        %v4329 = vmax.f32 %v4327, %v4328
        %v4330 = vpack.c.bf16 %v4329, %v4329
        %v4332 = vshrl.u32 %v4330, 16
        %v4334 = vrot.slane %v4332, 5
        %v4335 = vshll.u32 %v4330, 16
        %v4337 = vrot.slane %v4335, 6
        %v4338 = vor.u32 %v4334, %v4337
        %v4339 = vrot.slane %v4338, 4
        %vm4342 = vcmask 519170
        %vm4343 = vsmask.f32 7946
        %vm4344 = vmand %vm4342, %vm4343
        %v4345 = vld [vmem:[#allocation4 + $0x8] sm:$0xc]
        %v4346 = vsel %vm4344, %v4338, %v4345
        %4347 = vst [vmem:[#allocation4 + $0x8] sm:$0xc] %v4346
        %vm4348 = vcmask 518144
        %vm4349 = vmand %vm4348, %vm1827
        %v4350 = vld [vmem:[#allocation4 + $0xc] sm:$0x7]
        %v4351 = vsel %vm4349, %v4339, %v4350
        %4352 = vst [vmem:[#allocation4 + $0xc] sm:$0x7] %v4351
        %s4353 = scalar_lea.vmem [#allocation3], 72
        %v4354 = vld [vmem:[%s4353] ss:$2 sm:$0xff]
        %s4355 = scalar_lea.vmem [#allocation3], 73
        %v4356 = vld [vmem:[%s4355] ss:$2 sm:$0xff]
        %s4357 = scalar_lea.vmem [#allocation3], 90
        %v4358 = vld [vmem:[%s4357] ss:$2 sm:$0xff]
        %s4359 = scalar_lea.vmem [#allocation3], 91
        %v4360 = vld [vmem:[%s4359] ss:$2 sm:$0xff]
        %v4361 = vmax.f32 %v4354, %v4356
        %v4362 = vmax.f32 %v4358, %v4360
        %v4363 = vmax.f32 %v4361, %v4362
        %v4364 = vpack.c.bf16 %v4363, %v4363
        %v4366 = vshll.u32 %v4364, 16
        %v4368 = vrot.slane %v4366, 5
        %v4369 = vshrl.u32 %v4364, 16
        %v4371 = vrot.slane %v4369, 4
        %v4372 = vor.u32 %v4371, %v4368
        %v4373 = vrot.slane %v4372, 4
        %vm4376 = vcmask 519171
        %vm4377 = vsmask.f32 7950
        %vm4378 = vmand %vm4376, %vm4377
        %v4379 = vld [vmem:[#allocation4 + $0xc] sm:$0x8]
        %v4380 = vsel %vm4378, %v4368, %v4379
        %4381 = vst [vmem:[#allocation4 + $0xc] sm:$0x8] %v4380
        %vm4382 = vcmask 519168
        %vm4383 = vmand %vm4382, %vm619
        %v4384 = vld [vmem:[#allocation4 + $0x10] sm:$0xf]
        %v4385 = vsel %vm4383, %v4373, %v4384
        %4386 = vst [vmem:[#allocation4 + $0x10] sm:$0xf] %v4385
        %s4387 = scalar_lea.vmem [#allocation3], 108
        %v4388 = vld [vmem:[%s4387] ss:$2 sm:$0xff]
        %s4389 = scalar_lea.vmem [#allocation3], 109
        %v4390 = vld [vmem:[%s4389] ss:$2 sm:$0xff]
        %s4391 = scalar_lea.vmem [#allocation3], 126
        %v4392 = vld [vmem:[%s4391] ss:$2 sm:$0xff]
        %s4393 = scalar_lea.vmem [#allocation3], 127
        %v4394 = vld [vmem:[%s4393] ss:$2 sm:$0xff]
        %v4395 = vmax.f32 %v4388, %v4390
        %v4396 = vmax.f32 %v4392, %v4394
        %v4397 = vmax.f32 %v4395, %v4396
        %v4398 = vpack.c.bf16 %v4397, %v4397
        %v4400 = vshrl.u32 %v4398, 16
        %v4402 = vrot.slane %v4400, 7
        %v4403 = vshll.u32 %v4398, 16
        %v4405 = vor.u32 %v4402, %v4403
        %v4406 = vrot.slane %v4402, 4
        %vm4409 = vsmask.f32 7938
        %vm4410 = vmand %vm4382, %vm4409
        %v4411 = vld [vmem:[#allocation4 + $0x14] sm:$0xf]
        %v4412 = vsel %vm4410, %v4405, %v4411
        %4413 = vst [vmem:[#allocation4 + $0x14] sm:$0xf] %v4412
        %vm4414 = vcmask 516096
        %vm4415 = vsmask.f32 256
        %vm4416 = vmand %vm4414, %vm4415
        %v4417 = vld [vmem:[#allocation4 + $0x18] sm:$0x1]
        %v4418 = vsel %vm4416, %v4406, %v4417
        %4419 = vst [vmem:[#allocation4 + $0x18] sm:$0x1] %v4418
        %s4420 = scalar_lea.vmem [#allocation3], 144
        %v4421 = vld [vmem:[%s4420] ss:$2 sm:$0xff]
        %s4422 = scalar_lea.vmem [#allocation3], 145
        %v4423 = vld [vmem:[%s4422] ss:$2 sm:$0xff]
        %s4424 = scalar_lea.vmem [#allocation3], 162
        %v4425 = vld [vmem:[%s4424] ss:$2 sm:$0xff]
        %s4426 = scalar_lea.vmem [#allocation3], 163
        %v4427 = vld [vmem:[%s4426] ss:$2 sm:$0xff]
        %v4428 = vmax.f32 %v4421, %v4423
        %v4429 = vmax.f32 %v4425, %v4427
        %v4430 = vmax.f32 %v4428, %v4429
        %v4431 = vpack.c.bf16 %v4430, %v4430
        %v4433 = vshrl.u32 %v4431, 16
        %v4435 = vrot.slane %v4433, 6
        %v4436 = vshll.u32 %v4431, 16
        %v4438 = vrot.slane %v4436, 7
        %v4439 = vor.u32 %v4435, %v4438
        %v4440 = vrot.slane %v4439, 4
        %v4443 = vld [vmem:[#allocation4 + $0x18] sm:$0xe]
        %v4444 = vsel %vm4310, %v4439, %v4443
        %4445 = vst [vmem:[#allocation4 + $0x18] sm:$0xe] %v4444
        %v4446 = vld [vmem:[#allocation4 + $0x1c] sm:$0x3]
        %v4447 = vsel %vm4315, %v4440, %v4446
        %4448 = vst [vmem:[#allocation4 + $0x1c] sm:$0x3] %v4447
        %s4449 = scalar_lea.vmem [#allocation3], 180
        %v4450 = vld [vmem:[%s4449] ss:$2 sm:$0xff]
        %s4451 = scalar_lea.vmem [#allocation3], 181
        %v4452 = vld [vmem:[%s4451] ss:$2 sm:$0xff]
        %s4453 = scalar_lea.vmem [#allocation3], 198
        %v4454 = vld [vmem:[%s4453] ss:$2 sm:$0xff]
        %s4455 = scalar_lea.vmem [#allocation3], 199
        %v4456 = vld [vmem:[%s4455] ss:$2 sm:$0xff]
        %v4457 = vmax.f32 %v4450, %v4452
        %v4458 = vmax.f32 %v4454, %v4456
        %v4459 = vmax.f32 %v4457, %v4458
        %v4460 = vpack.c.bf16 %v4459, %v4459
        %v4462 = vshrl.u32 %v4460, 16
        %v4464 = vrot.slane %v4462, 5
        %v4465 = vshll.u32 %v4460, 16
        %v4467 = vrot.slane %v4465, 6
        %v4468 = vor.u32 %v4464, %v4467
        %v4469 = vrot.slane %v4468, 4
        %v4472 = vld [vmem:[#allocation4 + $0x1c] sm:$0xc]
        %v4473 = vsel %vm4344, %v4468, %v4472
        %4474 = vst [vmem:[#allocation4 + $0x1c] sm:$0xc] %v4473
        %v4475 = vld [vmem:[#allocation4 + $0x20] sm:$0x7]
        %v4476 = vsel %vm4349, %v4469, %v4475
        %4477 = vst [vmem:[#allocation4 + $0x20] sm:$0x7] %v4476
        %s4478 = scalar_lea.vmem [#allocation3], 216
        %v4479 = vld [vmem:[%s4478] ss:$2 sm:$0xff]
        %s4480 = scalar_lea.vmem [#allocation3], 217
        %v4481 = vld [vmem:[%s4480] ss:$2 sm:$0xff]
        %s4482 = scalar_lea.vmem [#allocation3], 234
        %v4483 = vld [vmem:[%s4482] ss:$2 sm:$0xff]
        %s4484 = scalar_lea.vmem [#allocation3], 235
        %v4485 = vld [vmem:[%s4484] ss:$2 sm:$0xff]
        %v4486 = vmax.f32 %v4479, %v4481
        %v4487 = vmax.f32 %v4483, %v4485
        %v4488 = vmax.f32 %v4486, %v4487
        %v4489 = vpack.c.bf16 %v4488, %v4488
        %v4491 = vshll.u32 %v4489, 16
        %v4493 = vrot.slane %v4491, 5
        %v4494 = vshrl.u32 %v4489, 16
        %v4496 = vrot.slane %v4494, 4
        %v4497 = vor.u32 %v4496, %v4493
        %v4498 = vrot.slane %v4497, 4
        %v4501 = vld [vmem:[#allocation4 + $0x20] sm:$0x8]
        %v4502 = vsel %vm4378, %v4493, %v4501
        %4503 = vst [vmem:[#allocation4 + $0x20] sm:$0x8] %v4502
        %v4504 = vld [vmem:[#allocation4 + $0x24] sm:$0xf]
        %v4505 = vsel %vm4383, %v4498, %v4504
        %4506 = vst [vmem:[#allocation4 + $0x24] sm:$0xf] %v4505
        %s4507 = scalar_lea.vmem [#allocation3], 252
        %v4508 = vld [vmem:[%s4507] ss:$2 sm:$0xff]
        %s4509 = scalar_lea.vmem [#allocation3], 253
        %v4510 = vld [vmem:[%s4509] ss:$2 sm:$0xff]
        %s4511 = scalar_lea.vmem [#allocation3], 270
        %v4512 = vld [vmem:[%s4511] ss:$2 sm:$0xff]
        %s4513 = scalar_lea.vmem [#allocation3], 271
        %v4514 = vld [vmem:[%s4513] ss:$2 sm:$0xff]
        %v4515 = vmax.f32 %v4508, %v4510
        %v4516 = vmax.f32 %v4512, %v4514
        %v4517 = vmax.f32 %v4515, %v4516
        %v4518 = vpack.c.bf16 %v4517, %v4517
        %v4520 = vshrl.u32 %v4518, 16
        %v4522 = vrot.slane %v4520, 7
        %v4523 = vshll.u32 %v4518, 16
        %v4525 = vor.u32 %v4522, %v4523
        %v4526 = vrot.slane %v4522, 4
        %v4529 = vld [vmem:[#allocation4 + $0x28] sm:$0xf]
        %v4530 = vsel %vm4410, %v4525, %v4529
        %4531 = vst [vmem:[#allocation4 + $0x28] sm:$0xf] %v4530
        %v4532 = vld [vmem:[#allocation4 + $0x2c] sm:$0x1]
        %v4533 = vsel %vm4416, %v4526, %v4532
        %4534 = vst [vmem:[#allocation4 + $0x2c] sm:$0x1] %v4533
        %4535 = vst [vmem:[#allocation5] sm:$0xff] 0
        %4536 = vst [vmem:[#allocation5 + $0x8] sm:$0xff] 0
        %4537 = vst [vmem:[#allocation5 + $0x10] sm:$0xf] 0
        %4538 = vst [vmem:[#allocation5 + $0x14] sm:$0xff] 0
        %4539 = vst [vmem:[#allocation5 + $0x1c] sm:$0xff] 0
        %4540 = vst [vmem:[#allocation5 + $0x24] sm:$0xf] 0
        %4541 = vst [vmem:[#allocation5 + $0x28] sm:$0xff] 0
        %4542 = vst [vmem:[#allocation5 + $0x30] sm:$0xff] 0
        %4543 = vst [vmem:[#allocation5 + $0x38] sm:$0xf] 0
        %4544 = vst [vmem:[#allocation5 + $0x3c] sm:$0xff] 0
        %4545 = vst [vmem:[#allocation5 + $0x44] sm:$0xff] 0
        %4546 = vst [vmem:[#allocation5 + $0x4c] sm:$0xf] 0
        %4547 = vst [vmem:[#allocation5 + $0x50] sm:$0xff] 0
        %4548 = vst [vmem:[#allocation5 + $0x58] sm:$0xff] 0
        %4549 = vst [vmem:[#allocation5 + $0x60] sm:$0xf] 0
        %4550 = vst [vmem:[#allocation5 + $0x64] sm:$0xff] 0
        %4551 = vst [vmem:[#allocation5 + $0x6c] sm:$0xff] 0
        %4552 = vst [vmem:[#allocation5 + $0x74] sm:$0xf] 0
        %4553 = vst [vmem:[#allocation5 + $0x78] sm:$0xff] 0
        %4554 = vst [vmem:[#allocation5 + $0x80] sm:$0xff] 0
        %4555 = vst [vmem:[#allocation5 + $0x88] sm:$0xf] 0
        %4556 = vst [vmem:[#allocation5 + $0x8c] sm:$0xff] 0
        %4557 = vst [vmem:[#allocation5 + $0x94] sm:$0xff] 0
        %4558 = vst [vmem:[#allocation5 + $0x9c] sm:$0xf] 0
        %4559 = vst [vmem:[#allocation5 + $0xa0] sm:$0xff] 0
        %4560 = vst [vmem:[#allocation5 + $0xa8] sm:$0xff] 0
        %4561 = vst [vmem:[#allocation5 + $0xb0] sm:$0xf] 0
        %4562 = vst [vmem:[#allocation5 + $0xb4] sm:$0xff] 0
        %4563 = vst [vmem:[#allocation5 + $0xbc] sm:$0xff] 0
        %4564 = vst [vmem:[#allocation5 + $0xc4] sm:$0xf] 0
        %v4565 = vld [vmem:[#allocation4] sm:$0xf]
        %v4566 = vld [vmem:[#allocation4 + $0x4] sm:$0xf]
        %v4567 = vld [vmem:[#allocation4 + $0x8] sm:$0xf]
        %v4568 = vld [vmem:[#allocation4 + $0xc] sm:$0xf]
        %v4569 = vld [vmem:[#allocation4 + $0x10] sm:$0xf]
        %v4570 = vld [vmem:[#allocation4 + $0x14] sm:$0xf]
        %v4571 = vld [vmem:[#allocation4 + $0x18] sm:$0xf]
        %v4572 = vld [vmem:[#allocation4 + $0x1c] sm:$0xf]
        %v4573 = vld [vmem:[#allocation4 + $0x20] sm:$0xf]
        %v4574 = vld [vmem:[#allocation4 + $0x24] sm:$0xf]
        %4575 = vst.msk [vmem:[#allocation5] sm:$0xf] %vm4270, %v4565
        %4576 = vst.msk [vmem:[#allocation5 + $0x14] sm:$0xf] %vm4270, %v4566
        %4577 = vst.msk [vmem:[#allocation5 + $0x28] sm:$0xf] %vm4270, %v4567
        %4578 = vst.msk [vmem:[#allocation5 + $0x3c] sm:$0xf] %vm4270, %v4568
        %4579 = vst.msk [vmem:[#allocation5 + $0x50] sm:$0xf] %vm4270, %v4569
        %4580 = vst.msk [vmem:[#allocation5 + $0x64] sm:$0xf] %vm4270, %v4570
        %4581 = vst.msk [vmem:[#allocation5 + $0x78] sm:$0xf] %vm4270, %v4571
        %4582 = vst.msk [vmem:[#allocation5 + $0x8c] sm:$0xf] %vm4270, %v4572
        %4583 = vst.msk [vmem:[#allocation5 + $0xa0] sm:$0xf] %vm4270, %v4573
        %4584 = vst.msk [vmem:[#allocation5 + $0xb4] sm:$0xf] %vm4270, %v4574
        %v4585 = vld [vmem:[#allocation4] sm:$0xf]
        %v4586 = vld [vmem:[#allocation4 + $0x4] sm:$0xf]
        %v4587 = vld [vmem:[#allocation4 + $0x8] sm:$0xf]
        %v4588 = vld [vmem:[#allocation4 + $0xc] sm:$0xf]
        %v4589 = vld [vmem:[#allocation4 + $0x10] sm:$0xf]
        %v4590 = vld [vmem:[#allocation4 + $0x14] sm:$0xf]
        %v4591 = vld [vmem:[#allocation4 + $0x18] sm:$0xf]
        %v4592 = vld [vmem:[#allocation4 + $0x1c] sm:$0xf]
        %v4593 = vld [vmem:[#allocation4 + $0x20] sm:$0xf]
        %v4594 = vld [vmem:[#allocation4 + $0x24] sm:$0xf]
        %v4595 = vld [vmem:[#allocation4 + $0x28] sm:$0x1]
        %v4597 = vshrl.u32 %v4585, 16
        %v4599 = vrot.slane %v4597, 4
        %v4600 = vshll.u32 %v4585, 16
        %v4602 = vrot.slane %v4600, 5
        %v4603 = vor.u32 %v4599, %v4602
        %v4604 = vrot.slane %v4603, 4
        %v4606 = vshll.u32 %v4586, 16
        %v4608 = vrot.slane %v4606, 5
        %v4609 = vsel %vm621, %v4604, %v4608
        %v4610 = vshrl.u32 %v4586, 16
        %v4612 = vrot.slane %v4610, 4
        %v4613 = vor.u32 %v4612, %v4608
        %v4614 = vrot.slane %v4613, 4
        %v4616 = vshll.u32 %v4587, 16
        %v4618 = vrot.slane %v4616, 5
        %v4619 = vsel %vm621, %v4614, %v4618
        %v4620 = vshrl.u32 %v4587, 16
        %v4622 = vrot.slane %v4620, 4
        %v4623 = vor.u32 %v4622, %v4618
        %v4624 = vrot.slane %v4623, 4
        %v4626 = vshll.u32 %v4588, 16
        %v4628 = vrot.slane %v4626, 5
        %v4629 = vsel %vm621, %v4624, %v4628
        %v4630 = vshrl.u32 %v4588, 16
        %v4632 = vrot.slane %v4630, 4
        %v4633 = vor.u32 %v4632, %v4628
        %v4634 = vrot.slane %v4633, 4
        %v4636 = vshll.u32 %v4589, 16
        %v4638 = vrot.slane %v4636, 5
        %v4639 = vsel %vm621, %v4634, %v4638
        %v4640 = vshrl.u32 %v4589, 16
        %v4642 = vrot.slane %v4640, 4
        %v4643 = vor.u32 %v4642, %v4638
        %v4644 = vrot.slane %v4643, 4
        %v4646 = vshll.u32 %v4590, 16
        %v4648 = vrot.slane %v4646, 5
        %v4649 = vsel %vm621, %v4644, %v4648
        %v4650 = vshrl.u32 %v4590, 16
        %v4652 = vrot.slane %v4650, 4
        %v4653 = vor.u32 %v4652, %v4648
        %v4654 = vrot.slane %v4653, 4
        %v4656 = vshll.u32 %v4591, 16
        %v4658 = vrot.slane %v4656, 5
        %v4659 = vsel %vm621, %v4654, %v4658
        %v4660 = vshrl.u32 %v4591, 16
        %v4662 = vrot.slane %v4660, 4
        %v4663 = vor.u32 %v4662, %v4658
        %v4664 = vrot.slane %v4663, 4
        %v4666 = vshll.u32 %v4592, 16
        %v4668 = vrot.slane %v4666, 5
        %v4669 = vsel %vm621, %v4664, %v4668
        %v4670 = vshrl.u32 %v4592, 16
        %v4672 = vrot.slane %v4670, 4
        %v4673 = vor.u32 %v4672, %v4668
        %v4674 = vrot.slane %v4673, 4
        %v4676 = vshll.u32 %v4593, 16
        %v4678 = vrot.slane %v4676, 5
        %v4679 = vsel %vm621, %v4674, %v4678
        %v4680 = vshrl.u32 %v4593, 16
        %v4682 = vrot.slane %v4680, 4
        %v4683 = vor.u32 %v4682, %v4678
        %v4684 = vrot.slane %v4683, 4
        %v4686 = vshll.u32 %v4594, 16
        %v4688 = vrot.slane %v4686, 5
        %v4689 = vsel %vm621, %v4684, %v4688
        %v4690 = vshrl.u32 %v4594, 16
        %v4692 = vrot.slane %v4690, 4
        %v4693 = vor.u32 %v4692, %v4688
        %v4694 = vrot.slane %v4693, 4
        %v4696 = vshll.u32 %v4595, 16
        %v4698 = vrot.slane %v4696, 5
        %v4699 = vsel %vm621, %v4694, %v4698
        %4700 = vrot.lane.b32.xlu0 %v4609, 64
        %v4701 = vpop.permute.xlu0 %4700
        %4702 = vrot.lane.b32.xlu0 %v4619, 64
        %v4703 = vpop.permute.xlu0 %4702
        %4704 = vrot.lane.b32.xlu0 %v4629, 64
        %v4705 = vpop.permute.xlu0 %4704
        %4706 = vrot.lane.b32.xlu0 %v4639, 64
        %v4707 = vpop.permute.xlu0 %4706
        %4708 = vrot.lane.b32.xlu0 %v4649, 64
        %v4709 = vpop.permute.xlu0 %4708
        %4710 = vrot.lane.b32.xlu0 %v4659, 64
        %v4711 = vpop.permute.xlu0 %4710
        %4712 = vrot.lane.b32.xlu0 %v4669, 64
        %v4713 = vpop.permute.xlu0 %4712
        %4714 = vrot.lane.b32.xlu0 %v4679, 64
        %v4715 = vpop.permute.xlu0 %4714
        %4716 = vrot.lane.b32.xlu0 %v4689, 64
        %v4717 = vpop.permute.xlu0 %4716
        %4718 = vrot.lane.b32.xlu0 %v4699, 64
        %v4719 = vpop.permute.xlu0 %4718
        %vm4730 = vcmask 1043968
        %4731 = vst.msk [vmem:[#allocation5] sm:$0xf] %vm4730, %v4701
        %4732 = vst.msk [vmem:[#allocation5 + $0x14] sm:$0xf] %vm4730, %v4703
        %4733 = vst.msk [vmem:[#allocation5 + $0x28] sm:$0xf] %vm4730, %v4705
        %4734 = vst.msk [vmem:[#allocation5 + $0x3c] sm:$0xf] %vm4730, %v4707
        %4735 = vst.msk [vmem:[#allocation5 + $0x50] sm:$0xf] %vm4730, %v4709
        %4736 = vst.msk [vmem:[#allocation5 + $0x64] sm:$0xf] %vm4730, %v4711
        %4737 = vst.msk [vmem:[#allocation5 + $0x78] sm:$0xf] %vm4730, %v4713
        %4738 = vst.msk [vmem:[#allocation5 + $0x8c] sm:$0xf] %vm4730, %v4715
        %4739 = vst.msk [vmem:[#allocation5 + $0xa0] sm:$0xf] %vm4730, %v4717
        %4740 = vst.msk [vmem:[#allocation5 + $0xb4] sm:$0xf] %vm4730, %v4719
        %v4741 = vld [vmem:[#allocation4] sm:$0xe]
        %v4742 = vld [vmem:[#allocation4 + $0x4] sm:$0xf]
        %v4743 = vld [vmem:[#allocation4 + $0x8] sm:$0xf]
        %v4744 = vld [vmem:[#allocation4 + $0xc] sm:$0xf]
        %v4745 = vld [vmem:[#allocation4 + $0x10] sm:$0xf]
        %v4746 = vld [vmem:[#allocation4 + $0x14] sm:$0xf]
        %v4747 = vld [vmem:[#allocation4 + $0x18] sm:$0xf]
        %v4748 = vld [vmem:[#allocation4 + $0x1c] sm:$0xf]
        %v4749 = vld [vmem:[#allocation4 + $0x20] sm:$0xf]
        %v4750 = vld [vmem:[#allocation4 + $0x24] sm:$0xf]
        %v4751 = vld [vmem:[#allocation4 + $0x28] sm:$0x1]
        %v4763 = vrot.slane %v4741, 5
        %v4764 = vrot.slane %v4763, 4
        %v4765 = vrot.slane %v4742, 5
        %v4766 = vsel %vm1207, %v4764, %v4765
        %v4767 = vrot.slane %v4765, 4
        %v4768 = vrot.slane %v4743, 5
        %v4769 = vsel %vm1207, %v4767, %v4768
        %v4770 = vrot.slane %v4768, 4
        %v4771 = vrot.slane %v4744, 5
        %v4772 = vsel %vm1207, %v4770, %v4771
        %v4773 = vrot.slane %v4771, 4
        %v4774 = vrot.slane %v4745, 5
        %v4775 = vsel %vm1207, %v4773, %v4774
        %v4776 = vrot.slane %v4774, 4
        %v4777 = vrot.slane %v4746, 5
        %v4778 = vsel %vm1207, %v4776, %v4777
        %v4779 = vrot.slane %v4777, 4
        %v4780 = vrot.slane %v4747, 5
        %v4781 = vsel %vm1207, %v4779, %v4780
        %v4782 = vrot.slane %v4780, 4
        %v4783 = vrot.slane %v4748, 5
        %v4784 = vsel %vm1207, %v4782, %v4783
        %v4785 = vrot.slane %v4783, 4
        %v4786 = vrot.slane %v4749, 5
        %v4787 = vsel %vm1207, %v4785, %v4786
        %v4788 = vrot.slane %v4786, 4
        %v4789 = vrot.slane %v4750, 5
        %v4790 = vsel %vm1207, %v4788, %v4789
        %v4791 = vrot.slane %v4789, 4
        %v4792 = vrot.slane %v4751, 5
        %v4793 = vsel %vm1207, %v4791, %v4792
        %4804 = vst.msk [vmem:[#allocation5 + $0x4] sm:$0xf] %vm4270, %v4766
        %4805 = vst.msk [vmem:[#allocation5 + $0x18] sm:$0xf] %vm4270, %v4769
        %4806 = vst.msk [vmem:[#allocation5 + $0x2c] sm:$0xf] %vm4270, %v4772
        %4807 = vst.msk [vmem:[#allocation5 + $0x40] sm:$0xf] %vm4270, %v4775
        %4808 = vst.msk [vmem:[#allocation5 + $0x54] sm:$0xf] %vm4270, %v4778
        %4809 = vst.msk [vmem:[#allocation5 + $0x68] sm:$0xf] %vm4270, %v4781
        %4810 = vst.msk [vmem:[#allocation5 + $0x7c] sm:$0xf] %vm4270, %v4784
        %4811 = vst.msk [vmem:[#allocation5 + $0x90] sm:$0xf] %vm4270, %v4787
        %4812 = vst.msk [vmem:[#allocation5 + $0xa4] sm:$0xf] %vm4270, %v4790
        %4813 = vst.msk [vmem:[#allocation5 + $0xb8] sm:$0xf] %vm4270, %v4793
        %v4814 = vld [vmem:[#allocation4 + $0x4] sm:$0xe]
        %v4815 = vld [vmem:[#allocation4 + $0x8] sm:$0xf]
        %v4816 = vld [vmem:[#allocation4 + $0xc] sm:$0xf]
        %v4817 = vld [vmem:[#allocation4 + $0x10] sm:$0xf]
        %v4818 = vld [vmem:[#allocation4 + $0x14] sm:$0xf]
        %v4819 = vld [vmem:[#allocation4 + $0x18] sm:$0xf]
        %v4820 = vld [vmem:[#allocation4 + $0x1c] sm:$0xf]
        %v4821 = vld [vmem:[#allocation4 + $0x20] sm:$0xf]
        %v4822 = vld [vmem:[#allocation4 + $0x24] sm:$0xf]
        %v4823 = vld [vmem:[#allocation4 + $0x28] sm:$0xf]
        %v4824 = vld [vmem:[#allocation4 + $0x2c] sm:$0x1]
        %v4836 = vrot.slane %v4814, 5
        %v4837 = vrot.slane %v4836, 4
        %v4838 = vrot.slane %v4815, 5
        %v4839 = vsel %vm1207, %v4837, %v4838
        %v4840 = vrot.slane %v4838, 4
        %v4841 = vrot.slane %v4816, 5
        %v4842 = vsel %vm1207, %v4840, %v4841
        %v4843 = vrot.slane %v4841, 4
        %v4844 = vrot.slane %v4817, 5
        %v4845 = vsel %vm1207, %v4843, %v4844
        %v4846 = vrot.slane %v4844, 4
        %v4847 = vrot.slane %v4818, 5
        %v4848 = vsel %vm1207, %v4846, %v4847
        %v4849 = vrot.slane %v4847, 4
        %v4850 = vrot.slane %v4819, 5
        %v4851 = vsel %vm1207, %v4849, %v4850
        %v4852 = vrot.slane %v4850, 4
        %v4853 = vrot.slane %v4820, 5
        %v4854 = vsel %vm1207, %v4852, %v4853
        %v4855 = vrot.slane %v4853, 4
        %v4856 = vrot.slane %v4821, 5
        %v4857 = vsel %vm1207, %v4855, %v4856
        %v4858 = vrot.slane %v4856, 4
        %v4859 = vrot.slane %v4822, 5
        %v4860 = vsel %vm1207, %v4858, %v4859
        %v4861 = vrot.slane %v4859, 4
        %v4862 = vrot.slane %v4823, 5
        %v4863 = vsel %vm1207, %v4861, %v4862
        %v4864 = vrot.slane %v4862, 4
        %v4865 = vrot.slane %v4824, 5
        %v4866 = vsel %vm1207, %v4864, %v4865
        %4867 = vrot.lane.b32.xlu0 %v4839, 64
        %v4868 = vpop.permute.xlu0 %4867
        %4869 = vrot.lane.b32.xlu0 %v4842, 64
        %v4870 = vpop.permute.xlu0 %4869
        %4871 = vrot.lane.b32.xlu0 %v4845, 64
        %v4872 = vpop.permute.xlu0 %4871
        %4873 = vrot.lane.b32.xlu0 %v4848, 64
        %v4874 = vpop.permute.xlu0 %4873
        %4875 = vrot.lane.b32.xlu0 %v4851, 64
        %v4876 = vpop.permute.xlu0 %4875
        %4877 = vrot.lane.b32.xlu0 %v4854, 64
        %v4878 = vpop.permute.xlu0 %4877
        %4879 = vrot.lane.b32.xlu0 %v4857, 64
        %v4880 = vpop.permute.xlu0 %4879
        %4881 = vrot.lane.b32.xlu0 %v4860, 64
        %v4882 = vpop.permute.xlu0 %4881
        %4883 = vrot.lane.b32.xlu0 %v4863, 64
        %v4884 = vpop.permute.xlu0 %4883
        %4885 = vrot.lane.b32.xlu0 %v4866, 64
        %v4886 = vpop.permute.xlu0 %4885
        %4897 = vst.msk [vmem:[#allocation5 + $0x4] sm:$0xf] %vm4730, %v4868
        %4898 = vst.msk [vmem:[#allocation5 + $0x18] sm:$0xf] %vm4730, %v4870
        %4899 = vst.msk [vmem:[#allocation5 + $0x2c] sm:$0xf] %vm4730, %v4872
        %4900 = vst.msk [vmem:[#allocation5 + $0x40] sm:$0xf] %vm4730, %v4874
        %4901 = vst.msk [vmem:[#allocation5 + $0x54] sm:$0xf] %vm4730, %v4876
        %4902 = vst.msk [vmem:[#allocation5 + $0x68] sm:$0xf] %vm4730, %v4878
        %4903 = vst.msk [vmem:[#allocation5 + $0x7c] sm:$0xf] %vm4730, %v4880
        %4904 = vst.msk [vmem:[#allocation5 + $0x90] sm:$0xf] %vm4730, %v4882
        %4905 = vst.msk [vmem:[#allocation5 + $0xa4] sm:$0xf] %vm4730, %v4884
        %4906 = vst.msk [vmem:[#allocation5 + $0xb8] sm:$0xf] %vm4730, %v4886
        %v4907 = vld [vmem:[#allocation4 + $0x4] sm:$0xe]
        %v4908 = vld [vmem:[#allocation4 + $0x8] sm:$0xf]
        %v4909 = vld [vmem:[#allocation4 + $0xc] sm:$0xf]
        %v4910 = vld [vmem:[#allocation4 + $0x10] sm:$0xf]
        %v4911 = vld [vmem:[#allocation4 + $0x14] sm:$0xf]
        %v4912 = vld [vmem:[#allocation4 + $0x18] sm:$0xf]
        %v4913 = vld [vmem:[#allocation4 + $0x1c] sm:$0xf]
        %v4914 = vld [vmem:[#allocation4 + $0x20] sm:$0xf]
        %v4915 = vld [vmem:[#allocation4 + $0x24] sm:$0xf]
        %v4916 = vld [vmem:[#allocation4 + $0x28] sm:$0xf]
        %v4917 = vld [vmem:[#allocation4 + $0x2c] sm:$0x3]
        %v4919 = vshrl.u32 %v4907, 16
        %v4921 = vrot.slane %v4919, 5
        %v4922 = vshll.u32 %v4907, 16
        %v4924 = vrot.slane %v4922, 6
        %v4925 = vor.u32 %v4921, %v4924
        %v4926 = vrot.slane %v4925, 4
        %v4928 = vshrl.u32 %v4908, 16
        %v4930 = vrot.slane %v4928, 5
        %v4931 = vshll.u32 %v4908, 16
        %v4933 = vrot.slane %v4931, 6
        %v4934 = vor.u32 %v4930, %v4933
        %v4935 = vsel %vm1829, %v4926, %v4934
        %v4936 = vrot.slane %v4934, 4
        %v4938 = vshrl.u32 %v4909, 16
        %v4940 = vrot.slane %v4938, 5
        %v4941 = vshll.u32 %v4909, 16
        %v4943 = vrot.slane %v4941, 6
        %v4944 = vor.u32 %v4940, %v4943
        %v4945 = vsel %vm1829, %v4936, %v4944
        %v4946 = vrot.slane %v4944, 4
        %v4948 = vshrl.u32 %v4910, 16
        %v4950 = vrot.slane %v4948, 5
        %v4951 = vshll.u32 %v4910, 16
        %v4953 = vrot.slane %v4951, 6
        %v4954 = vor.u32 %v4950, %v4953
        %v4955 = vsel %vm1829, %v4946, %v4954
        %v4956 = vrot.slane %v4954, 4
        %v4958 = vshrl.u32 %v4911, 16
        %v4960 = vrot.slane %v4958, 5
        %v4961 = vshll.u32 %v4911, 16
        %v4963 = vrot.slane %v4961, 6
        %v4964 = vor.u32 %v4960, %v4963
        %v4965 = vsel %vm1829, %v4956, %v4964
        %v4966 = vrot.slane %v4964, 4
        %v4968 = vshrl.u32 %v4912, 16
        %v4970 = vrot.slane %v4968, 5
        %v4971 = vshll.u32 %v4912, 16
        %v4973 = vrot.slane %v4971, 6
        %v4974 = vor.u32 %v4970, %v4973
        %v4975 = vsel %vm1829, %v4966, %v4974
        %v4976 = vrot.slane %v4974, 4
        %v4978 = vshrl.u32 %v4913, 16
        %v4980 = vrot.slane %v4978, 5
        %v4981 = vshll.u32 %v4913, 16
        %v4983 = vrot.slane %v4981, 6
        %v4984 = vor.u32 %v4980, %v4983
        %v4985 = vsel %vm1829, %v4976, %v4984
        %v4986 = vrot.slane %v4984, 4
        %v4988 = vshrl.u32 %v4914, 16
        %v4990 = vrot.slane %v4988, 5
        %v4991 = vshll.u32 %v4914, 16
        %v4993 = vrot.slane %v4991, 6
        %v4994 = vor.u32 %v4990, %v4993
        %v4995 = vsel %vm1829, %v4986, %v4994
        %v4996 = vrot.slane %v4994, 4
        %v4998 = vshrl.u32 %v4915, 16
        %v5000 = vrot.slane %v4998, 5
        %v5001 = vshll.u32 %v4915, 16
        %v5003 = vrot.slane %v5001, 6
        %v5004 = vor.u32 %v5000, %v5003
        %v5005 = vsel %vm1829, %v4996, %v5004
        %v5006 = vrot.slane %v5004, 4
        %v5008 = vshrl.u32 %v4916, 16
        %v5010 = vrot.slane %v5008, 5
        %v5011 = vshll.u32 %v4916, 16
        %v5013 = vrot.slane %v5011, 6
        %v5014 = vor.u32 %v5010, %v5013
        %v5015 = vsel %vm1829, %v5006, %v5014
        %v5016 = vrot.slane %v5014, 4
        %v5018 = vshrl.u32 %v4917, 16
        %v5020 = vrot.slane %v5018, 5
        %v5021 = vshll.u32 %v4917, 16
        %v5023 = vrot.slane %v5021, 6
        %v5024 = vor.u32 %v5020, %v5023
        %v5025 = vsel %vm1829, %v5016, %v5024
        %5036 = vst.msk [vmem:[#allocation5 + $0x8] sm:$0xf] %vm4270, %v4935
        %5037 = vst.msk [vmem:[#allocation5 + $0x1c] sm:$0xf] %vm4270, %v4945
        %5038 = vst.msk [vmem:[#allocation5 + $0x30] sm:$0xf] %vm4270, %v4955
        %5039 = vst.msk [vmem:[#allocation5 + $0x44] sm:$0xf] %vm4270, %v4965
        %5040 = vst.msk [vmem:[#allocation5 + $0x58] sm:$0xf] %vm4270, %v4975
        %5041 = vst.msk [vmem:[#allocation5 + $0x6c] sm:$0xf] %vm4270, %v4985
        %5042 = vst.msk [vmem:[#allocation5 + $0x80] sm:$0xf] %vm4270, %v4995
        %5043 = vst.msk [vmem:[#allocation5 + $0x94] sm:$0xf] %vm4270, %v5005
        %5044 = vst.msk [vmem:[#allocation5 + $0xa8] sm:$0xf] %vm4270, %v5015
        %5045 = vst.msk [vmem:[#allocation5 + $0xbc] sm:$0xf] %vm4270, %v5025
        %v5046 = vld [vmem:[#allocation4 + $0x4] sm:$0xc]
        %v5047 = vld [vmem:[#allocation4 + $0x8] sm:$0xf]
        %v5048 = vld [vmem:[#allocation4 + $0xc] sm:$0xf]
        %v5049 = vld [vmem:[#allocation4 + $0x10] sm:$0xf]
        %v5050 = vld [vmem:[#allocation4 + $0x14] sm:$0xf]
        %v5051 = vld [vmem:[#allocation4 + $0x18] sm:$0xf]
        %v5052 = vld [vmem:[#allocation4 + $0x1c] sm:$0xf]
        %v5053 = vld [vmem:[#allocation4 + $0x20] sm:$0xf]
        %v5054 = vld [vmem:[#allocation4 + $0x24] sm:$0xf]
        %v5055 = vld [vmem:[#allocation4 + $0x28] sm:$0xf]
        %v5056 = vld [vmem:[#allocation4 + $0x2c] sm:$0x3]
        %v5068 = vrot.slane %v5046, 6
        %v5069 = vrot.slane %v5068, 4
        %v5070 = vrot.slane %v5047, 6
        %v5071 = vsel %vm2419, %v5069, %v5070
        %v5072 = vrot.slane %v5070, 4
        %v5073 = vrot.slane %v5048, 6
        %v5074 = vsel %vm2419, %v5072, %v5073
        %v5075 = vrot.slane %v5073, 4
        %v5076 = vrot.slane %v5049, 6
        %v5077 = vsel %vm2419, %v5075, %v5076
        %v5078 = vrot.slane %v5076, 4
        %v5079 = vrot.slane %v5050, 6
        %v5080 = vsel %vm2419, %v5078, %v5079
        %v5081 = vrot.slane %v5079, 4
        %v5082 = vrot.slane %v5051, 6
        %v5083 = vsel %vm2419, %v5081, %v5082
        %v5084 = vrot.slane %v5082, 4
        %v5085 = vrot.slane %v5052, 6
        %v5086 = vsel %vm2419, %v5084, %v5085
        %v5087 = vrot.slane %v5085, 4
        %v5088 = vrot.slane %v5053, 6
        %v5089 = vsel %vm2419, %v5087, %v5088
        %v5090 = vrot.slane %v5088, 4
        %v5091 = vrot.slane %v5054, 6
        %v5092 = vsel %vm2419, %v5090, %v5091
        %v5093 = vrot.slane %v5091, 4
        %v5094 = vrot.slane %v5055, 6
        %v5095 = vsel %vm2419, %v5093, %v5094
        %v5096 = vrot.slane %v5094, 4
        %v5097 = vrot.slane %v5056, 6
        %v5098 = vsel %vm2419, %v5096, %v5097
        %5099 = vrot.lane.b32.xlu0 %v5071, 64
        %v5100 = vpop.permute.xlu0 %5099
        %5101 = vrot.lane.b32.xlu0 %v5074, 64
        %v5102 = vpop.permute.xlu0 %5101
        %5103 = vrot.lane.b32.xlu0 %v5077, 64
        %v5104 = vpop.permute.xlu0 %5103
        %5105 = vrot.lane.b32.xlu0 %v5080, 64
        %v5106 = vpop.permute.xlu0 %5105
        %5107 = vrot.lane.b32.xlu0 %v5083, 64
        %v5108 = vpop.permute.xlu0 %5107
        %5109 = vrot.lane.b32.xlu0 %v5086, 64
        %v5110 = vpop.permute.xlu0 %5109
        %5111 = vrot.lane.b32.xlu0 %v5089, 64
        %v5112 = vpop.permute.xlu0 %5111
        %5113 = vrot.lane.b32.xlu0 %v5092, 64
        %v5114 = vpop.permute.xlu0 %5113
        %5115 = vrot.lane.b32.xlu0 %v5095, 64
        %v5116 = vpop.permute.xlu0 %5115
        %5117 = vrot.lane.b32.xlu0 %v5098, 64
        %v5118 = vpop.permute.xlu0 %5117
        %5129 = vst.msk [vmem:[#allocation5 + $0x8] sm:$0xf] %vm4730, %v5100
        %5130 = vst.msk [vmem:[#allocation5 + $0x1c] sm:$0xf] %vm4730, %v5102
        %5131 = vst.msk [vmem:[#allocation5 + $0x30] sm:$0xf] %vm4730, %v5104
        %5132 = vst.msk [vmem:[#allocation5 + $0x44] sm:$0xf] %vm4730, %v5106
        %5133 = vst.msk [vmem:[#allocation5 + $0x58] sm:$0xf] %vm4730, %v5108
        %5134 = vst.msk [vmem:[#allocation5 + $0x6c] sm:$0xf] %vm4730, %v5110
        %5135 = vst.msk [vmem:[#allocation5 + $0x80] sm:$0xf] %vm4730, %v5112
        %5136 = vst.msk [vmem:[#allocation5 + $0x94] sm:$0xf] %vm4730, %v5114
        %5137 = vst.msk [vmem:[#allocation5 + $0xa8] sm:$0xf] %vm4730, %v5116
        %5138 = vst.msk [vmem:[#allocation5 + $0xbc] sm:$0xf] %vm4730, %v5118
        %v5139 = vld [vmem:[#allocation4 + $0x8] sm:$0xc]
        %v5140 = vld [vmem:[#allocation4 + $0xc] sm:$0xf]
        %v5141 = vld [vmem:[#allocation4 + $0x10] sm:$0xf]
        %v5142 = vld [vmem:[#allocation4 + $0x14] sm:$0xf]
        %v5143 = vld [vmem:[#allocation4 + $0x18] sm:$0xf]
        %v5144 = vld [vmem:[#allocation4 + $0x1c] sm:$0xf]
        %v5145 = vld [vmem:[#allocation4 + $0x20] sm:$0xf]
        %v5146 = vld [vmem:[#allocation4 + $0x24] sm:$0xf]
        %v5147 = vld [vmem:[#allocation4 + $0x28] sm:$0xf]
        %v5148 = vld [vmem:[#allocation4 + $0x2c] sm:$0xf]
        %v5149 = vld [vmem:[#allocation4 + $0x30] sm:$0x3]
        %v5161 = vrot.slane %v5139, 6
        %v5162 = vrot.slane %v5161, 4
        %v5163 = vrot.slane %v5140, 6
        %v5164 = vsel %vm2419, %v5162, %v5163
        %v5165 = vrot.slane %v5163, 4
        %v5166 = vrot.slane %v5141, 6
        %v5167 = vsel %vm2419, %v5165, %v5166
        %v5168 = vrot.slane %v5166, 4
        %v5169 = vrot.slane %v5142, 6
        %v5170 = vsel %vm2419, %v5168, %v5169
        %v5171 = vrot.slane %v5169, 4
        %v5172 = vrot.slane %v5143, 6
        %v5173 = vsel %vm2419, %v5171, %v5172
        %v5174 = vrot.slane %v5172, 4
        %v5175 = vrot.slane %v5144, 6
        %v5176 = vsel %vm2419, %v5174, %v5175
        %v5177 = vrot.slane %v5175, 4
        %v5178 = vrot.slane %v5145, 6
        %v5179 = vsel %vm2419, %v5177, %v5178
        %v5180 = vrot.slane %v5178, 4
        %v5181 = vrot.slane %v5146, 6
        %v5182 = vsel %vm2419, %v5180, %v5181
        %v5183 = vrot.slane %v5181, 4
        %v5184 = vrot.slane %v5147, 6
        %v5185 = vsel %vm2419, %v5183, %v5184
        %v5186 = vrot.slane %v5184, 4
        %v5187 = vrot.slane %v5148, 6
        %v5188 = vsel %vm2419, %v5186, %v5187
        %v5189 = vrot.slane %v5187, 4
        %v5190 = vrot.slane %v5149, 6
        %v5191 = vsel %vm2419, %v5189, %v5190
        %5202 = vst.msk [vmem:[#allocation5 + $0xc] sm:$0xf] %vm4270, %v5164
        %5203 = vst.msk [vmem:[#allocation5 + $0x20] sm:$0xf] %vm4270, %v5167
        %5204 = vst.msk [vmem:[#allocation5 + $0x34] sm:$0xf] %vm4270, %v5170
        %5205 = vst.msk [vmem:[#allocation5 + $0x48] sm:$0xf] %vm4270, %v5173
        %5206 = vst.msk [vmem:[#allocation5 + $0x5c] sm:$0xf] %vm4270, %v5176
        %5207 = vst.msk [vmem:[#allocation5 + $0x70] sm:$0xf] %vm4270, %v5179
        %5208 = vst.msk [vmem:[#allocation5 + $0x84] sm:$0xf] %vm4270, %v5182
        %5209 = vst.msk [vmem:[#allocation5 + $0x98] sm:$0xf] %vm4270, %v5185
        %5210 = vst.msk [vmem:[#allocation5 + $0xac] sm:$0xf] %vm4270, %v5188
        %5211 = vst.msk [vmem:[#allocation5 + $0xc0] sm:$0xf] %vm4270, %v5191
        %v5212 = vld [vmem:[#allocation4 + $0x8] sm:$0xc]
        %v5213 = vld [vmem:[#allocation4 + $0xc] sm:$0xf]
        %v5214 = vld [vmem:[#allocation4 + $0x10] sm:$0xf]
        %v5215 = vld [vmem:[#allocation4 + $0x14] sm:$0xf]
        %v5216 = vld [vmem:[#allocation4 + $0x18] sm:$0xf]
        %v5217 = vld [vmem:[#allocation4 + $0x1c] sm:$0xf]
        %v5218 = vld [vmem:[#allocation4 + $0x20] sm:$0xf]
        %v5219 = vld [vmem:[#allocation4 + $0x24] sm:$0xf]
        %v5220 = vld [vmem:[#allocation4 + $0x28] sm:$0xf]
        %v5221 = vld [vmem:[#allocation4 + $0x2c] sm:$0xf]
        %v5222 = vld [vmem:[#allocation4 + $0x30] sm:$0x7]
        %v5224 = vshrl.u32 %v5212, 16
        %v5226 = vrot.slane %v5224, 6
        %v5227 = vshll.u32 %v5212, 16
        %v5229 = vrot.slane %v5227, 7
        %v5230 = vor.u32 %v5226, %v5229
        %v5231 = vrot.slane %v5230, 4
        %v5233 = vshrl.u32 %v5213, 16
        %v5235 = vrot.slane %v5233, 6
        %v5236 = vshll.u32 %v5213, 16
        %v5238 = vrot.slane %v5236, 7
        %v5239 = vor.u32 %v5235, %v5238
        %v5240 = vsel %vm3041, %v5231, %v5239
        %v5241 = vrot.slane %v5239, 4
        %v5243 = vshrl.u32 %v5214, 16
        %v5245 = vrot.slane %v5243, 6
        %v5246 = vshll.u32 %v5214, 16
        %v5248 = vrot.slane %v5246, 7
        %v5249 = vor.u32 %v5245, %v5248
        %v5250 = vsel %vm3041, %v5241, %v5249
        %v5251 = vrot.slane %v5249, 4
        %v5253 = vshrl.u32 %v5215, 16
        %v5255 = vrot.slane %v5253, 6
        %v5256 = vshll.u32 %v5215, 16
        %v5258 = vrot.slane %v5256, 7
        %v5259 = vor.u32 %v5255, %v5258
        %v5260 = vsel %vm3041, %v5251, %v5259
        %v5261 = vrot.slane %v5259, 4
        %v5263 = vshrl.u32 %v5216, 16
        %v5265 = vrot.slane %v5263, 6
        %v5266 = vshll.u32 %v5216, 16
        %v5268 = vrot.slane %v5266, 7
        %v5269 = vor.u32 %v5265, %v5268
        %v5270 = vsel %vm3041, %v5261, %v5269
        %v5271 = vrot.slane %v5269, 4
        %v5273 = vshrl.u32 %v5217, 16
        %v5275 = vrot.slane %v5273, 6
        %v5276 = vshll.u32 %v5217, 16
        %v5278 = vrot.slane %v5276, 7
        %v5279 = vor.u32 %v5275, %v5278
        %v5280 = vsel %vm3041, %v5271, %v5279
        %v5281 = vrot.slane %v5279, 4
        %v5283 = vshrl.u32 %v5218, 16
        %v5285 = vrot.slane %v5283, 6
        %v5286 = vshll.u32 %v5218, 16
        %v5288 = vrot.slane %v5286, 7
        %v5289 = vor.u32 %v5285, %v5288
        %v5290 = vsel %vm3041, %v5281, %v5289
        %v5291 = vrot.slane %v5289, 4
        %v5293 = vshrl.u32 %v5219, 16
        %v5295 = vrot.slane %v5293, 6
        %v5296 = vshll.u32 %v5219, 16
        %v5298 = vrot.slane %v5296, 7
        %v5299 = vor.u32 %v5295, %v5298
        %v5300 = vsel %vm3041, %v5291, %v5299
        %v5301 = vrot.slane %v5299, 4
        %v5303 = vshrl.u32 %v5220, 16
        %v5305 = vrot.slane %v5303, 6
        %v5306 = vshll.u32 %v5220, 16
        %v5308 = vrot.slane %v5306, 7
        %v5309 = vor.u32 %v5305, %v5308
        %v5310 = vsel %vm3041, %v5301, %v5309
        %v5311 = vrot.slane %v5309, 4
        %v5313 = vshrl.u32 %v5221, 16
        %v5315 = vrot.slane %v5313, 6
        %v5316 = vshll.u32 %v5221, 16
        %v5318 = vrot.slane %v5316, 7
        %v5319 = vor.u32 %v5315, %v5318
        %v5320 = vsel %vm3041, %v5311, %v5319
        %v5321 = vrot.slane %v5319, 4
        %v5323 = vshrl.u32 %v5222, 16
        %v5325 = vrot.slane %v5323, 6
        %v5326 = vshll.u32 %v5222, 16
        %v5328 = vrot.slane %v5326, 7
        %v5329 = vor.u32 %v5325, %v5328
        %v5330 = vsel %vm3041, %v5321, %v5329
        %5331 = vrot.lane.b32.xlu0 %v5240, 64
        %v5332 = vpop.permute.xlu0 %5331
        %5333 = vrot.lane.b32.xlu0 %v5250, 64
        %v5334 = vpop.permute.xlu0 %5333
        %5335 = vrot.lane.b32.xlu0 %v5260, 64
        %v5336 = vpop.permute.xlu0 %5335
        %5337 = vrot.lane.b32.xlu0 %v5270, 64
        %v5338 = vpop.permute.xlu0 %5337
        %5339 = vrot.lane.b32.xlu0 %v5280, 64
        %v5340 = vpop.permute.xlu0 %5339
        %5341 = vrot.lane.b32.xlu0 %v5290, 64
        %v5342 = vpop.permute.xlu0 %5341
        %5343 = vrot.lane.b32.xlu0 %v5300, 64
        %v5344 = vpop.permute.xlu0 %5343
        %5345 = vrot.lane.b32.xlu0 %v5310, 64
        %v5346 = vpop.permute.xlu0 %5345
        %5347 = vrot.lane.b32.xlu0 %v5320, 64
        %v5348 = vpop.permute.xlu0 %5347
        %5349 = vrot.lane.b32.xlu0 %v5330, 64
        %v5350 = vpop.permute.xlu0 %5349
        %5361 = vst.msk [vmem:[#allocation5 + $0xc] sm:$0xf] %vm4730, %v5332
        %5362 = vst.msk [vmem:[#allocation5 + $0x20] sm:$0xf] %vm4730, %v5334
        %5363 = vst.msk [vmem:[#allocation5 + $0x34] sm:$0xf] %vm4730, %v5336
        %5364 = vst.msk [vmem:[#allocation5 + $0x48] sm:$0xf] %vm4730, %v5338
        %5365 = vst.msk [vmem:[#allocation5 + $0x5c] sm:$0xf] %vm4730, %v5340
        %5366 = vst.msk [vmem:[#allocation5 + $0x70] sm:$0xf] %vm4730, %v5342
        %5367 = vst.msk [vmem:[#allocation5 + $0x84] sm:$0xf] %vm4730, %v5344
        %5368 = vst.msk [vmem:[#allocation5 + $0x98] sm:$0xf] %vm4730, %v5346
        %5369 = vst.msk [vmem:[#allocation5 + $0xac] sm:$0xf] %vm4730, %v5348
        %5370 = vst.msk [vmem:[#allocation5 + $0xc0] sm:$0xf] %vm4730, %v5350
        %v5371 = vld [vmem:[#allocation4 + $0x8] sm:$0x8]
        %v5372 = vld [vmem:[#allocation4 + $0xc] sm:$0xf]
        %v5373 = vld [vmem:[#allocation4 + $0x10] sm:$0xf]
        %v5374 = vld [vmem:[#allocation4 + $0x14] sm:$0xf]
        %v5375 = vld [vmem:[#allocation4 + $0x18] sm:$0xf]
        %v5376 = vld [vmem:[#allocation4 + $0x1c] sm:$0xf]
        %v5377 = vld [vmem:[#allocation4 + $0x20] sm:$0xf]
        %v5378 = vld [vmem:[#allocation4 + $0x24] sm:$0xf]
        %v5379 = vld [vmem:[#allocation4 + $0x28] sm:$0xf]
        %v5380 = vld [vmem:[#allocation4 + $0x2c] sm:$0xf]
        %v5381 = vld [vmem:[#allocation4 + $0x30] sm:$0x7]
        %v5393 = vrot.slane %v5371, 7
        %v5394 = vrot.slane %v5393, 4
        %v5395 = vrot.slane %v5372, 7
        %v5396 = vsel %vm3631, %v5394, %v5395
        %v5397 = vrot.slane %v5395, 4
        %v5398 = vrot.slane %v5373, 7
        %v5399 = vsel %vm3631, %v5397, %v5398
        %v5400 = vrot.slane %v5398, 4
        %v5401 = vrot.slane %v5374, 7
        %v5402 = vsel %vm3631, %v5400, %v5401
        %v5403 = vrot.slane %v5401, 4
        %v5404 = vrot.slane %v5375, 7
        %v5405 = vsel %vm3631, %v5403, %v5404
        %v5406 = vrot.slane %v5404, 4
        %v5407 = vrot.slane %v5376, 7
        %v5408 = vsel %vm3631, %v5406, %v5407
        %v5409 = vrot.slane %v5407, 4
        %v5410 = vrot.slane %v5377, 7
        %v5411 = vsel %vm3631, %v5409, %v5410
        %v5412 = vrot.slane %v5410, 4
        %v5413 = vrot.slane %v5378, 7
        %v5414 = vsel %vm3631, %v5412, %v5413
        %v5415 = vrot.slane %v5413, 4
        %v5416 = vrot.slane %v5379, 7
        %v5417 = vsel %vm3631, %v5415, %v5416
        %v5418 = vrot.slane %v5416, 4
        %v5419 = vrot.slane %v5380, 7
        %v5420 = vsel %vm3631, %v5418, %v5419
        %v5421 = vrot.slane %v5419, 4
        %v5422 = vrot.slane %v5381, 7
        %v5423 = vsel %vm3631, %v5421, %v5422
        %5434 = vst.msk [vmem:[#allocation5 + $0x10] sm:$0xf] %vm4270, %v5396
        %5435 = vst.msk [vmem:[#allocation5 + $0x24] sm:$0xf] %vm4270, %v5399
        %5436 = vst.msk [vmem:[#allocation5 + $0x38] sm:$0xf] %vm4270, %v5402
        %5437 = vst.msk [vmem:[#allocation5 + $0x4c] sm:$0xf] %vm4270, %v5405
        %5438 = vst.msk [vmem:[#allocation5 + $0x60] sm:$0xf] %vm4270, %v5408
        %5439 = vst.msk [vmem:[#allocation5 + $0x74] sm:$0xf] %vm4270, %v5411
        %5440 = vst.msk [vmem:[#allocation5 + $0x88] sm:$0xf] %vm4270, %v5414
        %5441 = vst.msk [vmem:[#allocation5 + $0x9c] sm:$0xf] %vm4270, %v5417
        %5442 = vst.msk [vmem:[#allocation5 + $0xb0] sm:$0xf] %vm4270, %v5420
        %5443 = vst.msk [vmem:[#allocation5 + $0xc4] sm:$0xf] %vm4270, %v5423
        %v5444 = vld [vmem:[#allocation5] sm:$0xff]
        %v5445 = vld [vmem:[#allocation5 + $0x8] sm:$0xff]
        %v5446 = vld [vmem:[#allocation5 + $0x10] sm:$0xf]
        %v5447 = vld [vmem:[#allocation5 + $0x14] sm:$0xff]
        %v5448 = vld [vmem:[#allocation5 + $0x1c] sm:$0xff]
        %v5449 = vld [vmem:[#allocation5 + $0x24] sm:$0xf]
        %v5450 = vld [vmem:[#allocation5 + $0x28] sm:$0xff]
        %v5451 = vld [vmem:[#allocation5 + $0x30] sm:$0xff]
        %v5452 = vld [vmem:[#allocation5 + $0x38] sm:$0xf]
        %v5453 = vld [vmem:[#allocation5 + $0x3c] sm:$0xff]
        %v5454 = vld [vmem:[#allocation5 + $0x44] sm:$0xff]
        %v5455 = vld [vmem:[#allocation5 + $0x4c] sm:$0xf]
        %v5456 = vld [vmem:[#allocation5 + $0x50] sm:$0xff]
        %v5457 = vld [vmem:[#allocation5 + $0x58] sm:$0xff]
        %v5458 = vld [vmem:[#allocation5 + $0x60] sm:$0xf]
        %v5459 = vld [vmem:[#allocation5 + $0x64] sm:$0xff]
        %v5460 = vld [vmem:[#allocation5 + $0x6c] sm:$0xff]
        %v5461 = vld [vmem:[#allocation5 + $0x74] sm:$0xf]
        %v5462 = vld [vmem:[#allocation5 + $0x78] sm:$0xff]
        %v5463 = vld [vmem:[#allocation5 + $0x80] sm:$0xff]
        %v5464 = vld [vmem:[#allocation5 + $0x88] sm:$0xf]
        %v5465 = vld [vmem:[#allocation5 + $0x8c] sm:$0xff]
        %v5466 = vld [vmem:[#allocation5 + $0x94] sm:$0xff]
        %v5467 = vld [vmem:[#allocation5 + $0x9c] sm:$0xf]
        %v5468 = vld [vmem:[#allocation5 + $0xa0] sm:$0xff]
        %v5469 = vld [vmem:[#allocation5 + $0xa8] sm:$0xff]
        %v5470 = vld [vmem:[#allocation5 + $0xb0] sm:$0xf]
        %v5471 = vld [vmem:[#allocation5 + $0xb4] sm:$0xff]
        %v5472 = vld [vmem:[#allocation5 + $0xbc] sm:$0xff]
        %v5473 = vld [vmem:[#allocation5 + $0xc4] sm:$0xf]
        %v5474 = vld [vmem:[%s3] sm:$0xf]
        %v5475 = vld [vmem:[%s3 + $0x4] sm:$0xf]
        %v5476 = vld [vmem:[%s3 + $0x8] sm:$0xf]
        %v5477 = vld [vmem:[%s3 + $0xc] sm:$0xf]
        %v5478 = vld [vmem:[%s3 + $0x10] sm:$0xf]
        %v5479 = vld [vmem:[%s3 + $0x14] sm:$0xf]
        %v5480 = vld [vmem:[%s3 + $0x18] sm:$0xf]
        %v5481 = vld [vmem:[%s3 + $0x1c] sm:$0xf]
        %v5482 = vld [vmem:[%s3 + $0x20] sm:$0xf]
        %v5483 = vld [vmem:[%s3 + $0x24] sm:$0xf]
        %v5484 = vld [vmem:[%s3 + $0x28] sm:$0xf]
        %v5485 = vld [vmem:[%s3 + $0x2c] sm:$0xf]
        %v5486 = vld [vmem:[%s3 + $0x30] sm:$0xf]
        %v5487 = vld [vmem:[%s3 + $0x34] sm:$0xf]
        %v5488 = vld [vmem:[%s3 + $0x38] sm:$0xf]
        %v5489 = vld [vmem:[%s3 + $0x3c] sm:$0xf]
        %v5490 = vld [vmem:[%s3 + $0x40] sm:$0xf]
        %v5491 = vld [vmem:[%s3 + $0x44] sm:$0xf]
        %v5492 = vld [vmem:[%s3 + $0x48] sm:$0xf]
        %v5493 = vld [vmem:[%s3 + $0x4c] sm:$0xf]
        %v5494 = vld [vmem:[%s3 + $0x50] sm:$0xf]
        %v5495 = vld [vmem:[%s3 + $0x54] sm:$0xf]
        %v5496 = vld [vmem:[%s3 + $0x58] sm:$0xf]
        %v5497 = vld [vmem:[%s3 + $0x5c] sm:$0xf]
        %v5498 = vld [vmem:[%s3 + $0x60] sm:$0xf]
        %v5499 = vld [vmem:[%s3 + $0x64] sm:$0xf]
        %v5500 = vld [vmem:[%s3 + $0x68] sm:$0xf]
        %v5501 = vld [vmem:[%s3 + $0x6c] sm:$0xf]
        %v5502 = vld [vmem:[%s3 + $0x70] sm:$0xf]
        %v5503 = vld [vmem:[%s3 + $0x74] sm:$0xf]
        %v5504 = vld [vmem:[%s3 + $0x78] sm:$0xf]
        %v5505 = vld [vmem:[%s3 + $0x7c] sm:$0xf]
        %v5506 = vld [vmem:[%s3 + $0x80] sm:$0xf]
        %v5507 = vld [vmem:[%s3 + $0x84] sm:$0xf]
        %v5508 = vld [vmem:[%s3 + $0x88] sm:$0xf]
        %v5509 = vld [vmem:[%s3 + $0x8c] sm:$0xf]
        %v5510 = vld [vmem:[%s3 + $0x90] sm:$0xf]
        %v5511 = vld [vmem:[%s3 + $0x94] sm:$0xf]
        %v5512 = vld [vmem:[%s3 + $0x98] sm:$0xf]
        %v5513 = vld [vmem:[%s3 + $0x9c] sm:$0xf]
        %v5514 = vld [vmem:[%s3 + $0xa0] sm:$0xf]
        %v5515 = vld [vmem:[%s3 + $0xa4] sm:$0xf]
        %v5516 = vld [vmem:[%s3 + $0xa8] sm:$0xf]
        %v5517 = vld [vmem:[%s3 + $0xac] sm:$0xf]
        %v5518 = vld [vmem:[%s3 + $0xb0] sm:$0xf]
        %v5519 = vld [vmem:[%s3 + $0xb4] sm:$0xf]
        %v5520 = vld [vmem:[%s3 + $0xb8] sm:$0xf]
        %v5521 = vld [vmem:[%s3 + $0xbc] sm:$0xf]
        %v5522 = vld [vmem:[%s3 + $0xc0] sm:$0xf]
        %v5523 = vld [vmem:[%s3 + $0xc4] sm:$0xf]
        %v5524 = vld [vmem:[%s3 + $0xc8] sm:$0xf]
        %v5525 = vld [vmem:[%s3 + $0xcc] sm:$0xf]
        %v5526 = vld [vmem:[%s3 + $0xd0] sm:$0xf]
        %v5527 = vld [vmem:[%s3 + $0xd4] sm:$0xf]
        %v5528 = vld [vmem:[%s3 + $0xd8] sm:$0xf]
        %v5529 = vld [vmem:[%s3 + $0xdc] sm:$0xf]
        %v5530 = vld [vmem:[%s3 + $0xe0] sm:$0xf]
        %v5531 = vld [vmem:[%s3 + $0xe4] sm:$0xf]
        %v5532 = vld [vmem:[%s3 + $0xe8] sm:$0xf]
        %v5533 = vld [vmem:[%s3 + $0xec] sm:$0xf]
        %v5534 = vld [vmem:[%s3 + $0xf0] sm:$0xf]
        %v5535 = vld [vmem:[%s3 + $0xf4] sm:$0xf]
        %v5536 = vld [vmem:[%s3 + $0xf8] sm:$0xf]
        %v5537 = vld [vmem:[%s3 + $0xfc] sm:$0xf]
        %v5538 = vld [vmem:[%s3 + $0x100] sm:$0xf]
        %v5539 = vld [vmem:[%s3 + $0x104] sm:$0xf]
        %v5540 = vld [vmem:[%s3 + $0x108] sm:$0xf]
        %v5541 = vld [vmem:[%s3 + $0x10c] sm:$0xf]
        %v5542 = vld [vmem:[%s3 + $0x110] sm:$0xf]
        %v5543 = vld [vmem:[%s3 + $0x114] sm:$0xf]
        %v5544 = vld [vmem:[%s3 + $0x118] sm:$0xf]
        %v5545 = vld [vmem:[%s3 + $0x11c] sm:$0xf]
        %v5546 = vld [vmem:[%s3 + $0x120] sm:$0xf]
        %v5547 = vld [vmem:[%s3 + $0x124] sm:$0xf]
        %v5548 = vld [vmem:[%s3 + $0x128] sm:$0xf]
        %v5549 = vld [vmem:[%s3 + $0x12c] sm:$0xf]
        %v5550 = vld [vmem:[%s3 + $0x130] sm:$0xf]
        %v5551 = vld [vmem:[%s3 + $0x134] sm:$0xf]
        %v5552 = vld [vmem:[%s3 + $0x138] sm:$0xf]
        %v5553 = vld [vmem:[%s3 + $0x13c] sm:$0xf]
        %v5554 = vld [vmem:[%s4] sm:$0x1]
        %v5556 = vperm.slane %v5554, 0
        %v5588 = vunpack.c.l.b16 %v5444
        %v5589 = vunpack.c.h.b16 %v5444
        %v5590 = vunpack.c.l.b16 %v5445
        %v5591 = vunpack.c.h.b16 %v5445
        %v5592 = vunpack.c.l.b16 %v5446
        %v5593 = vunpack.c.l.b16 %v5447
        %v5594 = vunpack.c.h.b16 %v5447
        %v5595 = vunpack.c.l.b16 %v5448
        %v5596 = vunpack.c.h.b16 %v5448
        %v5597 = vunpack.c.l.b16 %v5449
        %v5598 = vunpack.c.l.b16 %v5450
        %v5599 = vunpack.c.h.b16 %v5450
        %v5600 = vunpack.c.l.b16 %v5451
        %v5601 = vunpack.c.h.b16 %v5451
        %v5602 = vunpack.c.l.b16 %v5452
        %v5603 = vunpack.c.l.b16 %v5453
        %v5604 = vunpack.c.h.b16 %v5453
        %v5605 = vunpack.c.l.b16 %v5454
        %v5606 = vunpack.c.h.b16 %v5454
        %v5607 = vunpack.c.l.b16 %v5455
        %v5608 = vunpack.c.l.b16 %v5456
        %v5609 = vunpack.c.h.b16 %v5456
        %v5610 = vunpack.c.l.b16 %v5457
        %v5611 = vunpack.c.h.b16 %v5457
        %v5612 = vunpack.c.l.b16 %v5458
        %v5613 = vunpack.c.l.b16 %v5459
        %v5614 = vunpack.c.h.b16 %v5459
        %v5615 = vunpack.c.l.b16 %v5460
        %v5616 = vunpack.c.h.b16 %v5460
        %v5617 = vunpack.c.l.b16 %v5461
        %v5618 = vunpack.c.l.b16 %v5462
        %v5619 = vunpack.c.h.b16 %v5462
        %v5620 = vunpack.c.l.b16 %v5463
        %v5621 = vunpack.c.h.b16 %v5463
        %v5622 = vunpack.c.l.b16 %v5464
        %v5623 = vunpack.c.l.b16 %v5465
        %v5624 = vunpack.c.h.b16 %v5465
        %v5625 = vunpack.c.l.b16 %v5466
        %v5626 = vunpack.c.h.b16 %v5466
        %v5627 = vunpack.c.l.b16 %v5467
        %v5628 = vunpack.c.l.b16 %v5468
        %v5629 = vunpack.c.h.b16 %v5468
        %v5630 = vunpack.c.l.b16 %v5469
        %v5631 = vunpack.c.h.b16 %v5469
        %v5632 = vunpack.c.l.b16 %v5470
        %v5633 = vunpack.c.l.b16 %v5471
        %v5634 = vunpack.c.h.b16 %v5471
        %v5635 = vunpack.c.l.b16 %v5472
        %v5636 = vunpack.c.h.b16 %v5472
        %v5637 = vunpack.c.l.b16 %v5473
        %v5638 = vpack.c.b16 %v5593, %v5588
        %v5639 = vpack.c.b16 %v5594, %v5589
        %v5640 = vpack.c.b16 %v5595, %v5590
        %v5641 = vpack.c.b16 %v5596, %v5591
        %v5642 = vpack.c.b16 %v5597, %v5592
        %v5643 = vpack.c.b16 %v5603, %v5598
        %v5644 = vpack.c.b16 %v5604, %v5599
        %v5645 = vpack.c.b16 %v5605, %v5600
        %v5646 = vpack.c.b16 %v5606, %v5601
        %v5647 = vpack.c.b16 %v5607, %v5602
        %v5648 = vpack.c.b16 %v5613, %v5608
        %v5649 = vpack.c.b16 %v5614, %v5609
        %v5650 = vpack.c.b16 %v5615, %v5610
        %v5651 = vpack.c.b16 %v5616, %v5611
        %v5652 = vpack.c.b16 %v5617, %v5612
        %v5653 = vpack.c.b16 %v5623, %v5618
        %v5654 = vpack.c.b16 %v5624, %v5619
        %v5655 = vpack.c.b16 %v5625, %v5620
        %v5656 = vpack.c.b16 %v5626, %v5621
        %v5657 = vpack.c.b16 %v5627, %v5622
        %v5658 = vpack.c.b16 %v5633, %v5628
        %v5659 = vpack.c.b16 %v5634, %v5629
        %v5660 = vpack.c.b16 %v5635, %v5630
        %v5661 = vpack.c.b16 %v5636, %v5631
        %v5662 = vpack.c.b16 %v5637, %v5632
        %v5768 = vunpack.c.l.b16 %v5474
        %v5769 = vunpack.c.l.b16 %v5475
        %v5770 = vunpack.c.l.b16 %v5476
        %v5771 = vunpack.c.l.b16 %v5477
        %v5772 = vunpack.c.l.b16 %v5478
        %v5773 = vunpack.c.l.b16 %v5479
        %v5774 = vunpack.c.l.b16 %v5480
        %v5775 = vunpack.c.l.b16 %v5481
        %v5776 = vunpack.c.l.b16 %v5482
        %v5777 = vunpack.c.l.b16 %v5483
        %v5778 = vunpack.c.l.b16 %v5484
        %v5779 = vunpack.c.l.b16 %v5485
        %v5780 = vunpack.c.l.b16 %v5486
        %v5781 = vunpack.c.l.b16 %v5487
        %v5782 = vunpack.c.l.b16 %v5488
        %v5783 = vunpack.c.l.b16 %v5489
        %v5784 = vunpack.c.l.b16 %v5490
        %v5785 = vunpack.c.l.b16 %v5491
        %v5786 = vunpack.c.l.b16 %v5492
        %v5787 = vunpack.c.l.b16 %v5493
        %v5788 = vunpack.c.l.b16 %v5494
        %v5789 = vunpack.c.l.b16 %v5495
        %v5790 = vunpack.c.l.b16 %v5496
        %v5791 = vunpack.c.l.b16 %v5497
        %v5792 = vunpack.c.l.b16 %v5498
        %v5793 = vunpack.c.l.b16 %v5499
        %v5794 = vunpack.c.l.b16 %v5500
        %v5795 = vunpack.c.l.b16 %v5501
        %v5796 = vunpack.c.l.b16 %v5502
        %v5797 = vunpack.c.l.b16 %v5503
        %v5798 = vunpack.c.l.b16 %v5504
        %v5799 = vunpack.c.l.b16 %v5505
        %v5800 = vunpack.c.l.b16 %v5506
        %v5801 = vunpack.c.l.b16 %v5507
        %v5802 = vunpack.c.l.b16 %v5508
        %v5803 = vunpack.c.l.b16 %v5509
        %v5804 = vunpack.c.l.b16 %v5510
        %v5805 = vunpack.c.l.b16 %v5511
        %v5806 = vunpack.c.l.b16 %v5512
        %v5807 = vunpack.c.l.b16 %v5513
        %v5808 = vunpack.c.l.b16 %v5514
        %v5809 = vunpack.c.l.b16 %v5515
        %v5810 = vunpack.c.l.b16 %v5516
        %v5811 = vunpack.c.l.b16 %v5517
        %v5812 = vunpack.c.l.b16 %v5518
        %v5813 = vunpack.c.l.b16 %v5519
        %v5814 = vunpack.c.l.b16 %v5520
        %v5815 = vunpack.c.l.b16 %v5521
        %v5816 = vunpack.c.l.b16 %v5522
        %v5817 = vunpack.c.l.b16 %v5523
        %v5818 = vunpack.c.l.b16 %v5524
        %v5819 = vunpack.c.l.b16 %v5525
        %v5820 = vunpack.c.l.b16 %v5526
        %v5821 = vunpack.c.l.b16 %v5527
        %v5822 = vunpack.c.l.b16 %v5528
        %v5823 = vunpack.c.l.b16 %v5529
        %v5824 = vunpack.c.l.b16 %v5530
        %v5825 = vunpack.c.l.b16 %v5531
        %v5826 = vunpack.c.l.b16 %v5532
        %v5827 = vunpack.c.l.b16 %v5533
        %v5828 = vunpack.c.l.b16 %v5534
        %v5829 = vunpack.c.l.b16 %v5535
        %v5830 = vunpack.c.l.b16 %v5536
        %v5831 = vunpack.c.l.b16 %v5537
        %v5832 = vunpack.c.l.b16 %v5538
        %v5833 = vunpack.c.l.b16 %v5539
        %v5834 = vunpack.c.l.b16 %v5540
        %v5835 = vunpack.c.l.b16 %v5541
        %v5836 = vunpack.c.l.b16 %v5542
        %v5837 = vunpack.c.l.b16 %v5543
        %v5838 = vunpack.c.l.b16 %v5544
        %v5839 = vunpack.c.l.b16 %v5545
        %v5840 = vunpack.c.l.b16 %v5546
        %v5841 = vunpack.c.l.b16 %v5547
        %v5842 = vunpack.c.l.b16 %v5548
        %v5843 = vunpack.c.l.b16 %v5549
        %v5844 = vunpack.c.l.b16 %v5550
        %v5845 = vunpack.c.l.b16 %v5551
        %v5846 = vunpack.c.l.b16 %v5552
        %v5847 = vunpack.c.l.b16 %v5553
        %v5848 = vpack.c.b16 %v5769, %v5768
        %v5849 = vpack.c.b16 %v5771, %v5770
        %v5850 = vpack.c.b16 %v5773, %v5772
        %v5851 = vpack.c.b16 %v5775, %v5774
        %v5852 = vpack.c.b16 %v5777, %v5776
        %v5853 = vpack.c.b16 %v5779, %v5778
        %v5854 = vpack.c.b16 %v5781, %v5780
        %v5855 = vpack.c.b16 %v5783, %v5782
        %v5856 = vpack.c.b16 %v5785, %v5784
        %v5857 = vpack.c.b16 %v5787, %v5786
        %v5858 = vpack.c.b16 %v5789, %v5788
        %v5859 = vpack.c.b16 %v5791, %v5790
        %v5860 = vpack.c.b16 %v5793, %v5792
        %v5861 = vpack.c.b16 %v5795, %v5794
        %v5862 = vpack.c.b16 %v5797, %v5796
        %v5863 = vpack.c.b16 %v5799, %v5798
        %v5864 = vpack.c.b16 %v5801, %v5800
        %v5865 = vpack.c.b16 %v5803, %v5802
        %v5866 = vpack.c.b16 %v5805, %v5804
        %v5867 = vpack.c.b16 %v5807, %v5806
        %v5868 = vpack.c.b16 %v5809, %v5808
        %v5869 = vpack.c.b16 %v5811, %v5810
        %v5870 = vpack.c.b16 %v5813, %v5812
        %v5871 = vpack.c.b16 %v5815, %v5814
        %v5872 = vpack.c.b16 %v5817, %v5816
        %v5873 = vpack.c.b16 %v5819, %v5818
        %v5874 = vpack.c.b16 %v5821, %v5820
        %v5875 = vpack.c.b16 %v5823, %v5822
        %v5876 = vpack.c.b16 %v5825, %v5824
        %v5877 = vpack.c.b16 %v5827, %v5826
        %v5878 = vpack.c.b16 %v5829, %v5828
        %v5879 = vpack.c.b16 %v5831, %v5830
        %v5880 = vpack.c.b16 %v5833, %v5832
        %v5881 = vpack.c.b16 %v5835, %v5834
        %v5882 = vpack.c.b16 %v5837, %v5836
        %v5883 = vpack.c.b16 %v5839, %v5838
        %v5884 = vpack.c.b16 %v5841, %v5840
        %v5885 = vpack.c.b16 %v5843, %v5842
        %v5886 = vpack.c.b16 %v5845, %v5844
        %v5887 = vpack.c.b16 %v5847, %v5846
        %5928 = vmatpush.bf16.msra.mxu0 %v5855
        %5929 = vmatpush.bf16.msra.mxu0 %v5854
        %5930 = vmatpush.bf16.msra.mxu0 %v5853
        %5931 = vmatpush.bf16.msra.mxu0 %v5852
        %5932 = vmatpush.bf16.msra.mxu0 %v5851
        %5933 = vmatpush.bf16.msra.mxu0 %v5850
        %5934 = vmatpush.bf16.msra.mxu0 %v5849
        %5935 = vmatpush.bf16.msra.mxu0 %v5848
        %5936 = vmatmul.bf16.gmra.mxu0 %v5638
        %v5937 = vpop.f32.mrf.mxu0
        %v5938 = vadd.f32 %v5556, %v5937
        %v5939 = vpop.f32.mrf.mxu0
        %v5940 = vadd.f32 %v5556, %v5939
        %5941 = vmatmul.bf16.gmra.mxu0 %v5643
        %v5942 = vpop.f32.mrf.mxu0
        %v5943 = vadd.f32 %v5556, %v5942
        %v5944 = vpop.f32.mrf.mxu0
        %v5945 = vadd.f32 %v5556, %v5944
        %5946 = vmatmul.bf16.gmra.mxu0 %v5648
        %v5947 = vpop.f32.mrf.mxu0
        %v5948 = vadd.f32 %v5556, %v5947
        %v5949 = vpop.f32.mrf.mxu0
        %v5950 = vadd.f32 %v5556, %v5949
        %5951 = vmatmul.bf16.gmra.mxu0 %v5653
        %v5952 = vpop.f32.mrf.mxu0
        %v5953 = vadd.f32 %v5556, %v5952
        %v5954 = vpop.f32.mrf.mxu0
        %v5955 = vadd.f32 %v5556, %v5954
        %5956 = vmatmul.bf16.gmra.mxu0 %v5658
        %v5957 = vpop.f32.mrf.mxu0
        %v5958 = vadd.f32 %v5556, %v5957
        %v5959 = vpop.f32.mrf.mxu0
        %v5960 = vadd.f32 %v5556, %v5959
        %5961 = vdwg.mxu0
        %5962 = vmatpush.bf16.msra.mxu0 %v5863
        %5963 = vmatpush.bf16.msra.mxu0 %v5862
        %5964 = vmatpush.bf16.msra.mxu0 %v5861
        %5965 = vmatpush.bf16.msra.mxu0 %v5860
        %5966 = vmatpush.bf16.msra.mxu0 %v5859
        %5967 = vmatpush.bf16.msra.mxu0 %v5858
        %5968 = vmatpush.bf16.msra.mxu0 %v5857
        %5969 = vmatpush.bf16.msra.mxu0 %v5856
        %5970 = vmatmul.bf16.gmra.mxu0 %v5639
        %v5971 = vpop.f32.mrf.mxu0
        %v5972 = vadd.f32 %v5938, %v5971
        %v5973 = vpop.f32.mrf.mxu0
        %v5974 = vadd.f32 %v5940, %v5973
        %5975 = vmatmul.bf16.gmra.mxu0 %v5644
        %v5976 = vpop.f32.mrf.mxu0
        %v5977 = vadd.f32 %v5943, %v5976
        %v5978 = vpop.f32.mrf.mxu0
        %v5979 = vadd.f32 %v5945, %v5978
        %5980 = vmatmul.bf16.gmra.mxu0 %v5649
        %v5981 = vpop.f32.mrf.mxu0
        %v5982 = vadd.f32 %v5948, %v5981
        %v5983 = vpop.f32.mrf.mxu0
        %v5984 = vadd.f32 %v5950, %v5983
        %5985 = vmatmul.bf16.gmra.mxu0 %v5654
        %v5986 = vpop.f32.mrf.mxu0
        %v5987 = vadd.f32 %v5953, %v5986
        %v5988 = vpop.f32.mrf.mxu0
        %v5989 = vadd.f32 %v5955, %v5988
        %5990 = vmatmul.bf16.gmra.mxu0 %v5659
        %v5991 = vpop.f32.mrf.mxu0
        %v5992 = vadd.f32 %v5958, %v5991
        %v5993 = vpop.f32.mrf.mxu0
        %v5994 = vadd.f32 %v5960, %v5993
        %5995 = vdwg.mxu0
        %5996 = vmatpush.bf16.msra.mxu0 %v5871
        %5997 = vmatpush.bf16.msra.mxu0 %v5870
        %5998 = vmatpush.bf16.msra.mxu0 %v5869
        %5999 = vmatpush.bf16.msra.mxu0 %v5868
        %6000 = vmatpush.bf16.msra.mxu0 %v5867
        %6001 = vmatpush.bf16.msra.mxu0 %v5866
        %6002 = vmatpush.bf16.msra.mxu0 %v5865
        %6003 = vmatpush.bf16.msra.mxu0 %v5864
        %6004 = vmatmul.bf16.gmra.mxu0 %v5640
        %v6005 = vpop.f32.mrf.mxu0
        %v6006 = vadd.f32 %v5972, %v6005
        %v6007 = vpop.f32.mrf.mxu0
        %v6008 = vadd.f32 %v5974, %v6007
        %6009 = vmatmul.bf16.gmra.mxu0 %v5645
        %v6010 = vpop.f32.mrf.mxu0
        %v6011 = vadd.f32 %v5977, %v6010
        %v6012 = vpop.f32.mrf.mxu0
        %v6013 = vadd.f32 %v5979, %v6012
        %6014 = vmatmul.bf16.gmra.mxu0 %v5650
        %v6015 = vpop.f32.mrf.mxu0
        %v6016 = vadd.f32 %v5982, %v6015
        %v6017 = vpop.f32.mrf.mxu0
        %v6018 = vadd.f32 %v5984, %v6017
        %6019 = vmatmul.bf16.gmra.mxu0 %v5655
        %v6020 = vpop.f32.mrf.mxu0
        %v6021 = vadd.f32 %v5987, %v6020
        %v6022 = vpop.f32.mrf.mxu0
        %v6023 = vadd.f32 %v5989, %v6022
        %6024 = vmatmul.bf16.gmra.mxu0 %v5660
        %v6025 = vpop.f32.mrf.mxu0
        %v6026 = vadd.f32 %v5992, %v6025
        %v6027 = vpop.f32.mrf.mxu0
        %v6028 = vadd.f32 %v5994, %v6027
        %6029 = vdwg.mxu0
        %6030 = vmatpush.bf16.msra.mxu0 %v5879
        %6031 = vmatpush.bf16.msra.mxu0 %v5878
        %6032 = vmatpush.bf16.msra.mxu0 %v5877
        %6033 = vmatpush.bf16.msra.mxu0 %v5876
        %6034 = vmatpush.bf16.msra.mxu0 %v5875
        %6035 = vmatpush.bf16.msra.mxu0 %v5874
        %6036 = vmatpush.bf16.msra.mxu0 %v5873
        %6037 = vmatpush.bf16.msra.mxu0 %v5872
        %6038 = vmatmul.bf16.gmra.mxu0 %v5641
        %v6039 = vpop.f32.mrf.mxu0
        %v6040 = vadd.f32 %v6006, %v6039
        %v6041 = vpop.f32.mrf.mxu0
        %v6042 = vadd.f32 %v6008, %v6041
        %6043 = vmatmul.bf16.gmra.mxu0 %v5646
        %v6044 = vpop.f32.mrf.mxu0
        %v6045 = vadd.f32 %v6011, %v6044
        %v6046 = vpop.f32.mrf.mxu0
        %v6047 = vadd.f32 %v6013, %v6046
        %6048 = vmatmul.bf16.gmra.mxu0 %v5651
        %v6049 = vpop.f32.mrf.mxu0
        %v6050 = vadd.f32 %v6016, %v6049
        %v6051 = vpop.f32.mrf.mxu0
        %v6052 = vadd.f32 %v6018, %v6051
        %6053 = vmatmul.bf16.gmra.mxu0 %v5656
        %v6054 = vpop.f32.mrf.mxu0
        %v6055 = vadd.f32 %v6021, %v6054
        %v6056 = vpop.f32.mrf.mxu0
        %v6057 = vadd.f32 %v6023, %v6056
        %6058 = vmatmul.bf16.gmra.mxu0 %v5661
        %v6059 = vpop.f32.mrf.mxu0
        %v6060 = vadd.f32 %v6026, %v6059
        %v6061 = vpop.f32.mrf.mxu0
        %v6062 = vadd.f32 %v6028, %v6061
        %6063 = vdwg.mxu0
        %6064 = vmatpush.bf16.msra.mxu0 %v5887
        %6065 = vmatpush.bf16.msra.mxu0 %v5886
        %6066 = vmatpush.bf16.msra.mxu0 %v5885
        %6067 = vmatpush.bf16.msra.mxu0 %v5884
        %6068 = vmatpush.bf16.msra.mxu0 %v5883
        %6069 = vmatpush.bf16.msra.mxu0 %v5882
        %6070 = vmatpush.bf16.msra.mxu0 %v5881
        %6071 = vmatpush.bf16.msra.mxu0 %v5880
        %6072 = vmatmul.bf16.gmra.mxu0 %v5642
        %v6073 = vpop.f32.mrf.mxu0
        %v6074 = vadd.f32 %v6040, %v6073
        %v6075 = vpop.f32.mrf.mxu0
        %v6076 = vadd.f32 %v6042, %v6075
        %6077 = vmatmul.bf16.gmra.mxu0 %v5647
        %v6078 = vpop.f32.mrf.mxu0
        %v6079 = vadd.f32 %v6045, %v6078
        %v6080 = vpop.f32.mrf.mxu0
        %v6081 = vadd.f32 %v6047, %v6080
        %6082 = vmatmul.bf16.gmra.mxu0 %v5652
        %v6083 = vpop.f32.mrf.mxu0
        %v6084 = vadd.f32 %v6050, %v6083
        %v6085 = vpop.f32.mrf.mxu0
        %v6086 = vadd.f32 %v6052, %v6085
        %6087 = vmatmul.bf16.gmra.mxu0 %v5657
        %v6088 = vpop.f32.mrf.mxu0
        %v6089 = vadd.f32 %v6055, %v6088
        %v6090 = vpop.f32.mrf.mxu0
        %v6091 = vadd.f32 %v6057, %v6090
        %6092 = vmatmul.bf16.gmra.mxu0 %v5662
        %v6093 = vpop.f32.mrf.mxu0
        %v6094 = vadd.f32 %v6060, %v6093
        %v6095 = vpop.f32.mrf.mxu0
        %v6096 = vadd.f32 %v6062, %v6095
        %6097 = vdwg.mxu0
        %v6098 = vmax.f32 %v6074, 0.0
        %v6099 = vmax.f32 %v6076, 0.0
        %v6100 = vmax.f32 %v6079, 0.0
        %v6101 = vmax.f32 %v6081, 0.0
        %v6102 = vmax.f32 %v6084, 0.0
        %v6103 = vmax.f32 %v6086, 0.0
        %v6104 = vmax.f32 %v6089, 0.0
        %v6105 = vmax.f32 %v6091, 0.0
        %v6106 = vmax.f32 %v6094, 0.0
        %v6107 = vmax.f32 %v6096, 0.0
        %6108 = vst [vmem:[#allocation6] sm:$0xff] %v6098
        %6109 = vst [vmem:[#allocation6 + $0x8] sm:$0xff] %v6099
        %6110 = vst [vmem:[#allocation6 + $0x10] sm:$0xff] %v6100
        %6111 = vst [vmem:[#allocation6 + $0x18] sm:$0xff] %v6101
        %6112 = vst [vmem:[#allocation6 + $0x20] sm:$0xff] %v6102
        %6113 = vst [vmem:[#allocation6 + $0x28] sm:$0xff] %v6103
        %6114 = vst [vmem:[#allocation6 + $0x30] sm:$0xff] %v6104
        %6115 = vst [vmem:[#allocation6 + $0x38] sm:$0xff] %v6105
        %6116 = vst [vmem:[#allocation6 + $0x40] sm:$0xff] %v6106
        %6117 = vst [vmem:[#allocation6 + $0x48] sm:$0xff] %v6107
        %6118 = vst [vmem:[#allocation7] sm:$0xf] 0
        %6119 = vst [vmem:[#allocation7 + $0x4] sm:$0xf] 0
        %6120 = vst [vmem:[#allocation7 + $0x8] sm:$0xf] 0
        %6121 = vst [vmem:[#allocation7 + $0xc] sm:$0xf] 0
        %6122 = vst [vmem:[#allocation7 + $0x10] sm:$0xf] 0
        %6123 = vst [vmem:[#allocation7 + $0x14] sm:$0x1] 0
        %v6124 = vld [vmem:[#allocation6] ss:$2 sm:$0xf]
        %s6125 = scalar_lea.vmem [#allocation6], 1
        %v6126 = vld [vmem:[%s6125] ss:$2 sm:$0xf]
        %s6127 = scalar_lea.vmem [#allocation6], 10
        %v6128 = vld [vmem:[%s6127] ss:$2 sm:$0xf]
        %s6129 = scalar_lea.vmem [#allocation6], 11
        %v6130 = vld [vmem:[%s6129] ss:$2 sm:$0xf]
        %v6131 = vmax.f32 %v6124, %v6126
        %v6132 = vmax.f32 %v6128, %v6130
        %v6133 = vmax.f32 %v6131, %v6132
        %v6134 = vpack.c.bf16 %v6133, %v6133
        %v6136 = vshll.u32 %v6134, 16
        %v6138 = vrot.slane %v6136, 5
        %v6139 = vshrl.u32 %v6134, 16
        %v6141 = vrot.slane %v6139, 4
        %v6142 = vor.u32 %v6141, %v6138
        %v6143 = vrot.slane %v6142, 4
        %vm6146 = vcmask 1043459
        %vm6147 = vmand %vm6146, %vm4377
        %v6148 = vld [vmem:[#allocation7] sm:$0x8]
        %v6149 = vsel %vm6147, %v6138, %v6148
        %6150 = vst [vmem:[#allocation7] sm:$0x8] %v6149
        %vm6151 = vmand %vm2417, %vm3039
        %v6152 = vld [vmem:[#allocation7 + $0x4] sm:$0x3]
        %v6153 = vsel %vm6151, %v6143, %v6152
        %6154 = vst [vmem:[#allocation7 + $0x4] sm:$0x3] %v6153
        %s6155 = scalar_lea.vmem [#allocation6], 20
        %v6156 = vld [vmem:[%s6155] ss:$2 sm:$0xf]
        %s6157 = scalar_lea.vmem [#allocation6], 21
        %v6158 = vld [vmem:[%s6157] ss:$2 sm:$0xf]
        %s6159 = scalar_lea.vmem [#allocation6], 30
        %v6160 = vld [vmem:[%s6159] ss:$2 sm:$0xf]
        %s6161 = scalar_lea.vmem [#allocation6], 31
        %v6162 = vld [vmem:[%s6161] ss:$2 sm:$0xf]
        %v6163 = vmax.f32 %v6156, %v6158
        %v6164 = vmax.f32 %v6160, %v6162
        %v6165 = vmax.f32 %v6163, %v6164
        %v6166 = vpack.c.bf16 %v6165, %v6165
        %v6168 = vshrl.u32 %v6166, 16
        %v6170 = vrot.slane %v6168, 5
        %v6171 = vshll.u32 %v6166, 16
        %v6173 = vrot.slane %v6171, 6
        %v6174 = vor.u32 %v6170, %v6173
        %v6175 = vrot.slane %v6170, 4
        %vm6178 = vcmask 1043458
        %vm6179 = vmand %vm6178, %vm4343
        %v6180 = vld [vmem:[#allocation7 + $0x4] sm:$0xc]
        %v6181 = vsel %vm6179, %v6174, %v6180
        %6182 = vst [vmem:[#allocation7 + $0x4] sm:$0xc] %v6181
        %vm6183 = vmand %vm3629, %vm4415
        %v6184 = vld [vmem:[#allocation7 + $0x8] sm:$0x1]
        %v6185 = vsel %vm6183, %v6175, %v6184
        %6186 = vst [vmem:[#allocation7 + $0x8] sm:$0x1] %v6185
        %s6187 = scalar_lea.vmem [#allocation6], 40
        %v6188 = vld [vmem:[%s6187] ss:$2 sm:$0xf]
        %s6189 = scalar_lea.vmem [#allocation6], 41
        %v6190 = vld [vmem:[%s6189] ss:$2 sm:$0xf]
        %s6191 = scalar_lea.vmem [#allocation6], 50
        %v6192 = vld [vmem:[%s6191] ss:$2 sm:$0xf]
        %s6193 = scalar_lea.vmem [#allocation6], 51
        %v6194 = vld [vmem:[%s6193] ss:$2 sm:$0xf]
        %v6195 = vmax.f32 %v6188, %v6190
        %v6196 = vmax.f32 %v6192, %v6194
        %v6197 = vmax.f32 %v6195, %v6196
        %v6198 = vpack.c.bf16 %v6197, %v6197
        %v6200 = vshrl.u32 %v6198, 16
        %v6202 = vrot.slane %v6200, 6
        %v6203 = vshll.u32 %v6198, 16
        %v6205 = vrot.slane %v6203, 7
        %v6206 = vor.u32 %v6202, %v6205
        %vm6208 = vcmask 1043457
        %vm6209 = vsmask.f32 3334
        %vm6210 = vmand %vm6208, %vm6209
        %v6211 = vld [vmem:[#allocation7 + $0x8] sm:$0xe]
        %v6212 = vsel %vm6210, %v6206, %v6211
        %6213 = vst [vmem:[#allocation7 + $0x8] sm:$0xe] %v6212
        %s6214 = scalar_lea.vmem [#allocation6], 60
        %v6215 = vld [vmem:[%s6214] ss:$2 sm:$0xf]
        %s6216 = scalar_lea.vmem [#allocation6], 61
        %v6217 = vld [vmem:[%s6216] ss:$2 sm:$0xf]
        %s6218 = scalar_lea.vmem [#allocation6], 70
        %v6219 = vld [vmem:[%s6218] ss:$2 sm:$0xf]
        %s6220 = scalar_lea.vmem [#allocation6], 71
        %v6221 = vld [vmem:[%s6220] ss:$2 sm:$0xf]
        %v6222 = vmax.f32 %v6215, %v6217
        %v6223 = vmax.f32 %v6219, %v6221
        %v6224 = vmax.f32 %v6222, %v6223
        %v6225 = vpack.c.bf16 %v6224, %v6224
        %v6227 = vshrl.u32 %v6225, 16
        %v6229 = vrot.slane %v6227, 7
        %v6230 = vshll.u32 %v6225, 16
        %v6232 = vor.u32 %v6229, %v6230
        %vm6234 = vsmask.f32 2306
        %vm6235 = vmand %vm1205, %vm6234
        %v6236 = vld [vmem:[#allocation7 + $0xc] sm:$0x7]
        %v6237 = vsel %vm6235, %v6232, %v6236
        %6238 = vst [vmem:[#allocation7 + $0xc] sm:$0x7] %v6237
        %v6239 = vld [vmem:[#allocation7] sm:$0xf]
        %v6240 = vld [vmem:[#allocation7 + $0x4] sm:$0xf]
        %v6241 = vld [vmem:[#allocation7 + $0x8] sm:$0xf]
        %6242 = vst [vmem:[#allocation8] sm:$0xf] %v6239
        %6243 = vst [vmem:[#allocation8 + $0x24] sm:$0xf] %v6240
        %6244 = vst [vmem:[#allocation8 + $0x48] sm:$0xf] %v6241
        %v6245 = vld [vmem:[#allocation7] sm:$0xf]
        %v6246 = vld [vmem:[#allocation7 + $0x4] sm:$0xf]
        %v6247 = vld [vmem:[#allocation7 + $0x8] sm:$0xf]
        %v6248 = vld [vmem:[#allocation7 + $0xc] sm:$0x1]
        %v6250 = vshrl.u32 %v6245, 16
        %v6252 = vrot.slane %v6250, 4
        %v6253 = vshll.u32 %v6245, 16
        %v6255 = vrot.slane %v6253, 5
        %v6256 = vor.u32 %v6252, %v6255
        %v6257 = vrot.slane %v6256, 4
        %v6259 = vshll.u32 %v6246, 16
        %v6261 = vrot.slane %v6259, 5
        %v6262 = vsel %vm621, %v6257, %v6261
        %v6263 = vshrl.u32 %v6246, 16
        %v6265 = vrot.slane %v6263, 4
        %v6266 = vor.u32 %v6265, %v6261
        %v6267 = vrot.slane %v6266, 4
        %v6269 = vshll.u32 %v6247, 16
        %v6271 = vrot.slane %v6269, 5
        %v6272 = vsel %vm621, %v6267, %v6271
        %v6273 = vshrl.u32 %v6247, 16
        %v6275 = vrot.slane %v6273, 4
        %v6276 = vor.u32 %v6275, %v6271
        %v6277 = vrot.slane %v6276, 4
        %v6279 = vshll.u32 %v6248, 16
        %v6281 = vrot.slane %v6279, 5
        %v6282 = vsel %vm621, %v6277, %v6281
        %6286 = vst [vmem:[#allocation8 + $0x4] sm:$0xf] %v6262
        %6287 = vst [vmem:[#allocation8 + $0x28] sm:$0xf] %v6272
        %6288 = vst [vmem:[#allocation8 + $0x4c] sm:$0xf] %v6282
        %v6289 = vld [vmem:[#allocation7] sm:$0xe]
        %v6290 = vld [vmem:[#allocation7 + $0x4] sm:$0xf]
        %v6291 = vld [vmem:[#allocation7 + $0x8] sm:$0xf]
        %v6292 = vld [vmem:[#allocation7 + $0xc] sm:$0x1]
        %v6297 = vrot.slane %v6289, 5
        %v6298 = vrot.slane %v6297, 4
        %v6299 = vrot.slane %v6290, 5
        %v6300 = vsel %vm1207, %v6298, %v6299
        %v6301 = vrot.slane %v6299, 4
        %v6302 = vrot.slane %v6291, 5
        %v6303 = vsel %vm1207, %v6301, %v6302
        %v6304 = vrot.slane %v6302, 4
        %v6305 = vrot.slane %v6292, 5
        %v6306 = vsel %vm1207, %v6304, %v6305
        %6310 = vst [vmem:[#allocation8 + $0x8] sm:$0xf] %v6300
        %6311 = vst [vmem:[#allocation8 + $0x2c] sm:$0xf] %v6303
        %6312 = vst [vmem:[#allocation8 + $0x50] sm:$0xf] %v6306
        %v6313 = vld [vmem:[#allocation7] sm:$0x8]
        %v6314 = vld [vmem:[#allocation7 + $0x4] sm:$0xf]
        %v6315 = vld [vmem:[#allocation7 + $0x8] sm:$0xf]
        %v6316 = vld [vmem:[#allocation7 + $0xc] sm:$0x7]
        %v6321 = vrot.slane %v6313, 7
        %v6322 = vrot.slane %v6321, 4
        %v6323 = vrot.slane %v6314, 7
        %v6324 = vsel %vm3631, %v6322, %v6323
        %v6325 = vrot.slane %v6323, 4
        %v6326 = vrot.slane %v6315, 7
        %v6327 = vsel %vm3631, %v6325, %v6326
        %v6328 = vrot.slane %v6326, 4
        %v6329 = vrot.slane %v6316, 7
        %v6330 = vsel %vm3631, %v6328, %v6329
        %6334 = vst [vmem:[#allocation8 + $0xc] sm:$0xf] %v6324
        %6335 = vst [vmem:[#allocation8 + $0x30] sm:$0xf] %v6327
        %6336 = vst [vmem:[#allocation8 + $0x54] sm:$0xf] %v6330
        %v6337 = vld [vmem:[#allocation7] sm:$0x8]
        %v6338 = vld [vmem:[#allocation7 + $0x4] sm:$0xf]
        %v6339 = vld [vmem:[#allocation7 + $0x8] sm:$0xf]
        %v6340 = vld [vmem:[#allocation7 + $0xc] sm:$0xf]
        %vm6341 = vsmask.f32 4368
        %vm6342 = vmor %vm4415, %vm6341
        %v6344 = vshrl.u32 %v6337, 16
        %v6346 = vrot.slane %v6344, 7
        %v6347 = vrot.slane %v6346, 4
        %v6349 = vshrl.u32 %v6338, 16
        %v6351 = vrot.slane %v6349, 7
        %v6352 = vshll.u32 %v6338, 16
        %v6354 = vor.u32 %v6351, %v6352
        %v6355 = vsel %vm6342, %v6347, %v6354
        %v6356 = vrot.slane %v6351, 4
        %v6358 = vshrl.u32 %v6339, 16
        %v6360 = vrot.slane %v6358, 7
        %v6361 = vshll.u32 %v6339, 16
        %v6363 = vor.u32 %v6360, %v6361
        %v6364 = vsel %vm6342, %v6356, %v6363
        %v6365 = vrot.slane %v6360, 4
        %v6367 = vshrl.u32 %v6340, 16
        %v6369 = vrot.slane %v6367, 7
        %v6370 = vshll.u32 %v6340, 16
        %v6372 = vor.u32 %v6369, %v6370
        %v6373 = vsel %vm6342, %v6365, %v6372
        %6377 = vst [vmem:[#allocation8 + $0x10] sm:$0xf] %v6355
        %6378 = vst [vmem:[#allocation8 + $0x34] sm:$0xf] %v6364
        %6379 = vst [vmem:[#allocation8 + $0x58] sm:$0xf] %v6373
        %v6380 = vld [vmem:[#allocation7 + $0x4] sm:$0xf]
        %v6381 = vld [vmem:[#allocation7 + $0x8] sm:$0xf]
        %v6382 = vld [vmem:[#allocation7 + $0xc] sm:$0xf]
        %6383 = vst [vmem:[#allocation8 + $0x14] sm:$0xf] %v6380
        %6384 = vst [vmem:[#allocation8 + $0x38] sm:$0xf] %v6381
        %6385 = vst [vmem:[#allocation8 + $0x5c] sm:$0xf] %v6382
        %v6386 = vld [vmem:[#allocation7 + $0x4] sm:$0xc]
        %v6387 = vld [vmem:[#allocation7 + $0x8] sm:$0xf]
        %v6388 = vld [vmem:[#allocation7 + $0xc] sm:$0xf]
        %v6389 = vld [vmem:[#allocation7 + $0x10] sm:$0x3]
        %v6394 = vrot.slane %v6386, 6
        %v6395 = vrot.slane %v6394, 4
        %v6396 = vrot.slane %v6387, 6
        %v6397 = vsel %vm2419, %v6395, %v6396
        %v6398 = vrot.slane %v6396, 4
        %v6399 = vrot.slane %v6388, 6
        %v6400 = vsel %vm2419, %v6398, %v6399
        %v6401 = vrot.slane %v6399, 4
        %v6402 = vrot.slane %v6389, 6
        %v6403 = vsel %vm2419, %v6401, %v6402
        %6407 = vst [vmem:[#allocation8 + $0x18] sm:$0xf] %v6397
        %6408 = vst [vmem:[#allocation8 + $0x3c] sm:$0xf] %v6400
        %6409 = vst [vmem:[#allocation8 + $0x60] sm:$0xf] %v6403
        %v6410 = vld [vmem:[#allocation7 + $0x4] sm:$0xc]
        %v6411 = vld [vmem:[#allocation7 + $0x8] sm:$0xf]
        %v6412 = vld [vmem:[#allocation7 + $0xc] sm:$0xf]
        %v6413 = vld [vmem:[#allocation7 + $0x10] sm:$0x7]
        %v6415 = vshrl.u32 %v6410, 16
        %v6417 = vrot.slane %v6415, 6
        %v6418 = vshll.u32 %v6410, 16
        %v6420 = vrot.slane %v6418, 7
        %v6421 = vor.u32 %v6417, %v6420
        %v6422 = vrot.slane %v6421, 4
        %v6424 = vshrl.u32 %v6411, 16
        %v6426 = vrot.slane %v6424, 6
        %v6427 = vshll.u32 %v6411, 16
        %v6429 = vrot.slane %v6427, 7
        %v6430 = vor.u32 %v6426, %v6429
        %v6431 = vsel %vm3041, %v6422, %v6430
        %v6432 = vrot.slane %v6430, 4
        %v6434 = vshrl.u32 %v6412, 16
        %v6436 = vrot.slane %v6434, 6
        %v6437 = vshll.u32 %v6412, 16
        %v6439 = vrot.slane %v6437, 7
        %v6440 = vor.u32 %v6436, %v6439
        %v6441 = vsel %vm3041, %v6432, %v6440
        %v6442 = vrot.slane %v6440, 4
        %v6444 = vshrl.u32 %v6413, 16
        %v6446 = vrot.slane %v6444, 6
        %v6447 = vshll.u32 %v6413, 16
        %v6449 = vrot.slane %v6447, 7
        %v6450 = vor.u32 %v6446, %v6449
        %v6451 = vsel %vm3041, %v6442, %v6450
        %6455 = vst [vmem:[#allocation8 + $0x1c] sm:$0xf] %v6431
        %6456 = vst [vmem:[#allocation8 + $0x40] sm:$0xf] %v6441
        %6457 = vst [vmem:[#allocation8 + $0x64] sm:$0xf] %v6451
        %v6458 = vld [vmem:[#allocation7 + $0x4] sm:$0x8]
        %v6459 = vld [vmem:[#allocation7 + $0x8] sm:$0xf]
        %v6460 = vld [vmem:[#allocation7 + $0xc] sm:$0xf]
        %v6461 = vld [vmem:[#allocation7 + $0x10] sm:$0x7]
        %v6466 = vrot.slane %v6458, 7
        %v6467 = vrot.slane %v6466, 4
        %v6468 = vrot.slane %v6459, 7
        %v6469 = vsel %vm3631, %v6467, %v6468
        %v6470 = vrot.slane %v6468, 4
        %v6471 = vrot.slane %v6460, 7
        %v6472 = vsel %vm3631, %v6470, %v6471
        %v6473 = vrot.slane %v6471, 4
        %v6474 = vrot.slane %v6461, 7
        %v6475 = vsel %vm3631, %v6473, %v6474
        %6479 = vst [vmem:[#allocation8 + $0x20] sm:$0xf] %v6469
        %6480 = vst [vmem:[#allocation8 + $0x44] sm:$0xf] %v6472
        %6481 = vst [vmem:[#allocation8 + $0x68] sm:$0xf] %v6475
        %v6482 = vld [vmem:[#allocation8] sm:$0xff]
        %v6483 = vld [vmem:[#allocation8 + $0x8] sm:$0xff]
        %v6484 = vld [vmem:[#allocation8 + $0x10] sm:$0xff]
        %v6485 = vld [vmem:[#allocation8 + $0x18] sm:$0xff]
        %v6486 = vld [vmem:[#allocation8 + $0x20] sm:$0xf]
        %v6487 = vld [vmem:[#allocation8 + $0x24] sm:$0xff]
        %v6488 = vld [vmem:[#allocation8 + $0x2c] sm:$0xff]
        %v6489 = vld [vmem:[#allocation8 + $0x34] sm:$0xff]
        %v6490 = vld [vmem:[#allocation8 + $0x3c] sm:$0xff]
        %v6491 = vld [vmem:[#allocation8 + $0x44] sm:$0xf]
        %v6492 = vld [vmem:[#allocation8 + $0x48] sm:$0xff]
        %v6493 = vld [vmem:[#allocation8 + $0x50] sm:$0xff]
        %v6494 = vld [vmem:[#allocation8 + $0x58] sm:$0xff]
        %v6495 = vld [vmem:[#allocation8 + $0x60] sm:$0xff]
        %v6496 = vld [vmem:[#allocation8 + $0x68] sm:$0xf]
        %v6497 = vld [vmem:[#allocation11] sm:$0xff]
        %v6498 = vld [vmem:[#allocation11 + $0x8] sm:$0xff]
        %v6499 = vld [vmem:[#allocation11 + $0x10] sm:$0xff]
        %v6500 = vld [vmem:[#allocation11 + $0x18] sm:$0xff]
        %v6501 = vld [vmem:[#allocation11 + $0x20] sm:$0xff]
        %v6502 = vld [vmem:[#allocation11 + $0x28] sm:$0xff]
        %v6503 = vld [vmem:[#allocation11 + $0x30] sm:$0xff]
        %v6504 = vld [vmem:[#allocation11 + $0x38] sm:$0xff]
        %v6505 = vld [vmem:[#allocation11 + $0x40] sm:$0xff]
        %v6506 = vld [vmem:[#allocation11 + $0x48] sm:$0xff]
        %v6507 = vld [vmem:[#allocation11 + $0x50] sm:$0xff]
        %v6508 = vld [vmem:[#allocation11 + $0x58] sm:$0xff]
        %v6509 = vld [vmem:[#allocation11 + $0x60] sm:$0xff]
        %v6510 = vld [vmem:[#allocation11 + $0x68] sm:$0xff]
        %v6511 = vld [vmem:[#allocation11 + $0x70] sm:$0xff]
        %v6512 = vld [vmem:[#allocation11 + $0x78] sm:$0xff]
        %v6513 = vld [vmem:[#allocation11 + $0x80] sm:$0xff]
        %v6514 = vld [vmem:[#allocation11 + $0x88] sm:$0xff]
        %v6515 = vld [vmem:[#allocation11 + $0x90] sm:$0xff]
        %v6516 = vld [vmem:[#allocation11 + $0x98] sm:$0xff]
        %v6517 = vld [vmem:[#allocation11 + $0xa0] sm:$0xff]
        %v6518 = vld [vmem:[#allocation11 + $0xa8] sm:$0xff]
        %v6519 = vld [vmem:[#allocation11 + $0xb0] sm:$0xff]
        %v6520 = vld [vmem:[#allocation11 + $0xb8] sm:$0xff]
        %v6521 = vld [vmem:[#allocation11 + $0xc0] sm:$0xff]
        %v6522 = vld [vmem:[#allocation11 + $0xc8] sm:$0xff]
        %v6523 = vld [vmem:[#allocation11 + $0xd0] sm:$0xff]
        %v6524 = vld [vmem:[#allocation11 + $0xd8] sm:$0xff]
        %v6525 = vld [vmem:[#allocation11 + $0xe0] sm:$0xff]
        %v6526 = vld [vmem:[#allocation11 + $0xe8] sm:$0xff]
        %v6527 = vld [vmem:[#allocation11 + $0xf0] sm:$0xff]
        %v6528 = vld [vmem:[#allocation11 + $0xf8] sm:$0xff]
        %v6529 = vld [vmem:[#allocation11 + $0x100] sm:$0xff]
        %v6530 = vld [vmem:[#allocation11 + $0x108] sm:$0xff]
        %v6531 = vld [vmem:[#allocation11 + $0x110] sm:$0xff]
        %v6532 = vld [vmem:[#allocation11 + $0x118] sm:$0xff]
        %v6533 = vld [vmem:[#allocation11 + $0x120] sm:$0xff]
        %v6534 = vld [vmem:[#allocation11 + $0x128] sm:$0xff]
        %v6535 = vld [vmem:[#allocation11 + $0x130] sm:$0xff]
        %v6536 = vld [vmem:[#allocation11 + $0x138] sm:$0xff]
        %v6537 = vld [vmem:[#allocation11 + $0x140] sm:$0xff]
        %v6538 = vld [vmem:[#allocation11 + $0x148] sm:$0xff]
        %v6539 = vld [vmem:[#allocation11 + $0x150] sm:$0xff]
        %v6540 = vld [vmem:[#allocation11 + $0x158] sm:$0xff]
        %v6541 = vld [vmem:[#allocation11 + $0x160] sm:$0xff]
        %v6542 = vld [vmem:[#allocation11 + $0x168] sm:$0xff]
        %v6543 = vld [vmem:[#allocation11 + $0x170] sm:$0xff]
        %v6544 = vld [vmem:[#allocation11 + $0x178] sm:$0xff]
        %v6545 = vld [vmem:[#allocation11 + $0x180] sm:$0xff]
        %v6546 = vld [vmem:[#allocation11 + $0x188] sm:$0xff]
        %v6547 = vld [vmem:[#allocation11 + $0x190] sm:$0xff]
        %v6548 = vld [vmem:[#allocation11 + $0x198] sm:$0xff]
        %v6549 = vld [vmem:[#allocation11 + $0x1a0] sm:$0xff]
        %v6550 = vld [vmem:[#allocation11 + $0x1a8] sm:$0xff]
        %v6551 = vld [vmem:[#allocation11 + $0x1b0] sm:$0xff]
        %v6552 = vld [vmem:[#allocation11 + $0x1b8] sm:$0xff]
        %v6553 = vld [vmem:[#allocation11 + $0x1c0] sm:$0xff]
        %v6554 = vld [vmem:[#allocation11 + $0x1c8] sm:$0xff]
        %v6555 = vld [vmem:[#allocation11 + $0x1d0] sm:$0xff]
        %v6556 = vld [vmem:[#allocation11 + $0x1d8] sm:$0xff]
        %v6557 = vld [vmem:[#allocation11 + $0x1e0] sm:$0xff]
        %v6558 = vld [vmem:[#allocation11 + $0x1e8] sm:$0xff]
        %v6559 = vld [vmem:[#allocation11 + $0x1f0] sm:$0xff]
        %v6560 = vld [vmem:[#allocation11 + $0x1f8] sm:$0xff]
        %v6561 = vld [vmem:[#allocation11 + $0x200] sm:$0xff]
        %v6562 = vld [vmem:[#allocation11 + $0x208] sm:$0xff]
        %v6563 = vld [vmem:[#allocation11 + $0x210] sm:$0xff]
        %v6564 = vld [vmem:[#allocation11 + $0x218] sm:$0xff]
        %v6565 = vld [vmem:[#allocation11 + $0x220] sm:$0xff]
        %v6566 = vld [vmem:[#allocation11 + $0x228] sm:$0xff]
        %v6567 = vld [vmem:[#allocation11 + $0x230] sm:$0xff]
        %v6568 = vld [vmem:[#allocation11 + $0x238] sm:$0xff]
        %v6569 = vld [vmem:[#allocation11 + $0x240] sm:$0xff]
        %v6570 = vld [vmem:[#allocation11 + $0x248] sm:$0xff]
        %v6571 = vld [vmem:[#allocation11 + $0x250] sm:$0xff]
        %v6572 = vld [vmem:[#allocation11 + $0x258] sm:$0xff]
        %v6573 = vld [vmem:[#allocation11 + $0x260] sm:$0xff]
        %v6574 = vld [vmem:[#allocation11 + $0x268] sm:$0xff]
        %v6575 = vld [vmem:[#allocation11 + $0x270] sm:$0xff]
        %v6576 = vld [vmem:[#allocation11 + $0x278] sm:$0xff]
        %v6577 = vld [vmem:[#allocation11 + $0x280] sm:$0xff]
        %v6578 = vld [vmem:[#allocation11 + $0x288] sm:$0xff]
        %v6579 = vld [vmem:[#allocation11 + $0x290] sm:$0xff]
        %v6580 = vld [vmem:[#allocation11 + $0x298] sm:$0xff]
        %v6581 = vld [vmem:[#allocation11 + $0x2a0] sm:$0xff]
        %v6582 = vld [vmem:[#allocation11 + $0x2a8] sm:$0xff]
        %v6583 = vld [vmem:[#allocation11 + $0x2b0] sm:$0xff]
        %v6584 = vld [vmem:[#allocation11 + $0x2b8] sm:$0xff]
        %v6585 = vld [vmem:[#allocation11 + $0x2c0] sm:$0xff]
        %v6586 = vld [vmem:[#allocation11 + $0x2c8] sm:$0xff]
        %v6587 = vld [vmem:[#allocation11 + $0x2d0] sm:$0xff]
        %v6588 = vld [vmem:[#allocation11 + $0x2d8] sm:$0xff]
        %v6589 = vld [vmem:[#allocation11 + $0x2e0] sm:$0xff]
        %v6590 = vld [vmem:[#allocation11 + $0x2e8] sm:$0xff]
        %v6591 = vld [vmem:[#allocation11 + $0x2f0] sm:$0xff]
        %v6592 = vld [vmem:[#allocation11 + $0x2f8] sm:$0xff]
        %v6593 = vld [vmem:[#allocation11 + $0x300] sm:$0xff]
        %v6594 = vld [vmem:[#allocation11 + $0x308] sm:$0xff]
        %v6595 = vld [vmem:[#allocation11 + $0x310] sm:$0xff]
        %v6596 = vld [vmem:[#allocation11 + $0x318] sm:$0xff]
        %v6597 = vld [vmem:[#allocation11 + $0x320] sm:$0xff]
        %v6598 = vld [vmem:[#allocation11 + $0x328] sm:$0xff]
        %v6599 = vld [vmem:[#allocation11 + $0x330] sm:$0xff]
        %v6600 = vld [vmem:[#allocation11 + $0x338] sm:$0xff]
        %v6601 = vld [vmem:[#allocation11 + $0x340] sm:$0xff]
        %v6602 = vld [vmem:[#allocation11 + $0x348] sm:$0xff]
        %v6603 = vld [vmem:[#allocation11 + $0x350] sm:$0xff]
        %v6604 = vld [vmem:[#allocation11 + $0x358] sm:$0xff]
        %v6605 = vld [vmem:[#allocation11 + $0x360] sm:$0xff]
        %v6606 = vld [vmem:[#allocation11 + $0x368] sm:$0xff]
        %v6607 = vld [vmem:[#allocation11 + $0x370] sm:$0xff]
        %v6608 = vld [vmem:[#allocation11 + $0x378] sm:$0xff]
        %v6609 = vld [vmem:[#allocation11 + $0x380] sm:$0xff]
        %v6610 = vld [vmem:[#allocation11 + $0x388] sm:$0xff]
        %v6611 = vld [vmem:[#allocation11 + $0x390] sm:$0xff]
        %v6612 = vld [vmem:[#allocation11 + $0x398] sm:$0xff]
        %v6613 = vld [vmem:[#allocation11 + $0x3a0] sm:$0xff]
        %v6614 = vld [vmem:[#allocation11 + $0x3a8] sm:$0xff]
        %v6615 = vld [vmem:[#allocation11 + $0x3b0] sm:$0xff]
        %v6616 = vld [vmem:[#allocation11 + $0x3b8] sm:$0xff]
        %v6617 = vld [vmem:[#allocation11 + $0x3c0] sm:$0xff]
        %v6618 = vld [vmem:[#allocation11 + $0x3c8] sm:$0xff]
        %v6619 = vld [vmem:[#allocation11 + $0x3d0] sm:$0xff]
        %v6620 = vld [vmem:[#allocation11 + $0x3d8] sm:$0xff]
        %v6621 = vld [vmem:[#allocation11 + $0x3e0] sm:$0xff]
        %v6622 = vld [vmem:[#allocation11 + $0x3e8] sm:$0xff]
        %v6623 = vld [vmem:[#allocation11 + $0x3f0] sm:$0xff]
        %v6624 = vld [vmem:[#allocation11 + $0x3f8] sm:$0xff]
        %v6625 = vld [vmem:[#allocation11 + $0x400] sm:$0xff]
        %v6626 = vld [vmem:[#allocation11 + $0x408] sm:$0xff]
        %v6627 = vld [vmem:[#allocation11 + $0x410] sm:$0xff]
        %v6628 = vld [vmem:[#allocation11 + $0x418] sm:$0xff]
        %v6629 = vld [vmem:[#allocation11 + $0x420] sm:$0xff]
        %v6630 = vld [vmem:[#allocation11 + $0x428] sm:$0xff]
        %v6631 = vld [vmem:[#allocation11 + $0x430] sm:$0xff]
        %v6632 = vld [vmem:[#allocation11 + $0x438] sm:$0xff]
        %v6633 = vld [vmem:[#allocation11 + $0x440] sm:$0xff]
        %v6634 = vld [vmem:[#allocation11 + $0x448] sm:$0xff]
        %v6635 = vld [vmem:[#allocation11 + $0x450] sm:$0xff]
        %v6636 = vld [vmem:[#allocation11 + $0x458] sm:$0xff]
        %v6637 = vld [vmem:[#allocation11 + $0x460] sm:$0xff]
        %v6638 = vld [vmem:[#allocation11 + $0x468] sm:$0xff]
        %v6639 = vld [vmem:[#allocation11 + $0x470] sm:$0xff]
        %v6640 = vld [vmem:[#allocation11 + $0x478] sm:$0xff]
        %v6641 = vld [vmem:[%s6] sm:$0x3]
        %v6643 = vperm.slane %v6641, 0
        %v6644 = vperm.slane %v6641, 1
        %v6662 = vunpack.c.l.b16 %v6482
        %v6663 = vunpack.c.h.b16 %v6482
        %v6664 = vunpack.c.l.b16 %v6483
        %v6665 = vunpack.c.h.b16 %v6483
        %v6666 = vunpack.c.l.b16 %v6484
        %v6667 = vunpack.c.h.b16 %v6484
        %v6668 = vunpack.c.l.b16 %v6485
        %v6669 = vunpack.c.h.b16 %v6485
        %v6670 = vunpack.c.l.b16 %v6486
        %v6671 = vunpack.c.l.b16 %v6487
        %v6672 = vunpack.c.h.b16 %v6487
        %v6673 = vunpack.c.l.b16 %v6488
        %v6674 = vunpack.c.h.b16 %v6488
        %v6675 = vunpack.c.l.b16 %v6489
        %v6676 = vunpack.c.h.b16 %v6489
        %v6677 = vunpack.c.l.b16 %v6490
        %v6678 = vunpack.c.h.b16 %v6490
        %v6679 = vunpack.c.l.b16 %v6491
        %v6680 = vunpack.c.l.b16 %v6492
        %v6681 = vunpack.c.h.b16 %v6492
        %v6682 = vunpack.c.l.b16 %v6493
        %v6683 = vunpack.c.h.b16 %v6493
        %v6684 = vunpack.c.l.b16 %v6494
        %v6685 = vunpack.c.h.b16 %v6494
        %v6686 = vunpack.c.l.b16 %v6495
        %v6687 = vunpack.c.h.b16 %v6495
        %v6688 = vunpack.c.l.b16 %v6496
        %v6689 = vpack.c.b16 %v6671, %v6662
        %v6690 = vpack.c.b16 %v6672, %v6663
        %v6691 = vpack.c.b16 %v6673, %v6664
        %v6692 = vpack.c.b16 %v6674, %v6665
        %v6693 = vpack.c.b16 %v6675, %v6666
        %v6694 = vpack.c.b16 %v6676, %v6667
        %v6695 = vpack.c.b16 %v6677, %v6668
        %v6696 = vpack.c.b16 %v6678, %v6669
        %v6697 = vpack.c.b16 %v6679, %v6670
        %v6698 = vpack.c.b16 %v6680, %v6680
        %v6699 = vpack.c.b16 %v6681, %v6681
        %v6700 = vpack.c.b16 %v6682, %v6682
        %v6701 = vpack.c.b16 %v6683, %v6683
        %v6702 = vpack.c.b16 %v6684, %v6684
        %v6703 = vpack.c.b16 %v6685, %v6685
        %v6704 = vpack.c.b16 %v6686, %v6686
        %v6705 = vpack.c.b16 %v6687, %v6687
        %v6706 = vpack.c.b16 %v6688, %v6688
        %v6869 = vunpack.c.l.b16 %v6497
        %v6870 = vunpack.c.h.b16 %v6497
        %v6871 = vunpack.c.l.b16 %v6498
        %v6872 = vunpack.c.h.b16 %v6498
        %v6873 = vunpack.c.l.b16 %v6499
        %v6874 = vunpack.c.h.b16 %v6499
        %v6875 = vunpack.c.l.b16 %v6500
        %v6876 = vunpack.c.h.b16 %v6500
        %v6877 = vunpack.c.l.b16 %v6501
        %v6878 = vunpack.c.h.b16 %v6501
        %v6879 = vunpack.c.l.b16 %v6502
        %v6880 = vunpack.c.h.b16 %v6502
        %v6881 = vunpack.c.l.b16 %v6503
        %v6882 = vunpack.c.h.b16 %v6503
        %v6883 = vunpack.c.l.b16 %v6504
        %v6884 = vunpack.c.h.b16 %v6504
        %v6885 = vunpack.c.l.b16 %v6505
        %v6886 = vunpack.c.h.b16 %v6505
        %v6887 = vunpack.c.l.b16 %v6506
        %v6888 = vunpack.c.h.b16 %v6506
        %v6889 = vunpack.c.l.b16 %v6507
        %v6890 = vunpack.c.h.b16 %v6507
        %v6891 = vunpack.c.l.b16 %v6508
        %v6892 = vunpack.c.h.b16 %v6508
        %v6893 = vunpack.c.l.b16 %v6509
        %v6894 = vunpack.c.h.b16 %v6509
        %v6895 = vunpack.c.l.b16 %v6510
        %v6896 = vunpack.c.h.b16 %v6510
        %v6897 = vunpack.c.l.b16 %v6511
        %v6898 = vunpack.c.h.b16 %v6511
        %v6899 = vunpack.c.l.b16 %v6512
        %v6900 = vunpack.c.h.b16 %v6512
        %v6901 = vunpack.c.l.b16 %v6513
        %v6902 = vunpack.c.h.b16 %v6513
        %v6903 = vunpack.c.l.b16 %v6514
        %v6904 = vunpack.c.h.b16 %v6514
        %v6905 = vunpack.c.l.b16 %v6515
        %v6906 = vunpack.c.h.b16 %v6515
        %v6907 = vunpack.c.l.b16 %v6516
        %v6908 = vunpack.c.h.b16 %v6516
        %v6909 = vunpack.c.l.b16 %v6517
        %v6910 = vunpack.c.h.b16 %v6517
        %v6911 = vunpack.c.l.b16 %v6518
        %v6912 = vunpack.c.h.b16 %v6518
        %v6913 = vunpack.c.l.b16 %v6519
        %v6914 = vunpack.c.h.b16 %v6519
        %v6915 = vunpack.c.l.b16 %v6520
        %v6916 = vunpack.c.h.b16 %v6520
        %v6917 = vunpack.c.l.b16 %v6521
        %v6918 = vunpack.c.h.b16 %v6521
        %v6919 = vunpack.c.l.b16 %v6522
        %v6920 = vunpack.c.h.b16 %v6522
        %v6921 = vunpack.c.l.b16 %v6523
        %v6922 = vunpack.c.h.b16 %v6523
        %v6923 = vunpack.c.l.b16 %v6524
        %v6924 = vunpack.c.h.b16 %v6524
        %v6925 = vunpack.c.l.b16 %v6525
        %v6926 = vunpack.c.h.b16 %v6525
        %v6927 = vunpack.c.l.b16 %v6526
        %v6928 = vunpack.c.h.b16 %v6526
        %v6929 = vunpack.c.l.b16 %v6527
        %v6930 = vunpack.c.h.b16 %v6527
        %v6931 = vunpack.c.l.b16 %v6528
        %v6932 = vunpack.c.h.b16 %v6528
        %v6933 = vunpack.c.l.b16 %v6529
        %v6934 = vunpack.c.h.b16 %v6529
        %v6935 = vunpack.c.l.b16 %v6530
        %v6936 = vunpack.c.h.b16 %v6530
        %v6937 = vunpack.c.l.b16 %v6531
        %v6938 = vunpack.c.h.b16 %v6531
        %v6939 = vunpack.c.l.b16 %v6532
        %v6940 = vunpack.c.h.b16 %v6532
        %v6941 = vunpack.c.l.b16 %v6533
        %v6942 = vunpack.c.h.b16 %v6533
        %v6943 = vunpack.c.l.b16 %v6534
        %v6944 = vunpack.c.h.b16 %v6534
        %v6945 = vunpack.c.l.b16 %v6535
        %v6946 = vunpack.c.h.b16 %v6535
        %v6947 = vunpack.c.l.b16 %v6536
        %v6948 = vunpack.c.h.b16 %v6536
        %v6949 = vunpack.c.l.b16 %v6537
        %v6950 = vunpack.c.h.b16 %v6537
        %v6951 = vunpack.c.l.b16 %v6538
        %v6952 = vunpack.c.h.b16 %v6538
        %v6953 = vunpack.c.l.b16 %v6539
        %v6954 = vunpack.c.h.b16 %v6539
        %v6955 = vunpack.c.l.b16 %v6540
        %v6956 = vunpack.c.h.b16 %v6540
        %v6957 = vunpack.c.l.b16 %v6541
        %v6958 = vunpack.c.h.b16 %v6541
        %v6959 = vunpack.c.l.b16 %v6542
        %v6960 = vunpack.c.h.b16 %v6542
        %v6961 = vunpack.c.l.b16 %v6543
        %v6962 = vunpack.c.h.b16 %v6543
        %v6963 = vunpack.c.l.b16 %v6544
        %v6964 = vunpack.c.h.b16 %v6544
        %v6965 = vunpack.c.l.b16 %v6545
        %v6966 = vunpack.c.h.b16 %v6545
        %v6967 = vunpack.c.l.b16 %v6546
        %v6968 = vunpack.c.h.b16 %v6546
        %v6969 = vunpack.c.l.b16 %v6547
        %v6970 = vunpack.c.h.b16 %v6547
        %v6971 = vunpack.c.l.b16 %v6548
        %v6972 = vunpack.c.h.b16 %v6548
        %v6973 = vunpack.c.l.b16 %v6549
        %v6974 = vunpack.c.h.b16 %v6549
        %v6975 = vunpack.c.l.b16 %v6550
        %v6976 = vunpack.c.h.b16 %v6550
        %v6977 = vunpack.c.l.b16 %v6551
        %v6978 = vunpack.c.h.b16 %v6551
        %v6979 = vunpack.c.l.b16 %v6552
        %v6980 = vunpack.c.h.b16 %v6552
        %v6981 = vunpack.c.l.b16 %v6553
        %v6982 = vunpack.c.h.b16 %v6553
        %v6983 = vunpack.c.l.b16 %v6554
        %v6984 = vunpack.c.h.b16 %v6554
        %v6985 = vunpack.c.l.b16 %v6555
        %v6986 = vunpack.c.h.b16 %v6555
        %v6987 = vunpack.c.l.b16 %v6556
        %v6988 = vunpack.c.h.b16 %v6556
        %v6989 = vunpack.c.l.b16 %v6557
        %v6990 = vunpack.c.h.b16 %v6557
        %v6991 = vunpack.c.l.b16 %v6558
        %v6992 = vunpack.c.h.b16 %v6558
        %v6993 = vunpack.c.l.b16 %v6559
        %v6994 = vunpack.c.h.b16 %v6559
        %v6995 = vunpack.c.l.b16 %v6560
        %v6996 = vunpack.c.h.b16 %v6560
        %v6997 = vunpack.c.l.b16 %v6561
        %v6998 = vunpack.c.h.b16 %v6561
        %v6999 = vunpack.c.l.b16 %v6562
        %v7000 = vunpack.c.h.b16 %v6562
        %v7001 = vunpack.c.l.b16 %v6563
        %v7002 = vunpack.c.h.b16 %v6563
        %v7003 = vunpack.c.l.b16 %v6564
        %v7004 = vunpack.c.h.b16 %v6564
        %v7005 = vunpack.c.l.b16 %v6565
        %v7006 = vunpack.c.h.b16 %v6565
        %v7007 = vunpack.c.l.b16 %v6566
        %v7008 = vunpack.c.h.b16 %v6566
        %v7009 = vunpack.c.l.b16 %v6567
        %v7010 = vunpack.c.h.b16 %v6567
        %v7011 = vunpack.c.l.b16 %v6568
        %v7012 = vunpack.c.h.b16 %v6568
        %v7013 = vunpack.c.l.b16 %v6569
        %v7014 = vunpack.c.h.b16 %v6569
        %v7015 = vunpack.c.l.b16 %v6570
        %v7016 = vunpack.c.h.b16 %v6570
        %v7017 = vunpack.c.l.b16 %v6571
        %v7018 = vunpack.c.h.b16 %v6571
        %v7019 = vunpack.c.l.b16 %v6572
        %v7020 = vunpack.c.h.b16 %v6572
        %v7021 = vunpack.c.l.b16 %v6573
        %v7022 = vunpack.c.h.b16 %v6573
        %v7023 = vunpack.c.l.b16 %v6574
        %v7024 = vunpack.c.h.b16 %v6574
        %v7025 = vunpack.c.l.b16 %v6575
        %v7026 = vunpack.c.h.b16 %v6575
        %v7027 = vunpack.c.l.b16 %v6576
        %v7028 = vunpack.c.h.b16 %v6576
        %v7029 = vunpack.c.l.b16 %v6577
        %v7030 = vunpack.c.h.b16 %v6577
        %v7031 = vunpack.c.l.b16 %v6578
        %v7032 = vunpack.c.h.b16 %v6578
        %v7033 = vunpack.c.l.b16 %v6579
        %v7034 = vunpack.c.h.b16 %v6579
        %v7035 = vunpack.c.l.b16 %v6580
        %v7036 = vunpack.c.h.b16 %v6580
        %v7037 = vunpack.c.l.b16 %v6581
        %v7038 = vunpack.c.h.b16 %v6581
        %v7039 = vunpack.c.l.b16 %v6582
        %v7040 = vunpack.c.h.b16 %v6582
        %v7041 = vunpack.c.l.b16 %v6583
        %v7042 = vunpack.c.h.b16 %v6583
        %v7043 = vunpack.c.l.b16 %v6584
        %v7044 = vunpack.c.h.b16 %v6584
        %v7045 = vunpack.c.l.b16 %v6585
        %v7046 = vunpack.c.h.b16 %v6585
        %v7047 = vunpack.c.l.b16 %v6586
        %v7048 = vunpack.c.h.b16 %v6586
        %v7049 = vunpack.c.l.b16 %v6587
        %v7050 = vunpack.c.h.b16 %v6587
        %v7051 = vunpack.c.l.b16 %v6588
        %v7052 = vunpack.c.h.b16 %v6588
        %v7053 = vunpack.c.l.b16 %v6589
        %v7054 = vunpack.c.h.b16 %v6589
        %v7055 = vunpack.c.l.b16 %v6590
        %v7056 = vunpack.c.h.b16 %v6590
        %v7057 = vunpack.c.l.b16 %v6591
        %v7058 = vunpack.c.h.b16 %v6591
        %v7059 = vunpack.c.l.b16 %v6592
        %v7060 = vunpack.c.h.b16 %v6592
        %v7061 = vunpack.c.l.b16 %v6593
        %v7062 = vunpack.c.h.b16 %v6593
        %v7063 = vunpack.c.l.b16 %v6594
        %v7064 = vunpack.c.h.b16 %v6594
        %v7065 = vunpack.c.l.b16 %v6595
        %v7066 = vunpack.c.h.b16 %v6595
        %v7067 = vunpack.c.l.b16 %v6596
        %v7068 = vunpack.c.h.b16 %v6596
        %v7069 = vunpack.c.l.b16 %v6597
        %v7070 = vunpack.c.h.b16 %v6597
        %v7071 = vunpack.c.l.b16 %v6598
        %v7072 = vunpack.c.h.b16 %v6598
        %v7073 = vunpack.c.l.b16 %v6599
        %v7074 = vunpack.c.h.b16 %v6599
        %v7075 = vunpack.c.l.b16 %v6600
        %v7076 = vunpack.c.h.b16 %v6600
        %v7077 = vunpack.c.l.b16 %v6601
        %v7078 = vunpack.c.h.b16 %v6601
        %v7079 = vunpack.c.l.b16 %v6602
        %v7080 = vunpack.c.h.b16 %v6602
        %v7081 = vunpack.c.l.b16 %v6603
        %v7082 = vunpack.c.h.b16 %v6603
        %v7083 = vunpack.c.l.b16 %v6604
        %v7084 = vunpack.c.h.b16 %v6604
        %v7085 = vunpack.c.l.b16 %v6605
        %v7086 = vunpack.c.h.b16 %v6605
        %v7087 = vunpack.c.l.b16 %v6606
        %v7088 = vunpack.c.h.b16 %v6606
        %v7089 = vunpack.c.l.b16 %v6607
        %v7090 = vunpack.c.h.b16 %v6607
        %v7091 = vunpack.c.l.b16 %v6608
        %v7092 = vunpack.c.h.b16 %v6608
        %v7093 = vunpack.c.l.b16 %v6609
        %v7094 = vunpack.c.h.b16 %v6609
        %v7095 = vunpack.c.l.b16 %v6610
        %v7096 = vunpack.c.h.b16 %v6610
        %v7097 = vunpack.c.l.b16 %v6611
        %v7098 = vunpack.c.h.b16 %v6611
        %v7099 = vunpack.c.l.b16 %v6612
        %v7100 = vunpack.c.h.b16 %v6612
        %v7101 = vunpack.c.l.b16 %v6613
        %v7102 = vunpack.c.h.b16 %v6613
        %v7103 = vunpack.c.l.b16 %v6614
        %v7104 = vunpack.c.h.b16 %v6614
        %v7105 = vunpack.c.l.b16 %v6615
        %v7106 = vunpack.c.h.b16 %v6615
        %v7107 = vunpack.c.l.b16 %v6616
        %v7108 = vunpack.c.h.b16 %v6616
        %v7109 = vunpack.c.l.b16 %v6617
        %v7110 = vunpack.c.h.b16 %v6617
        %v7111 = vunpack.c.l.b16 %v6618
        %v7112 = vunpack.c.h.b16 %v6618
        %v7113 = vunpack.c.l.b16 %v6619
        %v7114 = vunpack.c.h.b16 %v6619
        %v7115 = vunpack.c.l.b16 %v6620
        %v7116 = vunpack.c.h.b16 %v6620
        %v7117 = vunpack.c.l.b16 %v6621
        %v7118 = vunpack.c.h.b16 %v6621
        %v7119 = vunpack.c.l.b16 %v6622
        %v7120 = vunpack.c.h.b16 %v6622
        %v7121 = vunpack.c.l.b16 %v6623
        %v7122 = vunpack.c.h.b16 %v6623
        %v7123 = vunpack.c.l.b16 %v6624
        %v7124 = vunpack.c.h.b16 %v6624
        %v7125 = vunpack.c.l.b16 %v6625
        %v7126 = vunpack.c.h.b16 %v6625
        %v7127 = vunpack.c.l.b16 %v6626
        %v7128 = vunpack.c.h.b16 %v6626
        %v7129 = vunpack.c.l.b16 %v6627
        %v7130 = vunpack.c.h.b16 %v6627
        %v7131 = vunpack.c.l.b16 %v6628
        %v7132 = vunpack.c.h.b16 %v6628
        %v7133 = vunpack.c.l.b16 %v6629
        %v7134 = vunpack.c.h.b16 %v6629
        %v7135 = vunpack.c.l.b16 %v6630
        %v7136 = vunpack.c.h.b16 %v6630
        %v7137 = vunpack.c.l.b16 %v6631
        %v7138 = vunpack.c.h.b16 %v6631
        %v7139 = vunpack.c.l.b16 %v6632
        %v7140 = vunpack.c.h.b16 %v6632
        %v7141 = vunpack.c.l.b16 %v6633
        %v7142 = vunpack.c.h.b16 %v6633
        %v7143 = vunpack.c.l.b16 %v6634
        %v7144 = vunpack.c.h.b16 %v6634
        %v7145 = vunpack.c.l.b16 %v6635
        %v7146 = vunpack.c.h.b16 %v6635
        %v7147 = vunpack.c.l.b16 %v6636
        %v7148 = vunpack.c.h.b16 %v6636
        %v7149 = vunpack.c.l.b16 %v6637
        %v7150 = vunpack.c.h.b16 %v6637
        %v7151 = vunpack.c.l.b16 %v6638
        %v7152 = vunpack.c.h.b16 %v6638
        %v7153 = vunpack.c.l.b16 %v6639
        %v7154 = vunpack.c.h.b16 %v6639
        %v7155 = vunpack.c.l.b16 %v6640
        %v7156 = vunpack.c.h.b16 %v6640
        %v7157 = vpack.c.b16 %v6871, %v6869
        %v7158 = vpack.c.b16 %v6872, %v6870
        %v7159 = vpack.c.b16 %v6875, %v6873
        %v7160 = vpack.c.b16 %v6876, %v6874
        %v7161 = vpack.c.b16 %v6879, %v6877
        %v7162 = vpack.c.b16 %v6880, %v6878
        %v7163 = vpack.c.b16 %v6883, %v6881
        %v7164 = vpack.c.b16 %v6884, %v6882
        %v7165 = vpack.c.b16 %v6887, %v6885
        %v7166 = vpack.c.b16 %v6888, %v6886
        %v7167 = vpack.c.b16 %v6891, %v6889
        %v7168 = vpack.c.b16 %v6892, %v6890
        %v7169 = vpack.c.b16 %v6895, %v6893
        %v7170 = vpack.c.b16 %v6896, %v6894
        %v7171 = vpack.c.b16 %v6899, %v6897
        %v7172 = vpack.c.b16 %v6900, %v6898
        %v7173 = vpack.c.b16 %v6903, %v6901
        %v7174 = vpack.c.b16 %v6904, %v6902
        %v7175 = vpack.c.b16 %v6907, %v6905
        %v7176 = vpack.c.b16 %v6908, %v6906
        %v7177 = vpack.c.b16 %v6911, %v6909
        %v7178 = vpack.c.b16 %v6912, %v6910
        %v7179 = vpack.c.b16 %v6915, %v6913
        %v7180 = vpack.c.b16 %v6916, %v6914
        %v7181 = vpack.c.b16 %v6919, %v6917
        %v7182 = vpack.c.b16 %v6920, %v6918
        %v7183 = vpack.c.b16 %v6923, %v6921
        %v7184 = vpack.c.b16 %v6924, %v6922
        %v7185 = vpack.c.b16 %v6927, %v6925
        %v7186 = vpack.c.b16 %v6928, %v6926
        %v7187 = vpack.c.b16 %v6931, %v6929
        %v7188 = vpack.c.b16 %v6932, %v6930
        %v7189 = vpack.c.b16 %v6935, %v6933
        %v7190 = vpack.c.b16 %v6936, %v6934
        %v7191 = vpack.c.b16 %v6939, %v6937
        %v7192 = vpack.c.b16 %v6940, %v6938
        %v7193 = vpack.c.b16 %v6943, %v6941
        %v7194 = vpack.c.b16 %v6944, %v6942
        %v7195 = vpack.c.b16 %v6947, %v6945
        %v7196 = vpack.c.b16 %v6948, %v6946
        %v7197 = vpack.c.b16 %v6951, %v6949
        %v7198 = vpack.c.b16 %v6952, %v6950
        %v7199 = vpack.c.b16 %v6955, %v6953
        %v7200 = vpack.c.b16 %v6956, %v6954
        %v7201 = vpack.c.b16 %v6959, %v6957
        %v7202 = vpack.c.b16 %v6960, %v6958
        %v7203 = vpack.c.b16 %v6963, %v6961
        %v7204 = vpack.c.b16 %v6964, %v6962
        %v7205 = vpack.c.b16 %v6967, %v6965
        %v7206 = vpack.c.b16 %v6968, %v6966
        %v7207 = vpack.c.b16 %v6971, %v6969
        %v7208 = vpack.c.b16 %v6972, %v6970
        %v7209 = vpack.c.b16 %v6975, %v6973
        %v7210 = vpack.c.b16 %v6976, %v6974
        %v7211 = vpack.c.b16 %v6979, %v6977
        %v7212 = vpack.c.b16 %v6980, %v6978
        %v7213 = vpack.c.b16 %v6983, %v6981
        %v7214 = vpack.c.b16 %v6984, %v6982
        %v7215 = vpack.c.b16 %v6987, %v6985
        %v7216 = vpack.c.b16 %v6988, %v6986
        %v7217 = vpack.c.b16 %v6991, %v6989
        %v7218 = vpack.c.b16 %v6992, %v6990
        %v7219 = vpack.c.b16 %v6995, %v6993
        %v7220 = vpack.c.b16 %v6996, %v6994
        %v7221 = vpack.c.b16 %v6999, %v6997
        %v7222 = vpack.c.b16 %v7000, %v6998
        %v7223 = vpack.c.b16 %v7003, %v7001
        %v7224 = vpack.c.b16 %v7004, %v7002
        %v7225 = vpack.c.b16 %v7007, %v7005
        %v7226 = vpack.c.b16 %v7008, %v7006
        %v7227 = vpack.c.b16 %v7011, %v7009
        %v7228 = vpack.c.b16 %v7012, %v7010
        %v7229 = vpack.c.b16 %v7015, %v7013
        %v7230 = vpack.c.b16 %v7016, %v7014
        %v7231 = vpack.c.b16 %v7019, %v7017
        %v7232 = vpack.c.b16 %v7020, %v7018
        %v7233 = vpack.c.b16 %v7023, %v7021
        %v7234 = vpack.c.b16 %v7024, %v7022
        %v7235 = vpack.c.b16 %v7027, %v7025
        %v7236 = vpack.c.b16 %v7028, %v7026
        %v7237 = vpack.c.b16 %v7031, %v7029
        %v7238 = vpack.c.b16 %v7032, %v7030
        %v7239 = vpack.c.b16 %v7035, %v7033
        %v7240 = vpack.c.b16 %v7036, %v7034
        %v7241 = vpack.c.b16 %v7039, %v7037
        %v7242 = vpack.c.b16 %v7040, %v7038
        %v7243 = vpack.c.b16 %v7043, %v7041
        %v7244 = vpack.c.b16 %v7044, %v7042
        %v7245 = vpack.c.b16 %v7047, %v7045
        %v7246 = vpack.c.b16 %v7048, %v7046
        %v7247 = vpack.c.b16 %v7051, %v7049
        %v7248 = vpack.c.b16 %v7052, %v7050
        %v7249 = vpack.c.b16 %v7055, %v7053
        %v7250 = vpack.c.b16 %v7056, %v7054
        %v7251 = vpack.c.b16 %v7059, %v7057
        %v7252 = vpack.c.b16 %v7060, %v7058
        %v7253 = vpack.c.b16 %v7063, %v7061
        %v7254 = vpack.c.b16 %v7064, %v7062
        %v7255 = vpack.c.b16 %v7067, %v7065
        %v7256 = vpack.c.b16 %v7068, %v7066
        %v7257 = vpack.c.b16 %v7071, %v7069
        %v7258 = vpack.c.b16 %v7072, %v7070
        %v7259 = vpack.c.b16 %v7075, %v7073
        %v7260 = vpack.c.b16 %v7076, %v7074
        %v7261 = vpack.c.b16 %v7079, %v7077
        %v7262 = vpack.c.b16 %v7080, %v7078
        %v7263 = vpack.c.b16 %v7083, %v7081
        %v7264 = vpack.c.b16 %v7084, %v7082
        %v7265 = vpack.c.b16 %v7087, %v7085
        %v7266 = vpack.c.b16 %v7088, %v7086
        %v7267 = vpack.c.b16 %v7091, %v7089
        %v7268 = vpack.c.b16 %v7092, %v7090
        %v7269 = vpack.c.b16 %v7095, %v7093
        %v7270 = vpack.c.b16 %v7096, %v7094
        %v7271 = vpack.c.b16 %v7099, %v7097
        %v7272 = vpack.c.b16 %v7100, %v7098
        %v7273 = vpack.c.b16 %v7103, %v7101
        %v7274 = vpack.c.b16 %v7104, %v7102
        %v7275 = vpack.c.b16 %v7107, %v7105
        %v7276 = vpack.c.b16 %v7108, %v7106
        %v7277 = vpack.c.b16 %v7111, %v7109
        %v7278 = vpack.c.b16 %v7112, %v7110
        %v7279 = vpack.c.b16 %v7115, %v7113
        %v7280 = vpack.c.b16 %v7116, %v7114
        %v7281 = vpack.c.b16 %v7119, %v7117
        %v7282 = vpack.c.b16 %v7120, %v7118
        %v7283 = vpack.c.b16 %v7123, %v7121
        %v7284 = vpack.c.b16 %v7124, %v7122
        %v7285 = vpack.c.b16 %v7127, %v7125
        %v7286 = vpack.c.b16 %v7128, %v7126
        %v7287 = vpack.c.b16 %v7131, %v7129
        %v7288 = vpack.c.b16 %v7132, %v7130
        %v7289 = vpack.c.b16 %v7135, %v7133
        %v7290 = vpack.c.b16 %v7136, %v7134
        %v7291 = vpack.c.b16 %v7139, %v7137
        %v7292 = vpack.c.b16 %v7140, %v7138
        %v7293 = vpack.c.b16 %v7143, %v7141
        %v7294 = vpack.c.b16 %v7144, %v7142
        %v7295 = vpack.c.b16 %v7147, %v7145
        %v7296 = vpack.c.b16 %v7148, %v7146
        %v7297 = vpack.c.b16 %v7151, %v7149
        %v7298 = vpack.c.b16 %v7152, %v7150
        %v7299 = vpack.c.b16 %v7155, %v7153
        %v7300 = vpack.c.b16 %v7156, %v7154
        %7445 = vmatpush.bf16.msra.mxu0 %v7171
        %7446 = vmatpush.bf16.msra.mxu0 %v7169
        %7447 = vmatpush.bf16.msra.mxu0 %v7167
        %7448 = vmatpush.bf16.msra.mxu0 %v7165
        %7449 = vmatpush.bf16.msra.mxu0 %v7163
        %7450 = vmatpush.bf16.msra.mxu0 %v7161
        %7451 = vmatpush.bf16.msra.mxu0 %v7159
        %7452 = vmatpush.bf16.msra.mxu0 %v7157
        %7453 = vmatmul.bf16.gmra.mxu0 %v6689
        %v7454 = vpop.f32.mrf.mxu0
        %v7455 = vadd.f32 %v6643, %v7454
        %v7456 = vpop.f32.mrf.mxu0
        %v7457 = vadd.f32 %v6643, %v7456
        %7458 = vmatmul.bf16.gmra.mxu0 %v6698
        %v7459 = vpop.f32.mrf.mxu0
        %v7460 = vadd.f32 %v6643, %v7459
        %v7461 = vpop.f32.mrf.mxu0
        %7462 = vdwg.mxu0
        %7463 = vmatpush.bf16.msra.mxu0 %v7187
        %7464 = vmatpush.bf16.msra.mxu0 %v7185
        %7465 = vmatpush.bf16.msra.mxu0 %v7183
        %7466 = vmatpush.bf16.msra.mxu0 %v7181
        %7467 = vmatpush.bf16.msra.mxu0 %v7179
        %7468 = vmatpush.bf16.msra.mxu0 %v7177
        %7469 = vmatpush.bf16.msra.mxu0 %v7175
        %7470 = vmatpush.bf16.msra.mxu0 %v7173
        %7471 = vmatmul.bf16.gmra.mxu0 %v6690
        %v7472 = vpop.f32.mrf.mxu0
        %v7473 = vadd.f32 %v7455, %v7472
        %v7474 = vpop.f32.mrf.mxu0
        %v7475 = vadd.f32 %v7457, %v7474
        %7476 = vmatmul.bf16.gmra.mxu0 %v6699
        %v7477 = vpop.f32.mrf.mxu0
        %v7478 = vadd.f32 %v7460, %v7477
        %v7479 = vpop.f32.mrf.mxu0
        %7480 = vdwg.mxu0
        %7481 = vmatpush.bf16.msra.mxu0 %v7203
        %7482 = vmatpush.bf16.msra.mxu0 %v7201
        %7483 = vmatpush.bf16.msra.mxu0 %v7199
        %7484 = vmatpush.bf16.msra.mxu0 %v7197
        %7485 = vmatpush.bf16.msra.mxu0 %v7195
        %7486 = vmatpush.bf16.msra.mxu0 %v7193
        %7487 = vmatpush.bf16.msra.mxu0 %v7191
        %7488 = vmatpush.bf16.msra.mxu0 %v7189
        %7489 = vmatmul.bf16.gmra.mxu0 %v6691
        %v7490 = vpop.f32.mrf.mxu0
        %v7491 = vadd.f32 %v7473, %v7490
        %v7492 = vpop.f32.mrf.mxu0
        %v7493 = vadd.f32 %v7475, %v7492
        %7494 = vmatmul.bf16.gmra.mxu0 %v6700
        %v7495 = vpop.f32.mrf.mxu0
        %v7496 = vadd.f32 %v7478, %v7495
        %v7497 = vpop.f32.mrf.mxu0
        %7498 = vdwg.mxu0
        %7499 = vmatpush.bf16.msra.mxu0 %v7219
        %7500 = vmatpush.bf16.msra.mxu0 %v7217
        %7501 = vmatpush.bf16.msra.mxu0 %v7215
        %7502 = vmatpush.bf16.msra.mxu0 %v7213
        %7503 = vmatpush.bf16.msra.mxu0 %v7211
        %7504 = vmatpush.bf16.msra.mxu0 %v7209
        %7505 = vmatpush.bf16.msra.mxu0 %v7207
        %7506 = vmatpush.bf16.msra.mxu0 %v7205
        %7507 = vmatmul.bf16.gmra.mxu0 %v6692
        %v7508 = vpop.f32.mrf.mxu0
        %v7509 = vadd.f32 %v7491, %v7508
        %v7510 = vpop.f32.mrf.mxu0
        %v7511 = vadd.f32 %v7493, %v7510
        %7512 = vmatmul.bf16.gmra.mxu0 %v6701
        %v7513 = vpop.f32.mrf.mxu0
        %v7514 = vadd.f32 %v7496, %v7513
        %v7515 = vpop.f32.mrf.mxu0
        %7516 = vdwg.mxu0
        %7517 = vmatpush.bf16.msra.mxu0 %v7235
        %7518 = vmatpush.bf16.msra.mxu0 %v7233
        %7519 = vmatpush.bf16.msra.mxu0 %v7231
        %7520 = vmatpush.bf16.msra.mxu0 %v7229
        %7521 = vmatpush.bf16.msra.mxu0 %v7227
        %7522 = vmatpush.bf16.msra.mxu0 %v7225
        %7523 = vmatpush.bf16.msra.mxu0 %v7223
        %7524 = vmatpush.bf16.msra.mxu0 %v7221
        %7525 = vmatmul.bf16.gmra.mxu0 %v6693
        %v7526 = vpop.f32.mrf.mxu0
        %v7527 = vadd.f32 %v7509, %v7526
        %v7528 = vpop.f32.mrf.mxu0
        %v7529 = vadd.f32 %v7511, %v7528
        %7530 = vmatmul.bf16.gmra.mxu0 %v6702
        %v7531 = vpop.f32.mrf.mxu0
        %v7532 = vadd.f32 %v7514, %v7531
        %v7533 = vpop.f32.mrf.mxu0
        %7534 = vdwg.mxu0
        %7535 = vmatpush.bf16.msra.mxu0 %v7251
        %7536 = vmatpush.bf16.msra.mxu0 %v7249
        %7537 = vmatpush.bf16.msra.mxu0 %v7247
        %7538 = vmatpush.bf16.msra.mxu0 %v7245
        %7539 = vmatpush.bf16.msra.mxu0 %v7243
        %7540 = vmatpush.bf16.msra.mxu0 %v7241
        %7541 = vmatpush.bf16.msra.mxu0 %v7239
        %7542 = vmatpush.bf16.msra.mxu0 %v7237
        %7543 = vmatmul.bf16.gmra.mxu0 %v6694
        %v7544 = vpop.f32.mrf.mxu0
        %v7545 = vadd.f32 %v7527, %v7544
        %v7546 = vpop.f32.mrf.mxu0
        %v7547 = vadd.f32 %v7529, %v7546
        %7548 = vmatmul.bf16.gmra.mxu0 %v6703
        %v7549 = vpop.f32.mrf.mxu0
        %v7550 = vadd.f32 %v7532, %v7549
        %v7551 = vpop.f32.mrf.mxu0
        %7552 = vdwg.mxu0
        %7553 = vmatpush.bf16.msra.mxu0 %v7267
        %7554 = vmatpush.bf16.msra.mxu0 %v7265
        %7555 = vmatpush.bf16.msra.mxu0 %v7263
        %7556 = vmatpush.bf16.msra.mxu0 %v7261
        %7557 = vmatpush.bf16.msra.mxu0 %v7259
        %7558 = vmatpush.bf16.msra.mxu0 %v7257
        %7559 = vmatpush.bf16.msra.mxu0 %v7255
        %7560 = vmatpush.bf16.msra.mxu0 %v7253
        %7561 = vmatmul.bf16.gmra.mxu0 %v6695
        %v7562 = vpop.f32.mrf.mxu0
        %v7563 = vadd.f32 %v7545, %v7562
        %v7564 = vpop.f32.mrf.mxu0
        %v7565 = vadd.f32 %v7547, %v7564
        %7566 = vmatmul.bf16.gmra.mxu0 %v6704
        %v7567 = vpop.f32.mrf.mxu0
        %v7568 = vadd.f32 %v7550, %v7567
        %v7569 = vpop.f32.mrf.mxu0
        %7570 = vdwg.mxu0
        %7571 = vmatpush.bf16.msra.mxu0 %v7283
        %7572 = vmatpush.bf16.msra.mxu0 %v7281
        %7573 = vmatpush.bf16.msra.mxu0 %v7279
        %7574 = vmatpush.bf16.msra.mxu0 %v7277
        %7575 = vmatpush.bf16.msra.mxu0 %v7275
        %7576 = vmatpush.bf16.msra.mxu0 %v7273
        %7577 = vmatpush.bf16.msra.mxu0 %v7271
        %7578 = vmatpush.bf16.msra.mxu0 %v7269
        %7579 = vmatmul.bf16.gmra.mxu0 %v6696
        %v7580 = vpop.f32.mrf.mxu0
        %v7581 = vadd.f32 %v7563, %v7580
        %v7582 = vpop.f32.mrf.mxu0
        %v7583 = vadd.f32 %v7565, %v7582
        %7584 = vmatmul.bf16.gmra.mxu0 %v6705
        %v7585 = vpop.f32.mrf.mxu0
        %v7586 = vadd.f32 %v7568, %v7585
        %v7587 = vpop.f32.mrf.mxu0
        %7588 = vdwg.mxu0
        %7589 = vmatpush.bf16.msra.mxu0 %v7299
        %7590 = vmatpush.bf16.msra.mxu0 %v7297
        %7591 = vmatpush.bf16.msra.mxu0 %v7295
        %7592 = vmatpush.bf16.msra.mxu0 %v7293
        %7593 = vmatpush.bf16.msra.mxu0 %v7291
        %7594 = vmatpush.bf16.msra.mxu0 %v7289
        %7595 = vmatpush.bf16.msra.mxu0 %v7287
        %7596 = vmatpush.bf16.msra.mxu0 %v7285
        %7597 = vmatmul.bf16.gmra.mxu0 %v6697
        %v7598 = vpop.f32.mrf.mxu0
        %v7599 = vadd.f32 %v7581, %v7598
        %v7600 = vpop.f32.mrf.mxu0
        %v7601 = vadd.f32 %v7583, %v7600
        %7602 = vmatmul.bf16.gmra.mxu0 %v6706
        %v7603 = vpop.f32.mrf.mxu0
        %v7604 = vadd.f32 %v7586, %v7603
        %v7605 = vpop.f32.mrf.mxu0
        %7606 = vdwg.mxu0
        %7607 = vmatpush.bf16.msra.mxu0 %v7172
        %7608 = vmatpush.bf16.msra.mxu0 %v7170
        %7609 = vmatpush.bf16.msra.mxu0 %v7168
        %7610 = vmatpush.bf16.msra.mxu0 %v7166
        %7611 = vmatpush.bf16.msra.mxu0 %v7164
        %7612 = vmatpush.bf16.msra.mxu0 %v7162
        %7613 = vmatpush.bf16.msra.mxu0 %v7160
        %7614 = vmatpush.bf16.msra.mxu0 %v7158
        %7615 = vmatmul.bf16.gmra.mxu0 %v6689
        %v7616 = vpop.f32.mrf.mxu0
        %v7617 = vadd.f32 %v6644, %v7616
        %v7618 = vpop.f32.mrf.mxu0
        %v7619 = vadd.f32 %v6644, %v7618
        %7620 = vmatmul.bf16.gmra.mxu0 %v6698
        %v7621 = vpop.f32.mrf.mxu0
        %v7622 = vadd.f32 %v6644, %v7621
        %v7623 = vpop.f32.mrf.mxu0
        %7624 = vdwg.mxu0
        %7625 = vmatpush.bf16.msra.mxu0 %v7188
        %7626 = vmatpush.bf16.msra.mxu0 %v7186
        %7627 = vmatpush.bf16.msra.mxu0 %v7184
        %7628 = vmatpush.bf16.msra.mxu0 %v7182
        %7629 = vmatpush.bf16.msra.mxu0 %v7180
        %7630 = vmatpush.bf16.msra.mxu0 %v7178
        %7631 = vmatpush.bf16.msra.mxu0 %v7176
        %7632 = vmatpush.bf16.msra.mxu0 %v7174
        %7633 = vmatmul.bf16.gmra.mxu0 %v6690
        %v7634 = vpop.f32.mrf.mxu0
        %v7635 = vadd.f32 %v7617, %v7634
        %v7636 = vpop.f32.mrf.mxu0
        %v7637 = vadd.f32 %v7619, %v7636
        %7638 = vmatmul.bf16.gmra.mxu0 %v6699
        %v7639 = vpop.f32.mrf.mxu0
        %v7640 = vadd.f32 %v7622, %v7639
        %v7641 = vpop.f32.mrf.mxu0
        %7642 = vdwg.mxu0
        %7643 = vmatpush.bf16.msra.mxu0 %v7204
        %7644 = vmatpush.bf16.msra.mxu0 %v7202
        %7645 = vmatpush.bf16.msra.mxu0 %v7200
        %7646 = vmatpush.bf16.msra.mxu0 %v7198
        %7647 = vmatpush.bf16.msra.mxu0 %v7196
        %7648 = vmatpush.bf16.msra.mxu0 %v7194
        %7649 = vmatpush.bf16.msra.mxu0 %v7192
        %7650 = vmatpush.bf16.msra.mxu0 %v7190
        %7651 = vmatmul.bf16.gmra.mxu0 %v6691
        %v7652 = vpop.f32.mrf.mxu0
        %v7653 = vadd.f32 %v7635, %v7652
        %v7654 = vpop.f32.mrf.mxu0
        %v7655 = vadd.f32 %v7637, %v7654
        %7656 = vmatmul.bf16.gmra.mxu0 %v6700
        %v7657 = vpop.f32.mrf.mxu0
        %v7658 = vadd.f32 %v7640, %v7657
        %v7659 = vpop.f32.mrf.mxu0
        %7660 = vdwg.mxu0
        %7661 = vmatpush.bf16.msra.mxu0 %v7220
        %7662 = vmatpush.bf16.msra.mxu0 %v7218
        %7663 = vmatpush.bf16.msra.mxu0 %v7216
        %7664 = vmatpush.bf16.msra.mxu0 %v7214
        %7665 = vmatpush.bf16.msra.mxu0 %v7212
        %7666 = vmatpush.bf16.msra.mxu0 %v7210
        %7667 = vmatpush.bf16.msra.mxu0 %v7208
        %7668 = vmatpush.bf16.msra.mxu0 %v7206
        %7669 = vmatmul.bf16.gmra.mxu0 %v6692
        %v7670 = vpop.f32.mrf.mxu0
        %v7671 = vadd.f32 %v7653, %v7670
        %v7672 = vpop.f32.mrf.mxu0
        %v7673 = vadd.f32 %v7655, %v7672
        %7674 = vmatmul.bf16.gmra.mxu0 %v6701
        %v7675 = vpop.f32.mrf.mxu0
        %v7676 = vadd.f32 %v7658, %v7675
        %v7677 = vpop.f32.mrf.mxu0
        %7678 = vdwg.mxu0
        %7679 = vmatpush.bf16.msra.mxu0 %v7236
        %7680 = vmatpush.bf16.msra.mxu0 %v7234
        %7681 = vmatpush.bf16.msra.mxu0 %v7232
        %7682 = vmatpush.bf16.msra.mxu0 %v7230
        %7683 = vmatpush.bf16.msra.mxu0 %v7228
        %7684 = vmatpush.bf16.msra.mxu0 %v7226
        %7685 = vmatpush.bf16.msra.mxu0 %v7224
        %7686 = vmatpush.bf16.msra.mxu0 %v7222
        %7687 = vmatmul.bf16.gmra.mxu0 %v6693
        %v7688 = vpop.f32.mrf.mxu0
        %v7689 = vadd.f32 %v7671, %v7688
        %v7690 = vpop.f32.mrf.mxu0
        %v7691 = vadd.f32 %v7673, %v7690
        %7692 = vmatmul.bf16.gmra.mxu0 %v6702
        %v7693 = vpop.f32.mrf.mxu0
        %v7694 = vadd.f32 %v7676, %v7693
        %v7695 = vpop.f32.mrf.mxu0
        %7696 = vdwg.mxu0
        %7697 = vmatpush.bf16.msra.mxu0 %v7252
        %7698 = vmatpush.bf16.msra.mxu0 %v7250
        %7699 = vmatpush.bf16.msra.mxu0 %v7248
        %7700 = vmatpush.bf16.msra.mxu0 %v7246
        %7701 = vmatpush.bf16.msra.mxu0 %v7244
        %7702 = vmatpush.bf16.msra.mxu0 %v7242
        %7703 = vmatpush.bf16.msra.mxu0 %v7240
        %7704 = vmatpush.bf16.msra.mxu0 %v7238
        %7705 = vmatmul.bf16.gmra.mxu0 %v6694
        %v7706 = vpop.f32.mrf.mxu0
        %v7707 = vadd.f32 %v7689, %v7706
        %v7708 = vpop.f32.mrf.mxu0
        %v7709 = vadd.f32 %v7691, %v7708
        %7710 = vmatmul.bf16.gmra.mxu0 %v6703
        %v7711 = vpop.f32.mrf.mxu0
        %v7712 = vadd.f32 %v7694, %v7711
        %v7713 = vpop.f32.mrf.mxu0
        %7714 = vdwg.mxu0
        %7715 = vmatpush.bf16.msra.mxu0 %v7268
        %7716 = vmatpush.bf16.msra.mxu0 %v7266
        %7717 = vmatpush.bf16.msra.mxu0 %v7264
        %7718 = vmatpush.bf16.msra.mxu0 %v7262
        %7719 = vmatpush.bf16.msra.mxu0 %v7260
        %7720 = vmatpush.bf16.msra.mxu0 %v7258
        %7721 = vmatpush.bf16.msra.mxu0 %v7256
        %7722 = vmatpush.bf16.msra.mxu0 %v7254
        %7723 = vmatmul.bf16.gmra.mxu0 %v6695
        %v7724 = vpop.f32.mrf.mxu0
        %v7725 = vadd.f32 %v7707, %v7724
        %v7726 = vpop.f32.mrf.mxu0
        %v7727 = vadd.f32 %v7709, %v7726
        %7728 = vmatmul.bf16.gmra.mxu0 %v6704
        %v7729 = vpop.f32.mrf.mxu0
        %v7730 = vadd.f32 %v7712, %v7729
        %v7731 = vpop.f32.mrf.mxu0
        %7732 = vdwg.mxu0
        %7733 = vmatpush.bf16.msra.mxu0 %v7284
        %7734 = vmatpush.bf16.msra.mxu0 %v7282
        %7735 = vmatpush.bf16.msra.mxu0 %v7280
        %7736 = vmatpush.bf16.msra.mxu0 %v7278
        %7737 = vmatpush.bf16.msra.mxu0 %v7276
        %7738 = vmatpush.bf16.msra.mxu0 %v7274
        %7739 = vmatpush.bf16.msra.mxu0 %v7272
        %7740 = vmatpush.bf16.msra.mxu0 %v7270
        %7741 = vmatmul.bf16.gmra.mxu0 %v6696
        %v7742 = vpop.f32.mrf.mxu0
        %v7743 = vadd.f32 %v7725, %v7742
        %v7744 = vpop.f32.mrf.mxu0
        %v7745 = vadd.f32 %v7727, %v7744
        %7746 = vmatmul.bf16.gmra.mxu0 %v6705
        %v7747 = vpop.f32.mrf.mxu0
        %v7748 = vadd.f32 %v7730, %v7747
        %v7749 = vpop.f32.mrf.mxu0
        %7750 = vdwg.mxu0
        %7751 = vmatpush.bf16.msra.mxu0 %v7300
        %7752 = vmatpush.bf16.msra.mxu0 %v7298
        %7753 = vmatpush.bf16.msra.mxu0 %v7296
        %7754 = vmatpush.bf16.msra.mxu0 %v7294
        %7755 = vmatpush.bf16.msra.mxu0 %v7292
        %7756 = vmatpush.bf16.msra.mxu0 %v7290
        %7757 = vmatpush.bf16.msra.mxu0 %v7288
        %7758 = vmatpush.bf16.msra.mxu0 %v7286
        %7759 = vmatmul.bf16.gmra.mxu0 %v6697
        %v7760 = vpop.f32.mrf.mxu0
        %v7761 = vadd.f32 %v7743, %v7760
        %v7762 = vpop.f32.mrf.mxu0
        %v7763 = vadd.f32 %v7745, %v7762
        %7764 = vmatmul.bf16.gmra.mxu0 %v6706
        %v7765 = vpop.f32.mrf.mxu0
        %v7766 = vadd.f32 %v7748, %v7765
        %v7767 = vpop.f32.mrf.mxu0
        %7768 = vdwg.mxu0
        %v7769 = vmax.f32 %v7599, 0.0
        %v7770 = vmax.f32 %v7761, 0.0
        %v7771 = vmax.f32 %v7601, 0.0
        %v7772 = vmax.f32 %v7763, 0.0
        %v7773 = vmax.f32 %v7604, 0.0
        %v7774 = vmax.f32 %v7766, 0.0
        %7775 = vst [vmem:[#allocation9] sm:$0xff] %v7769
        %7776 = vst [vmem:[#allocation9 + $0x8] sm:$0xff] %v7770
        %7777 = vst [vmem:[#allocation9 + $0x10] sm:$0xff] %v7771
        %7778 = vst [vmem:[#allocation9 + $0x18] sm:$0xff] %v7772
        %7779 = vst [vmem:[#allocation9 + $0x20] sm:$0xff] %v7773
        %7780 = vst [vmem:[#allocation9 + $0x28] sm:$0xff] %v7774
        %v7781 = vld [vmem:[#allocation9] sm:$0x3]
        %v7782 = vld [vmem:[#allocation9 + $0x8] sm:$0x3]
        %v7783 = vld [vmem:[#allocation9] sm:$0xc0]
        %v7784 = vld [vmem:[#allocation9 + $0x8] sm:$0xc0]
        %v7787 = vrot.slane %v7783, 6
        %v7788 = vrot.slane %v7784, 6
        %v7791 = vmax.f32 %v7781, %v7787
        %v7792 = vmax.f32 %v7782, %v7788
        %vm7793 = vcmask 1041408
        %v7794 = vsel %vm7793, %v7791, -inf
        %v7795 = vrot.slane %v7794, 4
        %v7796 = vmax.f32 %v7794, %v7795
        %v7797 = vrot.slane %v7796, 2
        %v7798 = vmax.f32 %v7796, %v7797
        %v7799 = vrot.slane %v7798, 1
        %v7800 = vmax.f32 %v7798, %v7799
        %v7801 = vsel %vm7793, %v7792, -inf
        %v7802 = vrot.slane %v7801, 4
        %v7803 = vmax.f32 %v7801, %v7802
        %v7804 = vrot.slane %v7803, 2
        %v7805 = vmax.f32 %v7803, %v7804
        %v7806 = vrot.slane %v7805, 1
        %v7807 = vmax.f32 %v7805, %v7806
        %v7808 = vpack.c.bf16 %v7807, %v7800
        %v7810 = vrot.slane %v7808, 3
        %vm7811 = vcmask 1040384
        %v7814 = vsel %vm7811, %v7808, %v7810
        %vm7816 = vcmask 1041409
        %vm7817 = vmand %vm7816, %vm3039
        %vm7818 = vmor %vm7817, %vm6183
        %v7819 = vld [vmem:[#allocation10] sm:$0x3]
        %v7820 = vsel %vm7818, %v7814, %v7819
        %7821 = vst [vmem:[#allocation10] sm:$0x3] %v7820
        %v7822 = vld [vmem:[#allocation9] sm:$0xc]
        %v7823 = vld [vmem:[#allocation9 + $0x8] sm:$0xc]
        %v7824 = vld [vmem:[#allocation9 + $0x10] sm:$0x3]
        %v7825 = vld [vmem:[#allocation9 + $0x18] sm:$0x3]
        %v7828 = vrot.slane %v7824, 6
        %v7829 = vrot.slane %v7825, 6
        %v7832 = vmax.f32 %v7822, %v7828
        %v7833 = vmax.f32 %v7823, %v7829
        %vm7834 = vcmask 1043458
        %v7835 = vsel %vm7834, %v7832, -inf
        %v7836 = vrot.slane %v7835, 4
        %v7837 = vmax.f32 %v7835, %v7836
        %v7838 = vrot.slane %v7837, 2
        %v7839 = vmax.f32 %v7837, %v7838
        %v7840 = vrot.slane %v7839, 1
        %v7841 = vmax.f32 %v7839, %v7840
        %v7842 = vsel %vm7834, %v7833, -inf
        %v7843 = vrot.slane %v7842, 4
        %v7844 = vmax.f32 %v7842, %v7843
        %v7845 = vrot.slane %v7844, 2
        %v7846 = vmax.f32 %v7844, %v7845
        %v7847 = vrot.slane %v7846, 1
        %v7848 = vmax.f32 %v7846, %v7847
        %v7849 = vpack.c.bf16 %v7848, %v7841
        %v7851 = vrot.slane %v7849, 3
        %v7854 = vsel %vm7811, %v7849, %v7851
        %v7856 = vld [vmem:[#allocation10 + $0x2] sm:$0x3]
        %v7857 = vsel %vm7818, %v7854, %v7856
        %7858 = vst [vmem:[#allocation10 + $0x2] sm:$0x3] %v7857
        %v7859 = vld [vmem:[#allocation9 + $0x10] sm:$0x30]
        %v7860 = vld [vmem:[#allocation9 + $0x18] sm:$0x30]
        %v7861 = vld [vmem:[#allocation9 + $0x20] sm:$0xc]
        %v7862 = vld [vmem:[#allocation9 + $0x28] sm:$0xc]
        %v7865 = vrot.slane %v7861, 6
        %v7866 = vrot.slane %v7862, 6
        %v7869 = vmax.f32 %v7859, %v7865
        %v7870 = vmax.f32 %v7860, %v7866
        %vm7871 = vcmask 1045508
        %v7872 = vsel %vm7871, %v7869, -inf
        %v7873 = vrot.slane %v7872, 4
        %v7874 = vmax.f32 %v7872, %v7873
        %v7875 = vrot.slane %v7874, 2
        %v7876 = vmax.f32 %v7874, %v7875
        %v7877 = vrot.slane %v7876, 1
        %v7878 = vmax.f32 %v7876, %v7877
        %v7879 = vsel %vm7871, %v7870, -inf
        %v7880 = vrot.slane %v7879, 4
        %v7881 = vmax.f32 %v7879, %v7880
        %v7882 = vrot.slane %v7881, 2
        %v7883 = vmax.f32 %v7881, %v7882
        %v7884 = vrot.slane %v7883, 1
        %v7885 = vmax.f32 %v7883, %v7884
        %v7886 = vpack.c.bf16 %v7885, %v7878
        %v7888 = vrot.slane %v7886, 3
        %v7891 = vsel %vm7811, %v7886, %v7888
        %v7893 = vld [vmem:[#allocation10 + $0x4] sm:$0x3]
        %v7894 = vsel %vm7818, %v7891, %v7893
        %7895 = vst [vmem:[#allocation10 + $0x4] sm:$0x3] %v7894
        %v7896 = vld [vmem:[#allocation9 + $0x10] sm:$0xc0]
        %v7897 = vld [vmem:[#allocation9 + $0x18] sm:$0xc0]
        %v7898 = vld [vmem:[#allocation9 + $0x20] sm:$0x30]
        %v7899 = vld [vmem:[#allocation9 + $0x28] sm:$0x30]
        %v7902 = vrot.slane %v7898, 6
        %v7903 = vrot.slane %v7899, 6
        %v7906 = vmax.f32 %v7896, %v7902
        %v7907 = vmax.f32 %v7897, %v7903
        %vm7908 = vcmask 1047558
        %v7909 = vsel %vm7908, %v7906, -inf
        %v7910 = vrot.slane %v7909, 4
        %v7911 = vmax.f32 %v7909, %v7910
        %v7912 = vrot.slane %v7911, 2
        %v7913 = vmax.f32 %v7911, %v7912
        %v7914 = vrot.slane %v7913, 1
        %v7915 = vmax.f32 %v7913, %v7914
        %v7916 = vsel %vm7908, %v7907, -inf
        %v7917 = vrot.slane %v7916, 4
        %v7918 = vmax.f32 %v7916, %v7917
        %v7919 = vrot.slane %v7918, 2
        %v7920 = vmax.f32 %v7918, %v7919
        %v7921 = vrot.slane %v7920, 1
        %v7922 = vmax.f32 %v7920, %v7921
        %v7923 = vpack.c.bf16 %v7922, %v7915
        %v7925 = vrot.slane %v7923, 3
        %v7928 = vsel %vm7811, %v7923, %v7925
        %v7930 = vld [vmem:[#allocation10 + $0x6] sm:$0x3]
        %v7931 = vsel %vm7818, %v7928, %v7930
        %7932 = vst [vmem:[#allocation10 + $0x6] sm:$0x3] %v7931
        %v7933 = vld [vmem:[#allocation10] sm:$0xff]
        %v7934 = vld [vmem:[#allocation14] sm:$0xff]
        %v7935 = vld [vmem:[#allocation14 + $0x8] sm:$0xff]
        %v7936 = vld [vmem:[#allocation14 + $0x10] sm:$0xff]
        %v7937 = vld [vmem:[#allocation14 + $0x18] sm:$0xff]
        %v7938 = vld [vmem:[#allocation14 + $0x20] sm:$0xff]
        %v7939 = vld [vmem:[#allocation14 + $0x28] sm:$0xff]
        %v7940 = vld [vmem:[#allocation14 + $0x30] sm:$0xff]
        %v7941 = vld [vmem:[#allocation14 + $0x38] sm:$0xff]
        %v7942 = vld [vmem:[#allocation14 + $0x40] sm:$0xff]
        %v7943 = vld [vmem:[#allocation14 + $0x48] sm:$0xff]
        %v7944 = vld [vmem:[#allocation14 + $0x50] sm:$0xff]
        %v7945 = vld [vmem:[#allocation14 + $0x58] sm:$0xff]
        %v7946 = vld [vmem:[#allocation14 + $0x60] sm:$0xff]
        %v7947 = vld [vmem:[#allocation14 + $0x68] sm:$0xff]
        %v7948 = vld [vmem:[#allocation14 + $0x70] sm:$0xff]
        %v7949 = vld [vmem:[#allocation14 + $0x78] sm:$0xff]
        %v7950 = vld [vmem:[#allocation14 + $0x80] sm:$0xff]
        %v7951 = vld [vmem:[#allocation14 + $0x88] sm:$0xff]
        %v7952 = vld [vmem:[#allocation14 + $0x90] sm:$0xff]
        %v7953 = vld [vmem:[#allocation14 + $0x98] sm:$0xff]
        %v7954 = vld [vmem:[#allocation14 + $0xa0] sm:$0xff]
        %v7955 = vld [vmem:[#allocation14 + $0xa8] sm:$0xff]
        %v7956 = vld [vmem:[#allocation14 + $0xb0] sm:$0xff]
        %v7957 = vld [vmem:[#allocation14 + $0xb8] sm:$0xff]
        %v7958 = vld [vmem:[#allocation14 + $0xc0] sm:$0xff]
        %v7959 = vld [vmem:[#allocation14 + $0xc8] sm:$0xff]
        %v7960 = vld [vmem:[#allocation14 + $0xd0] sm:$0xff]
        %v7961 = vld [vmem:[#allocation14 + $0xd8] sm:$0xff]
        %v7962 = vld [vmem:[#allocation14 + $0xe0] sm:$0xff]
        %v7963 = vld [vmem:[#allocation14 + $0xe8] sm:$0xff]
        %v7964 = vld [vmem:[#allocation14 + $0xf0] sm:$0xff]
        %v7965 = vld [vmem:[#allocation14 + $0xf8] sm:$0xff]
        %v7966 = vld [vmem:[#allocation14 + $0x100] sm:$0xff]
        %v7967 = vld [vmem:[#allocation14 + $0x108] sm:$0xff]
        %v7968 = vld [vmem:[#allocation14 + $0x110] sm:$0xff]
        %v7969 = vld [vmem:[#allocation14 + $0x118] sm:$0xff]
        %v7970 = vld [vmem:[#allocation14 + $0x120] sm:$0xff]
        %v7971 = vld [vmem:[#allocation14 + $0x128] sm:$0xff]
        %v7972 = vld [vmem:[#allocation14 + $0x130] sm:$0xff]
        %v7973 = vld [vmem:[#allocation14 + $0x138] sm:$0xff]
        %v7974 = vld [vmem:[#allocation14 + $0x140] sm:$0xff]
        %v7975 = vld [vmem:[#allocation14 + $0x148] sm:$0xff]
        %v7976 = vld [vmem:[#allocation14 + $0x150] sm:$0xff]
        %v7977 = vld [vmem:[#allocation14 + $0x158] sm:$0xff]
        %v7978 = vld [vmem:[#allocation14 + $0x160] sm:$0xff]
        %v7979 = vld [vmem:[#allocation14 + $0x168] sm:$0xff]
        %v7980 = vld [vmem:[#allocation14 + $0x170] sm:$0xff]
        %v7981 = vld [vmem:[#allocation14 + $0x178] sm:$0xff]
        %v7982 = vld [vmem:[#allocation14 + $0x180] sm:$0xff]
        %v7983 = vld [vmem:[#allocation14 + $0x188] sm:$0xff]
        %v7984 = vld [vmem:[#allocation14 + $0x190] sm:$0xff]
        %v7985 = vld [vmem:[#allocation14 + $0x198] sm:$0xff]
        %v7986 = vld [vmem:[#allocation14 + $0x1a0] sm:$0xff]
        %v7987 = vld [vmem:[#allocation14 + $0x1a8] sm:$0xff]
        %v7988 = vld [vmem:[#allocation14 + $0x1b0] sm:$0xff]
        %v7989 = vld [vmem:[#allocation14 + $0x1b8] sm:$0xff]
        %v7990 = vld [vmem:[#allocation14 + $0x1c0] sm:$0xff]
        %v7991 = vld [vmem:[#allocation14 + $0x1c8] sm:$0xff]
        %v7992 = vld [vmem:[#allocation14 + $0x1d0] sm:$0xff]
        %v7993 = vld [vmem:[#allocation14 + $0x1d8] sm:$0xff]
        %v7994 = vld [vmem:[#allocation14 + $0x1e0] sm:$0xff]
        %v7995 = vld [vmem:[#allocation14 + $0x1e8] sm:$0xff]
        %v7996 = vld [vmem:[#allocation14 + $0x1f0] sm:$0xff]
        %v7997 = vld [vmem:[#allocation14 + $0x1f8] sm:$0xff]
        %v7998 = vld [vmem:[#allocation14 + $0x200] sm:$0xff]
        %v7999 = vld [vmem:[#allocation14 + $0x208] sm:$0xff]
        %v8000 = vld [vmem:[#allocation14 + $0x210] sm:$0xff]
        %v8001 = vld [vmem:[#allocation14 + $0x218] sm:$0xff]
        %v8002 = vld [vmem:[#allocation14 + $0x220] sm:$0xff]
        %v8003 = vld [vmem:[#allocation14 + $0x228] sm:$0xff]
        %v8004 = vld [vmem:[#allocation14 + $0x230] sm:$0xff]
        %v8005 = vld [vmem:[#allocation14 + $0x238] sm:$0xff]
        %v8006 = vld [vmem:[#allocation14 + $0x240] sm:$0xff]
        %v8007 = vld [vmem:[#allocation14 + $0x248] sm:$0xff]
        %v8008 = vld [vmem:[#allocation14 + $0x250] sm:$0xff]
        %v8009 = vld [vmem:[#allocation14 + $0x258] sm:$0xff]
        %v8010 = vld [vmem:[#allocation14 + $0x260] sm:$0xff]
        %v8011 = vld [vmem:[#allocation14 + $0x268] sm:$0xff]
        %v8012 = vld [vmem:[#allocation14 + $0x270] sm:$0xff]
        %v8013 = vld [vmem:[#allocation14 + $0x278] sm:$0xff]
        %v8014 = vld [vmem:[#allocation14 + $0x280] sm:$0xff]
        %v8015 = vld [vmem:[#allocation14 + $0x288] sm:$0xff]
        %v8016 = vld [vmem:[#allocation14 + $0x290] sm:$0xff]
        %v8017 = vld [vmem:[#allocation14 + $0x298] sm:$0xff]
        %v8018 = vld [vmem:[#allocation14 + $0x2a0] sm:$0xff]
        %v8019 = vld [vmem:[#allocation14 + $0x2a8] sm:$0xff]
        %v8020 = vld [vmem:[#allocation14 + $0x2b0] sm:$0xff]
        %v8021 = vld [vmem:[#allocation14 + $0x2b8] sm:$0xff]
        %v8022 = vld [vmem:[#allocation14 + $0x2c0] sm:$0xff]
        %v8023 = vld [vmem:[#allocation14 + $0x2c8] sm:$0xff]
        %v8024 = vld [vmem:[#allocation14 + $0x2d0] sm:$0xff]
        %v8025 = vld [vmem:[#allocation14 + $0x2d8] sm:$0xff]
        %v8026 = vld [vmem:[#allocation14 + $0x2e0] sm:$0xff]
        %v8027 = vld [vmem:[#allocation14 + $0x2e8] sm:$0xff]
        %v8028 = vld [vmem:[#allocation14 + $0x2f0] sm:$0xff]
        %v8029 = vld [vmem:[#allocation14 + $0x2f8] sm:$0xff]
        %v8030 = vld [vmem:[#allocation14 + $0x300] sm:$0xff]
        %v8031 = vld [vmem:[#allocation14 + $0x308] sm:$0xff]
        %v8032 = vld [vmem:[#allocation14 + $0x310] sm:$0xff]
        %v8033 = vld [vmem:[#allocation14 + $0x318] sm:$0xff]
        %v8034 = vld [vmem:[#allocation14 + $0x320] sm:$0xff]
        %v8035 = vld [vmem:[#allocation14 + $0x328] sm:$0xff]
        %v8036 = vld [vmem:[#allocation14 + $0x330] sm:$0xff]
        %v8037 = vld [vmem:[#allocation14 + $0x338] sm:$0xff]
        %v8038 = vld [vmem:[#allocation14 + $0x340] sm:$0xff]
        %v8039 = vld [vmem:[#allocation14 + $0x348] sm:$0xff]
        %v8040 = vld [vmem:[#allocation14 + $0x350] sm:$0xff]
        %v8041 = vld [vmem:[#allocation14 + $0x358] sm:$0xff]
        %v8042 = vld [vmem:[#allocation14 + $0x360] sm:$0xff]
        %v8043 = vld [vmem:[#allocation14 + $0x368] sm:$0xff]
        %v8044 = vld [vmem:[#allocation14 + $0x370] sm:$0xff]
        %v8045 = vld [vmem:[#allocation14 + $0x378] sm:$0xff]
        %v8046 = vld [vmem:[#allocation14 + $0x380] sm:$0xff]
        %v8047 = vld [vmem:[#allocation14 + $0x388] sm:$0xff]
        %v8048 = vld [vmem:[#allocation14 + $0x390] sm:$0xff]
        %v8049 = vld [vmem:[#allocation14 + $0x398] sm:$0xff]
        %v8050 = vld [vmem:[#allocation14 + $0x3a0] sm:$0xff]
        %v8051 = vld [vmem:[#allocation14 + $0x3a8] sm:$0xff]
        %v8052 = vld [vmem:[#allocation14 + $0x3b0] sm:$0xff]
        %v8053 = vld [vmem:[#allocation14 + $0x3b8] sm:$0xff]
        %v8054 = vld [vmem:[#allocation14 + $0x3c0] sm:$0xff]
        %v8055 = vld [vmem:[#allocation14 + $0x3c8] sm:$0xff]
        %v8056 = vld [vmem:[#allocation14 + $0x3d0] sm:$0xff]
        %v8057 = vld [vmem:[#allocation14 + $0x3d8] sm:$0xff]
        %v8058 = vld [vmem:[#allocation14 + $0x3e0] sm:$0xff]
        %v8059 = vld [vmem:[#allocation14 + $0x3e8] sm:$0xff]
        %v8060 = vld [vmem:[#allocation14 + $0x3f0] sm:$0xff]
        %v8061 = vld [vmem:[#allocation14 + $0x3f8] sm:$0xff]
        %v8062 = vld [vmem:[#allocation14 + $0x400] sm:$0xff]
        %v8063 = vld [vmem:[#allocation14 + $0x408] sm:$0xff]
        %v8064 = vld [vmem:[#allocation14 + $0x410] sm:$0xff]
        %v8065 = vld [vmem:[#allocation14 + $0x418] sm:$0xff]
        %v8066 = vld [vmem:[#allocation14 + $0x420] sm:$0xff]
        %v8067 = vld [vmem:[#allocation14 + $0x428] sm:$0xff]
        %v8068 = vld [vmem:[#allocation14 + $0x430] sm:$0xff]
        %v8069 = vld [vmem:[#allocation14 + $0x438] sm:$0xff]
        %v8070 = vld [vmem:[#allocation14 + $0x440] sm:$0xff]
        %v8071 = vld [vmem:[#allocation14 + $0x448] sm:$0xff]
        %v8072 = vld [vmem:[#allocation14 + $0x450] sm:$0xff]
        %v8073 = vld [vmem:[#allocation14 + $0x458] sm:$0xff]
        %v8074 = vld [vmem:[#allocation14 + $0x460] sm:$0xff]
        %v8075 = vld [vmem:[#allocation14 + $0x468] sm:$0xff]
        %v8076 = vld [vmem:[#allocation14 + $0x470] sm:$0xff]
        %v8077 = vld [vmem:[#allocation14 + $0x478] sm:$0xff]
        %v8078 = vld [vmem:[#allocation14 + $0x480] sm:$0xff]
        %v8079 = vld [vmem:[#allocation14 + $0x488] sm:$0xff]
        %v8080 = vld [vmem:[#allocation14 + $0x490] sm:$0xff]
        %v8081 = vld [vmem:[#allocation14 + $0x498] sm:$0xff]
        %v8082 = vld [vmem:[#allocation14 + $0x4a0] sm:$0xff]
        %v8083 = vld [vmem:[#allocation14 + $0x4a8] sm:$0xff]
        %v8084 = vld [vmem:[#allocation14 + $0x4b0] sm:$0xff]
        %v8085 = vld [vmem:[#allocation14 + $0x4b8] sm:$0xff]
        %v8086 = vld [vmem:[#allocation14 + $0x4c0] sm:$0xff]
        %v8087 = vld [vmem:[#allocation14 + $0x4c8] sm:$0xff]
        %v8088 = vld [vmem:[#allocation14 + $0x4d0] sm:$0xff]
        %v8089 = vld [vmem:[#allocation14 + $0x4d8] sm:$0xff]
        %v8090 = vld [vmem:[#allocation14 + $0x4e0] sm:$0xff]
        %v8091 = vld [vmem:[#allocation14 + $0x4e8] sm:$0xff]
        %v8092 = vld [vmem:[#allocation14 + $0x4f0] sm:$0xff]
        %v8093 = vld [vmem:[#allocation14 + $0x4f8] sm:$0xff]
        %v8094 = vld [vmem:[#allocation14 + $0x500] sm:$0xff]
        %v8095 = vld [vmem:[#allocation14 + $0x508] sm:$0xff]
        %v8096 = vld [vmem:[#allocation14 + $0x510] sm:$0xff]
        %v8097 = vld [vmem:[#allocation14 + $0x518] sm:$0xff]
        %v8098 = vld [vmem:[#allocation14 + $0x520] sm:$0xff]
        %v8099 = vld [vmem:[#allocation14 + $0x528] sm:$0xff]
        %v8100 = vld [vmem:[#allocation14 + $0x530] sm:$0xff]
        %v8101 = vld [vmem:[#allocation14 + $0x538] sm:$0xff]
        %v8102 = vld [vmem:[#allocation14 + $0x540] sm:$0xff]
        %v8103 = vld [vmem:[#allocation14 + $0x548] sm:$0xff]
        %v8104 = vld [vmem:[#allocation14 + $0x550] sm:$0xff]
        %v8105 = vld [vmem:[#allocation14 + $0x558] sm:$0xff]
        %v8106 = vld [vmem:[#allocation14 + $0x560] sm:$0xff]
        %v8107 = vld [vmem:[#allocation14 + $0x568] sm:$0xff]
        %v8108 = vld [vmem:[#allocation14 + $0x570] sm:$0xff]
        %v8109 = vld [vmem:[#allocation14 + $0x578] sm:$0xff]
        %v8110 = vld [vmem:[#allocation14 + $0x580] sm:$0xff]
        %v8111 = vld [vmem:[#allocation14 + $0x588] sm:$0xff]
        %v8112 = vld [vmem:[#allocation14 + $0x590] sm:$0xff]
        %v8113 = vld [vmem:[#allocation14 + $0x598] sm:$0xff]
        %v8114 = vld [vmem:[#allocation14 + $0x5a0] sm:$0xff]
        %v8115 = vld [vmem:[#allocation14 + $0x5a8] sm:$0xff]
        %v8116 = vld [vmem:[#allocation14 + $0x5b0] sm:$0xff]
        %v8117 = vld [vmem:[#allocation14 + $0x5b8] sm:$0xff]
        %v8118 = vld [vmem:[#allocation14 + $0x5c0] sm:$0xff]
        %v8119 = vld [vmem:[#allocation14 + $0x5c8] sm:$0xff]
        %v8120 = vld [vmem:[#allocation14 + $0x5d0] sm:$0xff]
        %v8121 = vld [vmem:[#allocation14 + $0x5d8] sm:$0xff]
        %v8122 = vld [vmem:[#allocation14 + $0x5e0] sm:$0xff]
        %v8123 = vld [vmem:[#allocation14 + $0x5e8] sm:$0xff]
        %v8124 = vld [vmem:[#allocation14 + $0x5f0] sm:$0xff]
        %v8125 = vld [vmem:[#allocation14 + $0x5f8] sm:$0xff]
        %v8126 = vld [vmem:[#allocation14 + $0x600] sm:$0xff]
        %v8127 = vld [vmem:[#allocation14 + $0x608] sm:$0xff]
        %v8128 = vld [vmem:[#allocation14 + $0x610] sm:$0xff]
        %v8129 = vld [vmem:[#allocation14 + $0x618] sm:$0xff]
        %v8130 = vld [vmem:[#allocation14 + $0x620] sm:$0xff]
        %v8131 = vld [vmem:[#allocation14 + $0x628] sm:$0xff]
        %v8132 = vld [vmem:[#allocation14 + $0x630] sm:$0xff]
        %v8133 = vld [vmem:[#allocation14 + $0x638] sm:$0xff]
        %v8134 = vld [vmem:[#allocation14 + $0x640] sm:$0xff]
        %v8135 = vld [vmem:[#allocation14 + $0x648] sm:$0xff]
        %v8136 = vld [vmem:[#allocation14 + $0x650] sm:$0xff]
        %v8137 = vld [vmem:[#allocation14 + $0x658] sm:$0xff]
        %v8138 = vld [vmem:[#allocation14 + $0x660] sm:$0xff]
        %v8139 = vld [vmem:[#allocation14 + $0x668] sm:$0xff]
        %v8140 = vld [vmem:[#allocation14 + $0x670] sm:$0xff]
        %v8141 = vld [vmem:[#allocation14 + $0x678] sm:$0xff]
        %v8142 = vld [vmem:[#allocation14 + $0x680] sm:$0xff]
        %v8143 = vld [vmem:[#allocation14 + $0x688] sm:$0xff]
        %v8144 = vld [vmem:[#allocation14 + $0x690] sm:$0xff]
        %v8145 = vld [vmem:[#allocation14 + $0x698] sm:$0xff]
        %v8146 = vld [vmem:[#allocation14 + $0x6a0] sm:$0xff]
        %v8147 = vld [vmem:[#allocation14 + $0x6a8] sm:$0xff]
        %v8148 = vld [vmem:[#allocation14 + $0x6b0] sm:$0xff]
        %v8149 = vld [vmem:[#allocation14 + $0x6b8] sm:$0xff]
        %v8150 = vld [vmem:[#allocation14 + $0x6c0] sm:$0xff]
        %v8151 = vld [vmem:[#allocation14 + $0x6c8] sm:$0xff]
        %v8152 = vld [vmem:[#allocation14 + $0x6d0] sm:$0xff]
        %v8153 = vld [vmem:[#allocation14 + $0x6d8] sm:$0xff]
        %v8154 = vld [vmem:[#allocation14 + $0x6e0] sm:$0xff]
        %v8155 = vld [vmem:[#allocation14 + $0x6e8] sm:$0xff]
        %v8156 = vld [vmem:[#allocation14 + $0x6f0] sm:$0xff]
        %v8157 = vld [vmem:[#allocation14 + $0x6f8] sm:$0xff]
        %v8158 = vld [vmem:[#allocation14 + $0x700] sm:$0xff]
        %v8159 = vld [vmem:[#allocation14 + $0x708] sm:$0xff]
        %v8160 = vld [vmem:[#allocation14 + $0x710] sm:$0xff]
        %v8161 = vld [vmem:[#allocation14 + $0x718] sm:$0xff]
        %v8162 = vld [vmem:[#allocation14 + $0x720] sm:$0xff]
        %v8163 = vld [vmem:[#allocation14 + $0x728] sm:$0xff]
        %v8164 = vld [vmem:[#allocation14 + $0x730] sm:$0xff]
        %v8165 = vld [vmem:[#allocation14 + $0x738] sm:$0xff]
        %v8166 = vld [vmem:[#allocation14 + $0x740] sm:$0xff]
        %v8167 = vld [vmem:[#allocation14 + $0x748] sm:$0xff]
        %v8168 = vld [vmem:[#allocation14 + $0x750] sm:$0xff]
        %v8169 = vld [vmem:[#allocation14 + $0x758] sm:$0xff]
        %v8170 = vld [vmem:[#allocation14 + $0x760] sm:$0xff]
        %v8171 = vld [vmem:[#allocation14 + $0x768] sm:$0xff]
        %v8172 = vld [vmem:[#allocation14 + $0x770] sm:$0xff]
        %v8173 = vld [vmem:[#allocation14 + $0x778] sm:$0xff]
        %v8174 = vld [vmem:[#allocation14 + $0x780] sm:$0xff]
        %v8175 = vld [vmem:[#allocation14 + $0x788] sm:$0xff]
        %v8176 = vld [vmem:[#allocation14 + $0x790] sm:$0xff]
        %v8177 = vld [vmem:[#allocation14 + $0x798] sm:$0xff]
        %v8178 = vld [vmem:[#allocation14 + $0x7a0] sm:$0xff]
        %v8179 = vld [vmem:[#allocation14 + $0x7a8] sm:$0xff]
        %v8180 = vld [vmem:[#allocation14 + $0x7b0] sm:$0xff]
        %v8181 = vld [vmem:[#allocation14 + $0x7b8] sm:$0xff]
        %v8182 = vld [vmem:[#allocation14 + $0x7c0] sm:$0xff]
        %v8183 = vld [vmem:[#allocation14 + $0x7c8] sm:$0xff]
        %v8184 = vld [vmem:[#allocation14 + $0x7d0] sm:$0xff]
        %v8185 = vld [vmem:[#allocation14 + $0x7d8] sm:$0xff]
        %v8186 = vld [vmem:[#allocation14 + $0x7e0] sm:$0xff]
        %v8187 = vld [vmem:[#allocation14 + $0x7e8] sm:$0xff]
        %v8188 = vld [vmem:[#allocation14 + $0x7f0] sm:$0xff]
        %v8189 = vld [vmem:[#allocation14 + $0x7f8] sm:$0xff]
        %v8190 = vld [vmem:[%s8] sm:$0xf]
        %8192 = vst [vmem:[#allocation1] ss:$9 sm:$0xff] %v7933
        %v8193 = vld [vmem:[#allocation1] sm:$0xff]
        %v8194 = vld [vmem:[#allocation1 + $0x9] sm:$0xff]
        %v8195 = vld [vmem:[#allocation1 + $0x12] sm:$0xff]
        %v8196 = vld [vmem:[#allocation1 + $0x1b] sm:$0xff]
        %v8197 = vld [vmem:[#allocation1 + $0x24] sm:$0xff]
        %v8198 = vld [vmem:[#allocation1 + $0x2d] sm:$0xff]
        %v8199 = vld [vmem:[#allocation1 + $0x36] sm:$0xff]
        %v8200 = vld [vmem:[#allocation1 + $0x3f] sm:$0xff]
        %v8465 = vunpack.c.l.b16 %v7934
        %v8466 = vunpack.c.h.b16 %v7934
        %v8467 = vunpack.c.l.b16 %v7935
        %v8468 = vunpack.c.h.b16 %v7935
        %v8469 = vunpack.c.l.b16 %v7936
        %v8470 = vunpack.c.h.b16 %v7936
        %v8471 = vunpack.c.l.b16 %v7937
        %v8472 = vunpack.c.h.b16 %v7937
        %v8473 = vunpack.c.l.b16 %v7938
        %v8474 = vunpack.c.h.b16 %v7938
        %v8475 = vunpack.c.l.b16 %v7939
        %v8476 = vunpack.c.h.b16 %v7939
        %v8477 = vunpack.c.l.b16 %v7940
        %v8478 = vunpack.c.h.b16 %v7940
        %v8479 = vunpack.c.l.b16 %v7941
        %v8480 = vunpack.c.h.b16 %v7941
        %v8481 = vunpack.c.l.b16 %v7942
        %v8482 = vunpack.c.h.b16 %v7942
        %v8483 = vunpack.c.l.b16 %v7943
        %v8484 = vunpack.c.h.b16 %v7943
        %v8485 = vunpack.c.l.b16 %v7944
        %v8486 = vunpack.c.h.b16 %v7944
        %v8487 = vunpack.c.l.b16 %v7945
        %v8488 = vunpack.c.h.b16 %v7945
        %v8489 = vunpack.c.l.b16 %v7946
        %v8490 = vunpack.c.h.b16 %v7946
        %v8491 = vunpack.c.l.b16 %v7947
        %v8492 = vunpack.c.h.b16 %v7947
        %v8493 = vunpack.c.l.b16 %v7948
        %v8494 = vunpack.c.h.b16 %v7948
        %v8495 = vunpack.c.l.b16 %v7949
        %v8496 = vunpack.c.h.b16 %v7949
        %v8497 = vunpack.c.l.b16 %v7950
        %v8498 = vunpack.c.h.b16 %v7950
        %v8499 = vunpack.c.l.b16 %v7951
        %v8500 = vunpack.c.h.b16 %v7951
        %v8501 = vunpack.c.l.b16 %v7952
        %v8502 = vunpack.c.h.b16 %v7952
        %v8503 = vunpack.c.l.b16 %v7953
        %v8504 = vunpack.c.h.b16 %v7953
        %v8505 = vunpack.c.l.b16 %v7954
        %v8506 = vunpack.c.h.b16 %v7954
        %v8507 = vunpack.c.l.b16 %v7955
        %v8508 = vunpack.c.h.b16 %v7955
        %v8509 = vunpack.c.l.b16 %v7956
        %v8510 = vunpack.c.h.b16 %v7956
        %v8511 = vunpack.c.l.b16 %v7957
        %v8512 = vunpack.c.h.b16 %v7957
        %v8513 = vunpack.c.l.b16 %v7958
        %v8514 = vunpack.c.h.b16 %v7958
        %v8515 = vunpack.c.l.b16 %v7959
        %v8516 = vunpack.c.h.b16 %v7959
        %v8517 = vunpack.c.l.b16 %v7960
        %v8518 = vunpack.c.h.b16 %v7960
        %v8519 = vunpack.c.l.b16 %v7961
        %v8520 = vunpack.c.h.b16 %v7961
        %v8521 = vunpack.c.l.b16 %v7962
        %v8522 = vunpack.c.h.b16 %v7962
        %v8523 = vunpack.c.l.b16 %v7963
        %v8524 = vunpack.c.h.b16 %v7963
        %v8525 = vunpack.c.l.b16 %v7964
        %v8526 = vunpack.c.h.b16 %v7964
        %v8527 = vunpack.c.l.b16 %v7965
        %v8528 = vunpack.c.h.b16 %v7965
        %v8529 = vunpack.c.l.b16 %v7966
        %v8530 = vunpack.c.h.b16 %v7966
        %v8531 = vunpack.c.l.b16 %v7967
        %v8532 = vunpack.c.h.b16 %v7967
        %v8533 = vunpack.c.l.b16 %v7968
        %v8534 = vunpack.c.h.b16 %v7968
        %v8535 = vunpack.c.l.b16 %v7969
        %v8536 = vunpack.c.h.b16 %v7969
        %v8537 = vunpack.c.l.b16 %v7970
        %v8538 = vunpack.c.h.b16 %v7970
        %v8539 = vunpack.c.l.b16 %v7971
        %v8540 = vunpack.c.h.b16 %v7971
        %v8541 = vunpack.c.l.b16 %v7972
        %v8542 = vunpack.c.h.b16 %v7972
        %v8543 = vunpack.c.l.b16 %v7973
        %v8544 = vunpack.c.h.b16 %v7973
        %v8545 = vunpack.c.l.b16 %v7974
        %v8546 = vunpack.c.h.b16 %v7974
        %v8547 = vunpack.c.l.b16 %v7975
        %v8548 = vunpack.c.h.b16 %v7975
        %v8549 = vunpack.c.l.b16 %v7976
        %v8550 = vunpack.c.h.b16 %v7976
        %v8551 = vunpack.c.l.b16 %v7977
        %v8552 = vunpack.c.h.b16 %v7977
        %v8553 = vunpack.c.l.b16 %v7978
        %v8554 = vunpack.c.h.b16 %v7978
        %v8555 = vunpack.c.l.b16 %v7979
        %v8556 = vunpack.c.h.b16 %v7979
        %v8557 = vunpack.c.l.b16 %v7980
        %v8558 = vunpack.c.h.b16 %v7980
        %v8559 = vunpack.c.l.b16 %v7981
        %v8560 = vunpack.c.h.b16 %v7981
        %v8561 = vunpack.c.l.b16 %v7982
        %v8562 = vunpack.c.h.b16 %v7982
        %v8563 = vunpack.c.l.b16 %v7983
        %v8564 = vunpack.c.h.b16 %v7983
        %v8565 = vunpack.c.l.b16 %v7984
        %v8566 = vunpack.c.h.b16 %v7984
        %v8567 = vunpack.c.l.b16 %v7985
        %v8568 = vunpack.c.h.b16 %v7985
        %v8569 = vunpack.c.l.b16 %v7986
        %v8570 = vunpack.c.h.b16 %v7986
        %v8571 = vunpack.c.l.b16 %v7987
        %v8572 = vunpack.c.h.b16 %v7987
        %v8573 = vunpack.c.l.b16 %v7988
        %v8574 = vunpack.c.h.b16 %v7988
        %v8575 = vunpack.c.l.b16 %v7989
        %v8576 = vunpack.c.h.b16 %v7989
        %v8577 = vunpack.c.l.b16 %v7990
        %v8578 = vunpack.c.h.b16 %v7990
        %v8579 = vunpack.c.l.b16 %v7991
        %v8580 = vunpack.c.h.b16 %v7991
        %v8581 = vunpack.c.l.b16 %v7992
        %v8582 = vunpack.c.h.b16 %v7992
        %v8583 = vunpack.c.l.b16 %v7993
        %v8584 = vunpack.c.h.b16 %v7993
        %v8585 = vunpack.c.l.b16 %v7994
        %v8586 = vunpack.c.h.b16 %v7994
        %v8587 = vunpack.c.l.b16 %v7995
        %v8588 = vunpack.c.h.b16 %v7995
        %v8589 = vunpack.c.l.b16 %v7996
        %v8590 = vunpack.c.h.b16 %v7996
        %v8591 = vunpack.c.l.b16 %v7997
        %v8592 = vunpack.c.h.b16 %v7997
        %v8593 = vunpack.c.l.b16 %v7998
        %v8594 = vunpack.c.h.b16 %v7998
        %v8595 = vunpack.c.l.b16 %v7999
        %v8596 = vunpack.c.h.b16 %v7999
        %v8597 = vunpack.c.l.b16 %v8000
        %v8598 = vunpack.c.h.b16 %v8000
        %v8599 = vunpack.c.l.b16 %v8001
        %v8600 = vunpack.c.h.b16 %v8001
        %v8601 = vunpack.c.l.b16 %v8002
        %v8602 = vunpack.c.h.b16 %v8002
        %v8603 = vunpack.c.l.b16 %v8003
        %v8604 = vunpack.c.h.b16 %v8003
        %v8605 = vunpack.c.l.b16 %v8004
        %v8606 = vunpack.c.h.b16 %v8004
        %v8607 = vunpack.c.l.b16 %v8005
        %v8608 = vunpack.c.h.b16 %v8005
        %v8609 = vunpack.c.l.b16 %v8006
        %v8610 = vunpack.c.h.b16 %v8006
        %v8611 = vunpack.c.l.b16 %v8007
        %v8612 = vunpack.c.h.b16 %v8007
        %v8613 = vunpack.c.l.b16 %v8008
        %v8614 = vunpack.c.h.b16 %v8008
        %v8615 = vunpack.c.l.b16 %v8009
        %v8616 = vunpack.c.h.b16 %v8009
        %v8617 = vunpack.c.l.b16 %v8010
        %v8618 = vunpack.c.h.b16 %v8010
        %v8619 = vunpack.c.l.b16 %v8011
        %v8620 = vunpack.c.h.b16 %v8011
        %v8621 = vunpack.c.l.b16 %v8012
        %v8622 = vunpack.c.h.b16 %v8012
        %v8623 = vunpack.c.l.b16 %v8013
        %v8624 = vunpack.c.h.b16 %v8013
        %v8625 = vunpack.c.l.b16 %v8014
        %v8626 = vunpack.c.h.b16 %v8014
        %v8627 = vunpack.c.l.b16 %v8015
        %v8628 = vunpack.c.h.b16 %v8015
        %v8629 = vunpack.c.l.b16 %v8016
        %v8630 = vunpack.c.h.b16 %v8016
        %v8631 = vunpack.c.l.b16 %v8017
        %v8632 = vunpack.c.h.b16 %v8017
        %v8633 = vunpack.c.l.b16 %v8018
        %v8634 = vunpack.c.h.b16 %v8018
        %v8635 = vunpack.c.l.b16 %v8019
        %v8636 = vunpack.c.h.b16 %v8019
        %v8637 = vunpack.c.l.b16 %v8020
        %v8638 = vunpack.c.h.b16 %v8020
        %v8639 = vunpack.c.l.b16 %v8021
        %v8640 = vunpack.c.h.b16 %v8021
        %v8641 = vunpack.c.l.b16 %v8022
        %v8642 = vunpack.c.h.b16 %v8022
        %v8643 = vunpack.c.l.b16 %v8023
        %v8644 = vunpack.c.h.b16 %v8023
        %v8645 = vunpack.c.l.b16 %v8024
        %v8646 = vunpack.c.h.b16 %v8024
        %v8647 = vunpack.c.l.b16 %v8025
        %v8648 = vunpack.c.h.b16 %v8025
        %v8649 = vunpack.c.l.b16 %v8026
        %v8650 = vunpack.c.h.b16 %v8026
        %v8651 = vunpack.c.l.b16 %v8027
        %v8652 = vunpack.c.h.b16 %v8027
        %v8653 = vunpack.c.l.b16 %v8028
        %v8654 = vunpack.c.h.b16 %v8028
        %v8655 = vunpack.c.l.b16 %v8029
        %v8656 = vunpack.c.h.b16 %v8029
        %v8657 = vunpack.c.l.b16 %v8030
        %v8658 = vunpack.c.h.b16 %v8030
        %v8659 = vunpack.c.l.b16 %v8031
        %v8660 = vunpack.c.h.b16 %v8031
        %v8661 = vunpack.c.l.b16 %v8032
        %v8662 = vunpack.c.h.b16 %v8032
        %v8663 = vunpack.c.l.b16 %v8033
        %v8664 = vunpack.c.h.b16 %v8033
        %v8665 = vunpack.c.l.b16 %v8034
        %v8666 = vunpack.c.h.b16 %v8034
        %v8667 = vunpack.c.l.b16 %v8035
        %v8668 = vunpack.c.h.b16 %v8035
        %v8669 = vunpack.c.l.b16 %v8036
        %v8670 = vunpack.c.h.b16 %v8036
        %v8671 = vunpack.c.l.b16 %v8037
        %v8672 = vunpack.c.h.b16 %v8037
        %v8673 = vunpack.c.l.b16 %v8038
        %v8674 = vunpack.c.h.b16 %v8038
        %v8675 = vunpack.c.l.b16 %v8039
        %v8676 = vunpack.c.h.b16 %v8039
        %v8677 = vunpack.c.l.b16 %v8040
        %v8678 = vunpack.c.h.b16 %v8040
        %v8679 = vunpack.c.l.b16 %v8041
        %v8680 = vunpack.c.h.b16 %v8041
        %v8681 = vunpack.c.l.b16 %v8042
        %v8682 = vunpack.c.h.b16 %v8042
        %v8683 = vunpack.c.l.b16 %v8043
        %v8684 = vunpack.c.h.b16 %v8043
        %v8685 = vunpack.c.l.b16 %v8044
        %v8686 = vunpack.c.h.b16 %v8044
        %v8687 = vunpack.c.l.b16 %v8045
        %v8688 = vunpack.c.h.b16 %v8045
        %v8689 = vunpack.c.l.b16 %v8046
        %v8690 = vunpack.c.h.b16 %v8046
        %v8691 = vunpack.c.l.b16 %v8047
        %v8692 = vunpack.c.h.b16 %v8047
        %v8693 = vunpack.c.l.b16 %v8048
        %v8694 = vunpack.c.h.b16 %v8048
        %v8695 = vunpack.c.l.b16 %v8049
        %v8696 = vunpack.c.h.b16 %v8049
        %v8697 = vunpack.c.l.b16 %v8050
        %v8698 = vunpack.c.h.b16 %v8050
        %v8699 = vunpack.c.l.b16 %v8051
        %v8700 = vunpack.c.h.b16 %v8051
        %v8701 = vunpack.c.l.b16 %v8052
        %v8702 = vunpack.c.h.b16 %v8052
        %v8703 = vunpack.c.l.b16 %v8053
        %v8704 = vunpack.c.h.b16 %v8053
        %v8705 = vunpack.c.l.b16 %v8054
        %v8706 = vunpack.c.h.b16 %v8054
        %v8707 = vunpack.c.l.b16 %v8055
        %v8708 = vunpack.c.h.b16 %v8055
        %v8709 = vunpack.c.l.b16 %v8056
        %v8710 = vunpack.c.h.b16 %v8056
        %v8711 = vunpack.c.l.b16 %v8057
        %v8712 = vunpack.c.h.b16 %v8057
        %v8713 = vunpack.c.l.b16 %v8058
        %v8714 = vunpack.c.h.b16 %v8058
        %v8715 = vunpack.c.l.b16 %v8059
        %v8716 = vunpack.c.h.b16 %v8059
        %v8717 = vunpack.c.l.b16 %v8060
        %v8718 = vunpack.c.h.b16 %v8060
        %v8719 = vunpack.c.l.b16 %v8061
        %v8720 = vunpack.c.h.b16 %v8061
        %v8721 = vunpack.c.l.b16 %v8062
        %v8722 = vunpack.c.h.b16 %v8062
        %v8723 = vunpack.c.l.b16 %v8063
        %v8724 = vunpack.c.h.b16 %v8063
        %v8725 = vunpack.c.l.b16 %v8064
        %v8726 = vunpack.c.h.b16 %v8064
        %v8727 = vunpack.c.l.b16 %v8065
        %v8728 = vunpack.c.h.b16 %v8065
        %v8729 = vunpack.c.l.b16 %v8066
        %v8730 = vunpack.c.h.b16 %v8066
        %v8731 = vunpack.c.l.b16 %v8067
        %v8732 = vunpack.c.h.b16 %v8067
        %v8733 = vunpack.c.l.b16 %v8068
        %v8734 = vunpack.c.h.b16 %v8068
        %v8735 = vunpack.c.l.b16 %v8069
        %v8736 = vunpack.c.h.b16 %v8069
        %v8737 = vunpack.c.l.b16 %v8070
        %v8738 = vunpack.c.h.b16 %v8070
        %v8739 = vunpack.c.l.b16 %v8071
        %v8740 = vunpack.c.h.b16 %v8071
        %v8741 = vunpack.c.l.b16 %v8072
        %v8742 = vunpack.c.h.b16 %v8072
        %v8743 = vunpack.c.l.b16 %v8073
        %v8744 = vunpack.c.h.b16 %v8073
        %v8745 = vunpack.c.l.b16 %v8074
        %v8746 = vunpack.c.h.b16 %v8074
        %v8747 = vunpack.c.l.b16 %v8075
        %v8748 = vunpack.c.h.b16 %v8075
        %v8749 = vunpack.c.l.b16 %v8076
        %v8750 = vunpack.c.h.b16 %v8076
        %v8751 = vunpack.c.l.b16 %v8077
        %v8752 = vunpack.c.h.b16 %v8077
        %v8753 = vunpack.c.l.b16 %v8078
        %v8754 = vunpack.c.h.b16 %v8078
        %v8755 = vunpack.c.l.b16 %v8079
        %v8756 = vunpack.c.h.b16 %v8079
        %v8757 = vunpack.c.l.b16 %v8080
        %v8758 = vunpack.c.h.b16 %v8080
        %v8759 = vunpack.c.l.b16 %v8081
        %v8760 = vunpack.c.h.b16 %v8081
        %v8761 = vunpack.c.l.b16 %v8082
        %v8762 = vunpack.c.h.b16 %v8082
        %v8763 = vunpack.c.l.b16 %v8083
        %v8764 = vunpack.c.h.b16 %v8083
        %v8765 = vunpack.c.l.b16 %v8084
        %v8766 = vunpack.c.h.b16 %v8084
        %v8767 = vunpack.c.l.b16 %v8085
        %v8768 = vunpack.c.h.b16 %v8085
        %v8769 = vunpack.c.l.b16 %v8086
        %v8770 = vunpack.c.h.b16 %v8086
        %v8771 = vunpack.c.l.b16 %v8087
        %v8772 = vunpack.c.h.b16 %v8087
        %v8773 = vunpack.c.l.b16 %v8088
        %v8774 = vunpack.c.h.b16 %v8088
        %v8775 = vunpack.c.l.b16 %v8089
        %v8776 = vunpack.c.h.b16 %v8089
        %v8777 = vunpack.c.l.b16 %v8090
        %v8778 = vunpack.c.h.b16 %v8090
        %v8779 = vunpack.c.l.b16 %v8091
        %v8780 = vunpack.c.h.b16 %v8091
        %v8781 = vunpack.c.l.b16 %v8092
        %v8782 = vunpack.c.h.b16 %v8092
        %v8783 = vunpack.c.l.b16 %v8093
        %v8784 = vunpack.c.h.b16 %v8093
        %v8785 = vunpack.c.l.b16 %v8094
        %v8786 = vunpack.c.h.b16 %v8094
        %v8787 = vunpack.c.l.b16 %v8095
        %v8788 = vunpack.c.h.b16 %v8095
        %v8789 = vunpack.c.l.b16 %v8096
        %v8790 = vunpack.c.h.b16 %v8096
        %v8791 = vunpack.c.l.b16 %v8097
        %v8792 = vunpack.c.h.b16 %v8097
        %v8793 = vunpack.c.l.b16 %v8098
        %v8794 = vunpack.c.h.b16 %v8098
        %v8795 = vunpack.c.l.b16 %v8099
        %v8796 = vunpack.c.h.b16 %v8099
        %v8797 = vunpack.c.l.b16 %v8100
        %v8798 = vunpack.c.h.b16 %v8100
        %v8799 = vunpack.c.l.b16 %v8101
        %v8800 = vunpack.c.h.b16 %v8101
        %v8801 = vunpack.c.l.b16 %v8102
        %v8802 = vunpack.c.h.b16 %v8102
        %v8803 = vunpack.c.l.b16 %v8103
        %v8804 = vunpack.c.h.b16 %v8103
        %v8805 = vunpack.c.l.b16 %v8104
        %v8806 = vunpack.c.h.b16 %v8104
        %v8807 = vunpack.c.l.b16 %v8105
        %v8808 = vunpack.c.h.b16 %v8105
        %v8809 = vunpack.c.l.b16 %v8106
        %v8810 = vunpack.c.h.b16 %v8106
        %v8811 = vunpack.c.l.b16 %v8107
        %v8812 = vunpack.c.h.b16 %v8107
        %v8813 = vunpack.c.l.b16 %v8108
        %v8814 = vunpack.c.h.b16 %v8108
        %v8815 = vunpack.c.l.b16 %v8109
        %v8816 = vunpack.c.h.b16 %v8109
        %v8817 = vunpack.c.l.b16 %v8110
        %v8818 = vunpack.c.h.b16 %v8110
        %v8819 = vunpack.c.l.b16 %v8111
        %v8820 = vunpack.c.h.b16 %v8111
        %v8821 = vunpack.c.l.b16 %v8112
        %v8822 = vunpack.c.h.b16 %v8112
        %v8823 = vunpack.c.l.b16 %v8113
        %v8824 = vunpack.c.h.b16 %v8113
        %v8825 = vunpack.c.l.b16 %v8114
        %v8826 = vunpack.c.h.b16 %v8114
        %v8827 = vunpack.c.l.b16 %v8115
        %v8828 = vunpack.c.h.b16 %v8115
        %v8829 = vunpack.c.l.b16 %v8116
        %v8830 = vunpack.c.h.b16 %v8116
        %v8831 = vunpack.c.l.b16 %v8117
        %v8832 = vunpack.c.h.b16 %v8117
        %v8833 = vunpack.c.l.b16 %v8118
        %v8834 = vunpack.c.h.b16 %v8118
        %v8835 = vunpack.c.l.b16 %v8119
        %v8836 = vunpack.c.h.b16 %v8119
        %v8837 = vunpack.c.l.b16 %v8120
        %v8838 = vunpack.c.h.b16 %v8120
        %v8839 = vunpack.c.l.b16 %v8121
        %v8840 = vunpack.c.h.b16 %v8121
        %v8841 = vunpack.c.l.b16 %v8122
        %v8842 = vunpack.c.h.b16 %v8122
        %v8843 = vunpack.c.l.b16 %v8123
        %v8844 = vunpack.c.h.b16 %v8123
        %v8845 = vunpack.c.l.b16 %v8124
        %v8846 = vunpack.c.h.b16 %v8124
        %v8847 = vunpack.c.l.b16 %v8125
        %v8848 = vunpack.c.h.b16 %v8125
        %v8849 = vunpack.c.l.b16 %v8126
        %v8850 = vunpack.c.h.b16 %v8126
        %v8851 = vunpack.c.l.b16 %v8127
        %v8852 = vunpack.c.h.b16 %v8127
        %v8853 = vunpack.c.l.b16 %v8128
        %v8854 = vunpack.c.h.b16 %v8128
        %v8855 = vunpack.c.l.b16 %v8129
        %v8856 = vunpack.c.h.b16 %v8129
        %v8857 = vunpack.c.l.b16 %v8130
        %v8858 = vunpack.c.h.b16 %v8130
        %v8859 = vunpack.c.l.b16 %v8131
        %v8860 = vunpack.c.h.b16 %v8131
        %v8861 = vunpack.c.l.b16 %v8132
        %v8862 = vunpack.c.h.b16 %v8132
        %v8863 = vunpack.c.l.b16 %v8133
        %v8864 = vunpack.c.h.b16 %v8133
        %v8865 = vunpack.c.l.b16 %v8134
        %v8866 = vunpack.c.h.b16 %v8134
        %v8867 = vunpack.c.l.b16 %v8135
        %v8868 = vunpack.c.h.b16 %v8135
        %v8869 = vunpack.c.l.b16 %v8136
        %v8870 = vunpack.c.h.b16 %v8136
        %v8871 = vunpack.c.l.b16 %v8137
        %v8872 = vunpack.c.h.b16 %v8137
        %v8873 = vunpack.c.l.b16 %v8138
        %v8874 = vunpack.c.h.b16 %v8138
        %v8875 = vunpack.c.l.b16 %v8139
        %v8876 = vunpack.c.h.b16 %v8139
        %v8877 = vunpack.c.l.b16 %v8140
        %v8878 = vunpack.c.h.b16 %v8140
        %v8879 = vunpack.c.l.b16 %v8141
        %v8880 = vunpack.c.h.b16 %v8141
        %v8881 = vunpack.c.l.b16 %v8142
        %v8882 = vunpack.c.h.b16 %v8142
        %v8883 = vunpack.c.l.b16 %v8143
        %v8884 = vunpack.c.h.b16 %v8143
        %v8885 = vunpack.c.l.b16 %v8144
        %v8886 = vunpack.c.h.b16 %v8144
        %v8887 = vunpack.c.l.b16 %v8145
        %v8888 = vunpack.c.h.b16 %v8145
        %v8889 = vunpack.c.l.b16 %v8146
        %v8890 = vunpack.c.h.b16 %v8146
        %v8891 = vunpack.c.l.b16 %v8147
        %v8892 = vunpack.c.h.b16 %v8147
        %v8893 = vunpack.c.l.b16 %v8148
        %v8894 = vunpack.c.h.b16 %v8148
        %v8895 = vunpack.c.l.b16 %v8149
        %v8896 = vunpack.c.h.b16 %v8149
        %v8897 = vunpack.c.l.b16 %v8150
        %v8898 = vunpack.c.h.b16 %v8150
        %v8899 = vunpack.c.l.b16 %v8151
        %v8900 = vunpack.c.h.b16 %v8151
        %v8901 = vunpack.c.l.b16 %v8152
        %v8902 = vunpack.c.h.b16 %v8152
        %v8903 = vunpack.c.l.b16 %v8153
        %v8904 = vunpack.c.h.b16 %v8153
        %v8905 = vunpack.c.l.b16 %v8154
        %v8906 = vunpack.c.h.b16 %v8154
        %v8907 = vunpack.c.l.b16 %v8155
        %v8908 = vunpack.c.h.b16 %v8155
        %v8909 = vunpack.c.l.b16 %v8156
        %v8910 = vunpack.c.h.b16 %v8156
        %v8911 = vunpack.c.l.b16 %v8157
        %v8912 = vunpack.c.h.b16 %v8157
        %v8913 = vunpack.c.l.b16 %v8158
        %v8914 = vunpack.c.h.b16 %v8158
        %v8915 = vunpack.c.l.b16 %v8159
        %v8916 = vunpack.c.h.b16 %v8159
        %v8917 = vunpack.c.l.b16 %v8160
        %v8918 = vunpack.c.h.b16 %v8160
        %v8919 = vunpack.c.l.b16 %v8161
        %v8920 = vunpack.c.h.b16 %v8161
        %v8921 = vunpack.c.l.b16 %v8162
        %v8922 = vunpack.c.h.b16 %v8162
        %v8923 = vunpack.c.l.b16 %v8163
        %v8924 = vunpack.c.h.b16 %v8163
        %v8925 = vunpack.c.l.b16 %v8164
        %v8926 = vunpack.c.h.b16 %v8164
        %v8927 = vunpack.c.l.b16 %v8165
        %v8928 = vunpack.c.h.b16 %v8165
        %v8929 = vunpack.c.l.b16 %v8166
        %v8930 = vunpack.c.h.b16 %v8166
        %v8931 = vunpack.c.l.b16 %v8167
        %v8932 = vunpack.c.h.b16 %v8167
        %v8933 = vunpack.c.l.b16 %v8168
        %v8934 = vunpack.c.h.b16 %v8168
        %v8935 = vunpack.c.l.b16 %v8169
        %v8936 = vunpack.c.h.b16 %v8169
        %v8937 = vunpack.c.l.b16 %v8170
        %v8938 = vunpack.c.h.b16 %v8170
        %v8939 = vunpack.c.l.b16 %v8171
        %v8940 = vunpack.c.h.b16 %v8171
        %v8941 = vunpack.c.l.b16 %v8172
        %v8942 = vunpack.c.h.b16 %v8172
        %v8943 = vunpack.c.l.b16 %v8173
        %v8944 = vunpack.c.h.b16 %v8173
        %v8945 = vunpack.c.l.b16 %v8174
        %v8946 = vunpack.c.h.b16 %v8174
        %v8947 = vunpack.c.l.b16 %v8175
        %v8948 = vunpack.c.h.b16 %v8175
        %v8949 = vunpack.c.l.b16 %v8176
        %v8950 = vunpack.c.h.b16 %v8176
        %v8951 = vunpack.c.l.b16 %v8177
        %v8952 = vunpack.c.h.b16 %v8177
        %v8953 = vunpack.c.l.b16 %v8178
        %v8954 = vunpack.c.h.b16 %v8178
        %v8955 = vunpack.c.l.b16 %v8179
        %v8956 = vunpack.c.h.b16 %v8179
        %v8957 = vunpack.c.l.b16 %v8180
        %v8958 = vunpack.c.h.b16 %v8180
        %v8959 = vunpack.c.l.b16 %v8181
        %v8960 = vunpack.c.h.b16 %v8181
        %v8961 = vunpack.c.l.b16 %v8182
        %v8962 = vunpack.c.h.b16 %v8182
        %v8963 = vunpack.c.l.b16 %v8183
        %v8964 = vunpack.c.h.b16 %v8183
        %v8965 = vunpack.c.l.b16 %v8184
        %v8966 = vunpack.c.h.b16 %v8184
        %v8967 = vunpack.c.l.b16 %v8185
        %v8968 = vunpack.c.h.b16 %v8185
        %v8969 = vunpack.c.l.b16 %v8186
        %v8970 = vunpack.c.h.b16 %v8186
        %v8971 = vunpack.c.l.b16 %v8187
        %v8972 = vunpack.c.h.b16 %v8187
        %v8973 = vunpack.c.l.b16 %v8188
        %v8974 = vunpack.c.h.b16 %v8188
        %v8975 = vunpack.c.l.b16 %v8189
        %v8976 = vunpack.c.h.b16 %v8189
        %v8977 = vpack.c.b16 %v8469, %v8465
        %v8978 = vpack.c.b16 %v8470, %v8466
        %v8979 = vpack.c.b16 %v8471, %v8467
        %v8980 = vpack.c.b16 %v8472, %v8468
        %v8981 = vpack.c.b16 %v8477, %v8473
        %v8982 = vpack.c.b16 %v8478, %v8474
        %v8983 = vpack.c.b16 %v8479, %v8475
        %v8984 = vpack.c.b16 %v8480, %v8476
        %v8985 = vpack.c.b16 %v8485, %v8481
        %v8986 = vpack.c.b16 %v8486, %v8482
        %v8987 = vpack.c.b16 %v8487, %v8483
        %v8988 = vpack.c.b16 %v8488, %v8484
        %v8989 = vpack.c.b16 %v8493, %v8489
        %v8990 = vpack.c.b16 %v8494, %v8490
        %v8991 = vpack.c.b16 %v8495, %v8491
        %v8992 = vpack.c.b16 %v8496, %v8492
        %v8993 = vpack.c.b16 %v8501, %v8497
        %v8994 = vpack.c.b16 %v8502, %v8498
        %v8995 = vpack.c.b16 %v8503, %v8499
        %v8996 = vpack.c.b16 %v8504, %v8500
        %v8997 = vpack.c.b16 %v8509, %v8505
        %v8998 = vpack.c.b16 %v8510, %v8506
        %v8999 = vpack.c.b16 %v8511, %v8507
        %v9000 = vpack.c.b16 %v8512, %v8508
        %v9001 = vpack.c.b16 %v8517, %v8513
        %v9002 = vpack.c.b16 %v8518, %v8514
        %v9003 = vpack.c.b16 %v8519, %v8515
        %v9004 = vpack.c.b16 %v8520, %v8516
        %v9005 = vpack.c.b16 %v8525, %v8521
        %v9006 = vpack.c.b16 %v8526, %v8522
        %v9007 = vpack.c.b16 %v8527, %v8523
        %v9008 = vpack.c.b16 %v8528, %v8524
        %v9009 = vpack.c.b16 %v8533, %v8529
        %v9010 = vpack.c.b16 %v8534, %v8530
        %v9011 = vpack.c.b16 %v8535, %v8531
        %v9012 = vpack.c.b16 %v8536, %v8532
        %v9013 = vpack.c.b16 %v8541, %v8537
        %v9014 = vpack.c.b16 %v8542, %v8538
        %v9015 = vpack.c.b16 %v8543, %v8539
        %v9016 = vpack.c.b16 %v8544, %v8540
        %v9017 = vpack.c.b16 %v8549, %v8545
        %v9018 = vpack.c.b16 %v8550, %v8546
        %v9019 = vpack.c.b16 %v8551, %v8547
        %v9020 = vpack.c.b16 %v8552, %v8548
        %v9021 = vpack.c.b16 %v8557, %v8553
        %v9022 = vpack.c.b16 %v8558, %v8554
        %v9023 = vpack.c.b16 %v8559, %v8555
        %v9024 = vpack.c.b16 %v8560, %v8556
        %v9025 = vpack.c.b16 %v8565, %v8561
        %v9026 = vpack.c.b16 %v8566, %v8562
        %v9027 = vpack.c.b16 %v8567, %v8563
        %v9028 = vpack.c.b16 %v8568, %v8564
        %v9029 = vpack.c.b16 %v8573, %v8569
        %v9030 = vpack.c.b16 %v8574, %v8570
        %v9031 = vpack.c.b16 %v8575, %v8571
        %v9032 = vpack.c.b16 %v8576, %v8572
        %v9033 = vpack.c.b16 %v8581, %v8577
        %v9034 = vpack.c.b16 %v8582, %v8578
        %v9035 = vpack.c.b16 %v8583, %v8579
        %v9036 = vpack.c.b16 %v8584, %v8580
        %v9037 = vpack.c.b16 %v8589, %v8585
        %v9038 = vpack.c.b16 %v8590, %v8586
        %v9039 = vpack.c.b16 %v8591, %v8587
        %v9040 = vpack.c.b16 %v8592, %v8588
        %v9041 = vpack.c.b16 %v8597, %v8593
        %v9042 = vpack.c.b16 %v8598, %v8594
        %v9043 = vpack.c.b16 %v8599, %v8595
        %v9044 = vpack.c.b16 %v8600, %v8596
        %v9045 = vpack.c.b16 %v8605, %v8601
        %v9046 = vpack.c.b16 %v8606, %v8602
        %v9047 = vpack.c.b16 %v8607, %v8603
        %v9048 = vpack.c.b16 %v8608, %v8604
        %v9049 = vpack.c.b16 %v8613, %v8609
        %v9050 = vpack.c.b16 %v8614, %v8610
        %v9051 = vpack.c.b16 %v8615, %v8611
        %v9052 = vpack.c.b16 %v8616, %v8612
        %v9053 = vpack.c.b16 %v8621, %v8617
        %v9054 = vpack.c.b16 %v8622, %v8618
        %v9055 = vpack.c.b16 %v8623, %v8619
        %v9056 = vpack.c.b16 %v8624, %v8620
        %v9057 = vpack.c.b16 %v8629, %v8625
        %v9058 = vpack.c.b16 %v8630, %v8626
        %v9059 = vpack.c.b16 %v8631, %v8627
        %v9060 = vpack.c.b16 %v8632, %v8628
        %v9061 = vpack.c.b16 %v8637, %v8633
        %v9062 = vpack.c.b16 %v8638, %v8634
        %v9063 = vpack.c.b16 %v8639, %v8635
        %v9064 = vpack.c.b16 %v8640, %v8636
        %v9065 = vpack.c.b16 %v8645, %v8641
        %v9066 = vpack.c.b16 %v8646, %v8642
        %v9067 = vpack.c.b16 %v8647, %v8643
        %v9068 = vpack.c.b16 %v8648, %v8644
        %v9069 = vpack.c.b16 %v8653, %v8649
        %v9070 = vpack.c.b16 %v8654, %v8650
        %v9071 = vpack.c.b16 %v8655, %v8651
        %v9072 = vpack.c.b16 %v8656, %v8652
        %v9073 = vpack.c.b16 %v8661, %v8657
        %v9074 = vpack.c.b16 %v8662, %v8658
        %v9075 = vpack.c.b16 %v8663, %v8659
        %v9076 = vpack.c.b16 %v8664, %v8660
        %v9077 = vpack.c.b16 %v8669, %v8665
        %v9078 = vpack.c.b16 %v8670, %v8666
        %v9079 = vpack.c.b16 %v8671, %v8667
        %v9080 = vpack.c.b16 %v8672, %v8668
        %v9081 = vpack.c.b16 %v8677, %v8673
        %v9082 = vpack.c.b16 %v8678, %v8674
        %v9083 = vpack.c.b16 %v8679, %v8675
        %v9084 = vpack.c.b16 %v8680, %v8676
        %v9085 = vpack.c.b16 %v8685, %v8681
        %v9086 = vpack.c.b16 %v8686, %v8682
        %v9087 = vpack.c.b16 %v8687, %v8683
        %v9088 = vpack.c.b16 %v8688, %v8684
        %v9089 = vpack.c.b16 %v8693, %v8689
        %v9090 = vpack.c.b16 %v8694, %v8690
        %v9091 = vpack.c.b16 %v8695, %v8691
        %v9092 = vpack.c.b16 %v8696, %v8692
        %v9093 = vpack.c.b16 %v8701, %v8697
        %v9094 = vpack.c.b16 %v8702, %v8698
        %v9095 = vpack.c.b16 %v8703, %v8699
        %v9096 = vpack.c.b16 %v8704, %v8700
        %v9097 = vpack.c.b16 %v8709, %v8705
        %v9098 = vpack.c.b16 %v8710, %v8706
        %v9099 = vpack.c.b16 %v8711, %v8707
        %v9100 = vpack.c.b16 %v8712, %v8708
        %v9101 = vpack.c.b16 %v8717, %v8713
        %v9102 = vpack.c.b16 %v8718, %v8714
        %v9103 = vpack.c.b16 %v8719, %v8715
        %v9104 = vpack.c.b16 %v8720, %v8716
        %v9105 = vpack.c.b16 %v8725, %v8721
        %v9106 = vpack.c.b16 %v8726, %v8722
        %v9107 = vpack.c.b16 %v8727, %v8723
        %v9108 = vpack.c.b16 %v8728, %v8724
        %v9109 = vpack.c.b16 %v8733, %v8729
        %v9110 = vpack.c.b16 %v8734, %v8730
        %v9111 = vpack.c.b16 %v8735, %v8731
        %v9112 = vpack.c.b16 %v8736, %v8732
        %v9113 = vpack.c.b16 %v8741, %v8737
        %v9114 = vpack.c.b16 %v8742, %v8738
        %v9115 = vpack.c.b16 %v8743, %v8739
        %v9116 = vpack.c.b16 %v8744, %v8740
        %v9117 = vpack.c.b16 %v8749, %v8745
        %v9118 = vpack.c.b16 %v8750, %v8746
        %v9119 = vpack.c.b16 %v8751, %v8747
        %v9120 = vpack.c.b16 %v8752, %v8748
        %v9121 = vpack.c.b16 %v8757, %v8753
        %v9122 = vpack.c.b16 %v8758, %v8754
        %v9123 = vpack.c.b16 %v8759, %v8755
        %v9124 = vpack.c.b16 %v8760, %v8756
        %v9125 = vpack.c.b16 %v8765, %v8761
        %v9126 = vpack.c.b16 %v8766, %v8762
        %v9127 = vpack.c.b16 %v8767, %v8763
        %v9128 = vpack.c.b16 %v8768, %v8764
        %v9129 = vpack.c.b16 %v8773, %v8769
        %v9130 = vpack.c.b16 %v8774, %v8770
        %v9131 = vpack.c.b16 %v8775, %v8771
        %v9132 = vpack.c.b16 %v8776, %v8772
        %v9133 = vpack.c.b16 %v8781, %v8777
        %v9134 = vpack.c.b16 %v8782, %v8778
        %v9135 = vpack.c.b16 %v8783, %v8779
        %v9136 = vpack.c.b16 %v8784, %v8780
        %v9137 = vpack.c.b16 %v8789, %v8785
        %v9138 = vpack.c.b16 %v8790, %v8786
        %v9139 = vpack.c.b16 %v8791, %v8787
        %v9140 = vpack.c.b16 %v8792, %v8788
        %v9141 = vpack.c.b16 %v8797, %v8793
        %v9142 = vpack.c.b16 %v8798, %v8794
        %v9143 = vpack.c.b16 %v8799, %v8795
        %v9144 = vpack.c.b16 %v8800, %v8796
        %v9145 = vpack.c.b16 %v8805, %v8801
        %v9146 = vpack.c.b16 %v8806, %v8802
        %v9147 = vpack.c.b16 %v8807, %v8803
        %v9148 = vpack.c.b16 %v8808, %v8804
        %v9149 = vpack.c.b16 %v8813, %v8809
        %v9150 = vpack.c.b16 %v8814, %v8810
        %v9151 = vpack.c.b16 %v8815, %v8811
        %v9152 = vpack.c.b16 %v8816, %v8812
        %v9153 = vpack.c.b16 %v8821, %v8817
        %v9154 = vpack.c.b16 %v8822, %v8818
        %v9155 = vpack.c.b16 %v8823, %v8819
        %v9156 = vpack.c.b16 %v8824, %v8820
        %v9157 = vpack.c.b16 %v8829, %v8825
        %v9158 = vpack.c.b16 %v8830, %v8826
        %v9159 = vpack.c.b16 %v8831, %v8827
        %v9160 = vpack.c.b16 %v8832, %v8828
        %v9161 = vpack.c.b16 %v8837, %v8833
        %v9162 = vpack.c.b16 %v8838, %v8834
        %v9163 = vpack.c.b16 %v8839, %v8835
        %v9164 = vpack.c.b16 %v8840, %v8836
        %v9165 = vpack.c.b16 %v8845, %v8841
        %v9166 = vpack.c.b16 %v8846, %v8842
        %v9167 = vpack.c.b16 %v8847, %v8843
        %v9168 = vpack.c.b16 %v8848, %v8844
        %v9169 = vpack.c.b16 %v8853, %v8849
        %v9170 = vpack.c.b16 %v8854, %v8850
        %v9171 = vpack.c.b16 %v8855, %v8851
        %v9172 = vpack.c.b16 %v8856, %v8852
        %v9173 = vpack.c.b16 %v8861, %v8857
        %v9174 = vpack.c.b16 %v8862, %v8858
        %v9175 = vpack.c.b16 %v8863, %v8859
        %v9176 = vpack.c.b16 %v8864, %v8860
        %v9177 = vpack.c.b16 %v8869, %v8865
        %v9178 = vpack.c.b16 %v8870, %v8866
        %v9179 = vpack.c.b16 %v8871, %v8867
        %v9180 = vpack.c.b16 %v8872, %v8868
        %v9181 = vpack.c.b16 %v8877, %v8873
        %v9182 = vpack.c.b16 %v8878, %v8874
        %v9183 = vpack.c.b16 %v8879, %v8875
        %v9184 = vpack.c.b16 %v8880, %v8876
        %v9185 = vpack.c.b16 %v8885, %v8881
        %v9186 = vpack.c.b16 %v8886, %v8882
        %v9187 = vpack.c.b16 %v8887, %v8883
        %v9188 = vpack.c.b16 %v8888, %v8884
        %v9189 = vpack.c.b16 %v8893, %v8889
        %v9190 = vpack.c.b16 %v8894, %v8890
        %v9191 = vpack.c.b16 %v8895, %v8891
        %v9192 = vpack.c.b16 %v8896, %v8892
        %v9193 = vpack.c.b16 %v8901, %v8897
        %v9194 = vpack.c.b16 %v8902, %v8898
        %v9195 = vpack.c.b16 %v8903, %v8899
        %v9196 = vpack.c.b16 %v8904, %v8900
        %v9197 = vpack.c.b16 %v8909, %v8905
        %v9198 = vpack.c.b16 %v8910, %v8906
        %v9199 = vpack.c.b16 %v8911, %v8907
        %v9200 = vpack.c.b16 %v8912, %v8908
        %v9201 = vpack.c.b16 %v8917, %v8913
        %v9202 = vpack.c.b16 %v8918, %v8914
        %v9203 = vpack.c.b16 %v8919, %v8915
        %v9204 = vpack.c.b16 %v8920, %v8916
        %v9205 = vpack.c.b16 %v8925, %v8921
        %v9206 = vpack.c.b16 %v8926, %v8922
        %v9207 = vpack.c.b16 %v8927, %v8923
        %v9208 = vpack.c.b16 %v8928, %v8924
        %v9209 = vpack.c.b16 %v8933, %v8929
        %v9210 = vpack.c.b16 %v8934, %v8930
        %v9211 = vpack.c.b16 %v8935, %v8931
        %v9212 = vpack.c.b16 %v8936, %v8932
        %v9213 = vpack.c.b16 %v8941, %v8937
        %v9214 = vpack.c.b16 %v8942, %v8938
        %v9215 = vpack.c.b16 %v8943, %v8939
        %v9216 = vpack.c.b16 %v8944, %v8940
        %v9217 = vpack.c.b16 %v8949, %v8945
        %v9218 = vpack.c.b16 %v8950, %v8946
        %v9219 = vpack.c.b16 %v8951, %v8947
        %v9220 = vpack.c.b16 %v8952, %v8948
        %v9221 = vpack.c.b16 %v8957, %v8953
        %v9222 = vpack.c.b16 %v8958, %v8954
        %v9223 = vpack.c.b16 %v8959, %v8955
        %v9224 = vpack.c.b16 %v8960, %v8956
        %v9225 = vpack.c.b16 %v8965, %v8961
        %v9226 = vpack.c.b16 %v8966, %v8962
        %v9227 = vpack.c.b16 %v8967, %v8963
        %v9228 = vpack.c.b16 %v8968, %v8964
        %v9229 = vpack.c.b16 %v8973, %v8969
        %v9230 = vpack.c.b16 %v8974, %v8970
        %v9231 = vpack.c.b16 %v8975, %v8971
        %v9232 = vpack.c.b16 %v8976, %v8972
        %v9490 = vperm.slane %v8190, 0
        %v9491 = vperm.slane %v8190, 1
        %v9492 = vperm.slane %v8190, 2
        %v9493 = vperm.slane %v8190, 3
        %9498 = vmatpush.bf16.msra.mxu0 %v9005
        %9499 = vmatpush.bf16.msra.mxu0 %v9001
        %9500 = vmatpush.bf16.msra.mxu0 %v8997
        %9501 = vmatpush.bf16.msra.mxu0 %v8993
        %9502 = vmatpush.bf16.msra.mxu0 %v8989
        %9503 = vmatpush.bf16.msra.mxu0 %v8985
        %9504 = vmatpush.bf16.msra.mxu0 %v8981
        %9505 = vmatpush.bf16.msra.mxu0 %v8977
        %9506 = vmatmul.bf16.gmra.mxu0 %v8193
        %v9507 = vpop.f32.mrf.mxu0
        %v9508 = vadd.f32 %v9490, %v9507
        %v9509 = vpop.f32.mrf.mxu0
        %9510 = vdwg.mxu0
        %9511 = vmatpush.bf16.msra.mxu0 %v9037
        %9512 = vmatpush.bf16.msra.mxu0 %v9033
        %9513 = vmatpush.bf16.msra.mxu0 %v9029
        %9514 = vmatpush.bf16.msra.mxu0 %v9025
        %9515 = vmatpush.bf16.msra.mxu0 %v9021
        %9516 = vmatpush.bf16.msra.mxu0 %v9017
        %9517 = vmatpush.bf16.msra.mxu0 %v9013
        %9518 = vmatpush.bf16.msra.mxu0 %v9009
        %9519 = vmatmul.bf16.gmra.mxu0 %v8194
        %v9520 = vpop.f32.mrf.mxu0
        %v9521 = vadd.f32 %v9508, %v9520
        %v9522 = vpop.f32.mrf.mxu0
        %9523 = vdwg.mxu0
        %9524 = vmatpush.bf16.msra.mxu0 %v9069
        %9525 = vmatpush.bf16.msra.mxu0 %v9065
        %9526 = vmatpush.bf16.msra.mxu0 %v9061
        %9527 = vmatpush.bf16.msra.mxu0 %v9057
        %9528 = vmatpush.bf16.msra.mxu0 %v9053
        %9529 = vmatpush.bf16.msra.mxu0 %v9049
        %9530 = vmatpush.bf16.msra.mxu0 %v9045
        %9531 = vmatpush.bf16.msra.mxu0 %v9041
        %9532 = vmatmul.bf16.gmra.mxu0 %v8195
        %v9533 = vpop.f32.mrf.mxu0
        %v9534 = vadd.f32 %v9521, %v9533
        %v9535 = vpop.f32.mrf.mxu0
        %9536 = vdwg.mxu0
        %9537 = vmatpush.bf16.msra.mxu0 %v9101
        %9538 = vmatpush.bf16.msra.mxu0 %v9097
        %9539 = vmatpush.bf16.msra.mxu0 %v9093
        %9540 = vmatpush.bf16.msra.mxu0 %v9089
        %9541 = vmatpush.bf16.msra.mxu0 %v9085
        %9542 = vmatpush.bf16.msra.mxu0 %v9081
        %9543 = vmatpush.bf16.msra.mxu0 %v9077
        %9544 = vmatpush.bf16.msra.mxu0 %v9073
        %9545 = vmatmul.bf16.gmra.mxu0 %v8196
        %v9546 = vpop.f32.mrf.mxu0
        %v9547 = vadd.f32 %v9534, %v9546
        %v9548 = vpop.f32.mrf.mxu0
        %9549 = vdwg.mxu0
        %9550 = vmatpush.bf16.msra.mxu0 %v9133
        %9551 = vmatpush.bf16.msra.mxu0 %v9129
        %9552 = vmatpush.bf16.msra.mxu0 %v9125
        %9553 = vmatpush.bf16.msra.mxu0 %v9121
        %9554 = vmatpush.bf16.msra.mxu0 %v9117
        %9555 = vmatpush.bf16.msra.mxu0 %v9113
        %9556 = vmatpush.bf16.msra.mxu0 %v9109
        %9557 = vmatpush.bf16.msra.mxu0 %v9105
        %9558 = vmatmul.bf16.gmra.mxu0 %v8197
        %v9559 = vpop.f32.mrf.mxu0
        %v9560 = vadd.f32 %v9547, %v9559
        %v9561 = vpop.f32.mrf.mxu0
        %9562 = vdwg.mxu0
        %9563 = vmatpush.bf16.msra.mxu0 %v9165
        %9564 = vmatpush.bf16.msra.mxu0 %v9161
        %9565 = vmatpush.bf16.msra.mxu0 %v9157
        %9566 = vmatpush.bf16.msra.mxu0 %v9153
        %9567 = vmatpush.bf16.msra.mxu0 %v9149
        %9568 = vmatpush.bf16.msra.mxu0 %v9145
        %9569 = vmatpush.bf16.msra.mxu0 %v9141
        %9570 = vmatpush.bf16.msra.mxu0 %v9137
        %9571 = vmatmul.bf16.gmra.mxu0 %v8198
        %v9572 = vpop.f32.mrf.mxu0
        %v9573 = vadd.f32 %v9560, %v9572
        %v9574 = vpop.f32.mrf.mxu0
        %9575 = vdwg.mxu0
        %9576 = vmatpush.bf16.msra.mxu0 %v9197
        %9577 = vmatpush.bf16.msra.mxu0 %v9193
        %9578 = vmatpush.bf16.msra.mxu0 %v9189
        %9579 = vmatpush.bf16.msra.mxu0 %v9185
        %9580 = vmatpush.bf16.msra.mxu0 %v9181
        %9581 = vmatpush.bf16.msra.mxu0 %v9177
        %9582 = vmatpush.bf16.msra.mxu0 %v9173
        %9583 = vmatpush.bf16.msra.mxu0 %v9169
        %9584 = vmatmul.bf16.gmra.mxu0 %v8199
        %v9585 = vpop.f32.mrf.mxu0
        %v9586 = vadd.f32 %v9573, %v9585
        %v9587 = vpop.f32.mrf.mxu0
        %9588 = vdwg.mxu0
        %9589 = vmatpush.bf16.msra.mxu0 %v9229
        %9590 = vmatpush.bf16.msra.mxu0 %v9225
        %9591 = vmatpush.bf16.msra.mxu0 %v9221
        %9592 = vmatpush.bf16.msra.mxu0 %v9217
        %9593 = vmatpush.bf16.msra.mxu0 %v9213
        %9594 = vmatpush.bf16.msra.mxu0 %v9209
        %9595 = vmatpush.bf16.msra.mxu0 %v9205
        %9596 = vmatpush.bf16.msra.mxu0 %v9201
        %9597 = vmatmul.bf16.gmra.mxu0 %v8200
        %v9598 = vpop.f32.mrf.mxu0
        %v9599 = vadd.f32 %v9586, %v9598
        %v9600 = vpop.f32.mrf.mxu0
        %9601 = vdwg.mxu0
        %9602 = vmatpush.bf16.msra.mxu0 %v9006
        %9603 = vmatpush.bf16.msra.mxu0 %v9002
        %9604 = vmatpush.bf16.msra.mxu0 %v8998
        %9605 = vmatpush.bf16.msra.mxu0 %v8994
        %9606 = vmatpush.bf16.msra.mxu0 %v8990
        %9607 = vmatpush.bf16.msra.mxu0 %v8986
        %9608 = vmatpush.bf16.msra.mxu0 %v8982
        %9609 = vmatpush.bf16.msra.mxu0 %v8978
        %9610 = vmatmul.bf16.gmra.mxu0 %v8193
        %v9611 = vpop.f32.mrf.mxu0
        %v9612 = vadd.f32 %v9491, %v9611
        %v9613 = vpop.f32.mrf.mxu0
        %9614 = vdwg.mxu0
        %9615 = vmatpush.bf16.msra.mxu0 %v9038
        %9616 = vmatpush.bf16.msra.mxu0 %v9034
        %9617 = vmatpush.bf16.msra.mxu0 %v9030
        %9618 = vmatpush.bf16.msra.mxu0 %v9026
        %9619 = vmatpush.bf16.msra.mxu0 %v9022
        %9620 = vmatpush.bf16.msra.mxu0 %v9018
        %9621 = vmatpush.bf16.msra.mxu0 %v9014
        %9622 = vmatpush.bf16.msra.mxu0 %v9010
        %9623 = vmatmul.bf16.gmra.mxu0 %v8194
        %v9624 = vpop.f32.mrf.mxu0
        %v9625 = vadd.f32 %v9612, %v9624
        %v9626 = vpop.f32.mrf.mxu0
        %9627 = vdwg.mxu0
        %9628 = vmatpush.bf16.msra.mxu0 %v9070
        %9629 = vmatpush.bf16.msra.mxu0 %v9066
        %9630 = vmatpush.bf16.msra.mxu0 %v9062
        %9631 = vmatpush.bf16.msra.mxu0 %v9058
        %9632 = vmatpush.bf16.msra.mxu0 %v9054
        %9633 = vmatpush.bf16.msra.mxu0 %v9050
        %9634 = vmatpush.bf16.msra.mxu0 %v9046
        %9635 = vmatpush.bf16.msra.mxu0 %v9042
        %9636 = vmatmul.bf16.gmra.mxu0 %v8195
        %v9637 = vpop.f32.mrf.mxu0
        %v9638 = vadd.f32 %v9625, %v9637
        %v9639 = vpop.f32.mrf.mxu0
        %9640 = vdwg.mxu0
        %9641 = vmatpush.bf16.msra.mxu0 %v9102
        %9642 = vmatpush.bf16.msra.mxu0 %v9098
        %9643 = vmatpush.bf16.msra.mxu0 %v9094
        %9644 = vmatpush.bf16.msra.mxu0 %v9090
        %9645 = vmatpush.bf16.msra.mxu0 %v9086
        %9646 = vmatpush.bf16.msra.mxu0 %v9082
        %9647 = vmatpush.bf16.msra.mxu0 %v9078
        %9648 = vmatpush.bf16.msra.mxu0 %v9074
        %9649 = vmatmul.bf16.gmra.mxu0 %v8196
        %v9650 = vpop.f32.mrf.mxu0
        %v9651 = vadd.f32 %v9638, %v9650
        %v9652 = vpop.f32.mrf.mxu0
        %9653 = vdwg.mxu0
        %9654 = vmatpush.bf16.msra.mxu0 %v9134
        %9655 = vmatpush.bf16.msra.mxu0 %v9130
        %9656 = vmatpush.bf16.msra.mxu0 %v9126
        %9657 = vmatpush.bf16.msra.mxu0 %v9122
        %9658 = vmatpush.bf16.msra.mxu0 %v9118
        %9659 = vmatpush.bf16.msra.mxu0 %v9114
        %9660 = vmatpush.bf16.msra.mxu0 %v9110
        %9661 = vmatpush.bf16.msra.mxu0 %v9106
        %9662 = vmatmul.bf16.gmra.mxu0 %v8197
        %v9663 = vpop.f32.mrf.mxu0
        %v9664 = vadd.f32 %v9651, %v9663
        %v9665 = vpop.f32.mrf.mxu0
        %9666 = vdwg.mxu0
        %9667 = vmatpush.bf16.msra.mxu0 %v9166
        %9668 = vmatpush.bf16.msra.mxu0 %v9162
        %9669 = vmatpush.bf16.msra.mxu0 %v9158
        %9670 = vmatpush.bf16.msra.mxu0 %v9154
        %9671 = vmatpush.bf16.msra.mxu0 %v9150
        %9672 = vmatpush.bf16.msra.mxu0 %v9146
        %9673 = vmatpush.bf16.msra.mxu0 %v9142
        %9674 = vmatpush.bf16.msra.mxu0 %v9138
        %9675 = vmatmul.bf16.gmra.mxu0 %v8198
        %v9676 = vpop.f32.mrf.mxu0
        %v9677 = vadd.f32 %v9664, %v9676
        %v9678 = vpop.f32.mrf.mxu0
        %9679 = vdwg.mxu0
        %9680 = vmatpush.bf16.msra.mxu0 %v9198
        %9681 = vmatpush.bf16.msra.mxu0 %v9194
        %9682 = vmatpush.bf16.msra.mxu0 %v9190
        %9683 = vmatpush.bf16.msra.mxu0 %v9186
        %9684 = vmatpush.bf16.msra.mxu0 %v9182
        %9685 = vmatpush.bf16.msra.mxu0 %v9178
        %9686 = vmatpush.bf16.msra.mxu0 %v9174
        %9687 = vmatpush.bf16.msra.mxu0 %v9170
        %9688 = vmatmul.bf16.gmra.mxu0 %v8199
        %v9689 = vpop.f32.mrf.mxu0
        %v9690 = vadd.f32 %v9677, %v9689
        %v9691 = vpop.f32.mrf.mxu0
        %9692 = vdwg.mxu0
        %9693 = vmatpush.bf16.msra.mxu0 %v9230
        %9694 = vmatpush.bf16.msra.mxu0 %v9226
        %9695 = vmatpush.bf16.msra.mxu0 %v9222
        %9696 = vmatpush.bf16.msra.mxu0 %v9218
        %9697 = vmatpush.bf16.msra.mxu0 %v9214
        %9698 = vmatpush.bf16.msra.mxu0 %v9210
        %9699 = vmatpush.bf16.msra.mxu0 %v9206
        %9700 = vmatpush.bf16.msra.mxu0 %v9202
        %9701 = vmatmul.bf16.gmra.mxu0 %v8200
        %v9702 = vpop.f32.mrf.mxu0
        %v9703 = vadd.f32 %v9690, %v9702
        %v9704 = vpop.f32.mrf.mxu0
        %9705 = vdwg.mxu0
        %9706 = vmatpush.bf16.msra.mxu0 %v9007
        %9707 = vmatpush.bf16.msra.mxu0 %v9003
        %9708 = vmatpush.bf16.msra.mxu0 %v8999
        %9709 = vmatpush.bf16.msra.mxu0 %v8995
        %9710 = vmatpush.bf16.msra.mxu0 %v8991
        %9711 = vmatpush.bf16.msra.mxu0 %v8987
        %9712 = vmatpush.bf16.msra.mxu0 %v8983
        %9713 = vmatpush.bf16.msra.mxu0 %v8979
        %9714 = vmatmul.bf16.gmra.mxu0 %v8193
        %v9715 = vpop.f32.mrf.mxu0
        %v9716 = vadd.f32 %v9492, %v9715
        %v9717 = vpop.f32.mrf.mxu0
        %9718 = vdwg.mxu0
        %9719 = vmatpush.bf16.msra.mxu0 %v9039
        %9720 = vmatpush.bf16.msra.mxu0 %v9035
        %9721 = vmatpush.bf16.msra.mxu0 %v9031
        %9722 = vmatpush.bf16.msra.mxu0 %v9027
        %9723 = vmatpush.bf16.msra.mxu0 %v9023
        %9724 = vmatpush.bf16.msra.mxu0 %v9019
        %9725 = vmatpush.bf16.msra.mxu0 %v9015
        %9726 = vmatpush.bf16.msra.mxu0 %v9011
        %9727 = vmatmul.bf16.gmra.mxu0 %v8194
        %v9728 = vpop.f32.mrf.mxu0
        %v9729 = vadd.f32 %v9716, %v9728
        %v9730 = vpop.f32.mrf.mxu0
        %9731 = vdwg.mxu0
        %9732 = vmatpush.bf16.msra.mxu0 %v9071
        %9733 = vmatpush.bf16.msra.mxu0 %v9067
        %9734 = vmatpush.bf16.msra.mxu0 %v9063
        %9735 = vmatpush.bf16.msra.mxu0 %v9059
        %9736 = vmatpush.bf16.msra.mxu0 %v9055
        %9737 = vmatpush.bf16.msra.mxu0 %v9051
        %9738 = vmatpush.bf16.msra.mxu0 %v9047
        %9739 = vmatpush.bf16.msra.mxu0 %v9043
        %9740 = vmatmul.bf16.gmra.mxu0 %v8195
        %v9741 = vpop.f32.mrf.mxu0
        %v9742 = vadd.f32 %v9729, %v9741
        %v9743 = vpop.f32.mrf.mxu0
        %9744 = vdwg.mxu0
        %9745 = vmatpush.bf16.msra.mxu0 %v9103
        %9746 = vmatpush.bf16.msra.mxu0 %v9099
        %9747 = vmatpush.bf16.msra.mxu0 %v9095
        %9748 = vmatpush.bf16.msra.mxu0 %v9091
        %9749 = vmatpush.bf16.msra.mxu0 %v9087
        %9750 = vmatpush.bf16.msra.mxu0 %v9083
        %9751 = vmatpush.bf16.msra.mxu0 %v9079
        %9752 = vmatpush.bf16.msra.mxu0 %v9075
        %9753 = vmatmul.bf16.gmra.mxu0 %v8196
        %v9754 = vpop.f32.mrf.mxu0
        %v9755 = vadd.f32 %v9742, %v9754
        %v9756 = vpop.f32.mrf.mxu0
        %9757 = vdwg.mxu0
        %9758 = vmatpush.bf16.msra.mxu0 %v9135
        %9759 = vmatpush.bf16.msra.mxu0 %v9131
        %9760 = vmatpush.bf16.msra.mxu0 %v9127
        %9761 = vmatpush.bf16.msra.mxu0 %v9123
        %9762 = vmatpush.bf16.msra.mxu0 %v9119
        %9763 = vmatpush.bf16.msra.mxu0 %v9115
        %9764 = vmatpush.bf16.msra.mxu0 %v9111
        %9765 = vmatpush.bf16.msra.mxu0 %v9107
        %9766 = vmatmul.bf16.gmra.mxu0 %v8197
        %v9767 = vpop.f32.mrf.mxu0
        %v9768 = vadd.f32 %v9755, %v9767
        %v9769 = vpop.f32.mrf.mxu0
        %9770 = vdwg.mxu0
        %9771 = vmatpush.bf16.msra.mxu0 %v9167
        %9772 = vmatpush.bf16.msra.mxu0 %v9163
        %9773 = vmatpush.bf16.msra.mxu0 %v9159
        %9774 = vmatpush.bf16.msra.mxu0 %v9155
        %9775 = vmatpush.bf16.msra.mxu0 %v9151
        %9776 = vmatpush.bf16.msra.mxu0 %v9147
        %9777 = vmatpush.bf16.msra.mxu0 %v9143
        %9778 = vmatpush.bf16.msra.mxu0 %v9139
        %9779 = vmatmul.bf16.gmra.mxu0 %v8198
        %v9780 = vpop.f32.mrf.mxu0
        %v9781 = vadd.f32 %v9768, %v9780
        %v9782 = vpop.f32.mrf.mxu0
        %9783 = vdwg.mxu0
        %9784 = vmatpush.bf16.msra.mxu0 %v9199
        %9785 = vmatpush.bf16.msra.mxu0 %v9195
        %9786 = vmatpush.bf16.msra.mxu0 %v9191
        %9787 = vmatpush.bf16.msra.mxu0 %v9187
        %9788 = vmatpush.bf16.msra.mxu0 %v9183
        %9789 = vmatpush.bf16.msra.mxu0 %v9179
        %9790 = vmatpush.bf16.msra.mxu0 %v9175
        %9791 = vmatpush.bf16.msra.mxu0 %v9171
        %9792 = vmatmul.bf16.gmra.mxu0 %v8199
        %v9793 = vpop.f32.mrf.mxu0
        %v9794 = vadd.f32 %v9781, %v9793
        %v9795 = vpop.f32.mrf.mxu0
        %9796 = vdwg.mxu0
        %9797 = vmatpush.bf16.msra.mxu0 %v9231
        %9798 = vmatpush.bf16.msra.mxu0 %v9227
        %9799 = vmatpush.bf16.msra.mxu0 %v9223
        %9800 = vmatpush.bf16.msra.mxu0 %v9219
        %9801 = vmatpush.bf16.msra.mxu0 %v9215
        %9802 = vmatpush.bf16.msra.mxu0 %v9211
        %9803 = vmatpush.bf16.msra.mxu0 %v9207
        %9804 = vmatpush.bf16.msra.mxu0 %v9203
        %9805 = vmatmul.bf16.gmra.mxu0 %v8200
        %v9806 = vpop.f32.mrf.mxu0
        %v9807 = vadd.f32 %v9794, %v9806
        %v9808 = vpop.f32.mrf.mxu0
        %9809 = vdwg.mxu0
        %9810 = vmatpush.bf16.msra.mxu0 %v9008
        %9811 = vmatpush.bf16.msra.mxu0 %v9004
        %9812 = vmatpush.bf16.msra.mxu0 %v9000
        %9813 = vmatpush.bf16.msra.mxu0 %v8996
        %9814 = vmatpush.bf16.msra.mxu0 %v8992
        %9815 = vmatpush.bf16.msra.mxu0 %v8988
        %9816 = vmatpush.bf16.msra.mxu0 %v8984
        %9817 = vmatpush.bf16.msra.mxu0 %v8980
        %9818 = vmatmul.bf16.gmra.mxu0 %v8193
        %v9819 = vpop.f32.mrf.mxu0
        %v9820 = vadd.f32 %v9493, %v9819
        %v9821 = vpop.f32.mrf.mxu0
        %9822 = vdwg.mxu0
        %9823 = vmatpush.bf16.msra.mxu0 %v9040
        %9824 = vmatpush.bf16.msra.mxu0 %v9036
        %9825 = vmatpush.bf16.msra.mxu0 %v9032
        %9826 = vmatpush.bf16.msra.mxu0 %v9028
        %9827 = vmatpush.bf16.msra.mxu0 %v9024
        %9828 = vmatpush.bf16.msra.mxu0 %v9020
        %9829 = vmatpush.bf16.msra.mxu0 %v9016
        %9830 = vmatpush.bf16.msra.mxu0 %v9012
        %9831 = vmatmul.bf16.gmra.mxu0 %v8194
        %v9832 = vpop.f32.mrf.mxu0
        %v9833 = vadd.f32 %v9820, %v9832
        %v9834 = vpop.f32.mrf.mxu0
        %9835 = vdwg.mxu0
        %9836 = vmatpush.bf16.msra.mxu0 %v9072
        %9837 = vmatpush.bf16.msra.mxu0 %v9068
        %9838 = vmatpush.bf16.msra.mxu0 %v9064
        %9839 = vmatpush.bf16.msra.mxu0 %v9060
        %9840 = vmatpush.bf16.msra.mxu0 %v9056
        %9841 = vmatpush.bf16.msra.mxu0 %v9052
        %9842 = vmatpush.bf16.msra.mxu0 %v9048
        %9843 = vmatpush.bf16.msra.mxu0 %v9044
        %9844 = vmatmul.bf16.gmra.mxu0 %v8195
        %v9845 = vpop.f32.mrf.mxu0
        %v9846 = vadd.f32 %v9833, %v9845
        %v9847 = vpop.f32.mrf.mxu0
        %9848 = vdwg.mxu0
        %9849 = vmatpush.bf16.msra.mxu0 %v9104
        %9850 = vmatpush.bf16.msra.mxu0 %v9100
        %9851 = vmatpush.bf16.msra.mxu0 %v9096
        %9852 = vmatpush.bf16.msra.mxu0 %v9092
        %9853 = vmatpush.bf16.msra.mxu0 %v9088
        %9854 = vmatpush.bf16.msra.mxu0 %v9084
        %9855 = vmatpush.bf16.msra.mxu0 %v9080
        %9856 = vmatpush.bf16.msra.mxu0 %v9076
        %9857 = vmatmul.bf16.gmra.mxu0 %v8196
        %v9858 = vpop.f32.mrf.mxu0
        %v9859 = vadd.f32 %v9846, %v9858
        %v9860 = vpop.f32.mrf.mxu0
        %9861 = vdwg.mxu0
        %9862 = vmatpush.bf16.msra.mxu0 %v9136
        %9863 = vmatpush.bf16.msra.mxu0 %v9132
        %9864 = vmatpush.bf16.msra.mxu0 %v9128
        %9865 = vmatpush.bf16.msra.mxu0 %v9124
        %9866 = vmatpush.bf16.msra.mxu0 %v9120
        %9867 = vmatpush.bf16.msra.mxu0 %v9116
        %9868 = vmatpush.bf16.msra.mxu0 %v9112
        %9869 = vmatpush.bf16.msra.mxu0 %v9108
        %9870 = vmatmul.bf16.gmra.mxu0 %v8197
        %v9871 = vpop.f32.mrf.mxu0
        %v9872 = vadd.f32 %v9859, %v9871
        %v9873 = vpop.f32.mrf.mxu0
        %9874 = vdwg.mxu0
        %9875 = vmatpush.bf16.msra.mxu0 %v9168
        %9876 = vmatpush.bf16.msra.mxu0 %v9164
        %9877 = vmatpush.bf16.msra.mxu0 %v9160
        %9878 = vmatpush.bf16.msra.mxu0 %v9156
        %9879 = vmatpush.bf16.msra.mxu0 %v9152
        %9880 = vmatpush.bf16.msra.mxu0 %v9148
        %9881 = vmatpush.bf16.msra.mxu0 %v9144
        %9882 = vmatpush.bf16.msra.mxu0 %v9140
        %9883 = vmatmul.bf16.gmra.mxu0 %v8198
        %v9884 = vpop.f32.mrf.mxu0
        %v9885 = vadd.f32 %v9872, %v9884
        %v9886 = vpop.f32.mrf.mxu0
        %9887 = vdwg.mxu0
        %9888 = vmatpush.bf16.msra.mxu0 %v9200
        %9889 = vmatpush.bf16.msra.mxu0 %v9196
        %9890 = vmatpush.bf16.msra.mxu0 %v9192
        %9891 = vmatpush.bf16.msra.mxu0 %v9188
        %9892 = vmatpush.bf16.msra.mxu0 %v9184
        %9893 = vmatpush.bf16.msra.mxu0 %v9180
        %9894 = vmatpush.bf16.msra.mxu0 %v9176
        %9895 = vmatpush.bf16.msra.mxu0 %v9172
        %9896 = vmatmul.bf16.gmra.mxu0 %v8199
        %v9897 = vpop.f32.mrf.mxu0
        %v9898 = vadd.f32 %v9885, %v9897
        %v9899 = vpop.f32.mrf.mxu0
        %9900 = vdwg.mxu0
        %9901 = vmatpush.bf16.msra.mxu0 %v9232
        %9902 = vmatpush.bf16.msra.mxu0 %v9228
        %9903 = vmatpush.bf16.msra.mxu0 %v9224
        %9904 = vmatpush.bf16.msra.mxu0 %v9220
        %9905 = vmatpush.bf16.msra.mxu0 %v9216
        %9906 = vmatpush.bf16.msra.mxu0 %v9212
        %9907 = vmatpush.bf16.msra.mxu0 %v9208
        %9908 = vmatpush.bf16.msra.mxu0 %v9204
        %9909 = vmatmul.bf16.gmra.mxu0 %v8200
        %v9910 = vpop.f32.mrf.mxu0
        %v9911 = vadd.f32 %v9898, %v9910
        %v9912 = vpop.f32.mrf.mxu0
        %9913 = vdwg.mxu0
        %v9914 = vmax.f32 %v9599, 0.0
        %v9915 = vmax.f32 %v9703, 0.0
        %v9916 = vmax.f32 %v9807, 0.0
        %v9917 = vmax.f32 %v9911, 0.0
        %v9918 = vpack.c.bf16 %v9914, %v9914
        %v9919 = vpack.c.bf16 %v9915, %v9915
        %v9920 = vpack.c.bf16 %v9916, %v9916
        %v9921 = vpack.c.bf16 %v9917, %v9917
        %v9922 = vld [vmem:[%s9] sm:$0xff]
        %v9923 = vld [vmem:[%s9 + $0x8] sm:$0xff]
        %v9924 = vld [vmem:[%s9 + $0x10] sm:$0xff]
        %v9925 = vld [vmem:[%s9 + $0x18] sm:$0xff]
        %v9926 = vld [vmem:[%s9 + $0x20] sm:$0xff]
        %v9927 = vld [vmem:[%s9 + $0x28] sm:$0xff]
        %v9928 = vld [vmem:[%s9 + $0x30] sm:$0xff]
        %v9929 = vld [vmem:[%s9 + $0x38] sm:$0xff]
        %v9930 = vld [vmem:[%s9 + $0x40] sm:$0xff]
        %v9931 = vld [vmem:[%s9 + $0x48] sm:$0xff]
        %v9932 = vld [vmem:[%s9 + $0x50] sm:$0xff]
        %v9933 = vld [vmem:[%s9 + $0x58] sm:$0xff]
        %v9934 = vld [vmem:[%s9 + $0x60] sm:$0xff]
        %v9935 = vld [vmem:[%s9 + $0x68] sm:$0xff]
        %v9936 = vld [vmem:[%s9 + $0x70] sm:$0xff]
        %v9937 = vld [vmem:[%s9 + $0x78] sm:$0xff]
        %v9938 = vld [vmem:[%s9 + $0x80] sm:$0xff]
        %v9939 = vld [vmem:[%s9 + $0x88] sm:$0xff]
        %v9940 = vld [vmem:[%s9 + $0x90] sm:$0xff]
        %v9941 = vld [vmem:[%s9 + $0x98] sm:$0xff]
        %v9942 = vld [vmem:[%s9 + $0xa0] sm:$0xff]
        %v9943 = vld [vmem:[%s9 + $0xa8] sm:$0xff]
        %v9944 = vld [vmem:[%s9 + $0xb0] sm:$0xff]
        %v9945 = vld [vmem:[%s9 + $0xb8] sm:$0xff]
        %v9946 = vld [vmem:[%s9 + $0xc0] sm:$0xff]
        %v9947 = vld [vmem:[%s9 + $0xc8] sm:$0xff]
        %v9948 = vld [vmem:[%s9 + $0xd0] sm:$0xff]
        %v9949 = vld [vmem:[%s9 + $0xd8] sm:$0xff]
        %v9950 = vld [vmem:[%s9 + $0xe0] sm:$0xff]
        %v9951 = vld [vmem:[%s9 + $0xe8] sm:$0xff]
        %v9952 = vld [vmem:[%s9 + $0xf0] sm:$0xff]
        %v9953 = vld [vmem:[%s9 + $0xf8] sm:$0xff]
        %v9954 = vld [vmem:[%s9 + $0x100] sm:$0xff]
        %v9955 = vld [vmem:[%s9 + $0x108] sm:$0xff]
        %v9956 = vld [vmem:[%s9 + $0x110] sm:$0xff]
        %v9957 = vld [vmem:[%s9 + $0x118] sm:$0xff]
        %v9958 = vld [vmem:[%s9 + $0x120] sm:$0xff]
        %v9959 = vld [vmem:[%s9 + $0x128] sm:$0xff]
        %v9960 = vld [vmem:[%s9 + $0x130] sm:$0xff]
        %v9961 = vld [vmem:[%s9 + $0x138] sm:$0xff]
        %v9962 = vld [vmem:[%s9 + $0x140] sm:$0xff]
        %v9963 = vld [vmem:[%s9 + $0x148] sm:$0xff]
        %v9964 = vld [vmem:[%s9 + $0x150] sm:$0xff]
        %v9965 = vld [vmem:[%s9 + $0x158] sm:$0xff]
        %v9966 = vld [vmem:[%s9 + $0x160] sm:$0xff]
        %v9967 = vld [vmem:[%s9 + $0x168] sm:$0xff]
        %v9968 = vld [vmem:[%s9 + $0x170] sm:$0xff]
        %v9969 = vld [vmem:[%s9 + $0x178] sm:$0xff]
        %v9970 = vld [vmem:[%s9 + $0x180] sm:$0xff]
        %v9971 = vld [vmem:[%s9 + $0x188] sm:$0xff]
        %v9972 = vld [vmem:[%s9 + $0x190] sm:$0xff]
        %v9973 = vld [vmem:[%s9 + $0x198] sm:$0xff]
        %v9974 = vld [vmem:[%s9 + $0x1a0] sm:$0xff]
        %v9975 = vld [vmem:[%s9 + $0x1a8] sm:$0xff]
        %v9976 = vld [vmem:[%s9 + $0x1b0] sm:$0xff]
        %v9977 = vld [vmem:[%s9 + $0x1b8] sm:$0xff]
        %v9978 = vld [vmem:[%s9 + $0x1c0] sm:$0xff]
        %v9979 = vld [vmem:[%s9 + $0x1c8] sm:$0xff]
        %v9980 = vld [vmem:[%s9 + $0x1d0] sm:$0xff]
        %v9981 = vld [vmem:[%s9 + $0x1d8] sm:$0xff]
        %v9982 = vld [vmem:[%s9 + $0x1e0] sm:$0xff]
        %v9983 = vld [vmem:[%s9 + $0x1e8] sm:$0xff]
        %v9984 = vld [vmem:[%s9 + $0x1f0] sm:$0xff]
        %v9985 = vld [vmem:[%s9 + $0x1f8] sm:$0xff]
        %v9986 = vld [vmem:[%s10] sm:$0x3]
        %v10051 = vunpack.c.l.b16 %v9922
        %v10052 = vunpack.c.h.b16 %v9922
        %v10053 = vunpack.c.l.b16 %v9923
        %v10054 = vunpack.c.h.b16 %v9923
        %v10055 = vunpack.c.l.b16 %v9924
        %v10056 = vunpack.c.h.b16 %v9924
        %v10057 = vunpack.c.l.b16 %v9925
        %v10058 = vunpack.c.h.b16 %v9925
        %v10059 = vunpack.c.l.b16 %v9926
        %v10060 = vunpack.c.h.b16 %v9926
        %v10061 = vunpack.c.l.b16 %v9927
        %v10062 = vunpack.c.h.b16 %v9927
        %v10063 = vunpack.c.l.b16 %v9928
        %v10064 = vunpack.c.h.b16 %v9928
        %v10065 = vunpack.c.l.b16 %v9929
        %v10066 = vunpack.c.h.b16 %v9929
        %v10067 = vunpack.c.l.b16 %v9930
        %v10068 = vunpack.c.h.b16 %v9930
        %v10069 = vunpack.c.l.b16 %v9931
        %v10070 = vunpack.c.h.b16 %v9931
        %v10071 = vunpack.c.l.b16 %v9932
        %v10072 = vunpack.c.h.b16 %v9932
        %v10073 = vunpack.c.l.b16 %v9933
        %v10074 = vunpack.c.h.b16 %v9933
        %v10075 = vunpack.c.l.b16 %v9934
        %v10076 = vunpack.c.h.b16 %v9934
        %v10077 = vunpack.c.l.b16 %v9935
        %v10078 = vunpack.c.h.b16 %v9935
        %v10079 = vunpack.c.l.b16 %v9936
        %v10080 = vunpack.c.h.b16 %v9936
        %v10081 = vunpack.c.l.b16 %v9937
        %v10082 = vunpack.c.h.b16 %v9937
        %v10083 = vunpack.c.l.b16 %v9938
        %v10084 = vunpack.c.h.b16 %v9938
        %v10085 = vunpack.c.l.b16 %v9939
        %v10086 = vunpack.c.h.b16 %v9939
        %v10087 = vunpack.c.l.b16 %v9940
        %v10088 = vunpack.c.h.b16 %v9940
        %v10089 = vunpack.c.l.b16 %v9941
        %v10090 = vunpack.c.h.b16 %v9941
        %v10091 = vunpack.c.l.b16 %v9942
        %v10092 = vunpack.c.h.b16 %v9942
        %v10093 = vunpack.c.l.b16 %v9943
        %v10094 = vunpack.c.h.b16 %v9943
        %v10095 = vunpack.c.l.b16 %v9944
        %v10096 = vunpack.c.h.b16 %v9944
        %v10097 = vunpack.c.l.b16 %v9945
        %v10098 = vunpack.c.h.b16 %v9945
        %v10099 = vunpack.c.l.b16 %v9946
        %v10100 = vunpack.c.h.b16 %v9946
        %v10101 = vunpack.c.l.b16 %v9947
        %v10102 = vunpack.c.h.b16 %v9947
        %v10103 = vunpack.c.l.b16 %v9948
        %v10104 = vunpack.c.h.b16 %v9948
        %v10105 = vunpack.c.l.b16 %v9949
        %v10106 = vunpack.c.h.b16 %v9949
        %v10107 = vunpack.c.l.b16 %v9950
        %v10108 = vunpack.c.h.b16 %v9950
        %v10109 = vunpack.c.l.b16 %v9951
        %v10110 = vunpack.c.h.b16 %v9951
        %v10111 = vunpack.c.l.b16 %v9952
        %v10112 = vunpack.c.h.b16 %v9952
        %v10113 = vunpack.c.l.b16 %v9953
        %v10114 = vunpack.c.h.b16 %v9953
        %v10115 = vunpack.c.l.b16 %v9954
        %v10116 = vunpack.c.h.b16 %v9954
        %v10117 = vunpack.c.l.b16 %v9955
        %v10118 = vunpack.c.h.b16 %v9955
        %v10119 = vunpack.c.l.b16 %v9956
        %v10120 = vunpack.c.h.b16 %v9956
        %v10121 = vunpack.c.l.b16 %v9957
        %v10122 = vunpack.c.h.b16 %v9957
        %v10123 = vunpack.c.l.b16 %v9958
        %v10124 = vunpack.c.h.b16 %v9958
        %v10125 = vunpack.c.l.b16 %v9959
        %v10126 = vunpack.c.h.b16 %v9959
        %v10127 = vunpack.c.l.b16 %v9960
        %v10128 = vunpack.c.h.b16 %v9960
        %v10129 = vunpack.c.l.b16 %v9961
        %v10130 = vunpack.c.h.b16 %v9961
        %v10131 = vunpack.c.l.b16 %v9962
        %v10132 = vunpack.c.h.b16 %v9962
        %v10133 = vunpack.c.l.b16 %v9963
        %v10134 = vunpack.c.h.b16 %v9963
        %v10135 = vunpack.c.l.b16 %v9964
        %v10136 = vunpack.c.h.b16 %v9964
        %v10137 = vunpack.c.l.b16 %v9965
        %v10138 = vunpack.c.h.b16 %v9965
        %v10139 = vunpack.c.l.b16 %v9966
        %v10140 = vunpack.c.h.b16 %v9966
        %v10141 = vunpack.c.l.b16 %v9967
        %v10142 = vunpack.c.h.b16 %v9967
        %v10143 = vunpack.c.l.b16 %v9968
        %v10144 = vunpack.c.h.b16 %v9968
        %v10145 = vunpack.c.l.b16 %v9969
        %v10146 = vunpack.c.h.b16 %v9969
        %v10147 = vunpack.c.l.b16 %v9970
        %v10148 = vunpack.c.h.b16 %v9970
        %v10149 = vunpack.c.l.b16 %v9971
        %v10150 = vunpack.c.h.b16 %v9971
        %v10151 = vunpack.c.l.b16 %v9972
        %v10152 = vunpack.c.h.b16 %v9972
        %v10153 = vunpack.c.l.b16 %v9973
        %v10154 = vunpack.c.h.b16 %v9973
        %v10155 = vunpack.c.l.b16 %v9974
        %v10156 = vunpack.c.h.b16 %v9974
        %v10157 = vunpack.c.l.b16 %v9975
        %v10158 = vunpack.c.h.b16 %v9975
        %v10159 = vunpack.c.l.b16 %v9976
        %v10160 = vunpack.c.h.b16 %v9976
        %v10161 = vunpack.c.l.b16 %v9977
        %v10162 = vunpack.c.h.b16 %v9977
        %v10163 = vunpack.c.l.b16 %v9978
        %v10164 = vunpack.c.h.b16 %v9978
        %v10165 = vunpack.c.l.b16 %v9979
        %v10166 = vunpack.c.h.b16 %v9979
        %v10167 = vunpack.c.l.b16 %v9980
        %v10168 = vunpack.c.h.b16 %v9980
        %v10169 = vunpack.c.l.b16 %v9981
        %v10170 = vunpack.c.h.b16 %v9981
        %v10171 = vunpack.c.l.b16 %v9982
        %v10172 = vunpack.c.h.b16 %v9982
        %v10173 = vunpack.c.l.b16 %v9983
        %v10174 = vunpack.c.h.b16 %v9983
        %v10175 = vunpack.c.l.b16 %v9984
        %v10176 = vunpack.c.h.b16 %v9984
        %v10177 = vunpack.c.l.b16 %v9985
        %v10178 = vunpack.c.h.b16 %v9985
        %v10179 = vpack.c.b16 %v10053, %v10051
        %v10180 = vpack.c.b16 %v10054, %v10052
        %v10181 = vpack.c.b16 %v10057, %v10055
        %v10182 = vpack.c.b16 %v10058, %v10056
        %v10183 = vpack.c.b16 %v10061, %v10059
        %v10184 = vpack.c.b16 %v10062, %v10060
        %v10185 = vpack.c.b16 %v10065, %v10063
        %v10186 = vpack.c.b16 %v10066, %v10064
        %v10187 = vpack.c.b16 %v10069, %v10067
        %v10188 = vpack.c.b16 %v10070, %v10068
        %v10189 = vpack.c.b16 %v10073, %v10071
        %v10190 = vpack.c.b16 %v10074, %v10072
        %v10191 = vpack.c.b16 %v10077, %v10075
        %v10192 = vpack.c.b16 %v10078, %v10076
        %v10193 = vpack.c.b16 %v10081, %v10079
        %v10194 = vpack.c.b16 %v10082, %v10080
        %v10195 = vpack.c.b16 %v10085, %v10083
        %v10196 = vpack.c.b16 %v10086, %v10084
        %v10197 = vpack.c.b16 %v10089, %v10087
        %v10198 = vpack.c.b16 %v10090, %v10088
        %v10199 = vpack.c.b16 %v10093, %v10091
        %v10200 = vpack.c.b16 %v10094, %v10092
        %v10201 = vpack.c.b16 %v10097, %v10095
        %v10202 = vpack.c.b16 %v10098, %v10096
        %v10203 = vpack.c.b16 %v10101, %v10099
        %v10204 = vpack.c.b16 %v10102, %v10100
        %v10205 = vpack.c.b16 %v10105, %v10103
        %v10206 = vpack.c.b16 %v10106, %v10104
        %v10207 = vpack.c.b16 %v10109, %v10107
        %v10208 = vpack.c.b16 %v10110, %v10108
        %v10209 = vpack.c.b16 %v10113, %v10111
        %v10210 = vpack.c.b16 %v10114, %v10112
        %v10211 = vpack.c.b16 %v10117, %v10115
        %v10212 = vpack.c.b16 %v10118, %v10116
        %v10213 = vpack.c.b16 %v10121, %v10119
        %v10214 = vpack.c.b16 %v10122, %v10120
        %v10215 = vpack.c.b16 %v10125, %v10123
        %v10216 = vpack.c.b16 %v10126, %v10124
        %v10217 = vpack.c.b16 %v10129, %v10127
        %v10218 = vpack.c.b16 %v10130, %v10128
        %v10219 = vpack.c.b16 %v10133, %v10131
        %v10220 = vpack.c.b16 %v10134, %v10132
        %v10221 = vpack.c.b16 %v10137, %v10135
        %v10222 = vpack.c.b16 %v10138, %v10136
        %v10223 = vpack.c.b16 %v10141, %v10139
        %v10224 = vpack.c.b16 %v10142, %v10140
        %v10225 = vpack.c.b16 %v10145, %v10143
        %v10226 = vpack.c.b16 %v10146, %v10144
        %v10227 = vpack.c.b16 %v10149, %v10147
        %v10228 = vpack.c.b16 %v10150, %v10148
        %v10229 = vpack.c.b16 %v10153, %v10151
        %v10230 = vpack.c.b16 %v10154, %v10152
        %v10231 = vpack.c.b16 %v10157, %v10155
        %v10232 = vpack.c.b16 %v10158, %v10156
        %v10233 = vpack.c.b16 %v10161, %v10159
        %v10234 = vpack.c.b16 %v10162, %v10160
        %v10235 = vpack.c.b16 %v10165, %v10163
        %v10236 = vpack.c.b16 %v10166, %v10164
        %v10237 = vpack.c.b16 %v10169, %v10167
        %v10238 = vpack.c.b16 %v10170, %v10168
        %v10239 = vpack.c.b16 %v10173, %v10171
        %v10240 = vpack.c.b16 %v10174, %v10172
        %v10241 = vpack.c.b16 %v10177, %v10175
        %v10242 = vpack.c.b16 %v10178, %v10176
        %v10308 = vperm.slane %v9986, 0
        %v10309 = vperm.slane %v9986, 1
        %10312 = vmatpush.bf16.msra.mxu0 %v10193
        %10313 = vmatpush.bf16.msra.mxu0 %v10191
        %10314 = vmatpush.bf16.msra.mxu0 %v10189
        %10315 = vmatpush.bf16.msra.mxu0 %v10187
        %10316 = vmatpush.bf16.msra.mxu0 %v10185
        %10317 = vmatpush.bf16.msra.mxu0 %v10183
        %10318 = vmatpush.bf16.msra.mxu0 %v10181
        %10319 = vmatpush.bf16.msra.mxu0 %v10179
        %10320 = vmatmul.bf16.gmra.mxu0 %v9918
        %v10321 = vpop.f32.mrf.mxu0
        %v10322 = vadd.f32 %v10308, %v10321
        %v10323 = vpop.f32.mrf.mxu0
        %10324 = vdwg.mxu0
        %10325 = vmatpush.bf16.msra.mxu0 %v10209
        %10326 = vmatpush.bf16.msra.mxu0 %v10207
        %10327 = vmatpush.bf16.msra.mxu0 %v10205
        %10328 = vmatpush.bf16.msra.mxu0 %v10203
        %10329 = vmatpush.bf16.msra.mxu0 %v10201
        %10330 = vmatpush.bf16.msra.mxu0 %v10199
        %10331 = vmatpush.bf16.msra.mxu0 %v10197
        %10332 = vmatpush.bf16.msra.mxu0 %v10195
        %10333 = vmatmul.bf16.gmra.mxu0 %v9919
        %v10334 = vpop.f32.mrf.mxu0
        %v10335 = vadd.f32 %v10322, %v10334
        %v10336 = vpop.f32.mrf.mxu0
        %10337 = vdwg.mxu0
        %10338 = vmatpush.bf16.msra.mxu0 %v10225
        %10339 = vmatpush.bf16.msra.mxu0 %v10223
        %10340 = vmatpush.bf16.msra.mxu0 %v10221
        %10341 = vmatpush.bf16.msra.mxu0 %v10219
        %10342 = vmatpush.bf16.msra.mxu0 %v10217
        %10343 = vmatpush.bf16.msra.mxu0 %v10215
        %10344 = vmatpush.bf16.msra.mxu0 %v10213
        %10345 = vmatpush.bf16.msra.mxu0 %v10211
        %10346 = vmatmul.bf16.gmra.mxu0 %v9920
        %v10347 = vpop.f32.mrf.mxu0
        %v10348 = vadd.f32 %v10335, %v10347
        %v10349 = vpop.f32.mrf.mxu0
        %10350 = vdwg.mxu0
        %10351 = vmatpush.bf16.msra.mxu0 %v10241
        %10352 = vmatpush.bf16.msra.mxu0 %v10239
        %10353 = vmatpush.bf16.msra.mxu0 %v10237
        %10354 = vmatpush.bf16.msra.mxu0 %v10235
        %10355 = vmatpush.bf16.msra.mxu0 %v10233
        %10356 = vmatpush.bf16.msra.mxu0 %v10231
        %10357 = vmatpush.bf16.msra.mxu0 %v10229
        %10358 = vmatpush.bf16.msra.mxu0 %v10227
        %10359 = vmatmul.bf16.gmra.mxu0 %v9921
        %v10360 = vpop.f32.mrf.mxu0
        %v10361 = vadd.f32 %v10348, %v10360
        %v10362 = vpop.f32.mrf.mxu0
        %10363 = vdwg.mxu0
        %10364 = vmatpush.bf16.msra.mxu0 %v10194
        %10365 = vmatpush.bf16.msra.mxu0 %v10192
        %10366 = vmatpush.bf16.msra.mxu0 %v10190
        %10367 = vmatpush.bf16.msra.mxu0 %v10188
        %10368 = vmatpush.bf16.msra.mxu0 %v10186
        %10369 = vmatpush.bf16.msra.mxu0 %v10184
        %10370 = vmatpush.bf16.msra.mxu0 %v10182
        %10371 = vmatpush.bf16.msra.mxu0 %v10180
        %10372 = vmatmul.bf16.gmra.mxu0 %v9918
        %v10373 = vpop.f32.mrf.mxu0
        %v10374 = vadd.f32 %v10309, %v10373
        %v10375 = vpop.f32.mrf.mxu0
        %10376 = vdwg.mxu0
        %10377 = vmatpush.bf16.msra.mxu0 %v10210
        %10378 = vmatpush.bf16.msra.mxu0 %v10208
        %10379 = vmatpush.bf16.msra.mxu0 %v10206
        %10380 = vmatpush.bf16.msra.mxu0 %v10204
        %10381 = vmatpush.bf16.msra.mxu0 %v10202
        %10382 = vmatpush.bf16.msra.mxu0 %v10200
        %10383 = vmatpush.bf16.msra.mxu0 %v10198
        %10384 = vmatpush.bf16.msra.mxu0 %v10196
        %10385 = vmatmul.bf16.gmra.mxu0 %v9919
        %v10386 = vpop.f32.mrf.mxu0
        %v10387 = vadd.f32 %v10374, %v10386
        %v10388 = vpop.f32.mrf.mxu0
        %10389 = vdwg.mxu0
        %10390 = vmatpush.bf16.msra.mxu0 %v10226
        %10391 = vmatpush.bf16.msra.mxu0 %v10224
        %10392 = vmatpush.bf16.msra.mxu0 %v10222
        %10393 = vmatpush.bf16.msra.mxu0 %v10220
        %10394 = vmatpush.bf16.msra.mxu0 %v10218
        %10395 = vmatpush.bf16.msra.mxu0 %v10216
        %10396 = vmatpush.bf16.msra.mxu0 %v10214
        %10397 = vmatpush.bf16.msra.mxu0 %v10212
        %10398 = vmatmul.bf16.gmra.mxu0 %v9920
        %v10399 = vpop.f32.mrf.mxu0
        %v10400 = vadd.f32 %v10387, %v10399
        %v10401 = vpop.f32.mrf.mxu0
        %10402 = vdwg.mxu0
        %10403 = vmatpush.bf16.msra.mxu0 %v10242
        %10404 = vmatpush.bf16.msra.mxu0 %v10240
        %10405 = vmatpush.bf16.msra.mxu0 %v10238
        %10406 = vmatpush.bf16.msra.mxu0 %v10236
        %10407 = vmatpush.bf16.msra.mxu0 %v10234
        %10408 = vmatpush.bf16.msra.mxu0 %v10232
        %10409 = vmatpush.bf16.msra.mxu0 %v10230
        %10410 = vmatpush.bf16.msra.mxu0 %v10228
        %10411 = vmatmul.bf16.gmra.mxu0 %v9921
        %v10412 = vpop.f32.mrf.mxu0
        %v10413 = vadd.f32 %v10400, %v10412
        %v10414 = vpop.f32.mrf.mxu0
        %10415 = vdwg.mxu0
        %v10416 = vmax.f32 %v10361, 0.0
        %v10417 = vmax.f32 %v10413, 0.0
        %v10418 = vpack.c.bf16 %v10416, %v10416
        %v10419 = vpack.c.bf16 %v10417, %v10417
        %v10420 = vld [vmem:[%s11] sm:$0xf]
        %v10421 = vld [vmem:[%s11 + $0x4] sm:$0xf]
        %v10422 = vld [vmem:[%s11 + $0x8] sm:$0xf]
        %v10423 = vld [vmem:[%s11 + $0xc] sm:$0xf]
        %v10424 = vld [vmem:[%s11 + $0x10] sm:$0xf]
        %v10425 = vld [vmem:[%s11 + $0x14] sm:$0xf]
        %v10426 = vld [vmem:[%s11 + $0x18] sm:$0xf]
        %v10427 = vld [vmem:[%s11 + $0x1c] sm:$0xf]
        %v10428 = vld [vmem:[%s11 + $0x20] sm:$0xf]
        %v10429 = vld [vmem:[%s11 + $0x24] sm:$0xf]
        %v10430 = vld [vmem:[%s11 + $0x28] sm:$0xf]
        %v10431 = vld [vmem:[%s11 + $0x2c] sm:$0xf]
        %v10432 = vld [vmem:[%s11 + $0x30] sm:$0xf]
        %v10433 = vld [vmem:[%s11 + $0x34] sm:$0xf]
        %v10434 = vld [vmem:[%s11 + $0x38] sm:$0xf]
        %v10435 = vld [vmem:[%s11 + $0x3c] sm:$0xf]
        %v10436 = vld [vmem:[%s11 + $0x40] sm:$0xf]
        %v10437 = vld [vmem:[%s11 + $0x44] sm:$0xf]
        %v10438 = vld [vmem:[%s11 + $0x48] sm:$0xf]
        %v10439 = vld [vmem:[%s11 + $0x4c] sm:$0xf]
        %v10440 = vld [vmem:[%s11 + $0x50] sm:$0xf]
        %v10441 = vld [vmem:[%s11 + $0x54] sm:$0xf]
        %v10442 = vld [vmem:[%s11 + $0x58] sm:$0xf]
        %v10443 = vld [vmem:[%s11 + $0x5c] sm:$0xf]
        %v10444 = vld [vmem:[%s11 + $0x60] sm:$0xf]
        %v10445 = vld [vmem:[%s11 + $0x64] sm:$0xf]
        %v10446 = vld [vmem:[%s11 + $0x68] sm:$0xf]
        %v10447 = vld [vmem:[%s11 + $0x6c] sm:$0xf]
        %v10448 = vld [vmem:[%s11 + $0x70] sm:$0xf]
        %v10449 = vld [vmem:[%s11 + $0x74] sm:$0xf]
        %v10450 = vld [vmem:[%s11 + $0x78] sm:$0xf]
        %v10451 = vld [vmem:[%s11 + $0x7c] sm:$0xf]
        %v10452 = vld [vmem:[%s12] sm:$0x1]
        %v10485 = vunpack.c.l.b16 %v10420
        %v10486 = vunpack.c.l.b16 %v10421
        %v10487 = vunpack.c.l.b16 %v10422
        %v10488 = vunpack.c.l.b16 %v10423
        %v10489 = vunpack.c.l.b16 %v10424
        %v10490 = vunpack.c.l.b16 %v10425
        %v10491 = vunpack.c.l.b16 %v10426
        %v10492 = vunpack.c.l.b16 %v10427
        %v10493 = vunpack.c.l.b16 %v10428
        %v10494 = vunpack.c.l.b16 %v10429
        %v10495 = vunpack.c.l.b16 %v10430
        %v10496 = vunpack.c.l.b16 %v10431
        %v10497 = vunpack.c.l.b16 %v10432
        %v10498 = vunpack.c.l.b16 %v10433
        %v10499 = vunpack.c.l.b16 %v10434
        %v10500 = vunpack.c.l.b16 %v10435
        %v10501 = vunpack.c.l.b16 %v10436
        %v10502 = vunpack.c.l.b16 %v10437
        %v10503 = vunpack.c.l.b16 %v10438
        %v10504 = vunpack.c.l.b16 %v10439
        %v10505 = vunpack.c.l.b16 %v10440
        %v10506 = vunpack.c.l.b16 %v10441
        %v10507 = vunpack.c.l.b16 %v10442
        %v10508 = vunpack.c.l.b16 %v10443
        %v10509 = vunpack.c.l.b16 %v10444
        %v10510 = vunpack.c.l.b16 %v10445
        %v10511 = vunpack.c.l.b16 %v10446
        %v10512 = vunpack.c.l.b16 %v10447
        %v10513 = vunpack.c.l.b16 %v10448
        %v10514 = vunpack.c.l.b16 %v10449
        %v10515 = vunpack.c.l.b16 %v10450
        %v10516 = vunpack.c.l.b16 %v10451
        %v10517 = vpack.c.b16 %v10486, %v10485
        %v10518 = vpack.c.b16 %v10488, %v10487
        %v10519 = vpack.c.b16 %v10490, %v10489
        %v10520 = vpack.c.b16 %v10492, %v10491
        %v10521 = vpack.c.b16 %v10494, %v10493
        %v10522 = vpack.c.b16 %v10496, %v10495
        %v10523 = vpack.c.b16 %v10498, %v10497
        %v10524 = vpack.c.b16 %v10500, %v10499
        %v10525 = vpack.c.b16 %v10502, %v10501
        %v10526 = vpack.c.b16 %v10504, %v10503
        %v10527 = vpack.c.b16 %v10506, %v10505
        %v10528 = vpack.c.b16 %v10508, %v10507
        %v10529 = vpack.c.b16 %v10510, %v10509
        %v10530 = vpack.c.b16 %v10512, %v10511
        %v10531 = vpack.c.b16 %v10514, %v10513
        %v10532 = vpack.c.b16 %v10516, %v10515
        %10549 = vmatpush.bf16.msra.mxu0 %v10524
        %10550 = vmatpush.bf16.msra.mxu0 %v10523
        %10551 = vmatpush.bf16.msra.mxu0 %v10522
        %10552 = vmatpush.bf16.msra.mxu0 %v10521
        %10553 = vmatpush.bf16.msra.mxu0 %v10520
        %10554 = vmatpush.bf16.msra.mxu0 %v10519
        %10555 = vmatpush.bf16.msra.mxu0 %v10518
        %10556 = vmatpush.bf16.msra.mxu0 %v10517
        %10557 = vmatmul.bf16.gmra.mxu0 %v10418
        %v10558 = vpop.f32.mrf.mxu0
        %v10559 = vadd.f32 %v10452, %v10558
        %v10560 = vpop.f32.mrf.mxu0
        %10561 = vdwg.mxu0
        %10562 = vmatpush.bf16.msra.mxu0 %v10532
        %10563 = vmatpush.bf16.msra.mxu0 %v10531
        %10564 = vmatpush.bf16.msra.mxu0 %v10530
        %10565 = vmatpush.bf16.msra.mxu0 %v10529
        %10566 = vmatpush.bf16.msra.mxu0 %v10528
        %10567 = vmatpush.bf16.msra.mxu0 %v10527
        %10568 = vmatpush.bf16.msra.mxu0 %v10526
        %10569 = vmatpush.bf16.msra.mxu0 %v10525
        %10570 = vmatmul.bf16.gmra.mxu0 %v10419
        %v10571 = vpop.f32.mrf.mxu0
        %v10572 = vadd.f32 %v10559, %v10571
        %v10573 = vpop.f32.mrf.mxu0
        %10574 = vdwg.mxu0
        %10575 = vst [vmem:[%s466] sm:$0x1] %v10572
        %s10576 = sand.u32 %s315, 1
        %s10577 = scalar_lea.sflag [#allocation13], %s10576
        %s10578 = sand.u32 %s315, 1
        %s10579 = scalar_lea.vmem [#allocation16], %s10578
        // Predicated region
        $region81: #{forward.1} parent=71 // pred_check
          %p10580 = pneg %p325
        $region82: #{forward.1} parent=71 // pred_check_branch
          %10582 = sbr.rel (%p10580) target = $region84
        $region83: #{forward.1} parent=71 // pred_region
          %10584 = vsyncadd %s10577, 0
          %s10585 = scalar_lea.hbm %s13, %s29
          %s10587 = sshll.u32 %s10579, 4
          %s10588 = int_to_ptr.vmem [resolvable:$true] %s10587
          %s10589 = sshll.u32 %s10585, 4
          %s10590 = int_to_ptr.hbm [resolvable:$true] %s10589
          %10592 = dma.vmem_to_hbm [thread:$0]  %s10588, 16, %s10590, %s10577
        $region84: #{forward.1} parent=71 // pred_fallthru
          _
      $region72: #{forward.1} parent=5 // pred_fallthru
        _
      %p10593 = scmp.le.s32.totalorder 2, %s24
      // Predicated region
      $region85: #{forward.1} parent=5 // pred_check
        %p10594 = pneg %p10593
      $region86: #{forward.1} parent=5 // pred_check_branch
        %10596 = sbr.rel (%p10594) target = $region88
      $region87: #{forward.1} parent=5 // pred_region
        %s10597 = ssub.s32 %s24, 2
        // Predicated region
        $region89: #{forward.1} parent=87 // pred_check
          %p10598 = pneg %p331
        $region90: #{forward.1} parent=87 // pred_check_branch
          %10600 = sbr.rel (%p10598) target = $region92
        $region91: #{forward.1} parent=87 // pred_region
          %s10601 = sand.u32 %s316, 1
          %s10602 = scalar_lea.sflag [#allocation13], %s10601
          %s10603 = sand.u32 %s316, 1
          %s10604 = scalar_lea.vmem [#allocation16], %s10603
          %10606 = dma.done %s10602, 16
        $region92: #{forward.1} parent=87 // pred_fallthru
          _
      $region88: #{forward.1} parent=5 // pred_fallthru
        _
    $region6: #{forward.1} parent=1 // loop_footer
      %s28 = sadd.s32 1, %s24
    $region7: #{forward.1} parent=1 // loop_footer_branch
      %23 = sbr.rel target = $region3
    $region8: #{forward.1} parent=1 // loop_exit
      _
    %10607 = vsyncpa [#allocation12], 1
    %s10608 = scalar_lea.sflag [#allocation12], 1
    %10609 = vsyncpa %s10608, 1
    %10610 = vsyncpa [#allocation15], 1
    %10611 = vsyncpa [#allocation13], 1
    %s10612 = scalar_lea.sflag [#allocation13], 1
    %10613 = vsyncpa %s10612, 1

</llo_original>
